<compile_context>
chip_gen: v5e
topology: v5e:2x2
jax: 0.10.0
libtpu: 0.0.40
codegen_flags: <defaults>
</compile_context>

<pallas_src>
import jax
import jax.numpy as jnp
from jax import lax
from jax.experimental import pallas as pl
from jax.experimental.pallas import tpu as pltpu

EPS = 1e-5                 # PyTorch InstanceNorm2d default eps, affine=False
MATMUL_DTYPE = jnp.bfloat16  # MXU-native on v5e/v6e/v7x; accumulation stays f32
SMALL_C_IM2COL = 64        # below this, use the store-built im2col slab


# ---------------- kernel helpers (traced inside the Pallas kernel) -----------

def _reflect_pad_into(pad_ref, y, H, W):
    """ReflectionPad2d(1): write y (H, W, C) into the (H+2, W+2, C) scratch.

    All halo rows/cols/corners are sourced from `y` (not read back from the
    scratch), so the halo stores can interleave with the interior copy.
    """
    pad_ref[1:H + 1, 1:W + 1, :] = y
    # top / bottom rows (reflection excludes the edge row)
    pad_ref[0:1, 1:W + 1, :] = y[1:2, :, :]
    pad_ref[H + 1:H + 2, 1:W + 1, :] = y[H - 2:H - 1, :, :]
    # left / right columns
    pad_ref[1:H + 1, 0:1, :] = y[:, 1:2, :]
    pad_ref[1:H + 1, W + 1:W + 2, :] = y[:, W - 2:W - 1, :]
    # corners
    pad_ref[0:1, 0:1, :] = y[1:2, 1:2, :]
    pad_ref[0:1, W + 1:W + 2, :] = y[1:2, W - 2:W - 1, :]
    pad_ref[H + 1:H + 2, 0:1, :] = y[H - 2:H - 1, 1:2, :]
    pad_ref[H + 1:H + 2, W + 1:W + 2, :] = y[H - 2:H - 1, W - 2:W - 1, :]


def _instance_norm(y, n_px):
    """InstanceNorm2d(affine=False) over the flattened spatial axis (f32 stats)."""
    inv_n = 1.0 / n_px
    s = jnp.sum(y, axis=0, keepdims=True)                       # (1, C)
    ss = jnp.sum(y * y, axis=0, keepdims=True)                  # (1, C)
    mean = s * inv_n
    var = ss * inv_n - mean * mean
    return (y - mean) * lax.rsqrt(var + EPS)


# ------------------------------- Pallas kernel -------------------------------

def _make_kernel(H, W, C, use_im2col):
    n_px = H * W

    def conv3x3(pad_ref, w_ref, slab_ref):
        """3x3 'valid' conv on the padded scratch. w_ref: (9*C, C) bf16."""
        if use_im2col:
            # Small C: build the (H*W, 9C) slab with explicit stores (no concat),
            # then one matmul with K = 9*C.
            for k in range(9):
                kh, kw = divmod(k, 3)
                tap = pad_ref[kh:kh + H, kw:kw + W, :].reshape(n_px, C)
                slab_ref[:, k * C:(k + 1) * C] = tap
            return jnp.dot(slab_ref[...], w_ref[...],
                           preferred_element_type=jnp.float32)   # (H*W, C) f32
        # Large C: 9 accumulated dots into an f32 accumulator (no slab at all).
        acc = jnp.zeros((n_px, C), jnp.float32)
        for k in range(9):
            kh, kw = divmod(k, 3)
            tap = pad_ref[kh:kh + H, kw:kw + W, :].reshape(n_px, C)
            acc = acc + jnp.dot(tap, w_ref[k * C:(k + 1) * C, :],
                                preferred_element_type=jnp.float32)
        return acc

    def kernel(x_ref, w1_ref, w2_ref, o_ref, pad_ref, *slab):
        slab_ref = slab[0] if use_im2col else None
        x = x_ref[0]                                             # (H, W, C) f32

        # branch: pad -> conv1 -> IN -> ReLU
        _reflect_pad_into(pad_ref, x.astype(pad_ref.dtype), H, W)
        h = conv3x3(pad_ref, w1_ref, slab_ref)                   # (H*W, C) f32
        h = jnp.maximum(_instance_norm(h, n_px), 0.0)

        # pad -> conv2 -> IN   (pad / slab scratch reused)
        _reflect_pad_into(pad_ref, h.reshape(H, W, C).astype(pad_ref.dtype), H, W)
        h2 = _instance_norm(conv3x3(pad_ref, w2_ref, slab_ref), n_px)

        # residual add (x kept in f32)
        o_ref[0] = (x.astype(jnp.float32) + h2.reshape(H, W, C)).astype(o_ref.dtype)

    return kernel


# --------------------------------- wrapper -----------------------------------

def resblock_forward(x_nchw, w1, b1, w2, b2):
    """x_nchw: (N, C, H, W); w*: (C, C, 3, 3) PyTorch layout; b*: (C,).

    NOTE: the conv biases are mathematically cancelled by the immediately
    following InstanceNorm2d(affine=False) (mean subtraction), so they are not
    used in the kernel. If the module ever changes to affine=True or reorders
    the norm, this shortcut must be revisited.
    """
    del b1, b2
    N, C, H, W = x_nchw.shape
    assert H >= 2 and W >= 2, "ReflectionPad2d(1) needs H, W >= 2"

    x = jnp.transpose(x_nchw, (0, 2, 3, 1))                      # NHWC (C -> lanes)

    # (Cout, Cin, 3, 3) -> (kh, kw, Cin, Cout) -> (9*Cin, Cout), rows ordered
    # (kh, kw, cin), matching the tap ordering in the kernel. Already bf16.
    def prep(w):
        return jnp.transpose(w, (2, 3, 1, 0)).reshape(9 * C, C).astype(MATMUL_DTYPE)
    w1_k, w2_k = prep(w1), prep(w2)

    use_im2col = C < SMALL_C_IM2COL
    pad_bytes = jnp.dtype(MATMUL_DTYPE).itemsize

    scratch = [pltpu.VMEM((H + 2, W + 2, C), MATMUL_DTYPE)]       # reflect-pad
    if use_im2col:
        scratch.append(pltpu.VMEM((H * W, 9 * C), MATMUL_DTYPE))  # im2col slab

    # Per-grid-step VMEM estimate (double-buffered I/O + scratch + f32 temps).
    blk = H * W * C * x.dtype.itemsize
    est = (4 * blk                                   # in/out blocks, double-buffered
           + 4 * 9 * C * C * pad_bytes               # both weight slabs, double-buffered
           + (H + 2) * (W + 2) * C * pad_bytes       # reflect-pad scratch
           + (H * W * 9 * C * pad_bytes if use_im2col else 0)
           + 6 * H * W * C * 4)                      # x / h / h2 / acc f32 temporaries

    # Cap against the actual chip's VMEM (v5e/v6e 128 MiB, v7x 64 MiB per TC).
    try:
        vmem_cap = int(pltpu.get_tpu_info().vmem_capacity_bytes)
    except Exception:
        vmem_cap = 64 * 2**20
    vmem_limit = int(min((vmem_cap * 3) // 4, max(2 * est, 16 * 2**20)))

    cost = pl.CostEstimate(
        flops=4 * N * H * W * 9 * C * C,              # two (H*W,9C)x(9C,C) matmuls
        transcendentals=2 * N * C,                    # rsqrt per channel per IN
        bytes_accessed=int(2 * N * blk + 2 * 9 * C * C * pad_bytes),
    )

    out_nhwc = pl.pallas_call(
        _make_kernel(H, W, C, use_im2col),
        out_shape=jax.ShapeDtypeStruct((N, H, W, C), x.dtype),
        grid_spec=pltpu.PrefetchScalarGridSpec(
            num_scalar_prefetch=0,
            grid=(N,),
            in_specs=[
                pl.BlockSpec((1, H, W, C), lambda n: (n, 0, 0, 0)),   # one image
                pl.BlockSpec((9 * C, C), lambda n: (0, 0)),           # w1 (resident)
                pl.BlockSpec((9 * C, C), lambda n: (0, 0)),           # w2 (resident)
            ],
            out_specs=pl.BlockSpec((1, H, W, C), lambda n: (n, 0, 0, 0)),
            scratch_shapes=scratch,
        ),
        compiler_params=pltpu.CompilerParams(
            dimension_semantics=("parallel",),
            vmem_limit_bytes=vmem_limit,
        ),
        cost_estimate=cost,
    )(x, w1_k, w2_k)

    return jnp.transpose(out_nhwc, (0, 3, 1, 2))                  # back to NCHW


# ------------------------- pure-JAX reference (NCHW) --------------------------

def resblock_ref(x, w1, b1, w2, b2):
    def conv(z, w, b):
        zp = jnp.pad(z, ((0, 0), (0, 0), (1, 1), (1, 1)), mode="reflect")
        y = lax.conv_general_dilated(zp, w, (1, 1), "VALID",
                                     dimension_numbers=("NCHW", "OIHW", "NCHW"))
        return y + b.reshape(1, -1, 1, 1)

    def inorm(y):
        m = jnp.mean(y, axis=(2, 3), keepdims=True)
        v = jnp.mean((y - m) ** 2, axis=(2, 3), keepdims=True)
        return (y - m) / jnp.sqrt(v + EPS)

    h = jnp.maximum(inorm(conv(x, w1, b1)), 0.0)
    return x + inorm(conv(h, w2, b2))


# ----------------------------------- main -------------------------------------

if __name__ == "__main__":
    key = jax.random.PRNGKey(0)
    kx, kw1, kb1, kw2, kb2 = jax.random.split(key, 5)

    N, C, H, W = 2, 4, 16, 16
    x = jax.random.normal(kx, (N, C, H, W), jnp.float32)

    # Deterministic synthetic parameters (Conv2d(f, f, 3) shapes).
    scale = 1.0 / jnp.sqrt(jnp.float32(C * 3 * 3))
    w1 = jax.random.normal(kw1, (C, C, 3, 3), jnp.float32) * scale
    b1 = jax.random.normal(kb1, (C,), jnp.float32) * scale
    w2 = jax.random.normal(kw2, (C, C, 3, 3), jnp.float32) * scale
    b2 = jax.random.normal(kb2, (C,), jnp.float32) * scale

    out = jax.jit(resblock_forward)(x, w1, b1, w2, b2)
    out = jax.block_until_ready(out)

    ref = resblock_ref(x, w1, b1, w2, b2)
    assert out.shape == (N, C, H, W) and out.dtype == jnp.float32
    # bf16 MXU operands with f32 accumulation -> relaxed tolerance.
    assert jnp.allclose(out, ref, atol=6e-2, rtol=6e-2), (
        float(jnp.max(jnp.abs(out - ref))))

    print("KERNEL_OK")
</pallas_src>

<mosaic_0001>
module attributes {stable_mosaic.version = 11 : i64} {
  func.func @kernel(%arg0: i32, %arg1: memref<1x16x16x4xf32, #tpu.memory_space<vmem>>, %arg2: memref<36x4xbf16, #tpu.memory_space<vmem>>, %arg3: memref<36x4xbf16, #tpu.memory_space<vmem>>, %arg4: memref<1x16x16x4xf32, #tpu.memory_space<vmem>>, %arg5: memref<18x18x4xbf16, #tpu.memory_space<vmem>>, %arg6: memref<256x36xbf16, #tpu.memory_space<vmem>>) attributes {dimension_semantics = [#tpu.dimension_semantics<parallel>], iteration_bounds = array<i64: 2>, scalar_prefetch = 0 : i64, scratch_operands = 2 : i64, tpu.core_type = #tpu.core_type<tc>, window_params = [{transform_indices = @transform_0, window_bounds = array<i64: 1, 16, 16, 4>}, {pipeline_mode = #tpu.pipeline_mode<synchronous>, transform_indices = @transform_1, window_bounds = array<i64: 36, 4>}, {pipeline_mode = #tpu.pipeline_mode<synchronous>, transform_indices = @transform_2, window_bounds = array<i64: 36, 4>}, {transform_indices = @transform_3, window_bounds = array<i64: 1, 16, 16, 4>}]} {
    %c0 = arith.constant 0 : index
    %c0_0 = arith.constant 0 : index
    %c0_1 = arith.constant 0 : index
    %c0_2 = arith.constant 0 : index
    %0 = vector.load %arg1[%c0, %c0_0, %c0_1, %c0_2] : memref<1x16x16x4xf32, #tpu.memory_space<vmem>>, vector<1x16x16x4xf32>
    %1 = vector.shape_cast %0 : vector<1x16x16x4xf32> to vector<16x16x4xf32>
    %2 = arith.truncf %1 : vector<16x16x4xf32> to vector<16x16x4xbf16>
    %c1 = arith.constant 1 : index
    %c1_3 = arith.constant 1 : index
    %c0_4 = arith.constant 0 : index
    %3 = vector.load %arg5[%c1, %c1_3, %c0_4] : memref<18x18x4xbf16, #tpu.memory_space<vmem>>, vector<16x16x4xbf16>
    tpu.vector_store %arg5[%c1, %c1_3, %c0_4], %2 {strides = array<i32>} : memref<18x18x4xbf16, #tpu.memory_space<vmem>>, vector<16x16x4xbf16>,
    %4 = vector.extract_strided_slice %2 {offsets = [1, 0, 0], sizes = [1, 16, 4], strides = [1, 1, 1]} : vector<16x16x4xbf16> to vector<1x16x4xbf16>
    %c0_5 = arith.constant 0 : index
    %c1_6 = arith.constant 1 : index
    %c0_7 = arith.constant 0 : index
    %5 = vector.load %arg5[%c0_5, %c1_6, %c0_7] : memref<18x18x4xbf16, #tpu.memory_space<vmem>>, vector<1x16x4xbf16>
    tpu.vector_store %arg5[%c0_5, %c1_6, %c0_7], %4 {strides = array<i32>} : memref<18x18x4xbf16, #tpu.memory_space<vmem>>, vector<1x16x4xbf16>,
    %6 = vector.extract_strided_slice %2 {offsets = [14, 0, 0], sizes = [1, 16, 4], strides = [1, 1, 1]} : vector<16x16x4xbf16> to vector<1x16x4xbf16>
    %c17 = arith.constant 17 : index
    %c1_8 = arith.constant 1 : index
    %c0_9 = arith.constant 0 : index
    %7 = vector.load %arg5[%c17, %c1_8, %c0_9] : memref<18x18x4xbf16, #tpu.memory_space<vmem>>, vector<1x16x4xbf16>
    tpu.vector_store %arg5[%c17, %c1_8, %c0_9], %6 {strides = array<i32>} : memref<18x18x4xbf16, #tpu.memory_space<vmem>>, vector<1x16x4xbf16>,
    %8 = vector.extract_strided_slice %2 {offsets = [0, 1, 0], sizes = [16, 1, 4], strides = [1, 1, 1]} : vector<16x16x4xbf16> to vector<16x1x4xbf16>
    %c1_10 = arith.constant 1 : index
    %c0_11 = arith.constant 0 : index
    %c0_12 = arith.constant 0 : index
    %9 = vector.load %arg5[%c1_10, %c0_11, %c0_12] : memref<18x18x4xbf16, #tpu.memory_space<vmem>>, vector<16x1x4xbf16>
    tpu.vector_store %arg5[%c1_10, %c0_11, %c0_12], %8 {strides = array<i32>} : memref<18x18x4xbf16, #tpu.memory_space<vmem>>, vector<16x1x4xbf16>,
    %10 = vector.extract_strided_slice %2 {offsets = [0, 14, 0], sizes = [16, 1, 4], strides = [1, 1, 1]} : vector<16x16x4xbf16> to vector<16x1x4xbf16>
    %c1_13 = arith.constant 1 : index
    %c17_14 = arith.constant 17 : index
    %c0_15 = arith.constant 0 : index
    %11 = vector.load %arg5[%c1_13, %c17_14, %c0_15] : memref<18x18x4xbf16, #tpu.memory_space<vmem>>, vector<16x1x4xbf16>
    tpu.vector_store %arg5[%c1_13, %c17_14, %c0_15], %10 {strides = array<i32>} : memref<18x18x4xbf16, #tpu.memory_space<vmem>>, vector<16x1x4xbf16>,
    %12 = vector.extract_strided_slice %2 {offsets = [1, 1, 0], sizes = [1, 1, 4], strides = [1, 1, 1]} : vector<16x16x4xbf16> to vector<1x1x4xbf16>
    %c0_16 = arith.constant 0 : index
    %c0_17 = arith.constant 0 : index
    %c0_18 = arith.constant 0 : index
    %13 = vector.load %arg5[%c0_16, %c0_17, %c0_18] : memref<18x18x4xbf16, #tpu.memory_space<vmem>>, vector<1x1x4xbf16>
    tpu.vector_store %arg5[%c0_16, %c0_17, %c0_18], %12 {strides = array<i32>} : memref<18x18x4xbf16, #tpu.memory_space<vmem>>, vector<1x1x4xbf16>,
    %14 = vector.extract_strided_slice %2 {offsets = [1, 14, 0], sizes = [1, 1, 4], strides = [1, 1, 1]} : vector<16x16x4xbf16> to vector<1x1x4xbf16>
    %c0_19 = arith.constant 0 : index
    %c17_20 = arith.constant 17 : index
    %c0_21 = arith.constant 0 : index
    %15 = vector.load %arg5[%c0_19, %c17_20, %c0_21] : memref<18x18x4xbf16, #tpu.memory_space<vmem>>, vector<1x1x4xbf16>
    tpu.vector_store %arg5[%c0_19, %c17_20, %c0_21], %14 {strides = array<i32>} : memref<18x18x4xbf16, #tpu.memory_space<vmem>>, vector<1x1x4xbf16>,
    %16 = vector.extract_strided_slice %2 {offsets = [14, 1, 0], sizes = [1, 1, 4], strides = [1, 1, 1]} : vector<16x16x4xbf16> to vector<1x1x4xbf16>
    %c17_22 = arith.constant 17 : index
    %c0_23 = arith.constant 0 : index
    %c0_24 = arith.constant 0 : index
    %17 = vector.load %arg5[%c17_22, %c0_23, %c0_24] : memref<18x18x4xbf16, #tpu.memory_space<vmem>>, vector<1x1x4xbf16>
    tpu.vector_store %arg5[%c17_22, %c0_23, %c0_24], %16 {strides = array<i32>} : memref<18x18x4xbf16, #tpu.memory_space<vmem>>, vector<1x1x4xbf16>,
    %18 = vector.extract_strided_slice %2 {offsets = [14, 14, 0], sizes = [1, 1, 4], strides = [1, 1, 1]} : vector<16x16x4xbf16> to vector<1x1x4xbf16>
    %c17_25 = arith.constant 17 : index
    %c17_26 = arith.constant 17 : index
    %c0_27 = arith.constant 0 : index
    %19 = vector.load %arg5[%c17_25, %c17_26, %c0_27] : memref<18x18x4xbf16, #tpu.memory_space<vmem>>, vector<1x1x4xbf16>
    tpu.vector_store %arg5[%c17_25, %c17_26, %c0_27], %18 {strides = array<i32>} : memref<18x18x4xbf16, #tpu.memory_space<vmem>>, vector<1x1x4xbf16>,
    %c0_28 = arith.constant 0 : index
    %c0_29 = arith.constant 0 : index
    %c0_30 = arith.constant 0 : index
    %20 = vector.load %arg5[%c0_28, %c0_29, %c0_30] : memref<18x18x4xbf16, #tpu.memory_space<vmem>>, vector<16x16x4xbf16>
    %21 = vector.shape_cast %20 : vector<16x16x4xbf16> to vector<256x4xbf16>
    %c0_31 = arith.constant 0 : index
    %c0_32 = arith.constant 0 : index
    %22 = vector.load %arg6[%c0_31, %c0_32] : memref<256x36xbf16, #tpu.memory_space<vmem>>, vector<256x4xbf16>
    tpu.vector_store %arg6[%c0_31, %c0_32], %21 {strides = array<i32>} : memref<256x36xbf16, #tpu.memory_space<vmem>>, vector<256x4xbf16>,
    %c0_33 = arith.constant 0 : index
    %c1_34 = arith.constant 1 : index
    %c0_35 = arith.constant 0 : index
    %23 = vector.load %arg5[%c0_33, %c1_34, %c0_35] : memref<18x18x4xbf16, #tpu.memory_space<vmem>>, vector<16x16x4xbf16>
    %24 = vector.shape_cast %23 : vector<16x16x4xbf16> to vector<256x4xbf16>
    %c0_36 = arith.constant 0 : index
    %c4 = arith.constant 4 : index
    %25 = vector.load %arg6[%c0_36, %c4] : memref<256x36xbf16, #tpu.memory_space<vmem>>, vector<256x4xbf16>
    tpu.vector_store %arg6[%c0_36, %c4], %24 {strides = array<i32>} : memref<256x36xbf16, #tpu.memory_space<vmem>>, vector<256x4xbf16>,
    %c0_37 = arith.constant 0 : index
    %c2 = arith.constant 2 : index
    %c0_38 = arith.constant 0 : index
    %26 = vector.load %arg5[%c0_37, %c2, %c0_38] : memref<18x18x4xbf16, #tpu.memory_space<vmem>>, vector<16x16x4xbf16>
    %27 = vector.shape_cast %26 : vector<16x16x4xbf16> to vector<256x4xbf16>
    %c0_39 = arith.constant 0 : index
    %c8 = arith.constant 8 : index
    %28 = vector.load %arg6[%c0_39, %c8] : memref<256x36xbf16, #tpu.memory_space<vmem>>, vector<256x4xbf16>
    tpu.vector_store %arg6[%c0_39, %c8], %27 {strides = array<i32>} : memref<256x36xbf16, #tpu.memory_space<vmem>>, vector<256x4xbf16>,
    %c1_40 = arith.constant 1 : index
    %c0_41 = arith.constant 0 : index
    %c0_42 = arith.constant 0 : index
    %29 = vector.load %arg5[%c1_40, %c0_41, %c0_42] : memref<18x18x4xbf16, #tpu.memory_space<vmem>>, vector<16x16x4xbf16>
    %30 = vector.shape_cast %29 : vector<16x16x4xbf16> to vector<256x4xbf16>
    %c0_43 = arith.constant 0 : index
    %c12 = arith.constant 12 : index
    %31 = vector.load %arg6[%c0_43, %c12] : memref<256x36xbf16, #tpu.memory_space<vmem>>, vector<256x4xbf16>
    tpu.vector_store %arg6[%c0_43, %c12], %30 {strides = array<i32>} : memref<256x36xbf16, #tpu.memory_space<vmem>>, vector<256x4xbf16>,
    %c1_44 = arith.constant 1 : index
    %c1_45 = arith.constant 1 : index
    %c0_46 = arith.constant 0 : index
    %32 = vector.load %arg5[%c1_44, %c1_45, %c0_46] : memref<18x18x4xbf16, #tpu.memory_space<vmem>>, vector<16x16x4xbf16>
    %33 = vector.shape_cast %32 : vector<16x16x4xbf16> to vector<256x4xbf16>
    %c0_47 = arith.constant 0 : index
    %c16 = arith.constant 16 : index
    %34 = vector.load %arg6[%c0_47, %c16] : memref<256x36xbf16, #tpu.memory_space<vmem>>, vector<256x4xbf16>
    tpu.vector_store %arg6[%c0_47, %c16], %33 {strides = array<i32>} : memref<256x36xbf16, #tpu.memory_space<vmem>>, vector<256x4xbf16>,
    %c1_48 = arith.constant 1 : index
    %c2_49 = arith.constant 2 : index
    %c0_50 = arith.constant 0 : index
    %35 = vector.load %arg5[%c1_48, %c2_49, %c0_50] : memref<18x18x4xbf16, #tpu.memory_space<vmem>>, vector<16x16x4xbf16>
    %36 = vector.shape_cast %35 : vector<16x16x4xbf16> to vector<256x4xbf16>
    %c0_51 = arith.constant 0 : index
    %c20 = arith.constant 20 : index
    %37 = vector.load %arg6[%c0_51, %c20] : memref<256x36xbf16, #tpu.memory_space<vmem>>, vector<256x4xbf16>
    tpu.vector_store %arg6[%c0_51, %c20], %36 {strides = array<i32>} : memref<256x36xbf16, #tpu.memory_space<vmem>>, vector<256x4xbf16>,
    %c2_52 = arith.constant 2 : index
    %c0_53 = arith.constant 0 : index
    %c0_54 = arith.constant 0 : index
    %38 = vector.load %arg5[%c2_52, %c0_53, %c0_54] : memref<18x18x4xbf16, #tpu.memory_space<vmem>>, vector<16x16x4xbf16>
    %39 = vector.shape_cast %38 : vector<16x16x4xbf16> to vector<256x4xbf16>
    %c0_55 = arith.constant 0 : index
    %c24 = arith.constant 24 : index
    %40 = vector.load %arg6[%c0_55, %c24] : memref<256x36xbf16, #tpu.memory_space<vmem>>, vector<256x4xbf16>
    tpu.vector_store %arg6[%c0_55, %c24], %39 {strides = array<i32>} : memref<256x36xbf16, #tpu.memory_space<vmem>>, vector<256x4xbf16>,
    %c2_56 = arith.constant 2 : index
    %c1_57 = arith.constant 1 : index
    %c0_58 = arith.constant 0 : index
    %41 = vector.load %arg5[%c2_56, %c1_57, %c0_58] : memref<18x18x4xbf16, #tpu.memory_space<vmem>>, vector<16x16x4xbf16>
    %42 = vector.shape_cast %41 : vector<16x16x4xbf16> to vector<256x4xbf16>
    %c0_59 = arith.constant 0 : index
    %c28 = arith.constant 28 : index
    %43 = vector.load %arg6[%c0_59, %c28] : memref<256x36xbf16, #tpu.memory_space<vmem>>, vector<256x4xbf16>
    tpu.vector_store %arg6[%c0_59, %c28], %42 {strides = array<i32>} : memref<256x36xbf16, #tpu.memory_space<vmem>>, vector<256x4xbf16>,
    %c2_60 = arith.constant 2 : index
    %c2_61 = arith.constant 2 : index
    %c0_62 = arith.constant 0 : index
    %44 = vector.load %arg5[%c2_60, %c2_61, %c0_62] : memref<18x18x4xbf16, #tpu.memory_space<vmem>>, vector<16x16x4xbf16>
    %45 = vector.shape_cast %44 : vector<16x16x4xbf16> to vector<256x4xbf16>
    %c0_63 = arith.constant 0 : index
    %c32 = arith.constant 32 : index
    %46 = vector.load %arg6[%c0_63, %c32] : memref<256x36xbf16, #tpu.memory_space<vmem>>, vector<256x4xbf16>
    tpu.vector_store %arg6[%c0_63, %c32], %45 {strides = array<i32>} : memref<256x36xbf16, #tpu.memory_space<vmem>>, vector<256x4xbf16>,
    %c0_64 = arith.constant 0 : index
    %c0_65 = arith.constant 0 : index
    %47 = vector.load %arg6[%c0_64, %c0_65] : memref<256x36xbf16, #tpu.memory_space<vmem>>, vector<256x36xbf16>
    %c0_66 = arith.constant 0 : index
    %c0_67 = arith.constant 0 : index
    %48 = vector.load %arg2[%c0_66, %c0_67] : memref<36x4xbf16, #tpu.memory_space<vmem>>, vector<36x4xbf16>
    %cst = arith.constant dense<0.000000e+00> : vector<256x4xf32>
    %49 = tpu.matmul %47, %48, %cst {dimension_numbers = #tpu.dot_dimension_numbers<[1], [0], [0], [1], [0, 0, 1, 1], [], []>} : vector<256x36xbf16>, vector<36x4xbf16>, vector<256x4xf32> -> vector<256x4xf32>
    %cst_68 = arith.constant dense<0.000000e+00> : vector<4xf32>
    %50 = vector.multi_reduction <add>, %49, %cst_68 [0] : vector<256x4xf32> to vector<4xf32>
    %51 = vector.shape_cast %50 : vector<4xf32> to vector<1x4xf32>
    %52 = arith.mulf %49, %49 : vector<256x4xf32>
    %cst_69 = arith.constant dense<0.000000e+00> : vector<4xf32>
    %53 = vector.multi_reduction <add>, %52, %cst_69 [0] : vector<256x4xf32> to vector<4xf32>
    %54 = vector.shape_cast %53 : vector<4xf32> to vector<1x4xf32>
    %cst_70 = arith.constant 3.906250e-03 : f32
    %55 = vector.broadcast %cst_70 : f32 to vector<1x4xf32>
    %56 = arith.mulf %51, %55 : vector<1x4xf32>
    %cst_71 = arith.constant 3.906250e-03 : f32
    %57 = vector.broadcast %cst_71 : f32 to vector<1x4xf32>
    %58 = arith.mulf %54, %57 : vector<1x4xf32>
    %59 = arith.mulf %56, %56 : vector<1x4xf32>
    %60 = arith.subf %58, %59 : vector<1x4xf32>
    %61 = vector.broadcast %56 : vector<1x4xf32> to vector<256x4xf32>
    %62 = arith.subf %49, %61 : vector<256x4xf32>
    %cst_72 = arith.constant 9.99999974E-6 : f32
    %63 = vector.broadcast %cst_72 : f32 to vector<1x4xf32>
    %64 = arith.addf %60, %63 : vector<1x4xf32>
    %65 = math.rsqrt %64 : vector<1x4xf32>
    %66 = vector.broadcast %65 : vector<1x4xf32> to vector<256x4xf32>
    %67 = arith.mulf %62, %66 : vector<256x4xf32>
    %cst_73 = arith.constant 0.000000e+00 : f32
    %68 = vector.broadcast %cst_73 : f32 to vector<256x4xf32>
    %69 = arith.maximumf %67, %68 : vector<256x4xf32>
    %70 = vector.shape_cast %69 : vector<256x4xf32> to vector<16x16x4xf32>
    %71 = arith.truncf %70 : vector<16x16x4xf32> to vector<16x16x4xbf16>
    %c1_74 = arith.constant 1 : index
    %c1_75 = arith.constant 1 : index
    %c0_76 = arith.constant 0 : index
    %72 = vector.load %arg5[%c1_74, %c1_75, %c0_76] : memref<18x18x4xbf16, #tpu.memory_space<vmem>>, vector<16x16x4xbf16>
    tpu.vector_store %arg5[%c1_74, %c1_75, %c0_76], %71 {strides = array<i32>} : memref<18x18x4xbf16, #tpu.memory_space<vmem>>, vector<16x16x4xbf16>,
    %73 = vector.extract_strided_slice %71 {offsets = [1, 0, 0], sizes = [1, 16, 4], strides = [1, 1, 1]} : vector<16x16x4xbf16> to vector<1x16x4xbf16>
    %c0_77 = arith.constant 0 : index
    %c1_78 = arith.constant 1 : index
    %c0_79 = arith.constant 0 : index
    %74 = vector.load %arg5[%c0_77, %c1_78, %c0_79] : memref<18x18x4xbf16, #tpu.memory_space<vmem>>, vector<1x16x4xbf16>
    tpu.vector_store %arg5[%c0_77, %c1_78, %c0_79], %73 {strides = array<i32>} : memref<18x18x4xbf16, #tpu.memory_space<vmem>>, vector<1x16x4xbf16>,
    %75 = vector.extract_strided_slice %71 {offsets = [14, 0, 0], sizes = [1, 16, 4], strides = [1, 1, 1]} : vector<16x16x4xbf16> to vector<1x16x4xbf16>
    %c17_80 = arith.constant 17 : index
    %c1_81 = arith.constant 1 : index
    %c0_82 = arith.constant 0 : index
    %76 = vector.load %arg5[%c17_80, %c1_81, %c0_82] : memref<18x18x4xbf16, #tpu.memory_space<vmem>>, vector<1x16x4xbf16>
    tpu.vector_store %arg5[%c17_80, %c1_81, %c0_82], %75 {strides = array<i32>} : memref<18x18x4xbf16, #tpu.memory_space<vmem>>, vector<1x16x4xbf16>,
    %77 = vector.extract_strided_slice %71 {offsets = [0, 1, 0], sizes = [16, 1, 4], strides = [1, 1, 1]} : vector<16x16x4xbf16> to vector<16x1x4xbf16>
    %c1_83 = arith.constant 1 : index
    %c0_84 = arith.constant 0 : index
    %c0_85 = arith.constant 0 : index
    %78 = vector.load %arg5[%c1_83, %c0_84, %c0_85] : memref<18x18x4xbf16, #tpu.memory_space<vmem>>, vector<16x1x4xbf16>
    tpu.vector_store %arg5[%c1_83, %c0_84, %c0_85], %77 {strides = array<i32>} : memref<18x18x4xbf16, #tpu.memory_space<vmem>>, vector<16x1x4xbf16>,
    %79 = vector.extract_strided_slice %71 {offsets = [0, 14, 0], sizes = [16, 1, 4], strides = [1, 1, 1]} : vector<16x16x4xbf16> to vector<16x1x4xbf16>
    %c1_86 = arith.constant 1 : index
    %c17_87 = arith.constant 17 : index
    %c0_88 = arith.constant 0 : index
    %80 = vector.load %arg5[%c1_86, %c17_87, %c0_88] : memref<18x18x4xbf16, #tpu.memory_space<vmem>>, vector<16x1x4xbf16>
    tpu.vector_store %arg5[%c1_86, %c17_87, %c0_88], %79 {strides = array<i32>} : memref<18x18x4xbf16, #tpu.memory_space<vmem>>, vector<16x1x4xbf16>,
    %81 = vector.extract_strided_slice %71 {offsets = [1, 1, 0], sizes = [1, 1, 4], strides = [1, 1, 1]} : vector<16x16x4xbf16> to vector<1x1x4xbf16>
    %c0_89 = arith.constant 0 : index
    %c0_90 = arith.constant 0 : index
    %c0_91 = arith.constant 0 : index
    %82 = vector.load %arg5[%c0_89, %c0_90, %c0_91] : memref<18x18x4xbf16, #tpu.memory_space<vmem>>, vector<1x1x4xbf16>
    tpu.vector_store %arg5[%c0_89, %c0_90, %c0_91], %81 {strides = array<i32>} : memref<18x18x4xbf16, #tpu.memory_space<vmem>>, vector<1x1x4xbf16>,
    %83 = vector.extract_strided_slice %71 {offsets = [1, 14, 0], sizes = [1, 1, 4], strides = [1, 1, 1]} : vector<16x16x4xbf16> to vector<1x1x4xbf16>
    %c0_92 = arith.constant 0 : index
    %c17_93 = arith.constant 17 : index
    %c0_94 = arith.constant 0 : index
    %84 = vector.load %arg5[%c0_92, %c17_93, %c0_94] : memref<18x18x4xbf16, #tpu.memory_space<vmem>>, vector<1x1x4xbf16>
    tpu.vector_store %arg5[%c0_92, %c17_93, %c0_94], %83 {strides = array<i32>} : memref<18x18x4xbf16, #tpu.memory_space<vmem>>, vector<1x1x4xbf16>,
    %85 = vector.extract_strided_slice %71 {offsets = [14, 1, 0], sizes = [1, 1, 4], strides = [1, 1, 1]} : vector<16x16x4xbf16> to vector<1x1x4xbf16>
    %c17_95 = arith.constant 17 : index
    %c0_96 = arith.constant 0 : index
    %c0_97 = arith.constant 0 : index
    %86 = vector.load %arg5[%c17_95, %c0_96, %c0_97] : memref<18x18x4xbf16, #tpu.memory_space<vmem>>, vector<1x1x4xbf16>
    tpu.vector_store %arg5[%c17_95, %c0_96, %c0_97], %85 {strides = array<i32>} : memref<18x18x4xbf16, #tpu.memory_space<vmem>>, vector<1x1x4xbf16>,
    %87 = vector.extract_strided_slice %71 {offsets = [14, 14, 0], sizes = [1, 1, 4], strides = [1, 1, 1]} : vector<16x16x4xbf16> to vector<1x1x4xbf16>
    %c17_98 = arith.constant 17 : index
    %c17_99 = arith.constant 17 : index
    %c0_100 = arith.constant 0 : index
    %88 = vector.load %arg5[%c17_98, %c17_99, %c0_100] : memref<18x18x4xbf16, #tpu.memory_space<vmem>>, vector<1x1x4xbf16>
    tpu.vector_store %arg5[%c17_98, %c17_99, %c0_100], %87 {strides = array<i32>} : memref<18x18x4xbf16, #tpu.memory_space<vmem>>, vector<1x1x4xbf16>,
    %c0_101 = arith.constant 0 : index
    %c0_102 = arith.constant 0 : index
    %c0_103 = arith.constant 0 : index
    %89 = vector.load %arg5[%c0_101, %c0_102, %c0_103] : memref<18x18x4xbf16, #tpu.memory_space<vmem>>, vector<16x16x4xbf16>
    %90 = vector.shape_cast %89 : vector<16x16x4xbf16> to vector<256x4xbf16>
    %c0_104 = arith.constant 0 : index
    %c0_105 = arith.constant 0 : index
    %91 = vector.load %arg6[%c0_104, %c0_105] : memref<256x36xbf16, #tpu.memory_space<vmem>>, vector<256x4xbf16>
    tpu.vector_store %arg6[%c0_104, %c0_105], %90 {strides = array<i32>} : memref<256x36xbf16, #tpu.memory_space<vmem>>, vector<256x4xbf16>,
    %c0_106 = arith.constant 0 : index
    %c1_107 = arith.constant 1 : index
    %c0_108 = arith.constant 0 : index
    %92 = vector.load %arg5[%c0_106, %c1_107, %c0_108] : memref<18x18x4xbf16, #tpu.memory_space<vmem>>, vector<16x16x4xbf16>
    %93 = vector.shape_cast %92 : vector<16x16x4xbf16> to vector<256x4xbf16>
    %c0_109 = arith.constant 0 : index
    %c4_110 = arith.constant 4 : index
    %94 = vector.load %arg6[%c0_109, %c4_110] : memref<256x36xbf16, #tpu.memory_space<vmem>>, vector<256x4xbf16>
    tpu.vector_store %arg6[%c0_109, %c4_110], %93 {strides = array<i32>} : memref<256x36xbf16, #tpu.memory_space<vmem>>, vector<256x4xbf16>,
    %c0_111 = arith.constant 0 : index
    %c2_112 = arith.constant 2 : index
    %c0_113 = arith.constant 0 : index
    %95 = vector.load %arg5[%c0_111, %c2_112, %c0_113] : memref<18x18x4xbf16, #tpu.memory_space<vmem>>, vector<16x16x4xbf16>
    %96 = vector.shape_cast %95 : vector<16x16x4xbf16> to vector<256x4xbf16>
    %c0_114 = arith.constant 0 : index
    %c8_115 = arith.constant 8 : index
    %97 = vector.load %arg6[%c0_114, %c8_115] : memref<256x36xbf16, #tpu.memory_space<vmem>>, vector<256x4xbf16>
    tpu.vector_store %arg6[%c0_114, %c8_115], %96 {strides = array<i32>} : memref<256x36xbf16, #tpu.memory_space<vmem>>, vector<256x4xbf16>,
    %c1_116 = arith.constant 1 : index
    %c0_117 = arith.constant 0 : index
    %c0_118 = arith.constant 0 : index
    %98 = vector.load %arg5[%c1_116, %c0_117, %c0_118] : memref<18x18x4xbf16, #tpu.memory_space<vmem>>, vector<16x16x4xbf16>
    %99 = vector.shape_cast %98 : vector<16x16x4xbf16> to vector<256x4xbf16>
    %c0_119 = arith.constant 0 : index
    %c12_120 = arith.constant 12 : index
    %100 = vector.load %arg6[%c0_119, %c12_120] : memref<256x36xbf16, #tpu.memory_space<vmem>>, vector<256x4xbf16>
    tpu.vector_store %arg6[%c0_119, %c12_120], %99 {strides = array<i32>} : memref<256x36xbf16, #tpu.memory_space<vmem>>, vector<256x4xbf16>,
    %c1_121 = arith.constant 1 : index
    %c1_122 = arith.constant 1 : index
    %c0_123 = arith.constant 0 : index
    %101 = vector.load %arg5[%c1_121, %c1_122, %c0_123] : memref<18x18x4xbf16, #tpu.memory_space<vmem>>, vector<16x16x4xbf16>
    %102 = vector.shape_cast %101 : vector<16x16x4xbf16> to vector<256x4xbf16>
    %c0_124 = arith.constant 0 : index
    %c16_125 = arith.constant 16 : index
    %103 = vector.load %arg6[%c0_124, %c16_125] : memref<256x36xbf16, #tpu.memory_space<vmem>>, vector<256x4xbf16>
    tpu.vector_store %arg6[%c0_124, %c16_125], %102 {strides = array<i32>} : memref<256x36xbf16, #tpu.memory_space<vmem>>, vector<256x4xbf16>,
    %c1_126 = arith.constant 1 : index
    %c2_127 = arith.constant 2 : index
    %c0_128 = arith.constant 0 : index
    %104 = vector.load %arg5[%c1_126, %c2_127, %c0_128] : memref<18x18x4xbf16, #tpu.memory_space<vmem>>, vector<16x16x4xbf16>
    %105 = vector.shape_cast %104 : vector<16x16x4xbf16> to vector<256x4xbf16>
    %c0_129 = arith.constant 0 : index
    %c20_130 = arith.constant 20 : index
    %106 = vector.load %arg6[%c0_129, %c20_130] : memref<256x36xbf16, #tpu.memory_space<vmem>>, vector<256x4xbf16>
    tpu.vector_store %arg6[%c0_129, %c20_130], %105 {strides = array<i32>} : memref<256x36xbf16, #tpu.memory_space<vmem>>, vector<256x4xbf16>,
    %c2_131 = arith.constant 2 : index
    %c0_132 = arith.constant 0 : index
    %c0_133 = arith.constant 0 : index
    %107 = vector.load %arg5[%c2_131, %c0_132, %c0_133] : memref<18x18x4xbf16, #tpu.memory_space<vmem>>, vector<16x16x4xbf16>
    %108 = vector.shape_cast %107 : vector<16x16x4xbf16> to vector<256x4xbf16>
    %c0_134 = arith.constant 0 : index
    %c24_135 = arith.constant 24 : index
    %109 = vector.load %arg6[%c0_134, %c24_135] : memref<256x36xbf16, #tpu.memory_space<vmem>>, vector<256x4xbf16>
    tpu.vector_store %arg6[%c0_134, %c24_135], %108 {strides = array<i32>} : memref<256x36xbf16, #tpu.memory_space<vmem>>, vector<256x4xbf16>,
    %c2_136 = arith.constant 2 : index
    %c1_137 = arith.constant 1 : index
    %c0_138 = arith.constant 0 : index
    %110 = vector.load %arg5[%c2_136, %c1_137, %c0_138] : memref<18x18x4xbf16, #tpu.memory_space<vmem>>, vector<16x16x4xbf16>
    %111 = vector.shape_cast %110 : vector<16x16x4xbf16> to vector<256x4xbf16>
    %c0_139 = arith.constant 0 : index
    %c28_140 = arith.constant 28 : index
    %112 = vector.load %arg6[%c0_139, %c28_140] : memref<256x36xbf16, #tpu.memory_space<vmem>>, vector<256x4xbf16>
    tpu.vector_store %arg6[%c0_139, %c28_140], %111 {strides = array<i32>} : memref<256x36xbf16, #tpu.memory_space<vmem>>, vector<256x4xbf16>,
    %c2_141 = arith.constant 2 : index
    %c2_142 = arith.constant 2 : index
    %c0_143 = arith.constant 0 : index
    %113 = vector.load %arg5[%c2_141, %c2_142, %c0_143] : memref<18x18x4xbf16, #tpu.memory_space<vmem>>, vector<16x16x4xbf16>
    %114 = vector.shape_cast %113 : vector<16x16x4xbf16> to vector<256x4xbf16>
    %c0_144 = arith.constant 0 : index
    %c32_145 = arith.constant 32 : index
    %115 = vector.load %arg6[%c0_144, %c32_145] : memref<256x36xbf16, #tpu.memory_space<vmem>>, vector<256x4xbf16>
    tpu.vector_store %arg6[%c0_144, %c32_145], %114 {strides = array<i32>} : memref<256x36xbf16, #tpu.memory_space<vmem>>, vector<256x4xbf16>,
    %c0_146 = arith.constant 0 : index
    %c0_147 = arith.constant 0 : index
    %116 = vector.load %arg6[%c0_146, %c0_147] : memref<256x36xbf16, #tpu.memory_space<vmem>>, vector<256x36xbf16>
    %c0_148 = arith.constant 0 : index
    %c0_149 = arith.constant 0 : index
    %117 = vector.load %arg3[%c0_148, %c0_149] : memref<36x4xbf16, #tpu.memory_space<vmem>>, vector<36x4xbf16>
    %cst_150 = arith.constant dense<0.000000e+00> : vector<256x4xf32>
    %118 = tpu.matmul %116, %117, %cst_150 {dimension_numbers = #tpu.dot_dimension_numbers<[1], [0], [0], [1], [0, 0, 1, 1], [], []>} : vector<256x36xbf16>, vector<36x4xbf16>, vector<256x4xf32> -> vector<256x4xf32>
    %cst_151 = arith.constant dense<0.000000e+00> : vector<4xf32>
    %119 = vector.multi_reduction <add>, %118, %cst_151 [0] : vector<256x4xf32> to vector<4xf32>
    %120 = vector.shape_cast %119 : vector<4xf32> to vector<1x4xf32>
    %121 = arith.mulf %118, %118 : vector<256x4xf32>
    %cst_152 = arith.constant dense<0.000000e+00> : vector<4xf32>
    %122 = vector.multi_reduction <add>, %121, %cst_152 [0] : vector<256x4xf32> to vector<4xf32>
    %123 = vector.shape_cast %122 : vector<4xf32> to vector<1x4xf32>
    %cst_153 = arith.constant 3.906250e-03 : f32
    %124 = vector.broadcast %cst_153 : f32 to vector<1x4xf32>
    %125 = arith.mulf %120, %124 : vector<1x4xf32>
    %cst_154 = arith.constant 3.906250e-03 : f32
    %126 = vector.broadcast %cst_154 : f32 to vector<1x4xf32>
    %127 = arith.mulf %123, %126 : vector<1x4xf32>
    %128 = arith.mulf %125, %125 : vector<1x4xf32>
    %129 = arith.subf %127, %128 : vector<1x4xf32>
    %130 = vector.broadcast %125 : vector<1x4xf32> to vector<256x4xf32>
    %131 = arith.subf %118, %130 : vector<256x4xf32>
    %cst_155 = arith.constant 9.99999974E-6 : f32
    %132 = vector.broadcast %cst_155 : f32 to vector<1x4xf32>
    %133 = arith.addf %129, %132 : vector<1x4xf32>
    %134 = math.rsqrt %133 : vector<1x4xf32>
    %135 = vector.broadcast %134 : vector<1x4xf32> to vector<256x4xf32>
    %136 = arith.mulf %131, %135 : vector<256x4xf32>
    %137 = vector.shape_cast %136 : vector<256x4xf32> to vector<16x16x4xf32>
    %138 = arith.addf %1, %137 : vector<16x16x4xf32>
    %c0_156 = arith.constant 0 : index
    %c0_157 = arith.constant 0 : index
    %c0_158 = arith.constant 0 : index
    %c0_159 = arith.constant 0 : index
    %139 = vector.load %arg4[%c0_156, %c0_157, %c0_158, %c0_159] : memref<1x16x16x4xf32, #tpu.memory_space<vmem>>, vector<1x16x16x4xf32>
    %140 = vector.shape_cast %139 : vector<1x16x16x4xf32> to vector<16x16x4xf32>
    %141 = vector.shape_cast %138 : vector<16x16x4xf32> to vector<1x16x16x4xf32>
    tpu.vector_store %arg4[%c0_156, %c0_157, %c0_158, %c0_159], %141 {strides = array<i32>} : memref<1x16x16x4xf32, #tpu.memory_space<vmem>>, vector<1x16x16x4xf32>,
    return
  }
  func.func @transform_0(%arg0: i32) -> (i32, i32, i32, i32) {
    %c0_i32 = arith.constant 0 : i32
    %c0_i32_0 = arith.constant 0 : i32
    %c0_i32_1 = arith.constant 0 : i32
    %c0_i32_2 = arith.constant 0 : i32
    return %arg0, %c0_i32, %c0_i32_0, %c0_i32_1 : i32, i32, i32, i32
  }
  func.func @transform_1(%arg0: i32) -> (i32, i32) {
    %c0_i32 = arith.constant 0 : i32
    %c0_i32_0 = arith.constant 0 : i32
    %c0_i32_1 = arith.constant 0 : i32
    return %c0_i32, %c0_i32_0 : i32, i32
  }
  func.func @transform_2(%arg0: i32) -> (i32, i32) {
    %c0_i32 = arith.constant 0 : i32
    %c0_i32_0 = arith.constant 0 : i32
    %c0_i32_1 = arith.constant 0 : i32
    return %c0_i32, %c0_i32_0 : i32, i32
  }
  func.func @transform_3(%arg0: i32) -> (i32, i32, i32, i32) {
    %c0_i32 = arith.constant 0 : i32
    %c0_i32_0 = arith.constant 0 : i32
    %c0_i32_1 = arith.constant 0 : i32
    %c0_i32_2 = arith.constant 0 : i32
    return %arg0, %c0_i32, %c0_i32_0, %c0_i32_1 : i32, i32, i32, i32
  }
}

</mosaic_0001>

<llo_original>
// kernel: resblock_forward.1
$region0: #{resblock_forward.1}
  #allocation0 [shape = 'u32[]', space=smem, size = 0x4, offset = 0x4, fixed_abs, tag = 'smem constant byte address 0x4 - core index']
  #allocation1 [shape = 'u32[72,128]{1,0:T(1,128)}', space=vmem, size = 0x9000, scoped, tag = 'internal scratch']
  #allocation2 [shape = 'bf16[18,18,4]{2,1,0:T(8,128)(2,1)}', space=vmem, size = 0x1b000, scoped, tag = 'scratch operand']
  #allocation3 [shape = 'bf16[256,36]{1,0:T(8,128)(2,1)}', space=vmem, size = 0x10000, scoped, tag = 'scratch operand']
  %s0 = inlined_call_operand.vmem [shape: f32[2,16,16,4], index: 0, kind: input, shape index: {}]
  %s1 = inlined_call_operand.vmem [shape: bf16[36,4], index: 1, kind: input, shape index: {}]
  %s2 = inlined_call_operand.vmem [shape: bf16[36,4], index: 2, kind: input, shape index: {}]
  %s3 = inlined_call_operand.vmem [shape: f32[2,16,16,4], index: 3, kind: output, shape index: {}]
  %s4 = sld [smem:[#allocation0]]
  $region45: #{resblock_forward.1} parent=0
    _
  %s6 = ssub.s32 1, %s4
  %s7 = scalar_select 0, %s6, %s4
  loop: start=0, step=1, limit=4
  $region2: #{resblock_forward.1} parent=0 // loop_pre_header
    _
  $region3: #{resblock_forward.1} parent=0 // loop_header
    %s9 = sphi 0, %s13
    %p10 = scmp.ge.s32.totalorder %s9, 4
    %s19 = sphi 0, %s21
    %s22 = sphi 0, %s19
    %s23 = sphi 0, %s22
    %s39 = sphi 0, %s23
    %s43 = sphi 0, %s43
    %s45 = sphi 0, %s43
    %s46 = sphi 0, %s45
    %s60 = sphi 0, %s46
    %s64 = sphi 0, %s64
    %s66 = sphi 0, %s64
    %s67 = sphi 0, %s66
    %s81 = sphi 0, %s67
    %s87 = sphi 0, %s89
    %s90 = sphi 0, %s87
    %s91 = sphi 0, %s90
    %s107 = sphi 0, %s91
  $region4: #{resblock_forward.1} parent=0 // loop_header_branch
    %12 = sbr.rel (%p10) target = $region8
  $region5: #{resblock_forward.1} parent=0 // loop_body
    %s14 = ssub.s32 %s9, 1
    %s15 = ssub.s32 %s9, 2
    %s16 = sadd.s32 %s9, 1
    %s17 = ssub.s32 %s9, %s16
    %p18 = scmp.eq.s32.totalorder %s17, 0
    %s20 = sadd.s32 %s19, 1
    %s21 = scalar_select %p18, %s19, %s20
    %p24 = pneg %p18
    %p25 = scmp.eq.s32.totalorder %s9, 1
    %p26 = por %p24, %p25
    %p27 = scmp.ne.s32.totalorder %s19, %s22
    %p28 = scmp.eq.s32.totalorder %s9, 0
    %p29 = por %p27, %p28
    %p30 = scmp.ne.s32.totalorder %s19, %s22
    %p31 = scmp.eq.s32.totalorder %s14, 1
    %p32 = por %p30, %p31
    %p33 = scmp.ne.s32.totalorder %s22, %s23
    %p34 = scmp.eq.s32.totalorder %s14, 0
    %p35 = por %p33, %p34
    %p36 = scmp.ne.s32.totalorder %s22, %s23
    %p37 = scmp.eq.s32.totalorder %s15, 1
    %p38 = por %p36, %p37
    %p40 = scmp.ne.s32.totalorder %s23, %s39
    %p41 = scmp.eq.s32.totalorder %s15, 0
    %p42 = por %p40, %p41
    %s44 = sadd.s32 %s43, 1
    %p47 = scmp.eq.s32.totalorder %s9, 1
    %p48 = scmp.ne.s32.totalorder %s43, %s45
    %p49 = scmp.eq.s32.totalorder %s9, 0
    %p50 = por %p48, %p49
    %p51 = scmp.ne.s32.totalorder %s43, %s45
    %p52 = scmp.eq.s32.totalorder %s14, 1
    %p53 = por %p51, %p52
    %p54 = scmp.ne.s32.totalorder %s45, %s46
    %p55 = scmp.eq.s32.totalorder %s14, 0
    %p56 = por %p54, %p55
    %p57 = scmp.ne.s32.totalorder %s45, %s46
    %p58 = scmp.eq.s32.totalorder %s15, 1
    %p59 = por %p57, %p58
    %p61 = scmp.ne.s32.totalorder %s46, %s60
    %p62 = scmp.eq.s32.totalorder %s15, 0
    %p63 = por %p61, %p62
    %s65 = sadd.s32 %s64, 1
    %p68 = scmp.eq.s32.totalorder %s9, 1
    %p69 = scmp.ne.s32.totalorder %s64, %s66
    %p70 = scmp.eq.s32.totalorder %s9, 0
    %p71 = por %p69, %p70
    %p72 = scmp.ne.s32.totalorder %s64, %s66
    %p73 = scmp.eq.s32.totalorder %s14, 1
    %p74 = por %p72, %p73
    %p75 = scmp.ne.s32.totalorder %s66, %s67
    %p76 = scmp.eq.s32.totalorder %s14, 0
    %p77 = por %p75, %p76
    %p78 = scmp.ne.s32.totalorder %s66, %s67
    %p79 = scmp.eq.s32.totalorder %s15, 1
    %p80 = por %p78, %p79
    %p82 = scmp.ne.s32.totalorder %s67, %s81
    %p83 = scmp.eq.s32.totalorder %s15, 0
    %p84 = por %p82, %p83
    %s85 = ssub.s32 %s9, %s16
    %p86 = scmp.eq.s32.totalorder %s85, 0
    %s88 = sadd.s32 %s87, 1
    %s89 = scalar_select %p86, %s87, %s88
    %p92 = pneg %p86
    %p93 = scmp.eq.s32.totalorder %s9, 1
    %p94 = por %p92, %p93
    %p95 = scmp.ne.s32.totalorder %s87, %s90
    %p96 = scmp.eq.s32.totalorder %s9, 0
    %p97 = por %p95, %p96
    %p98 = scmp.ne.s32.totalorder %s87, %s90
    %p99 = scmp.eq.s32.totalorder %s14, 1
    %p100 = por %p98, %p99
    %p101 = scmp.ne.s32.totalorder %s90, %s91
    %p102 = scmp.eq.s32.totalorder %s14, 0
    %p103 = por %p101, %p102
    %p104 = scmp.ne.s32.totalorder %s90, %s91
    %p105 = scmp.eq.s32.totalorder %s15, 1
    %p106 = por %p104, %p105
    %p108 = scmp.ne.s32.totalorder %s91, %s107
    %p109 = scmp.eq.s32.totalorder %s15, 0
    %p110 = por %p108, %p109
    %p111 = scmp.le.s32.totalorder 1, %s9
    %p112 = scmp.lt.s32.totalorder %s9, 3
    %p113 = pnand %p111, %p112
    %p114 = pneg %p113
    // Predicated region
    $region9: #{resblock_forward.1} parent=5 // pred_check
      _
    $region10: #{resblock_forward.1} parent=5 // pred_check_branch
      %116 = sbr.rel (%p113) target = $region12
    $region11: #{resblock_forward.1} parent=5 // pred_region
      %s117 = ssub.s32 %s9, 1
      // Predicated region
      $region13: #{resblock_forward.1} parent=11 // pred_check
        %p118 = pneg %p56
      $region14: #{resblock_forward.1} parent=11 // pred_check_branch
        %120 = sbr.rel (%p118) target = $region16
      $region15: #{resblock_forward.1} parent=11 // pred_region
        _
      $region16: #{resblock_forward.1} parent=11 // pred_fallthru
        _
      // Predicated region
      $region17: #{resblock_forward.1} parent=11 // pred_check
        %p121 = pneg %p77
      $region18: #{resblock_forward.1} parent=11 // pred_check_branch
        %123 = sbr.rel (%p121) target = $region20
      $region19: #{resblock_forward.1} parent=11 // pred_region
        _
      $region20: #{resblock_forward.1} parent=11 // pred_fallthru
        _
    $region12: #{resblock_forward.1} parent=5 // pred_fallthru
      _
    %p124 = scmp.lt.s32.totalorder %s9, 2
    // Predicated region
    $region21: #{resblock_forward.1} parent=5 // pred_check
      %p125 = pneg %p124
    $region22: #{resblock_forward.1} parent=5 // pred_check_branch
      %127 = sbr.rel (%p125) target = $region24
    $region23: #{resblock_forward.1} parent=5 // pred_region
      // Predicated region
      $region25: #{resblock_forward.1} parent=23 // pred_check
        %p128 = pneg %p29
      $region26: #{resblock_forward.1} parent=23 // pred_check_branch
        %130 = sbr.rel (%p128) target = $region28
      $region27: #{resblock_forward.1} parent=23 // pred_region
        %p131 = scmp.lt.s32.totalorder %s9, 1
        %s132 = scalar_select %p131, %s9, 1
        %s133 = smul.addr %s132, 32
        %s134 = smul.addr %s133, 8
        %s135 = scalar_lea.vmem %s0, %s134
      $region28: #{resblock_forward.1} parent=23 // pred_fallthru
        _
    $region24: #{resblock_forward.1} parent=5 // pred_fallthru
      _
    %p136 = scmp.le.s32.totalorder 1, %s9
    %p137 = scmp.lt.s32.totalorder %s9, 3
    %p138 = pnand %p136, %p137
    %p139 = pneg %p138
    // Predicated region
    $region29: #{resblock_forward.1} parent=5 // pred_check
      _
    $region30: #{resblock_forward.1} parent=5 // pred_check_branch
      %141 = sbr.rel (%p138) target = $region32
    $region31: #{resblock_forward.1} parent=5 // pred_region
      %s142 = ssub.s32 %s9, 1
      %p143 = scmp.lt.s32.totalorder %s14, 1
      %s144 = scalar_select %p143, %s14, 1
      %s145 = smul.addr %s144, 32
      %s146 = smul.addr %s145, 8
      %s147 = scalar_lea.vmem %s0, %s146
      %p148 = pneg %p35
      %p149 = pneg %p32
      %p150 = pneg %p56
      %p151 = pneg %p53
      %p152 = pneg %p77
      %p153 = pneg %p74
      %p154 = pneg %p103
      %p155 = pneg %p100
      %p156 = scmp.lt.s32.totalorder %s14, 1
      %s157 = scalar_select %p156, %s14, 1
      %s158 = smul.addr %s157, 32
      %s159 = smul.addr %s158, 8
      %s160 = scalar_lea.vmem %s3, %s159
      %p161 = scmp.lt.s32.totalorder %s14, 1
      %s162 = scalar_select %p161, %s14, 1
      %s163 = smul.addr %s162, 32
      %s164 = smul.addr %s163, 8
      %s165 = scalar_lea.vmem %s0, %s164
      %p166 = scmp.lt.s32.totalorder %s14, 1
      %s167 = scalar_select %p166, %s14, 1
      %s168 = smul.addr %s167, 32
      %s169 = smul.addr %s168, 8
      %s170 = scalar_lea.vmem %s3, %s169
      %v172 = vld [vmem:[%s165] sm:$0xff]
      %v173 = vld [vmem:[%s165 + $0x8] sm:$0xff]
      %v174 = vld [vmem:[%s165 + $0x10] sm:$0xff]
      %v175 = vld [vmem:[%s165 + $0x18] sm:$0xff]
      %v176 = vld [vmem:[%s165 + $0x20] sm:$0xff]
      %v177 = vld [vmem:[%s165 + $0x28] sm:$0xff]
      %v178 = vld [vmem:[%s165 + $0x30] sm:$0xff]
      %v179 = vld [vmem:[%s165 + $0x38] sm:$0xff]
      %v180 = vld [vmem:[%s165 + $0x40] sm:$0xff]
      %v181 = vld [vmem:[%s165 + $0x48] sm:$0xff]
      %v182 = vld [vmem:[%s165 + $0x50] sm:$0xff]
      %v183 = vld [vmem:[%s165 + $0x58] sm:$0xff]
      %v184 = vld [vmem:[%s165 + $0x60] sm:$0xff]
      %v185 = vld [vmem:[%s165 + $0x68] sm:$0xff]
      %v186 = vld [vmem:[%s165 + $0x70] sm:$0xff]
      %v187 = vld [vmem:[%s165 + $0x78] sm:$0xff]
      %v188 = vld [vmem:[%s165 + $0x80] sm:$0xff]
      %v189 = vld [vmem:[%s165 + $0x88] sm:$0xff]
      %v190 = vld [vmem:[%s165 + $0x90] sm:$0xff]
      %v191 = vld [vmem:[%s165 + $0x98] sm:$0xff]
      %v192 = vld [vmem:[%s165 + $0xa0] sm:$0xff]
      %v193 = vld [vmem:[%s165 + $0xa8] sm:$0xff]
      %v194 = vld [vmem:[%s165 + $0xb0] sm:$0xff]
      %v195 = vld [vmem:[%s165 + $0xb8] sm:$0xff]
      %v196 = vld [vmem:[%s165 + $0xc0] sm:$0xff]
      %v197 = vld [vmem:[%s165 + $0xc8] sm:$0xff]
      %v198 = vld [vmem:[%s165 + $0xd0] sm:$0xff]
      %v199 = vld [vmem:[%s165 + $0xd8] sm:$0xff]
      %v200 = vld [vmem:[%s165 + $0xe0] sm:$0xff]
      %v201 = vld [vmem:[%s165 + $0xe8] sm:$0xff]
      %v202 = vld [vmem:[%s165 + $0xf0] sm:$0xff]
      %v203 = vld [vmem:[%s165 + $0xf8] sm:$0xff]
      %v204 = vpack.c.bf16 %v172, %v172
      %v205 = vpack.c.bf16 %v173, %v173
      %v206 = vpack.c.bf16 %v174, %v174
      %v207 = vpack.c.bf16 %v175, %v175
      %v208 = vpack.c.bf16 %v176, %v176
      %v209 = vpack.c.bf16 %v177, %v177
      %v210 = vpack.c.bf16 %v178, %v178
      %v211 = vpack.c.bf16 %v179, %v179
      %v212 = vpack.c.bf16 %v180, %v180
      %v213 = vpack.c.bf16 %v181, %v181
      %v214 = vpack.c.bf16 %v182, %v182
      %v215 = vpack.c.bf16 %v183, %v183
      %v216 = vpack.c.bf16 %v184, %v184
      %v217 = vpack.c.bf16 %v185, %v185
      %v218 = vpack.c.bf16 %v186, %v186
      %v219 = vpack.c.bf16 %v187, %v187
      %v220 = vpack.c.bf16 %v188, %v188
      %v221 = vpack.c.bf16 %v189, %v189
      %v222 = vpack.c.bf16 %v190, %v190
      %v223 = vpack.c.bf16 %v191, %v191
      %v224 = vpack.c.bf16 %v192, %v192
      %v225 = vpack.c.bf16 %v193, %v193
      %v226 = vpack.c.bf16 %v194, %v194
      %v227 = vpack.c.bf16 %v195, %v195
      %v228 = vpack.c.bf16 %v196, %v196
      %v229 = vpack.c.bf16 %v197, %v197
      %v230 = vpack.c.bf16 %v198, %v198
      %v231 = vpack.c.bf16 %v199, %v199
      %v232 = vpack.c.bf16 %v200, %v200
      %v233 = vpack.c.bf16 %v201, %v201
      %v234 = vpack.c.bf16 %v202, %v202
      %v235 = vpack.c.bf16 %v203, %v203
      %vm236 = vsmask.f32 256
      %vm237 = vsmask.f32 4368
      %vm238 = vmor %vm236, %vm237
      %v240 = vshrl.u32 %v204, 16
      %v242 = vrot.slane %v240, 7
      %v243 = vshll.u32 %v204, 16
      %v245 = vor.u32 %v242, %v243
      %v246 = vrot.slane %v242, 4
      %v248 = vshrl.u32 %v205, 16
      %v250 = vrot.slane %v248, 7
      %v251 = vshll.u32 %v205, 16
      %v253 = vor.u32 %v250, %v251
      %v254 = vsel %vm238, %v246, %v253
      %v255 = vrot.slane %v250, 4
      %v257 = vshrl.u32 %v206, 16
      %v259 = vrot.slane %v257, 7
      %v260 = vshll.u32 %v206, 16
      %v262 = vor.u32 %v259, %v260
      %v263 = vrot.slane %v259, 4
      %v265 = vshrl.u32 %v207, 16
      %v267 = vrot.slane %v265, 7
      %v268 = vshll.u32 %v207, 16
      %v270 = vor.u32 %v267, %v268
      %v271 = vsel %vm238, %v263, %v270
      %v272 = vrot.slane %v267, 4
      %v274 = vshrl.u32 %v208, 16
      %v276 = vrot.slane %v274, 7
      %v277 = vshll.u32 %v208, 16
      %v279 = vor.u32 %v276, %v277
      %v280 = vrot.slane %v276, 4
      %v282 = vshrl.u32 %v209, 16
      %v284 = vrot.slane %v282, 7
      %v285 = vshll.u32 %v209, 16
      %v287 = vor.u32 %v284, %v285
      %v288 = vsel %vm238, %v280, %v287
      %v289 = vrot.slane %v284, 4
      %v291 = vshrl.u32 %v210, 16
      %v293 = vrot.slane %v291, 7
      %v294 = vshll.u32 %v210, 16
      %v296 = vor.u32 %v293, %v294
      %v297 = vrot.slane %v293, 4
      %v299 = vshrl.u32 %v211, 16
      %v301 = vrot.slane %v299, 7
      %v302 = vshll.u32 %v211, 16
      %v304 = vor.u32 %v301, %v302
      %v305 = vsel %vm238, %v297, %v304
      %v306 = vrot.slane %v301, 4
      %v308 = vshrl.u32 %v212, 16
      %v310 = vrot.slane %v308, 7
      %v311 = vshll.u32 %v212, 16
      %v313 = vor.u32 %v310, %v311
      %v314 = vrot.slane %v310, 4
      %v316 = vshrl.u32 %v213, 16
      %v318 = vrot.slane %v316, 7
      %v319 = vshll.u32 %v213, 16
      %v321 = vor.u32 %v318, %v319
      %v322 = vsel %vm238, %v314, %v321
      %v323 = vrot.slane %v318, 4
      %v325 = vshrl.u32 %v214, 16
      %v327 = vrot.slane %v325, 7
      %v328 = vshll.u32 %v214, 16
      %v330 = vor.u32 %v327, %v328
      %v331 = vrot.slane %v327, 4
      %v333 = vshrl.u32 %v215, 16
      %v335 = vrot.slane %v333, 7
      %v336 = vshll.u32 %v215, 16
      %v338 = vor.u32 %v335, %v336
      %v339 = vsel %vm238, %v331, %v338
      %v340 = vrot.slane %v335, 4
      %v342 = vshrl.u32 %v216, 16
      %v344 = vrot.slane %v342, 7
      %v345 = vshll.u32 %v216, 16
      %v347 = vor.u32 %v344, %v345
      %v348 = vrot.slane %v344, 4
      %v350 = vshrl.u32 %v217, 16
      %v352 = vrot.slane %v350, 7
      %v353 = vshll.u32 %v217, 16
      %v355 = vor.u32 %v352, %v353
      %v356 = vsel %vm238, %v348, %v355
      %v357 = vrot.slane %v352, 4
      %v359 = vshrl.u32 %v218, 16
      %v361 = vrot.slane %v359, 7
      %v362 = vshll.u32 %v218, 16
      %v364 = vor.u32 %v361, %v362
      %v365 = vrot.slane %v361, 4
      %v367 = vshrl.u32 %v219, 16
      %v369 = vrot.slane %v367, 7
      %v370 = vshll.u32 %v219, 16
      %v372 = vor.u32 %v369, %v370
      %v373 = vsel %vm238, %v365, %v372
      %v374 = vrot.slane %v369, 4
      %v376 = vshrl.u32 %v220, 16
      %v378 = vrot.slane %v376, 7
      %v379 = vshll.u32 %v220, 16
      %v381 = vor.u32 %v378, %v379
      %v382 = vrot.slane %v378, 4
      %v384 = vshrl.u32 %v221, 16
      %v386 = vrot.slane %v384, 7
      %v387 = vshll.u32 %v221, 16
      %v389 = vor.u32 %v386, %v387
      %v390 = vsel %vm238, %v382, %v389
      %v391 = vrot.slane %v386, 4
      %v393 = vshrl.u32 %v222, 16
      %v395 = vrot.slane %v393, 7
      %v396 = vshll.u32 %v222, 16
      %v398 = vor.u32 %v395, %v396
      %v399 = vrot.slane %v395, 4
      %v401 = vshrl.u32 %v223, 16
      %v403 = vrot.slane %v401, 7
      %v404 = vshll.u32 %v223, 16
      %v406 = vor.u32 %v403, %v404
      %v407 = vsel %vm238, %v399, %v406
      %v408 = vrot.slane %v403, 4
      %v410 = vshrl.u32 %v224, 16
      %v412 = vrot.slane %v410, 7
      %v413 = vshll.u32 %v224, 16
      %v415 = vor.u32 %v412, %v413
      %v416 = vrot.slane %v412, 4
      %v418 = vshrl.u32 %v225, 16
      %v420 = vrot.slane %v418, 7
      %v421 = vshll.u32 %v225, 16
      %v423 = vor.u32 %v420, %v421
      %v424 = vsel %vm238, %v416, %v423
      %v425 = vrot.slane %v420, 4
      %v427 = vshrl.u32 %v226, 16
      %v429 = vrot.slane %v427, 7
      %v430 = vshll.u32 %v226, 16
      %v432 = vor.u32 %v429, %v430
      %v433 = vrot.slane %v429, 4
      %v435 = vshrl.u32 %v227, 16
      %v437 = vrot.slane %v435, 7
      %v438 = vshll.u32 %v227, 16
      %v440 = vor.u32 %v437, %v438
      %v441 = vsel %vm238, %v433, %v440
      %v442 = vrot.slane %v437, 4
      %v444 = vshrl.u32 %v228, 16
      %v446 = vrot.slane %v444, 7
      %v447 = vshll.u32 %v228, 16
      %v449 = vor.u32 %v446, %v447
      %v450 = vrot.slane %v446, 4
      %v452 = vshrl.u32 %v229, 16
      %v454 = vrot.slane %v452, 7
      %v455 = vshll.u32 %v229, 16
      %v457 = vor.u32 %v454, %v455
      %v458 = vsel %vm238, %v450, %v457
      %v459 = vrot.slane %v454, 4
      %v461 = vshrl.u32 %v230, 16
      %v463 = vrot.slane %v461, 7
      %v464 = vshll.u32 %v230, 16
      %v466 = vor.u32 %v463, %v464
      %v467 = vrot.slane %v463, 4
      %v469 = vshrl.u32 %v231, 16
      %v471 = vrot.slane %v469, 7
      %v472 = vshll.u32 %v231, 16
      %v474 = vor.u32 %v471, %v472
      %v475 = vsel %vm238, %v467, %v474
      %v476 = vrot.slane %v471, 4
      %v478 = vshrl.u32 %v232, 16
      %v480 = vrot.slane %v478, 7
      %v481 = vshll.u32 %v232, 16
      %v483 = vor.u32 %v480, %v481
      %v484 = vrot.slane %v480, 4
      %v486 = vshrl.u32 %v233, 16
      %v488 = vrot.slane %v486, 7
      %v489 = vshll.u32 %v233, 16
      %v491 = vor.u32 %v488, %v489
      %v492 = vsel %vm238, %v484, %v491
      %v493 = vrot.slane %v488, 4
      %v495 = vshrl.u32 %v234, 16
      %v497 = vrot.slane %v495, 7
      %v498 = vshll.u32 %v234, 16
      %v500 = vor.u32 %v497, %v498
      %v501 = vrot.slane %v497, 4
      %v503 = vshrl.u32 %v235, 16
      %v505 = vrot.slane %v503, 7
      %v506 = vshll.u32 %v235, 16
      %v508 = vor.u32 %v505, %v506
      %v509 = vsel %vm238, %v501, %v508
      %v510 = vrot.slane %v505, 4
      %s559 = scalar_lea.vmem [#allocation2], 12
      %vm560 = vcmask 27648
      %vm561 = vsmask.f32 7938
      %vm562 = vmand %vm560, %vm561
      %v563 = vld [vmem:[%s559] sm:$0xf]
      %v564 = vsel %vm562, %v245, %v563
      %565 = vst [vmem:[%s559] sm:$0xf] %v564
      %vm566 = vcmask 27648
      %567 = vst.msk [vmem:[%s559 + $0x4] sm:$0xf] %vm566, %v254
      %vm568 = vcmask 24576
      %vm569 = vmand %vm568, %vm236
      %v570 = vld [vmem:[%s559 + $0x8] sm:$0x1]
      %v571 = vsel %vm569, %v255, %v570
      %572 = vst [vmem:[%s559 + $0x8] sm:$0x1] %v571
      %v573 = vld [vmem:[%s559 + $0xc] sm:$0xf]
      %v574 = vsel %vm562, %v262, %v573
      %575 = vst [vmem:[%s559 + $0xc] sm:$0xf] %v574
      %576 = vst.msk [vmem:[%s559 + $0x10] sm:$0xf] %vm566, %v271
      %v577 = vld [vmem:[%s559 + $0x14] sm:$0x1]
      %v578 = vsel %vm569, %v272, %v577
      %579 = vst [vmem:[%s559 + $0x14] sm:$0x1] %v578
      %v580 = vld [vmem:[%s559 + $0x18] sm:$0xf]
      %v581 = vsel %vm562, %v279, %v580
      %582 = vst [vmem:[%s559 + $0x18] sm:$0xf] %v581
      %583 = vst.msk [vmem:[%s559 + $0x1c] sm:$0xf] %vm566, %v288
      %v584 = vld [vmem:[%s559 + $0x20] sm:$0x1]
      %v585 = vsel %vm569, %v289, %v584
      %586 = vst [vmem:[%s559 + $0x20] sm:$0x1] %v585
      %v587 = vld [vmem:[%s559 + $0x24] sm:$0xf]
      %v588 = vsel %vm562, %v296, %v587
      %589 = vst [vmem:[%s559 + $0x24] sm:$0xf] %v588
      %590 = vst.msk [vmem:[%s559 + $0x28] sm:$0xf] %vm566, %v305
      %v591 = vld [vmem:[%s559 + $0x2c] sm:$0x1]
      %v592 = vsel %vm569, %v306, %v591
      %593 = vst [vmem:[%s559 + $0x2c] sm:$0x1] %v592
      %v594 = vld [vmem:[%s559 + $0x30] sm:$0xf]
      %v595 = vsel %vm562, %v313, %v594
      %596 = vst [vmem:[%s559 + $0x30] sm:$0xf] %v595
      %597 = vst.msk [vmem:[%s559 + $0x34] sm:$0xf] %vm566, %v322
      %v598 = vld [vmem:[%s559 + $0x38] sm:$0x1]
      %v599 = vsel %vm569, %v323, %v598
      %600 = vst [vmem:[%s559 + $0x38] sm:$0x1] %v599
      %v601 = vld [vmem:[%s559 + $0x3c] sm:$0xf]
      %v602 = vsel %vm562, %v330, %v601
      %603 = vst [vmem:[%s559 + $0x3c] sm:$0xf] %v602
      %604 = vst.msk [vmem:[%s559 + $0x40] sm:$0xf] %vm566, %v339
      %v605 = vld [vmem:[%s559 + $0x44] sm:$0x1]
      %v606 = vsel %vm569, %v340, %v605
      %607 = vst [vmem:[%s559 + $0x44] sm:$0x1] %v606
      %v608 = vld [vmem:[%s559 + $0x48] sm:$0xf]
      %v609 = vsel %vm562, %v347, %v608
      %610 = vst [vmem:[%s559 + $0x48] sm:$0xf] %v609
      %611 = vst.msk [vmem:[%s559 + $0x4c] sm:$0xf] %vm566, %v356
      %v612 = vld [vmem:[%s559 + $0x50] sm:$0x1]
      %v613 = vsel %vm569, %v357, %v612
      %614 = vst [vmem:[%s559 + $0x50] sm:$0x1] %v613
      %v615 = vld [vmem:[%s559 + $0x54] sm:$0xf]
      %v616 = vsel %vm562, %v364, %v615
      %617 = vst [vmem:[%s559 + $0x54] sm:$0xf] %v616
      %618 = vst.msk [vmem:[%s559 + $0x58] sm:$0xf] %vm566, %v373
      %v619 = vld [vmem:[%s559 + $0x5c] sm:$0x1]
      %v620 = vsel %vm569, %v374, %v619
      %621 = vst [vmem:[%s559 + $0x5c] sm:$0x1] %v620
      %v622 = vld [vmem:[%s559 + $0x60] sm:$0xf]
      %v623 = vsel %vm562, %v381, %v622
      %624 = vst [vmem:[%s559 + $0x60] sm:$0xf] %v623
      %625 = vst.msk [vmem:[%s559 + $0x64] sm:$0xf] %vm566, %v390
      %v626 = vld [vmem:[%s559 + $0x68] sm:$0x1]
      %v627 = vsel %vm569, %v391, %v626
      %628 = vst [vmem:[%s559 + $0x68] sm:$0x1] %v627
      %v629 = vld [vmem:[%s559 + $0x6c] sm:$0xf]
      %v630 = vsel %vm562, %v398, %v629
      %631 = vst [vmem:[%s559 + $0x6c] sm:$0xf] %v630
      %632 = vst.msk [vmem:[%s559 + $0x70] sm:$0xf] %vm566, %v407
      %v633 = vld [vmem:[%s559 + $0x74] sm:$0x1]
      %v634 = vsel %vm569, %v408, %v633
      %635 = vst [vmem:[%s559 + $0x74] sm:$0x1] %v634
      %v636 = vld [vmem:[%s559 + $0x78] sm:$0xf]
      %v637 = vsel %vm562, %v415, %v636
      %638 = vst [vmem:[%s559 + $0x78] sm:$0xf] %v637
      %639 = vst.msk [vmem:[%s559 + $0x7c] sm:$0xf] %vm566, %v424
      %v640 = vld [vmem:[%s559 + $0x80] sm:$0x1]
      %v641 = vsel %vm569, %v425, %v640
      %642 = vst [vmem:[%s559 + $0x80] sm:$0x1] %v641
      %v643 = vld [vmem:[%s559 + $0x84] sm:$0xf]
      %v644 = vsel %vm562, %v432, %v643
      %645 = vst [vmem:[%s559 + $0x84] sm:$0xf] %v644
      %646 = vst.msk [vmem:[%s559 + $0x88] sm:$0xf] %vm566, %v441
      %v647 = vld [vmem:[%s559 + $0x8c] sm:$0x1]
      %v648 = vsel %vm569, %v442, %v647
      %649 = vst [vmem:[%s559 + $0x8c] sm:$0x1] %v648
      %v650 = vld [vmem:[%s559 + $0x90] sm:$0xf]
      %v651 = vsel %vm562, %v449, %v650
      %652 = vst [vmem:[%s559 + $0x90] sm:$0xf] %v651
      %653 = vst.msk [vmem:[%s559 + $0x94] sm:$0xf] %vm566, %v458
      %v654 = vld [vmem:[%s559 + $0x98] sm:$0x1]
      %v655 = vsel %vm569, %v459, %v654
      %656 = vst [vmem:[%s559 + $0x98] sm:$0x1] %v655
      %v657 = vld [vmem:[%s559 + $0x9c] sm:$0xf]
      %v658 = vsel %vm562, %v466, %v657
      %659 = vst [vmem:[%s559 + $0x9c] sm:$0xf] %v658
      %660 = vst.msk [vmem:[%s559 + $0xa0] sm:$0xf] %vm566, %v475
      %v661 = vld [vmem:[%s559 + $0xa4] sm:$0x1]
      %v662 = vsel %vm569, %v476, %v661
      %663 = vst [vmem:[%s559 + $0xa4] sm:$0x1] %v662
      %v664 = vld [vmem:[%s559 + $0xa8] sm:$0xf]
      %v665 = vsel %vm562, %v483, %v664
      %666 = vst [vmem:[%s559 + $0xa8] sm:$0xf] %v665
      %667 = vst.msk [vmem:[%s559 + $0xac] sm:$0xf] %vm566, %v492
      %v668 = vld [vmem:[%s559 + $0xb0] sm:$0x1]
      %v669 = vsel %vm569, %v493, %v668
      %670 = vst [vmem:[%s559 + $0xb0] sm:$0x1] %v669
      %v671 = vld [vmem:[%s559 + $0xb4] sm:$0xf]
      %v672 = vsel %vm562, %v500, %v671
      %673 = vst [vmem:[%s559 + $0xb4] sm:$0xf] %v672
      %674 = vst.msk [vmem:[%s559 + $0xb8] sm:$0xf] %vm566, %v509
      %v675 = vld [vmem:[%s559 + $0xbc] sm:$0x1]
      %v676 = vsel %vm569, %v510, %v675
      %677 = vst [vmem:[%s559 + $0xbc] sm:$0x1] %v676
      %v678 = vld [vmem:[#allocation2] sm:$0xf]
      %v679 = vsel %vm562, %v262, %v678
      %680 = vst [vmem:[#allocation2] sm:$0xf] %v679
      %681 = vst.msk [vmem:[#allocation2 + $0x4] sm:$0xf] %vm566, %v271
      %v682 = vld [vmem:[#allocation2 + $0x8] sm:$0x1]
      %v683 = vsel %vm569, %v272, %v682
      %684 = vst [vmem:[#allocation2 + $0x8] sm:$0x1] %v683
      %s685 = scalar_lea.vmem [#allocation2], 204
      %v686 = vld [vmem:[%s685] sm:$0xf]
      %v687 = vsel %vm562, %v483, %v686
      %688 = vst [vmem:[%s685] sm:$0xf] %v687
      %689 = vst.msk [vmem:[%s685 + $0x4] sm:$0xf] %vm566, %v492
      %v690 = vld [vmem:[%s685 + $0x8] sm:$0x1]
      %v691 = vsel %vm569, %v493, %v690
      %692 = vst [vmem:[%s685 + $0x8] sm:$0x1] %v691
      %v693 = vrot.slane %v240, 4
      %v694 = vrot.slane %v693, 4
      %v695 = vrot.slane %v257, 4
      %v696 = vrot.slane %v695, 4
      %v697 = vrot.slane %v274, 4
      %v698 = vrot.slane %v697, 4
      %v699 = vrot.slane %v291, 4
      %v700 = vrot.slane %v699, 4
      %v701 = vrot.slane %v308, 4
      %v702 = vrot.slane %v701, 4
      %v703 = vrot.slane %v325, 4
      %v704 = vrot.slane %v703, 4
      %v705 = vrot.slane %v342, 4
      %v706 = vrot.slane %v705, 4
      %v707 = vrot.slane %v359, 4
      %v708 = vrot.slane %v707, 4
      %v709 = vrot.slane %v376, 4
      %v710 = vrot.slane %v709, 4
      %v711 = vrot.slane %v393, 4
      %v712 = vrot.slane %v711, 4
      %v713 = vrot.slane %v410, 4
      %v714 = vrot.slane %v713, 4
      %v715 = vrot.slane %v427, 4
      %v716 = vrot.slane %v715, 4
      %v717 = vrot.slane %v444, 4
      %v718 = vrot.slane %v717, 4
      %v719 = vrot.slane %v461, 4
      %v720 = vrot.slane %v719, 4
      %v721 = vrot.slane %v478, 4
      %v722 = vrot.slane %v721, 4
      %v723 = vrot.slane %v495, 4
      %v724 = vrot.slane %v723, 4
      %v741 = vld [vmem:[%s559] sm:$0x1]
      %v742 = vsel %vm569, %v694, %v741
      %743 = vst [vmem:[%s559] sm:$0x1] %v742
      %v744 = vld [vmem:[%s559 + $0xc] sm:$0x1]
      %v745 = vsel %vm569, %v696, %v744
      %746 = vst [vmem:[%s559 + $0xc] sm:$0x1] %v745
      %v747 = vld [vmem:[%s559 + $0x18] sm:$0x1]
      %v748 = vsel %vm569, %v698, %v747
      %749 = vst [vmem:[%s559 + $0x18] sm:$0x1] %v748
      %v750 = vld [vmem:[%s559 + $0x24] sm:$0x1]
      %v751 = vsel %vm569, %v700, %v750
      %752 = vst [vmem:[%s559 + $0x24] sm:$0x1] %v751
      %v753 = vld [vmem:[%s559 + $0x30] sm:$0x1]
      %v754 = vsel %vm569, %v702, %v753
      %755 = vst [vmem:[%s559 + $0x30] sm:$0x1] %v754
      %v756 = vld [vmem:[%s559 + $0x3c] sm:$0x1]
      %v757 = vsel %vm569, %v704, %v756
      %758 = vst [vmem:[%s559 + $0x3c] sm:$0x1] %v757
      %v759 = vld [vmem:[%s559 + $0x48] sm:$0x1]
      %v760 = vsel %vm569, %v706, %v759
      %761 = vst [vmem:[%s559 + $0x48] sm:$0x1] %v760
      %v762 = vld [vmem:[%s559 + $0x54] sm:$0x1]
      %v763 = vsel %vm569, %v708, %v762
      %764 = vst [vmem:[%s559 + $0x54] sm:$0x1] %v763
      %v765 = vld [vmem:[%s559 + $0x60] sm:$0x1]
      %v766 = vsel %vm569, %v710, %v765
      %767 = vst [vmem:[%s559 + $0x60] sm:$0x1] %v766
      %v768 = vld [vmem:[%s559 + $0x6c] sm:$0x1]
      %v769 = vsel %vm569, %v712, %v768
      %770 = vst [vmem:[%s559 + $0x6c] sm:$0x1] %v769
      %v771 = vld [vmem:[%s559 + $0x78] sm:$0x1]
      %v772 = vsel %vm569, %v714, %v771
      %773 = vst [vmem:[%s559 + $0x78] sm:$0x1] %v772
      %v774 = vld [vmem:[%s559 + $0x84] sm:$0x1]
      %v775 = vsel %vm569, %v716, %v774
      %776 = vst [vmem:[%s559 + $0x84] sm:$0x1] %v775
      %v777 = vld [vmem:[%s559 + $0x90] sm:$0x1]
      %v778 = vsel %vm569, %v718, %v777
      %779 = vst [vmem:[%s559 + $0x90] sm:$0x1] %v778
      %v780 = vld [vmem:[%s559 + $0x9c] sm:$0x1]
      %v781 = vsel %vm569, %v720, %v780
      %782 = vst [vmem:[%s559 + $0x9c] sm:$0x1] %v781
      %v783 = vld [vmem:[%s559 + $0xa8] sm:$0x1]
      %v784 = vsel %vm569, %v722, %v783
      %785 = vst [vmem:[%s559 + $0xa8] sm:$0x1] %v784
      %v786 = vld [vmem:[%s559 + $0xb4] sm:$0x1]
      %v787 = vsel %vm569, %v724, %v786
      %788 = vst [vmem:[%s559 + $0xb4] sm:$0x1] %v787
      %v789 = vrot.slane %v251, 7
      %v790 = vrot.slane %v789, 4
      %v791 = vrot.slane %v268, 7
      %v792 = vrot.slane %v791, 4
      %v793 = vrot.slane %v285, 7
      %v794 = vrot.slane %v793, 4
      %v795 = vrot.slane %v302, 7
      %v796 = vrot.slane %v795, 4
      %v797 = vrot.slane %v319, 7
      %v798 = vrot.slane %v797, 4
      %v799 = vrot.slane %v336, 7
      %v800 = vrot.slane %v799, 4
      %v801 = vrot.slane %v353, 7
      %v802 = vrot.slane %v801, 4
      %v803 = vrot.slane %v370, 7
      %v804 = vrot.slane %v803, 4
      %v805 = vrot.slane %v387, 7
      %v806 = vrot.slane %v805, 4
      %v807 = vrot.slane %v404, 7
      %v808 = vrot.slane %v807, 4
      %v809 = vrot.slane %v421, 7
      %v810 = vrot.slane %v809, 4
      %v811 = vrot.slane %v438, 7
      %v812 = vrot.slane %v811, 4
      %v813 = vrot.slane %v455, 7
      %v814 = vrot.slane %v813, 4
      %v815 = vrot.slane %v472, 7
      %v816 = vrot.slane %v815, 4
      %v817 = vrot.slane %v489, 7
      %v818 = vrot.slane %v817, 4
      %v819 = vrot.slane %v506, 7
      %v820 = vrot.slane %v819, 4
      %vm837 = vmand %vm568, %vm561
      %v838 = vld [vmem:[%s559 + $0x8] sm:$0x1]
      %v839 = vsel %vm837, %v790, %v838
      %840 = vst [vmem:[%s559 + $0x8] sm:$0x1] %v839
      %v841 = vld [vmem:[%s559 + $0x14] sm:$0x1]
      %v842 = vsel %vm837, %v792, %v841
      %843 = vst [vmem:[%s559 + $0x14] sm:$0x1] %v842
      %v844 = vld [vmem:[%s559 + $0x20] sm:$0x1]
      %v845 = vsel %vm837, %v794, %v844
      %846 = vst [vmem:[%s559 + $0x20] sm:$0x1] %v845
      %v847 = vld [vmem:[%s559 + $0x2c] sm:$0x1]
      %v848 = vsel %vm837, %v796, %v847
      %849 = vst [vmem:[%s559 + $0x2c] sm:$0x1] %v848
      %v850 = vld [vmem:[%s559 + $0x38] sm:$0x1]
      %v851 = vsel %vm837, %v798, %v850
      %852 = vst [vmem:[%s559 + $0x38] sm:$0x1] %v851
      %v853 = vld [vmem:[%s559 + $0x44] sm:$0x1]
      %v854 = vsel %vm837, %v800, %v853
      %855 = vst [vmem:[%s559 + $0x44] sm:$0x1] %v854
      %v856 = vld [vmem:[%s559 + $0x50] sm:$0x1]
      %v857 = vsel %vm837, %v802, %v856
      %858 = vst [vmem:[%s559 + $0x50] sm:$0x1] %v857
      %v859 = vld [vmem:[%s559 + $0x5c] sm:$0x1]
      %v860 = vsel %vm837, %v804, %v859
      %861 = vst [vmem:[%s559 + $0x5c] sm:$0x1] %v860
      %v862 = vld [vmem:[%s559 + $0x68] sm:$0x1]
      %v863 = vsel %vm837, %v806, %v862
      %864 = vst [vmem:[%s559 + $0x68] sm:$0x1] %v863
      %v865 = vld [vmem:[%s559 + $0x74] sm:$0x1]
      %v866 = vsel %vm837, %v808, %v865
      %867 = vst [vmem:[%s559 + $0x74] sm:$0x1] %v866
      %v868 = vld [vmem:[%s559 + $0x80] sm:$0x1]
      %v869 = vsel %vm837, %v810, %v868
      %870 = vst [vmem:[%s559 + $0x80] sm:$0x1] %v869
      %v871 = vld [vmem:[%s559 + $0x8c] sm:$0x1]
      %v872 = vsel %vm837, %v812, %v871
      %873 = vst [vmem:[%s559 + $0x8c] sm:$0x1] %v872
      %v874 = vld [vmem:[%s559 + $0x98] sm:$0x1]
      %v875 = vsel %vm837, %v814, %v874
      %876 = vst [vmem:[%s559 + $0x98] sm:$0x1] %v875
      %v877 = vld [vmem:[%s559 + $0xa4] sm:$0x1]
      %v878 = vsel %vm837, %v816, %v877
      %879 = vst [vmem:[%s559 + $0xa4] sm:$0x1] %v878
      %v880 = vld [vmem:[%s559 + $0xb0] sm:$0x1]
      %v881 = vsel %vm837, %v818, %v880
      %882 = vst [vmem:[%s559 + $0xb0] sm:$0x1] %v881
      %v883 = vld [vmem:[%s559 + $0xbc] sm:$0x1]
      %v884 = vsel %vm837, %v820, %v883
      %885 = vst [vmem:[%s559 + $0xbc] sm:$0x1] %v884
      %v886 = vld [vmem:[#allocation2] sm:$0x1]
      %v887 = vsel %vm569, %v696, %v886
      %888 = vst [vmem:[#allocation2] sm:$0x1] %v887
      %v889 = vld [vmem:[#allocation2 + $0x8] sm:$0x1]
      %v890 = vsel %vm837, %v792, %v889
      %891 = vst [vmem:[#allocation2 + $0x8] sm:$0x1] %v890
      %v892 = vld [vmem:[%s685] sm:$0x1]
      %v893 = vsel %vm569, %v722, %v892
      %894 = vst [vmem:[%s685] sm:$0x1] %v893
      %v895 = vld [vmem:[%s685 + $0x8] sm:$0x1]
      %v896 = vsel %vm837, %v818, %v895
      %897 = vst [vmem:[%s685 + $0x8] sm:$0x1] %v896
      %v898 = vld [vmem:[#allocation2] sm:$0xf]
      %v899 = vld [vmem:[#allocation2 + $0x4] sm:$0xf]
      %v900 = vld [vmem:[#allocation2 + $0xc] sm:$0xf]
      %v901 = vld [vmem:[#allocation2 + $0x10] sm:$0xf]
      %v902 = vld [vmem:[#allocation2 + $0x18] sm:$0xf]
      %v903 = vld [vmem:[#allocation2 + $0x1c] sm:$0xf]
      %v904 = vld [vmem:[#allocation2 + $0x24] sm:$0xf]
      %v905 = vld [vmem:[#allocation2 + $0x28] sm:$0xf]
      %v906 = vld [vmem:[#allocation2 + $0x30] sm:$0xf]
      %v907 = vld [vmem:[#allocation2 + $0x34] sm:$0xf]
      %v908 = vld [vmem:[#allocation2 + $0x3c] sm:$0xf]
      %v909 = vld [vmem:[#allocation2 + $0x40] sm:$0xf]
      %v910 = vld [vmem:[#allocation2 + $0x48] sm:$0xf]
      %v911 = vld [vmem:[#allocation2 + $0x4c] sm:$0xf]
      %v912 = vld [vmem:[#allocation2 + $0x54] sm:$0xf]
      %v913 = vld [vmem:[#allocation2 + $0x58] sm:$0xf]
      %v914 = vld [vmem:[#allocation2 + $0x60] sm:$0xf]
      %v915 = vld [vmem:[#allocation2 + $0x64] sm:$0xf]
      %v916 = vld [vmem:[#allocation2 + $0x6c] sm:$0xf]
      %v917 = vld [vmem:[#allocation2 + $0x70] sm:$0xf]
      %v918 = vld [vmem:[#allocation2 + $0x78] sm:$0xf]
      %v919 = vld [vmem:[#allocation2 + $0x7c] sm:$0xf]
      %v920 = vld [vmem:[#allocation2 + $0x84] sm:$0xf]
      %v921 = vld [vmem:[#allocation2 + $0x88] sm:$0xf]
      %v922 = vld [vmem:[#allocation2 + $0x90] sm:$0xf]
      %v923 = vld [vmem:[#allocation2 + $0x94] sm:$0xf]
      %v924 = vld [vmem:[#allocation2 + $0x9c] sm:$0xf]
      %v925 = vld [vmem:[#allocation2 + $0xa0] sm:$0xf]
      %v926 = vld [vmem:[#allocation2 + $0xa8] sm:$0xf]
      %v927 = vld [vmem:[#allocation2 + $0xac] sm:$0xf]
      %v928 = vld [vmem:[#allocation2 + $0xb4] sm:$0xf]
      %v929 = vld [vmem:[#allocation2 + $0xb8] sm:$0xf]
      %930 = vst.msk [vmem:[#allocation3] sm:$0xf] %vm566, %v898
      %931 = vst.msk [vmem:[#allocation3 + $0x4] sm:$0xf] %vm566, %v899
      %932 = vst.msk [vmem:[#allocation3 + $0x8] sm:$0xf] %vm566, %v900
      %933 = vst.msk [vmem:[#allocation3 + $0xc] sm:$0xf] %vm566, %v901
      %934 = vst.msk [vmem:[#allocation3 + $0x10] sm:$0xf] %vm566, %v902
      %935 = vst.msk [vmem:[#allocation3 + $0x14] sm:$0xf] %vm566, %v903
      %936 = vst.msk [vmem:[#allocation3 + $0x18] sm:$0xf] %vm566, %v904
      %937 = vst.msk [vmem:[#allocation3 + $0x1c] sm:$0xf] %vm566, %v905
      %938 = vst.msk [vmem:[#allocation3 + $0x20] sm:$0xf] %vm566, %v906
      %939 = vst.msk [vmem:[#allocation3 + $0x24] sm:$0xf] %vm566, %v907
      %940 = vst.msk [vmem:[#allocation3 + $0x28] sm:$0xf] %vm566, %v908
      %941 = vst.msk [vmem:[#allocation3 + $0x2c] sm:$0xf] %vm566, %v909
      %942 = vst.msk [vmem:[#allocation3 + $0x30] sm:$0xf] %vm566, %v910
      %943 = vst.msk [vmem:[#allocation3 + $0x34] sm:$0xf] %vm566, %v911
      %944 = vst.msk [vmem:[#allocation3 + $0x38] sm:$0xf] %vm566, %v912
      %945 = vst.msk [vmem:[#allocation3 + $0x3c] sm:$0xf] %vm566, %v913
      %946 = vst.msk [vmem:[#allocation3 + $0x40] sm:$0xf] %vm566, %v914
      %947 = vst.msk [vmem:[#allocation3 + $0x44] sm:$0xf] %vm566, %v915
      %948 = vst.msk [vmem:[#allocation3 + $0x48] sm:$0xf] %vm566, %v916
      %949 = vst.msk [vmem:[#allocation3 + $0x4c] sm:$0xf] %vm566, %v917
      %950 = vst.msk [vmem:[#allocation3 + $0x50] sm:$0xf] %vm566, %v918
      %951 = vst.msk [vmem:[#allocation3 + $0x54] sm:$0xf] %vm566, %v919
      %952 = vst.msk [vmem:[#allocation3 + $0x58] sm:$0xf] %vm566, %v920
      %953 = vst.msk [vmem:[#allocation3 + $0x5c] sm:$0xf] %vm566, %v921
      %954 = vst.msk [vmem:[#allocation3 + $0x60] sm:$0xf] %vm566, %v922
      %955 = vst.msk [vmem:[#allocation3 + $0x64] sm:$0xf] %vm566, %v923
      %956 = vst.msk [vmem:[#allocation3 + $0x68] sm:$0xf] %vm566, %v924
      %957 = vst.msk [vmem:[#allocation3 + $0x6c] sm:$0xf] %vm566, %v925
      %958 = vst.msk [vmem:[#allocation3 + $0x70] sm:$0xf] %vm566, %v926
      %959 = vst.msk [vmem:[#allocation3 + $0x74] sm:$0xf] %vm566, %v927
      %960 = vst.msk [vmem:[#allocation3 + $0x78] sm:$0xf] %vm566, %v928
      %961 = vst.msk [vmem:[#allocation3 + $0x7c] sm:$0xf] %vm566, %v929
      %v962 = vld [vmem:[#allocation2] sm:$0xf]
      %v963 = vld [vmem:[#allocation2 + $0x4] sm:$0xf]
      %v964 = vld [vmem:[#allocation2 + $0x8] sm:$0x1]
      %v965 = vld [vmem:[#allocation2 + $0xc] sm:$0xf]
      %v966 = vld [vmem:[#allocation2 + $0x10] sm:$0xf]
      %v967 = vld [vmem:[#allocation2 + $0x14] sm:$0x1]
      %v968 = vld [vmem:[#allocation2 + $0x18] sm:$0xf]
      %v969 = vld [vmem:[#allocation2 + $0x1c] sm:$0xf]
      %v970 = vld [vmem:[#allocation2 + $0x20] sm:$0x1]
      %v971 = vld [vmem:[#allocation2 + $0x24] sm:$0xf]
      %v972 = vld [vmem:[#allocation2 + $0x28] sm:$0xf]
      %v973 = vld [vmem:[#allocation2 + $0x2c] sm:$0x1]
      %v974 = vld [vmem:[#allocation2 + $0x30] sm:$0xf]
      %v975 = vld [vmem:[#allocation2 + $0x34] sm:$0xf]
      %v976 = vld [vmem:[#allocation2 + $0x38] sm:$0x1]
      %v977 = vld [vmem:[#allocation2 + $0x3c] sm:$0xf]
      %v978 = vld [vmem:[#allocation2 + $0x40] sm:$0xf]
      %v979 = vld [vmem:[#allocation2 + $0x44] sm:$0x1]
      %v980 = vld [vmem:[#allocation2 + $0x48] sm:$0xf]
      %v981 = vld [vmem:[#allocation2 + $0x4c] sm:$0xf]
      %v982 = vld [vmem:[#allocation2 + $0x50] sm:$0x1]
      %v983 = vld [vmem:[#allocation2 + $0x54] sm:$0xf]
      %v984 = vld [vmem:[#allocation2 + $0x58] sm:$0xf]
      %v985 = vld [vmem:[#allocation2 + $0x5c] sm:$0x1]
      %v986 = vld [vmem:[#allocation2 + $0x60] sm:$0xf]
      %v987 = vld [vmem:[#allocation2 + $0x64] sm:$0xf]
      %v988 = vld [vmem:[#allocation2 + $0x68] sm:$0x1]
      %v989 = vld [vmem:[#allocation2 + $0x6c] sm:$0xf]
      %v990 = vld [vmem:[#allocation2 + $0x70] sm:$0xf]
      %v991 = vld [vmem:[#allocation2 + $0x74] sm:$0x1]
      %v992 = vld [vmem:[#allocation2 + $0x78] sm:$0xf]
      %v993 = vld [vmem:[#allocation2 + $0x7c] sm:$0xf]
      %v994 = vld [vmem:[#allocation2 + $0x80] sm:$0x1]
      %v995 = vld [vmem:[#allocation2 + $0x84] sm:$0xf]
      %v996 = vld [vmem:[#allocation2 + $0x88] sm:$0xf]
      %v997 = vld [vmem:[#allocation2 + $0x8c] sm:$0x1]
      %v998 = vld [vmem:[#allocation2 + $0x90] sm:$0xf]
      %v999 = vld [vmem:[#allocation2 + $0x94] sm:$0xf]
      %v1000 = vld [vmem:[#allocation2 + $0x98] sm:$0x1]
      %v1001 = vld [vmem:[#allocation2 + $0x9c] sm:$0xf]
      %v1002 = vld [vmem:[#allocation2 + $0xa0] sm:$0xf]
      %v1003 = vld [vmem:[#allocation2 + $0xa4] sm:$0x1]
      %v1004 = vld [vmem:[#allocation2 + $0xa8] sm:$0xf]
      %v1005 = vld [vmem:[#allocation2 + $0xac] sm:$0xf]
      %v1006 = vld [vmem:[#allocation2 + $0xb0] sm:$0x1]
      %v1007 = vld [vmem:[#allocation2 + $0xb4] sm:$0xf]
      %v1008 = vld [vmem:[#allocation2 + $0xb8] sm:$0xf]
      %v1009 = vld [vmem:[#allocation2 + $0xbc] sm:$0x1]
      %vm1010 = vsmask.f32 3328
      %vm1011 = vsmask.f32 7440
      %vm1012 = vmor %vm1010, %vm1011
      %v1014 = vshrl.u32 %v962, 16
      %v1016 = vrot.slane %v1014, 4
      %v1017 = vshll.u32 %v962, 16
      %v1019 = vrot.slane %v1017, 5
      %v1020 = vor.u32 %v1016, %v1019
      %v1021 = vrot.slane %v1020, 4
      %v1023 = vshll.u32 %v963, 16
      %v1025 = vrot.slane %v1023, 5
      %v1026 = vsel %vm1012, %v1021, %v1025
      %v1027 = vshrl.u32 %v963, 16
      %v1029 = vrot.slane %v1027, 4
      %v1030 = vor.u32 %v1029, %v1025
      %v1031 = vrot.slane %v1030, 4
      %v1033 = vshll.u32 %v964, 16
      %v1035 = vrot.slane %v1033, 5
      %v1036 = vsel %vm1012, %v1031, %v1035
      %v1038 = vshrl.u32 %v965, 16
      %v1040 = vrot.slane %v1038, 4
      %v1041 = vshll.u32 %v965, 16
      %v1043 = vrot.slane %v1041, 5
      %v1044 = vor.u32 %v1040, %v1043
      %v1045 = vrot.slane %v1044, 4
      %v1047 = vshll.u32 %v966, 16
      %v1049 = vrot.slane %v1047, 5
      %v1050 = vsel %vm1012, %v1045, %v1049
      %v1051 = vshrl.u32 %v966, 16
      %v1053 = vrot.slane %v1051, 4
      %v1054 = vor.u32 %v1053, %v1049
      %v1055 = vrot.slane %v1054, 4
      %v1057 = vshll.u32 %v967, 16
      %v1059 = vrot.slane %v1057, 5
      %v1060 = vsel %vm1012, %v1055, %v1059
      %v1062 = vshrl.u32 %v968, 16
      %v1064 = vrot.slane %v1062, 4
      %v1065 = vshll.u32 %v968, 16
      %v1067 = vrot.slane %v1065, 5
      %v1068 = vor.u32 %v1064, %v1067
      %v1069 = vrot.slane %v1068, 4
      %v1071 = vshll.u32 %v969, 16
      %v1073 = vrot.slane %v1071, 5
      %v1074 = vsel %vm1012, %v1069, %v1073
      %v1075 = vshrl.u32 %v969, 16
      %v1077 = vrot.slane %v1075, 4
      %v1078 = vor.u32 %v1077, %v1073
      %v1079 = vrot.slane %v1078, 4
      %v1081 = vshll.u32 %v970, 16
      %v1083 = vrot.slane %v1081, 5
      %v1084 = vsel %vm1012, %v1079, %v1083
      %v1086 = vshrl.u32 %v971, 16
      %v1088 = vrot.slane %v1086, 4
      %v1089 = vshll.u32 %v971, 16
      %v1091 = vrot.slane %v1089, 5
      %v1092 = vor.u32 %v1088, %v1091
      %v1093 = vrot.slane %v1092, 4
      %v1095 = vshll.u32 %v972, 16
      %v1097 = vrot.slane %v1095, 5
      %v1098 = vsel %vm1012, %v1093, %v1097
      %v1099 = vshrl.u32 %v972, 16
      %v1101 = vrot.slane %v1099, 4
      %v1102 = vor.u32 %v1101, %v1097
      %v1103 = vrot.slane %v1102, 4
      %v1105 = vshll.u32 %v973, 16
      %v1107 = vrot.slane %v1105, 5
      %v1108 = vsel %vm1012, %v1103, %v1107
      %v1110 = vshrl.u32 %v974, 16
      %v1112 = vrot.slane %v1110, 4
      %v1113 = vshll.u32 %v974, 16
      %v1115 = vrot.slane %v1113, 5
      %v1116 = vor.u32 %v1112, %v1115
      %v1117 = vrot.slane %v1116, 4
      %v1119 = vshll.u32 %v975, 16
      %v1121 = vrot.slane %v1119, 5
      %v1122 = vsel %vm1012, %v1117, %v1121
      %v1123 = vshrl.u32 %v975, 16
      %v1125 = vrot.slane %v1123, 4
      %v1126 = vor.u32 %v1125, %v1121
      %v1127 = vrot.slane %v1126, 4
      %v1129 = vshll.u32 %v976, 16
      %v1131 = vrot.slane %v1129, 5
      %v1132 = vsel %vm1012, %v1127, %v1131
      %v1134 = vshrl.u32 %v977, 16
      %v1136 = vrot.slane %v1134, 4
      %v1137 = vshll.u32 %v977, 16
      %v1139 = vrot.slane %v1137, 5
      %v1140 = vor.u32 %v1136, %v1139
      %v1141 = vrot.slane %v1140, 4
      %v1143 = vshll.u32 %v978, 16
      %v1145 = vrot.slane %v1143, 5
      %v1146 = vsel %vm1012, %v1141, %v1145
      %v1147 = vshrl.u32 %v978, 16
      %v1149 = vrot.slane %v1147, 4
      %v1150 = vor.u32 %v1149, %v1145
      %v1151 = vrot.slane %v1150, 4
      %v1153 = vshll.u32 %v979, 16
      %v1155 = vrot.slane %v1153, 5
      %v1156 = vsel %vm1012, %v1151, %v1155
      %v1158 = vshrl.u32 %v980, 16
      %v1160 = vrot.slane %v1158, 4
      %v1161 = vshll.u32 %v980, 16
      %v1163 = vrot.slane %v1161, 5
      %v1164 = vor.u32 %v1160, %v1163
      %v1165 = vrot.slane %v1164, 4
      %v1167 = vshll.u32 %v981, 16
      %v1169 = vrot.slane %v1167, 5
      %v1170 = vsel %vm1012, %v1165, %v1169
      %v1171 = vshrl.u32 %v981, 16
      %v1173 = vrot.slane %v1171, 4
      %v1174 = vor.u32 %v1173, %v1169
      %v1175 = vrot.slane %v1174, 4
      %v1177 = vshll.u32 %v982, 16
      %v1179 = vrot.slane %v1177, 5
      %v1180 = vsel %vm1012, %v1175, %v1179
      %v1182 = vshrl.u32 %v983, 16
      %v1184 = vrot.slane %v1182, 4
      %v1185 = vshll.u32 %v983, 16
      %v1187 = vrot.slane %v1185, 5
      %v1188 = vor.u32 %v1184, %v1187
      %v1189 = vrot.slane %v1188, 4
      %v1191 = vshll.u32 %v984, 16
      %v1193 = vrot.slane %v1191, 5
      %v1194 = vsel %vm1012, %v1189, %v1193
      %v1195 = vshrl.u32 %v984, 16
      %v1197 = vrot.slane %v1195, 4
      %v1198 = vor.u32 %v1197, %v1193
      %v1199 = vrot.slane %v1198, 4
      %v1201 = vshll.u32 %v985, 16
      %v1203 = vrot.slane %v1201, 5
      %v1204 = vsel %vm1012, %v1199, %v1203
      %v1206 = vshrl.u32 %v986, 16
      %v1208 = vrot.slane %v1206, 4
      %v1209 = vshll.u32 %v986, 16
      %v1211 = vrot.slane %v1209, 5
      %v1212 = vor.u32 %v1208, %v1211
      %v1213 = vrot.slane %v1212, 4
      %v1215 = vshll.u32 %v987, 16
      %v1217 = vrot.slane %v1215, 5
      %v1218 = vsel %vm1012, %v1213, %v1217
      %v1219 = vshrl.u32 %v987, 16
      %v1221 = vrot.slane %v1219, 4
      %v1222 = vor.u32 %v1221, %v1217
      %v1223 = vrot.slane %v1222, 4
      %v1225 = vshll.u32 %v988, 16
      %v1227 = vrot.slane %v1225, 5
      %v1228 = vsel %vm1012, %v1223, %v1227
      %v1230 = vshrl.u32 %v989, 16
      %v1232 = vrot.slane %v1230, 4
      %v1233 = vshll.u32 %v989, 16
      %v1235 = vrot.slane %v1233, 5
      %v1236 = vor.u32 %v1232, %v1235
      %v1237 = vrot.slane %v1236, 4
      %v1239 = vshll.u32 %v990, 16
      %v1241 = vrot.slane %v1239, 5
      %v1242 = vsel %vm1012, %v1237, %v1241
      %v1243 = vshrl.u32 %v990, 16
      %v1245 = vrot.slane %v1243, 4
      %v1246 = vor.u32 %v1245, %v1241
      %v1247 = vrot.slane %v1246, 4
      %v1249 = vshll.u32 %v991, 16
      %v1251 = vrot.slane %v1249, 5
      %v1252 = vsel %vm1012, %v1247, %v1251
      %v1254 = vshrl.u32 %v992, 16
      %v1256 = vrot.slane %v1254, 4
      %v1257 = vshll.u32 %v992, 16
      %v1259 = vrot.slane %v1257, 5
      %v1260 = vor.u32 %v1256, %v1259
      %v1261 = vrot.slane %v1260, 4
      %v1263 = vshll.u32 %v993, 16
      %v1265 = vrot.slane %v1263, 5
      %v1266 = vsel %vm1012, %v1261, %v1265
      %v1267 = vshrl.u32 %v993, 16
      %v1269 = vrot.slane %v1267, 4
      %v1270 = vor.u32 %v1269, %v1265
      %v1271 = vrot.slane %v1270, 4
      %v1273 = vshll.u32 %v994, 16
      %v1275 = vrot.slane %v1273, 5
      %v1276 = vsel %vm1012, %v1271, %v1275
      %v1278 = vshrl.u32 %v995, 16
      %v1280 = vrot.slane %v1278, 4
      %v1281 = vshll.u32 %v995, 16
      %v1283 = vrot.slane %v1281, 5
      %v1284 = vor.u32 %v1280, %v1283
      %v1285 = vrot.slane %v1284, 4
      %v1287 = vshll.u32 %v996, 16
      %v1289 = vrot.slane %v1287, 5
      %v1290 = vsel %vm1012, %v1285, %v1289
      %v1291 = vshrl.u32 %v996, 16
      %v1293 = vrot.slane %v1291, 4
      %v1294 = vor.u32 %v1293, %v1289
      %v1295 = vrot.slane %v1294, 4
      %v1297 = vshll.u32 %v997, 16
      %v1299 = vrot.slane %v1297, 5
      %v1300 = vsel %vm1012, %v1295, %v1299
      %v1302 = vshrl.u32 %v998, 16
      %v1304 = vrot.slane %v1302, 4
      %v1305 = vshll.u32 %v998, 16
      %v1307 = vrot.slane %v1305, 5
      %v1308 = vor.u32 %v1304, %v1307
      %v1309 = vrot.slane %v1308, 4
      %v1311 = vshll.u32 %v999, 16
      %v1313 = vrot.slane %v1311, 5
      %v1314 = vsel %vm1012, %v1309, %v1313
      %v1315 = vshrl.u32 %v999, 16
      %v1317 = vrot.slane %v1315, 4
      %v1318 = vor.u32 %v1317, %v1313
      %v1319 = vrot.slane %v1318, 4
      %v1321 = vshll.u32 %v1000, 16
      %v1323 = vrot.slane %v1321, 5
      %v1324 = vsel %vm1012, %v1319, %v1323
      %v1326 = vshrl.u32 %v1001, 16
      %v1328 = vrot.slane %v1326, 4
      %v1329 = vshll.u32 %v1001, 16
      %v1331 = vrot.slane %v1329, 5
      %v1332 = vor.u32 %v1328, %v1331
      %v1333 = vrot.slane %v1332, 4
      %v1335 = vshll.u32 %v1002, 16
      %v1337 = vrot.slane %v1335, 5
      %v1338 = vsel %vm1012, %v1333, %v1337
      %v1339 = vshrl.u32 %v1002, 16
      %v1341 = vrot.slane %v1339, 4
      %v1342 = vor.u32 %v1341, %v1337
      %v1343 = vrot.slane %v1342, 4
      %v1345 = vshll.u32 %v1003, 16
      %v1347 = vrot.slane %v1345, 5
      %v1348 = vsel %vm1012, %v1343, %v1347
      %v1350 = vshrl.u32 %v1004, 16
      %v1352 = vrot.slane %v1350, 4
      %v1353 = vshll.u32 %v1004, 16
      %v1355 = vrot.slane %v1353, 5
      %v1356 = vor.u32 %v1352, %v1355
      %v1357 = vrot.slane %v1356, 4
      %v1359 = vshll.u32 %v1005, 16
      %v1361 = vrot.slane %v1359, 5
      %v1362 = vsel %vm1012, %v1357, %v1361
      %v1363 = vshrl.u32 %v1005, 16
      %v1365 = vrot.slane %v1363, 4
      %v1366 = vor.u32 %v1365, %v1361
      %v1367 = vrot.slane %v1366, 4
      %v1369 = vshll.u32 %v1006, 16
      %v1371 = vrot.slane %v1369, 5
      %v1372 = vsel %vm1012, %v1367, %v1371
      %v1374 = vshrl.u32 %v1007, 16
      %v1376 = vrot.slane %v1374, 4
      %v1377 = vshll.u32 %v1007, 16
      %v1379 = vrot.slane %v1377, 5
      %v1380 = vor.u32 %v1376, %v1379
      %v1381 = vrot.slane %v1380, 4
      %v1383 = vshll.u32 %v1008, 16
      %v1385 = vrot.slane %v1383, 5
      %v1386 = vsel %vm1012, %v1381, %v1385
      %v1387 = vshrl.u32 %v1008, 16
      %v1389 = vrot.slane %v1387, 4
      %v1390 = vor.u32 %v1389, %v1385
      %v1391 = vrot.slane %v1390, 4
      %v1393 = vshll.u32 %v1009, 16
      %v1395 = vrot.slane %v1393, 5
      %v1396 = vsel %vm1012, %v1391, %v1395
      %1397 = vrot.lane.b32.xlu0 %v1026, 4
      %v1398 = vpop.permute.xlu0 %1397
      %1399 = vrot.lane.b32.xlu0 %v1036, 4
      %v1400 = vpop.permute.xlu0 %1399
      %1401 = vrot.lane.b32.xlu0 %v1050, 4
      %v1402 = vpop.permute.xlu0 %1401
      %1403 = vrot.lane.b32.xlu0 %v1060, 4
      %v1404 = vpop.permute.xlu0 %1403
      %1405 = vrot.lane.b32.xlu0 %v1074, 4
      %v1406 = vpop.permute.xlu0 %1405
      %1407 = vrot.lane.b32.xlu0 %v1084, 4
      %v1408 = vpop.permute.xlu0 %1407
      %1409 = vrot.lane.b32.xlu0 %v1098, 4
      %v1410 = vpop.permute.xlu0 %1409
      %1411 = vrot.lane.b32.xlu0 %v1108, 4
      %v1412 = vpop.permute.xlu0 %1411
      %1413 = vrot.lane.b32.xlu0 %v1122, 4
      %v1414 = vpop.permute.xlu0 %1413
      %1415 = vrot.lane.b32.xlu0 %v1132, 4
      %v1416 = vpop.permute.xlu0 %1415
      %1417 = vrot.lane.b32.xlu0 %v1146, 4
      %v1418 = vpop.permute.xlu0 %1417
      %1419 = vrot.lane.b32.xlu0 %v1156, 4
      %v1420 = vpop.permute.xlu0 %1419
      %1421 = vrot.lane.b32.xlu0 %v1170, 4
      %v1422 = vpop.permute.xlu0 %1421
      %1423 = vrot.lane.b32.xlu0 %v1180, 4
      %v1424 = vpop.permute.xlu0 %1423
      %1425 = vrot.lane.b32.xlu0 %v1194, 4
      %v1426 = vpop.permute.xlu0 %1425
      %1427 = vrot.lane.b32.xlu0 %v1204, 4
      %v1428 = vpop.permute.xlu0 %1427
      %1429 = vrot.lane.b32.xlu0 %v1218, 4
      %v1430 = vpop.permute.xlu0 %1429
      %1431 = vrot.lane.b32.xlu0 %v1228, 4
      %v1432 = vpop.permute.xlu0 %1431
      %1433 = vrot.lane.b32.xlu0 %v1242, 4
      %v1434 = vpop.permute.xlu0 %1433
      %1435 = vrot.lane.b32.xlu0 %v1252, 4
      %v1436 = vpop.permute.xlu0 %1435
      %1437 = vrot.lane.b32.xlu0 %v1266, 4
      %v1438 = vpop.permute.xlu0 %1437
      %1439 = vrot.lane.b32.xlu0 %v1276, 4
      %v1440 = vpop.permute.xlu0 %1439
      %1441 = vrot.lane.b32.xlu0 %v1290, 4
      %v1442 = vpop.permute.xlu0 %1441
      %1443 = vrot.lane.b32.xlu0 %v1300, 4
      %v1444 = vpop.permute.xlu0 %1443
      %1445 = vrot.lane.b32.xlu0 %v1314, 4
      %v1446 = vpop.permute.xlu0 %1445
      %1447 = vrot.lane.b32.xlu0 %v1324, 4
      %v1448 = vpop.permute.xlu0 %1447
      %1449 = vrot.lane.b32.xlu0 %v1338, 4
      %v1450 = vpop.permute.xlu0 %1449
      %1451 = vrot.lane.b32.xlu0 %v1348, 4
      %v1452 = vpop.permute.xlu0 %1451
      %1453 = vrot.lane.b32.xlu0 %v1362, 4
      %v1454 = vpop.permute.xlu0 %1453
      %1455 = vrot.lane.b32.xlu0 %v1372, 4
      %v1456 = vpop.permute.xlu0 %1455
      %1457 = vrot.lane.b32.xlu0 %v1386, 4
      %v1458 = vpop.permute.xlu0 %1457
      %1459 = vrot.lane.b32.xlu0 %v1396, 4
      %v1460 = vpop.permute.xlu0 %1459
      %vm1493 = vcmask 60448
      %1494 = vst.msk [vmem:[#allocation3] sm:$0xf] %vm1493, %v1398
      %1495 = vst.msk [vmem:[#allocation3 + $0x4] sm:$0xf] %vm1493, %v1400
      %1496 = vst.msk [vmem:[#allocation3 + $0x8] sm:$0xf] %vm1493, %v1402
      %1497 = vst.msk [vmem:[#allocation3 + $0xc] sm:$0xf] %vm1493, %v1404
      %1498 = vst.msk [vmem:[#allocation3 + $0x10] sm:$0xf] %vm1493, %v1406
      %1499 = vst.msk [vmem:[#allocation3 + $0x14] sm:$0xf] %vm1493, %v1408
      %1500 = vst.msk [vmem:[#allocation3 + $0x18] sm:$0xf] %vm1493, %v1410
      %1501 = vst.msk [vmem:[#allocation3 + $0x1c] sm:$0xf] %vm1493, %v1412
      %1502 = vst.msk [vmem:[#allocation3 + $0x20] sm:$0xf] %vm1493, %v1414
      %1503 = vst.msk [vmem:[#allocation3 + $0x24] sm:$0xf] %vm1493, %v1416
      %1504 = vst.msk [vmem:[#allocation3 + $0x28] sm:$0xf] %vm1493, %v1418
      %1505 = vst.msk [vmem:[#allocation3 + $0x2c] sm:$0xf] %vm1493, %v1420
      %1506 = vst.msk [vmem:[#allocation3 + $0x30] sm:$0xf] %vm1493, %v1422
      %1507 = vst.msk [vmem:[#allocation3 + $0x34] sm:$0xf] %vm1493, %v1424
      %1508 = vst.msk [vmem:[#allocation3 + $0x38] sm:$0xf] %vm1493, %v1426
      %1509 = vst.msk [vmem:[#allocation3 + $0x3c] sm:$0xf] %vm1493, %v1428
      %1510 = vst.msk [vmem:[#allocation3 + $0x40] sm:$0xf] %vm1493, %v1430
      %1511 = vst.msk [vmem:[#allocation3 + $0x44] sm:$0xf] %vm1493, %v1432
      %1512 = vst.msk [vmem:[#allocation3 + $0x48] sm:$0xf] %vm1493, %v1434
      %1513 = vst.msk [vmem:[#allocation3 + $0x4c] sm:$0xf] %vm1493, %v1436
      %1514 = vst.msk [vmem:[#allocation3 + $0x50] sm:$0xf] %vm1493, %v1438
      %1515 = vst.msk [vmem:[#allocation3 + $0x54] sm:$0xf] %vm1493, %v1440
      %1516 = vst.msk [vmem:[#allocation3 + $0x58] sm:$0xf] %vm1493, %v1442
      %1517 = vst.msk [vmem:[#allocation3 + $0x5c] sm:$0xf] %vm1493, %v1444
      %1518 = vst.msk [vmem:[#allocation3 + $0x60] sm:$0xf] %vm1493, %v1446
      %1519 = vst.msk [vmem:[#allocation3 + $0x64] sm:$0xf] %vm1493, %v1448
      %1520 = vst.msk [vmem:[#allocation3 + $0x68] sm:$0xf] %vm1493, %v1450
      %1521 = vst.msk [vmem:[#allocation3 + $0x6c] sm:$0xf] %vm1493, %v1452
      %1522 = vst.msk [vmem:[#allocation3 + $0x70] sm:$0xf] %vm1493, %v1454
      %1523 = vst.msk [vmem:[#allocation3 + $0x74] sm:$0xf] %vm1493, %v1456
      %1524 = vst.msk [vmem:[#allocation3 + $0x78] sm:$0xf] %vm1493, %v1458
      %1525 = vst.msk [vmem:[#allocation3 + $0x7c] sm:$0xf] %vm1493, %v1460
      %v1526 = vld [vmem:[#allocation2] sm:$0xe]
      %v1527 = vld [vmem:[#allocation2 + $0x4] sm:$0xf]
      %v1528 = vld [vmem:[#allocation2 + $0x8] sm:$0x1]
      %v1529 = vld [vmem:[#allocation2 + $0xc] sm:$0xe]
      %v1530 = vld [vmem:[#allocation2 + $0x10] sm:$0xf]
      %v1531 = vld [vmem:[#allocation2 + $0x14] sm:$0x1]
      %v1532 = vld [vmem:[#allocation2 + $0x18] sm:$0xe]
      %v1533 = vld [vmem:[#allocation2 + $0x1c] sm:$0xf]
      %v1534 = vld [vmem:[#allocation2 + $0x20] sm:$0x1]
      %v1535 = vld [vmem:[#allocation2 + $0x24] sm:$0xe]
      %v1536 = vld [vmem:[#allocation2 + $0x28] sm:$0xf]
      %v1537 = vld [vmem:[#allocation2 + $0x2c] sm:$0x1]
      %v1538 = vld [vmem:[#allocation2 + $0x30] sm:$0xe]
      %v1539 = vld [vmem:[#allocation2 + $0x34] sm:$0xf]
      %v1540 = vld [vmem:[#allocation2 + $0x38] sm:$0x1]
      %v1541 = vld [vmem:[#allocation2 + $0x3c] sm:$0xe]
      %v1542 = vld [vmem:[#allocation2 + $0x40] sm:$0xf]
      %v1543 = vld [vmem:[#allocation2 + $0x44] sm:$0x1]
      %v1544 = vld [vmem:[#allocation2 + $0x48] sm:$0xe]
      %v1545 = vld [vmem:[#allocation2 + $0x4c] sm:$0xf]
      %v1546 = vld [vmem:[#allocation2 + $0x50] sm:$0x1]
      %v1547 = vld [vmem:[#allocation2 + $0x54] sm:$0xe]
      %v1548 = vld [vmem:[#allocation2 + $0x58] sm:$0xf]
      %v1549 = vld [vmem:[#allocation2 + $0x5c] sm:$0x1]
      %v1550 = vld [vmem:[#allocation2 + $0x60] sm:$0xe]
      %v1551 = vld [vmem:[#allocation2 + $0x64] sm:$0xf]
      %v1552 = vld [vmem:[#allocation2 + $0x68] sm:$0x1]
      %v1553 = vld [vmem:[#allocation2 + $0x6c] sm:$0xe]
      %v1554 = vld [vmem:[#allocation2 + $0x70] sm:$0xf]
      %v1555 = vld [vmem:[#allocation2 + $0x74] sm:$0x1]
      %v1556 = vld [vmem:[#allocation2 + $0x78] sm:$0xe]
      %v1557 = vld [vmem:[#allocation2 + $0x7c] sm:$0xf]
      %v1558 = vld [vmem:[#allocation2 + $0x80] sm:$0x1]
      %v1559 = vld [vmem:[#allocation2 + $0x84] sm:$0xe]
      %v1560 = vld [vmem:[#allocation2 + $0x88] sm:$0xf]
      %v1561 = vld [vmem:[#allocation2 + $0x8c] sm:$0x1]
      %v1562 = vld [vmem:[#allocation2 + $0x90] sm:$0xe]
      %v1563 = vld [vmem:[#allocation2 + $0x94] sm:$0xf]
      %v1564 = vld [vmem:[#allocation2 + $0x98] sm:$0x1]
      %v1565 = vld [vmem:[#allocation2 + $0x9c] sm:$0xe]
      %v1566 = vld [vmem:[#allocation2 + $0xa0] sm:$0xf]
      %v1567 = vld [vmem:[#allocation2 + $0xa4] sm:$0x1]
      %v1568 = vld [vmem:[#allocation2 + $0xa8] sm:$0xe]
      %v1569 = vld [vmem:[#allocation2 + $0xac] sm:$0xf]
      %v1570 = vld [vmem:[#allocation2 + $0xb0] sm:$0x1]
      %v1571 = vld [vmem:[#allocation2 + $0xb4] sm:$0xe]
      %v1572 = vld [vmem:[#allocation2 + $0xb8] sm:$0xf]
      %v1573 = vld [vmem:[#allocation2 + $0xbc] sm:$0x1]
      %vm1622 = vcmask 1042432
      %vm1623 = vcmask 1046532
      %vm1624 = vmor %vm1622, %vm1623
      %v1625 = vrot.slane %v1526, 5
      %v1626 = vrot.slane %v1625, 4
      %v1627 = vrot.slane %v1527, 5
      %v1628 = vsel %vm1624, %v1626, %v1627
      %v1629 = vrot.slane %v1627, 4
      %v1630 = vrot.slane %v1528, 5
      %v1631 = vsel %vm1624, %v1629, %v1630
      %v1632 = vrot.slane %v1529, 5
      %v1633 = vrot.slane %v1632, 4
      %v1634 = vrot.slane %v1530, 5
      %v1635 = vsel %vm1624, %v1633, %v1634
      %v1636 = vrot.slane %v1634, 4
      %v1637 = vrot.slane %v1531, 5
      %v1638 = vsel %vm1624, %v1636, %v1637
      %v1639 = vrot.slane %v1532, 5
      %v1640 = vrot.slane %v1639, 4
      %v1641 = vrot.slane %v1533, 5
      %v1642 = vsel %vm1624, %v1640, %v1641
      %v1643 = vrot.slane %v1641, 4
      %v1644 = vrot.slane %v1534, 5
      %v1645 = vsel %vm1624, %v1643, %v1644
      %v1646 = vrot.slane %v1535, 5
      %v1647 = vrot.slane %v1646, 4
      %v1648 = vrot.slane %v1536, 5
      %v1649 = vsel %vm1624, %v1647, %v1648
      %v1650 = vrot.slane %v1648, 4
      %v1651 = vrot.slane %v1537, 5
      %v1652 = vsel %vm1624, %v1650, %v1651
      %v1653 = vrot.slane %v1538, 5
      %v1654 = vrot.slane %v1653, 4
      %v1655 = vrot.slane %v1539, 5
      %v1656 = vsel %vm1624, %v1654, %v1655
      %v1657 = vrot.slane %v1655, 4
      %v1658 = vrot.slane %v1540, 5
      %v1659 = vsel %vm1624, %v1657, %v1658
      %v1660 = vrot.slane %v1541, 5
      %v1661 = vrot.slane %v1660, 4
      %v1662 = vrot.slane %v1542, 5
      %v1663 = vsel %vm1624, %v1661, %v1662
      %v1664 = vrot.slane %v1662, 4
      %v1665 = vrot.slane %v1543, 5
      %v1666 = vsel %vm1624, %v1664, %v1665
      %v1667 = vrot.slane %v1544, 5
      %v1668 = vrot.slane %v1667, 4
      %v1669 = vrot.slane %v1545, 5
      %v1670 = vsel %vm1624, %v1668, %v1669
      %v1671 = vrot.slane %v1669, 4
      %v1672 = vrot.slane %v1546, 5
      %v1673 = vsel %vm1624, %v1671, %v1672
      %v1674 = vrot.slane %v1547, 5
      %v1675 = vrot.slane %v1674, 4
      %v1676 = vrot.slane %v1548, 5
      %v1677 = vsel %vm1624, %v1675, %v1676
      %v1678 = vrot.slane %v1676, 4
      %v1679 = vrot.slane %v1549, 5
      %v1680 = vsel %vm1624, %v1678, %v1679
      %v1681 = vrot.slane %v1550, 5
      %v1682 = vrot.slane %v1681, 4
      %v1683 = vrot.slane %v1551, 5
      %v1684 = vsel %vm1624, %v1682, %v1683
      %v1685 = vrot.slane %v1683, 4
      %v1686 = vrot.slane %v1552, 5
      %v1687 = vsel %vm1624, %v1685, %v1686
      %v1688 = vrot.slane %v1553, 5
      %v1689 = vrot.slane %v1688, 4
      %v1690 = vrot.slane %v1554, 5
      %v1691 = vsel %vm1624, %v1689, %v1690
      %v1692 = vrot.slane %v1690, 4
      %v1693 = vrot.slane %v1555, 5
      %v1694 = vsel %vm1624, %v1692, %v1693
      %v1695 = vrot.slane %v1556, 5
      %v1696 = vrot.slane %v1695, 4
      %v1697 = vrot.slane %v1557, 5
      %v1698 = vsel %vm1624, %v1696, %v1697
      %v1699 = vrot.slane %v1697, 4
      %v1700 = vrot.slane %v1558, 5
      %v1701 = vsel %vm1624, %v1699, %v1700
      %v1702 = vrot.slane %v1559, 5
      %v1703 = vrot.slane %v1702, 4
      %v1704 = vrot.slane %v1560, 5
      %v1705 = vsel %vm1624, %v1703, %v1704
      %v1706 = vrot.slane %v1704, 4
      %v1707 = vrot.slane %v1561, 5
      %v1708 = vsel %vm1624, %v1706, %v1707
      %v1709 = vrot.slane %v1562, 5
      %v1710 = vrot.slane %v1709, 4
      %v1711 = vrot.slane %v1563, 5
      %v1712 = vsel %vm1624, %v1710, %v1711
      %v1713 = vrot.slane %v1711, 4
      %v1714 = vrot.slane %v1564, 5
      %v1715 = vsel %vm1624, %v1713, %v1714
      %v1716 = vrot.slane %v1565, 5
      %v1717 = vrot.slane %v1716, 4
      %v1718 = vrot.slane %v1566, 5
      %v1719 = vsel %vm1624, %v1717, %v1718
      %v1720 = vrot.slane %v1718, 4
      %v1721 = vrot.slane %v1567, 5
      %v1722 = vsel %vm1624, %v1720, %v1721
      %v1723 = vrot.slane %v1568, 5
      %v1724 = vrot.slane %v1723, 4
      %v1725 = vrot.slane %v1569, 5
      %v1726 = vsel %vm1624, %v1724, %v1725
      %v1727 = vrot.slane %v1725, 4
      %v1728 = vrot.slane %v1570, 5
      %v1729 = vsel %vm1624, %v1727, %v1728
      %v1730 = vrot.slane %v1571, 5
      %v1731 = vrot.slane %v1730, 4
      %v1732 = vrot.slane %v1572, 5
      %v1733 = vsel %vm1624, %v1731, %v1732
      %v1734 = vrot.slane %v1732, 4
      %v1735 = vrot.slane %v1573, 5
      %v1736 = vsel %vm1624, %v1734, %v1735
      %1737 = vrot.lane.b32.xlu0 %v1628, 8
      %v1738 = vpop.permute.xlu0 %1737
      %1739 = vrot.lane.b32.xlu0 %v1631, 8
      %v1740 = vpop.permute.xlu0 %1739
      %1741 = vrot.lane.b32.xlu0 %v1635, 8
      %v1742 = vpop.permute.xlu0 %1741
      %1743 = vrot.lane.b32.xlu0 %v1638, 8
      %v1744 = vpop.permute.xlu0 %1743
      %1745 = vrot.lane.b32.xlu0 %v1642, 8
      %v1746 = vpop.permute.xlu0 %1745
      %1747 = vrot.lane.b32.xlu0 %v1645, 8
      %v1748 = vpop.permute.xlu0 %1747
      %1749 = vrot.lane.b32.xlu0 %v1649, 8
      %v1750 = vpop.permute.xlu0 %1749
      %1751 = vrot.lane.b32.xlu0 %v1652, 8
      %v1752 = vpop.permute.xlu0 %1751
      %1753 = vrot.lane.b32.xlu0 %v1656, 8
      %v1754 = vpop.permute.xlu0 %1753
      %1755 = vrot.lane.b32.xlu0 %v1659, 8
      %v1756 = vpop.permute.xlu0 %1755
      %1757 = vrot.lane.b32.xlu0 %v1663, 8
      %v1758 = vpop.permute.xlu0 %1757
      %1759 = vrot.lane.b32.xlu0 %v1666, 8
      %v1760 = vpop.permute.xlu0 %1759
      %1761 = vrot.lane.b32.xlu0 %v1670, 8
      %v1762 = vpop.permute.xlu0 %1761
      %1763 = vrot.lane.b32.xlu0 %v1673, 8
      %v1764 = vpop.permute.xlu0 %1763
      %1765 = vrot.lane.b32.xlu0 %v1677, 8
      %v1766 = vpop.permute.xlu0 %1765
      %1767 = vrot.lane.b32.xlu0 %v1680, 8
      %v1768 = vpop.permute.xlu0 %1767
      %1769 = vrot.lane.b32.xlu0 %v1684, 8
      %v1770 = vpop.permute.xlu0 %1769
      %1771 = vrot.lane.b32.xlu0 %v1687, 8
      %v1772 = vpop.permute.xlu0 %1771
      %1773 = vrot.lane.b32.xlu0 %v1691, 8
      %v1774 = vpop.permute.xlu0 %1773
      %1775 = vrot.lane.b32.xlu0 %v1694, 8
      %v1776 = vpop.permute.xlu0 %1775
      %1777 = vrot.lane.b32.xlu0 %v1698, 8
      %v1778 = vpop.permute.xlu0 %1777
      %1779 = vrot.lane.b32.xlu0 %v1701, 8
      %v1780 = vpop.permute.xlu0 %1779
      %1781 = vrot.lane.b32.xlu0 %v1705, 8
      %v1782 = vpop.permute.xlu0 %1781
      %1783 = vrot.lane.b32.xlu0 %v1708, 8
      %v1784 = vpop.permute.xlu0 %1783
      %1785 = vrot.lane.b32.xlu0 %v1712, 8
      %v1786 = vpop.permute.xlu0 %1785
      %1787 = vrot.lane.b32.xlu0 %v1715, 8
      %v1788 = vpop.permute.xlu0 %1787
      %1789 = vrot.lane.b32.xlu0 %v1719, 8
      %v1790 = vpop.permute.xlu0 %1789
      %1791 = vrot.lane.b32.xlu0 %v1722, 8
      %v1792 = vpop.permute.xlu0 %1791
      %1793 = vrot.lane.b32.xlu0 %v1726, 8
      %v1794 = vpop.permute.xlu0 %1793
      %1795 = vrot.lane.b32.xlu0 %v1729, 8
      %v1796 = vpop.permute.xlu0 %1795
      %1797 = vrot.lane.b32.xlu0 %v1733, 8
      %v1798 = vpop.permute.xlu0 %1797
      %1799 = vrot.lane.b32.xlu0 %v1736, 8
      %v1800 = vpop.permute.xlu0 %1799
      %vm1833 = vcmask 93248
      %1834 = vst.msk [vmem:[#allocation3] sm:$0xf] %vm1833, %v1738
      %1835 = vst.msk [vmem:[#allocation3 + $0x4] sm:$0xf] %vm1833, %v1740
      %1836 = vst.msk [vmem:[#allocation3 + $0x8] sm:$0xf] %vm1833, %v1742
      %1837 = vst.msk [vmem:[#allocation3 + $0xc] sm:$0xf] %vm1833, %v1744
      %1838 = vst.msk [vmem:[#allocation3 + $0x10] sm:$0xf] %vm1833, %v1746
      %1839 = vst.msk [vmem:[#allocation3 + $0x14] sm:$0xf] %vm1833, %v1748
      %1840 = vst.msk [vmem:[#allocation3 + $0x18] sm:$0xf] %vm1833, %v1750
      %1841 = vst.msk [vmem:[#allocation3 + $0x1c] sm:$0xf] %vm1833, %v1752
      %1842 = vst.msk [vmem:[#allocation3 + $0x20] sm:$0xf] %vm1833, %v1754
      %1843 = vst.msk [vmem:[#allocation3 + $0x24] sm:$0xf] %vm1833, %v1756
      %1844 = vst.msk [vmem:[#allocation3 + $0x28] sm:$0xf] %vm1833, %v1758
      %1845 = vst.msk [vmem:[#allocation3 + $0x2c] sm:$0xf] %vm1833, %v1760
      %1846 = vst.msk [vmem:[#allocation3 + $0x30] sm:$0xf] %vm1833, %v1762
      %1847 = vst.msk [vmem:[#allocation3 + $0x34] sm:$0xf] %vm1833, %v1764
      %1848 = vst.msk [vmem:[#allocation3 + $0x38] sm:$0xf] %vm1833, %v1766
      %1849 = vst.msk [vmem:[#allocation3 + $0x3c] sm:$0xf] %vm1833, %v1768
      %1850 = vst.msk [vmem:[#allocation3 + $0x40] sm:$0xf] %vm1833, %v1770
      %1851 = vst.msk [vmem:[#allocation3 + $0x44] sm:$0xf] %vm1833, %v1772
      %1852 = vst.msk [vmem:[#allocation3 + $0x48] sm:$0xf] %vm1833, %v1774
      %1853 = vst.msk [vmem:[#allocation3 + $0x4c] sm:$0xf] %vm1833, %v1776
      %1854 = vst.msk [vmem:[#allocation3 + $0x50] sm:$0xf] %vm1833, %v1778
      %1855 = vst.msk [vmem:[#allocation3 + $0x54] sm:$0xf] %vm1833, %v1780
      %1856 = vst.msk [vmem:[#allocation3 + $0x58] sm:$0xf] %vm1833, %v1782
      %1857 = vst.msk [vmem:[#allocation3 + $0x5c] sm:$0xf] %vm1833, %v1784
      %1858 = vst.msk [vmem:[#allocation3 + $0x60] sm:$0xf] %vm1833, %v1786
      %1859 = vst.msk [vmem:[#allocation3 + $0x64] sm:$0xf] %vm1833, %v1788
      %1860 = vst.msk [vmem:[#allocation3 + $0x68] sm:$0xf] %vm1833, %v1790
      %1861 = vst.msk [vmem:[#allocation3 + $0x6c] sm:$0xf] %vm1833, %v1792
      %1862 = vst.msk [vmem:[#allocation3 + $0x70] sm:$0xf] %vm1833, %v1794
      %1863 = vst.msk [vmem:[#allocation3 + $0x74] sm:$0xf] %vm1833, %v1796
      %1864 = vst.msk [vmem:[#allocation3 + $0x78] sm:$0xf] %vm1833, %v1798
      %1865 = vst.msk [vmem:[#allocation3 + $0x7c] sm:$0xf] %vm1833, %v1800
      %v1866 = vld [vmem:[%s559] sm:$0xf]
      %v1867 = vld [vmem:[%s559 + $0x4] sm:$0xf]
      %v1868 = vld [vmem:[%s559 + $0xc] sm:$0xf]
      %v1869 = vld [vmem:[%s559 + $0x10] sm:$0xf]
      %v1870 = vld [vmem:[%s559 + $0x18] sm:$0xf]
      %v1871 = vld [vmem:[%s559 + $0x1c] sm:$0xf]
      %v1872 = vld [vmem:[%s559 + $0x24] sm:$0xf]
      %v1873 = vld [vmem:[%s559 + $0x28] sm:$0xf]
      %v1874 = vld [vmem:[%s559 + $0x30] sm:$0xf]
      %v1875 = vld [vmem:[%s559 + $0x34] sm:$0xf]
      %v1876 = vld [vmem:[%s559 + $0x3c] sm:$0xf]
      %v1877 = vld [vmem:[%s559 + $0x40] sm:$0xf]
      %v1878 = vld [vmem:[%s559 + $0x48] sm:$0xf]
      %v1879 = vld [vmem:[%s559 + $0x4c] sm:$0xf]
      %v1880 = vld [vmem:[%s559 + $0x54] sm:$0xf]
      %v1881 = vld [vmem:[%s559 + $0x58] sm:$0xf]
      %v1882 = vld [vmem:[%s559 + $0x60] sm:$0xf]
      %v1883 = vld [vmem:[%s559 + $0x64] sm:$0xf]
      %v1884 = vld [vmem:[%s559 + $0x6c] sm:$0xf]
      %v1885 = vld [vmem:[%s559 + $0x70] sm:$0xf]
      %v1886 = vld [vmem:[%s559 + $0x78] sm:$0xf]
      %v1887 = vld [vmem:[%s559 + $0x7c] sm:$0xf]
      %v1888 = vld [vmem:[%s559 + $0x84] sm:$0xf]
      %v1889 = vld [vmem:[%s559 + $0x88] sm:$0xf]
      %v1890 = vld [vmem:[%s559 + $0x90] sm:$0xf]
      %v1891 = vld [vmem:[%s559 + $0x94] sm:$0xf]
      %v1892 = vld [vmem:[%s559 + $0x9c] sm:$0xf]
      %v1893 = vld [vmem:[%s559 + $0xa0] sm:$0xf]
      %v1894 = vld [vmem:[%s559 + $0xa8] sm:$0xf]
      %v1895 = vld [vmem:[%s559 + $0xac] sm:$0xf]
      %v1896 = vld [vmem:[%s559 + $0xb4] sm:$0xf]
      %v1897 = vld [vmem:[%s559 + $0xb8] sm:$0xf]
      %1930 = vrot.lane.b32.xlu0 %v1866, 12
      %v1931 = vpop.permute.xlu0 %1930
      %1932 = vrot.lane.b32.xlu0 %v1867, 12
      %v1933 = vpop.permute.xlu0 %1932
      %1934 = vrot.lane.b32.xlu0 %v1868, 12
      %v1935 = vpop.permute.xlu0 %1934
      %1936 = vrot.lane.b32.xlu0 %v1869, 12
      %v1937 = vpop.permute.xlu0 %1936
      %1938 = vrot.lane.b32.xlu0 %v1870, 12
      %v1939 = vpop.permute.xlu0 %1938
      %1940 = vrot.lane.b32.xlu0 %v1871, 12
      %v1941 = vpop.permute.xlu0 %1940
      %1942 = vrot.lane.b32.xlu0 %v1872, 12
      %v1943 = vpop.permute.xlu0 %1942
      %1944 = vrot.lane.b32.xlu0 %v1873, 12
      %v1945 = vpop.permute.xlu0 %1944
      %1946 = vrot.lane.b32.xlu0 %v1874, 12
      %v1947 = vpop.permute.xlu0 %1946
      %1948 = vrot.lane.b32.xlu0 %v1875, 12
      %v1949 = vpop.permute.xlu0 %1948
      %1950 = vrot.lane.b32.xlu0 %v1876, 12
      %v1951 = vpop.permute.xlu0 %1950
      %1952 = vrot.lane.b32.xlu0 %v1877, 12
      %v1953 = vpop.permute.xlu0 %1952
      %1954 = vrot.lane.b32.xlu0 %v1878, 12
      %v1955 = vpop.permute.xlu0 %1954
      %1956 = vrot.lane.b32.xlu0 %v1879, 12
      %v1957 = vpop.permute.xlu0 %1956
      %1958 = vrot.lane.b32.xlu0 %v1880, 12
      %v1959 = vpop.permute.xlu0 %1958
      %1960 = vrot.lane.b32.xlu0 %v1881, 12
      %v1961 = vpop.permute.xlu0 %1960
      %1962 = vrot.lane.b32.xlu0 %v1882, 12
      %v1963 = vpop.permute.xlu0 %1962
      %1964 = vrot.lane.b32.xlu0 %v1883, 12
      %v1965 = vpop.permute.xlu0 %1964
      %1966 = vrot.lane.b32.xlu0 %v1884, 12
      %v1967 = vpop.permute.xlu0 %1966
      %1968 = vrot.lane.b32.xlu0 %v1885, 12
      %v1969 = vpop.permute.xlu0 %1968
      %1970 = vrot.lane.b32.xlu0 %v1886, 12
      %v1971 = vpop.permute.xlu0 %1970
      %1972 = vrot.lane.b32.xlu0 %v1887, 12
      %v1973 = vpop.permute.xlu0 %1972
      %1974 = vrot.lane.b32.xlu0 %v1888, 12
      %v1975 = vpop.permute.xlu0 %1974
      %1976 = vrot.lane.b32.xlu0 %v1889, 12
      %v1977 = vpop.permute.xlu0 %1976
      %1978 = vrot.lane.b32.xlu0 %v1890, 12
      %v1979 = vpop.permute.xlu0 %1978
      %1980 = vrot.lane.b32.xlu0 %v1891, 12
      %v1981 = vpop.permute.xlu0 %1980
      %1982 = vrot.lane.b32.xlu0 %v1892, 12
      %v1983 = vpop.permute.xlu0 %1982
      %1984 = vrot.lane.b32.xlu0 %v1893, 12
      %v1985 = vpop.permute.xlu0 %1984
      %1986 = vrot.lane.b32.xlu0 %v1894, 12
      %v1987 = vpop.permute.xlu0 %1986
      %1988 = vrot.lane.b32.xlu0 %v1895, 12
      %v1989 = vpop.permute.xlu0 %1988
      %1990 = vrot.lane.b32.xlu0 %v1896, 12
      %v1991 = vpop.permute.xlu0 %1990
      %1992 = vrot.lane.b32.xlu0 %v1897, 12
      %v1993 = vpop.permute.xlu0 %1992
      %vm2026 = vcmask 126048
      %2027 = vst.msk [vmem:[#allocation3] sm:$0xf] %vm2026, %v1931
      %2028 = vst.msk [vmem:[#allocation3 + $0x4] sm:$0xf] %vm2026, %v1933
      %2029 = vst.msk [vmem:[#allocation3 + $0x8] sm:$0xf] %vm2026, %v1935
      %2030 = vst.msk [vmem:[#allocation3 + $0xc] sm:$0xf] %vm2026, %v1937
      %2031 = vst.msk [vmem:[#allocation3 + $0x10] sm:$0xf] %vm2026, %v1939
      %2032 = vst.msk [vmem:[#allocation3 + $0x14] sm:$0xf] %vm2026, %v1941
      %2033 = vst.msk [vmem:[#allocation3 + $0x18] sm:$0xf] %vm2026, %v1943
      %2034 = vst.msk [vmem:[#allocation3 + $0x1c] sm:$0xf] %vm2026, %v1945
      %2035 = vst.msk [vmem:[#allocation3 + $0x20] sm:$0xf] %vm2026, %v1947
      %2036 = vst.msk [vmem:[#allocation3 + $0x24] sm:$0xf] %vm2026, %v1949
      %2037 = vst.msk [vmem:[#allocation3 + $0x28] sm:$0xf] %vm2026, %v1951
      %2038 = vst.msk [vmem:[#allocation3 + $0x2c] sm:$0xf] %vm2026, %v1953
      %2039 = vst.msk [vmem:[#allocation3 + $0x30] sm:$0xf] %vm2026, %v1955
      %2040 = vst.msk [vmem:[#allocation3 + $0x34] sm:$0xf] %vm2026, %v1957
      %2041 = vst.msk [vmem:[#allocation3 + $0x38] sm:$0xf] %vm2026, %v1959
      %2042 = vst.msk [vmem:[#allocation3 + $0x3c] sm:$0xf] %vm2026, %v1961
      %2043 = vst.msk [vmem:[#allocation3 + $0x40] sm:$0xf] %vm2026, %v1963
      %2044 = vst.msk [vmem:[#allocation3 + $0x44] sm:$0xf] %vm2026, %v1965
      %2045 = vst.msk [vmem:[#allocation3 + $0x48] sm:$0xf] %vm2026, %v1967
      %2046 = vst.msk [vmem:[#allocation3 + $0x4c] sm:$0xf] %vm2026, %v1969
      %2047 = vst.msk [vmem:[#allocation3 + $0x50] sm:$0xf] %vm2026, %v1971
      %2048 = vst.msk [vmem:[#allocation3 + $0x54] sm:$0xf] %vm2026, %v1973
      %2049 = vst.msk [vmem:[#allocation3 + $0x58] sm:$0xf] %vm2026, %v1975
      %2050 = vst.msk [vmem:[#allocation3 + $0x5c] sm:$0xf] %vm2026, %v1977
      %2051 = vst.msk [vmem:[#allocation3 + $0x60] sm:$0xf] %vm2026, %v1979
      %2052 = vst.msk [vmem:[#allocation3 + $0x64] sm:$0xf] %vm2026, %v1981
      %2053 = vst.msk [vmem:[#allocation3 + $0x68] sm:$0xf] %vm2026, %v1983
      %2054 = vst.msk [vmem:[#allocation3 + $0x6c] sm:$0xf] %vm2026, %v1985
      %2055 = vst.msk [vmem:[#allocation3 + $0x70] sm:$0xf] %vm2026, %v1987
      %2056 = vst.msk [vmem:[#allocation3 + $0x74] sm:$0xf] %vm2026, %v1989
      %2057 = vst.msk [vmem:[#allocation3 + $0x78] sm:$0xf] %vm2026, %v1991
      %2058 = vst.msk [vmem:[#allocation3 + $0x7c] sm:$0xf] %vm2026, %v1993
      %v2059 = vld [vmem:[%s559] sm:$0xf]
      %v2060 = vld [vmem:[%s559 + $0x4] sm:$0xf]
      %v2061 = vld [vmem:[%s559 + $0x8] sm:$0x1]
      %v2062 = vld [vmem:[%s559 + $0xc] sm:$0xf]
      %v2063 = vld [vmem:[%s559 + $0x10] sm:$0xf]
      %v2064 = vld [vmem:[%s559 + $0x14] sm:$0x1]
      %v2065 = vld [vmem:[%s559 + $0x18] sm:$0xf]
      %v2066 = vld [vmem:[%s559 + $0x1c] sm:$0xf]
      %v2067 = vld [vmem:[%s559 + $0x20] sm:$0x1]
      %v2068 = vld [vmem:[%s559 + $0x24] sm:$0xf]
      %v2069 = vld [vmem:[%s559 + $0x28] sm:$0xf]
      %v2070 = vld [vmem:[%s559 + $0x2c] sm:$0x1]
      %v2071 = vld [vmem:[%s559 + $0x30] sm:$0xf]
      %v2072 = vld [vmem:[%s559 + $0x34] sm:$0xf]
      %v2073 = vld [vmem:[%s559 + $0x38] sm:$0x1]
      %v2074 = vld [vmem:[%s559 + $0x3c] sm:$0xf]
      %v2075 = vld [vmem:[%s559 + $0x40] sm:$0xf]
      %v2076 = vld [vmem:[%s559 + $0x44] sm:$0x1]
      %v2077 = vld [vmem:[%s559 + $0x48] sm:$0xf]
      %v2078 = vld [vmem:[%s559 + $0x4c] sm:$0xf]
      %v2079 = vld [vmem:[%s559 + $0x50] sm:$0x1]
      %v2080 = vld [vmem:[%s559 + $0x54] sm:$0xf]
      %v2081 = vld [vmem:[%s559 + $0x58] sm:$0xf]
      %v2082 = vld [vmem:[%s559 + $0x5c] sm:$0x1]
      %v2083 = vld [vmem:[%s559 + $0x60] sm:$0xf]
      %v2084 = vld [vmem:[%s559 + $0x64] sm:$0xf]
      %v2085 = vld [vmem:[%s559 + $0x68] sm:$0x1]
      %v2086 = vld [vmem:[%s559 + $0x6c] sm:$0xf]
      %v2087 = vld [vmem:[%s559 + $0x70] sm:$0xf]
      %v2088 = vld [vmem:[%s559 + $0x74] sm:$0x1]
      %v2089 = vld [vmem:[%s559 + $0x78] sm:$0xf]
      %v2090 = vld [vmem:[%s559 + $0x7c] sm:$0xf]
      %v2091 = vld [vmem:[%s559 + $0x80] sm:$0x1]
      %v2092 = vld [vmem:[%s559 + $0x84] sm:$0xf]
      %v2093 = vld [vmem:[%s559 + $0x88] sm:$0xf]
      %v2094 = vld [vmem:[%s559 + $0x8c] sm:$0x1]
      %v2095 = vld [vmem:[%s559 + $0x90] sm:$0xf]
      %v2096 = vld [vmem:[%s559 + $0x94] sm:$0xf]
      %v2097 = vld [vmem:[%s559 + $0x98] sm:$0x1]
      %v2098 = vld [vmem:[%s559 + $0x9c] sm:$0xf]
      %v2099 = vld [vmem:[%s559 + $0xa0] sm:$0xf]
      %v2100 = vld [vmem:[%s559 + $0xa4] sm:$0x1]
      %v2101 = vld [vmem:[%s559 + $0xa8] sm:$0xf]
      %v2102 = vld [vmem:[%s559 + $0xac] sm:$0xf]
      %v2103 = vld [vmem:[%s559 + $0xb0] sm:$0x1]
      %v2104 = vld [vmem:[%s559 + $0xb4] sm:$0xf]
      %v2105 = vld [vmem:[%s559 + $0xb8] sm:$0xf]
      %v2106 = vld [vmem:[%s559 + $0xbc] sm:$0x1]
      %v2108 = vshrl.u32 %v2059, 16
      %v2110 = vrot.slane %v2108, 4
      %v2111 = vshll.u32 %v2059, 16
      %v2113 = vrot.slane %v2111, 5
      %v2114 = vor.u32 %v2110, %v2113
      %v2115 = vrot.slane %v2114, 4
      %v2117 = vshll.u32 %v2060, 16
      %v2119 = vrot.slane %v2117, 5
      %v2120 = vsel %vm1012, %v2115, %v2119
      %v2121 = vshrl.u32 %v2060, 16
      %v2123 = vrot.slane %v2121, 4
      %v2124 = vor.u32 %v2123, %v2119
      %v2125 = vrot.slane %v2124, 4
      %v2127 = vshll.u32 %v2061, 16
      %v2129 = vrot.slane %v2127, 5
      %v2130 = vsel %vm1012, %v2125, %v2129
      %v2132 = vshrl.u32 %v2062, 16
      %v2134 = vrot.slane %v2132, 4
      %v2135 = vshll.u32 %v2062, 16
      %v2137 = vrot.slane %v2135, 5
      %v2138 = vor.u32 %v2134, %v2137
      %v2139 = vrot.slane %v2138, 4
      %v2141 = vshll.u32 %v2063, 16
      %v2143 = vrot.slane %v2141, 5
      %v2144 = vsel %vm1012, %v2139, %v2143
      %v2145 = vshrl.u32 %v2063, 16
      %v2147 = vrot.slane %v2145, 4
      %v2148 = vor.u32 %v2147, %v2143
      %v2149 = vrot.slane %v2148, 4
      %v2151 = vshll.u32 %v2064, 16
      %v2153 = vrot.slane %v2151, 5
      %v2154 = vsel %vm1012, %v2149, %v2153
      %v2156 = vshrl.u32 %v2065, 16
      %v2158 = vrot.slane %v2156, 4
      %v2159 = vshll.u32 %v2065, 16
      %v2161 = vrot.slane %v2159, 5
      %v2162 = vor.u32 %v2158, %v2161
      %v2163 = vrot.slane %v2162, 4
      %v2165 = vshll.u32 %v2066, 16
      %v2167 = vrot.slane %v2165, 5
      %v2168 = vsel %vm1012, %v2163, %v2167
      %v2169 = vshrl.u32 %v2066, 16
      %v2171 = vrot.slane %v2169, 4
      %v2172 = vor.u32 %v2171, %v2167
      %v2173 = vrot.slane %v2172, 4
      %v2175 = vshll.u32 %v2067, 16
      %v2177 = vrot.slane %v2175, 5
      %v2178 = vsel %vm1012, %v2173, %v2177
      %v2180 = vshrl.u32 %v2068, 16
      %v2182 = vrot.slane %v2180, 4
      %v2183 = vshll.u32 %v2068, 16
      %v2185 = vrot.slane %v2183, 5
      %v2186 = vor.u32 %v2182, %v2185
      %v2187 = vrot.slane %v2186, 4
      %v2189 = vshll.u32 %v2069, 16
      %v2191 = vrot.slane %v2189, 5
      %v2192 = vsel %vm1012, %v2187, %v2191
      %v2193 = vshrl.u32 %v2069, 16
      %v2195 = vrot.slane %v2193, 4
      %v2196 = vor.u32 %v2195, %v2191
      %v2197 = vrot.slane %v2196, 4
      %v2199 = vshll.u32 %v2070, 16
      %v2201 = vrot.slane %v2199, 5
      %v2202 = vsel %vm1012, %v2197, %v2201
      %v2204 = vshrl.u32 %v2071, 16
      %v2206 = vrot.slane %v2204, 4
      %v2207 = vshll.u32 %v2071, 16
      %v2209 = vrot.slane %v2207, 5
      %v2210 = vor.u32 %v2206, %v2209
      %v2211 = vrot.slane %v2210, 4
      %v2213 = vshll.u32 %v2072, 16
      %v2215 = vrot.slane %v2213, 5
      %v2216 = vsel %vm1012, %v2211, %v2215
      %v2217 = vshrl.u32 %v2072, 16
      %v2219 = vrot.slane %v2217, 4
      %v2220 = vor.u32 %v2219, %v2215
      %v2221 = vrot.slane %v2220, 4
      %v2223 = vshll.u32 %v2073, 16
      %v2225 = vrot.slane %v2223, 5
      %v2226 = vsel %vm1012, %v2221, %v2225
      %v2228 = vshrl.u32 %v2074, 16
      %v2230 = vrot.slane %v2228, 4
      %v2231 = vshll.u32 %v2074, 16
      %v2233 = vrot.slane %v2231, 5
      %v2234 = vor.u32 %v2230, %v2233
      %v2235 = vrot.slane %v2234, 4
      %v2237 = vshll.u32 %v2075, 16
      %v2239 = vrot.slane %v2237, 5
      %v2240 = vsel %vm1012, %v2235, %v2239
      %v2241 = vshrl.u32 %v2075, 16
      %v2243 = vrot.slane %v2241, 4
      %v2244 = vor.u32 %v2243, %v2239
      %v2245 = vrot.slane %v2244, 4
      %v2247 = vshll.u32 %v2076, 16
      %v2249 = vrot.slane %v2247, 5
      %v2250 = vsel %vm1012, %v2245, %v2249
      %v2252 = vshrl.u32 %v2077, 16
      %v2254 = vrot.slane %v2252, 4
      %v2255 = vshll.u32 %v2077, 16
      %v2257 = vrot.slane %v2255, 5
      %v2258 = vor.u32 %v2254, %v2257
      %v2259 = vrot.slane %v2258, 4
      %v2261 = vshll.u32 %v2078, 16
      %v2263 = vrot.slane %v2261, 5
      %v2264 = vsel %vm1012, %v2259, %v2263
      %v2265 = vshrl.u32 %v2078, 16
      %v2267 = vrot.slane %v2265, 4
      %v2268 = vor.u32 %v2267, %v2263
      %v2269 = vrot.slane %v2268, 4
      %v2271 = vshll.u32 %v2079, 16
      %v2273 = vrot.slane %v2271, 5
      %v2274 = vsel %vm1012, %v2269, %v2273
      %v2276 = vshrl.u32 %v2080, 16
      %v2278 = vrot.slane %v2276, 4
      %v2279 = vshll.u32 %v2080, 16
      %v2281 = vrot.slane %v2279, 5
      %v2282 = vor.u32 %v2278, %v2281
      %v2283 = vrot.slane %v2282, 4
      %v2285 = vshll.u32 %v2081, 16
      %v2287 = vrot.slane %v2285, 5
      %v2288 = vsel %vm1012, %v2283, %v2287
      %v2289 = vshrl.u32 %v2081, 16
      %v2291 = vrot.slane %v2289, 4
      %v2292 = vor.u32 %v2291, %v2287
      %v2293 = vrot.slane %v2292, 4
      %v2295 = vshll.u32 %v2082, 16
      %v2297 = vrot.slane %v2295, 5
      %v2298 = vsel %vm1012, %v2293, %v2297
      %v2300 = vshrl.u32 %v2083, 16
      %v2302 = vrot.slane %v2300, 4
      %v2303 = vshll.u32 %v2083, 16
      %v2305 = vrot.slane %v2303, 5
      %v2306 = vor.u32 %v2302, %v2305
      %v2307 = vrot.slane %v2306, 4
      %v2309 = vshll.u32 %v2084, 16
      %v2311 = vrot.slane %v2309, 5
      %v2312 = vsel %vm1012, %v2307, %v2311
      %v2313 = vshrl.u32 %v2084, 16
      %v2315 = vrot.slane %v2313, 4
      %v2316 = vor.u32 %v2315, %v2311
      %v2317 = vrot.slane %v2316, 4
      %v2319 = vshll.u32 %v2085, 16
      %v2321 = vrot.slane %v2319, 5
      %v2322 = vsel %vm1012, %v2317, %v2321
      %v2324 = vshrl.u32 %v2086, 16
      %v2326 = vrot.slane %v2324, 4
      %v2327 = vshll.u32 %v2086, 16
      %v2329 = vrot.slane %v2327, 5
      %v2330 = vor.u32 %v2326, %v2329
      %v2331 = vrot.slane %v2330, 4
      %v2333 = vshll.u32 %v2087, 16
      %v2335 = vrot.slane %v2333, 5
      %v2336 = vsel %vm1012, %v2331, %v2335
      %v2337 = vshrl.u32 %v2087, 16
      %v2339 = vrot.slane %v2337, 4
      %v2340 = vor.u32 %v2339, %v2335
      %v2341 = vrot.slane %v2340, 4
      %v2343 = vshll.u32 %v2088, 16
      %v2345 = vrot.slane %v2343, 5
      %v2346 = vsel %vm1012, %v2341, %v2345
      %v2348 = vshrl.u32 %v2089, 16
      %v2350 = vrot.slane %v2348, 4
      %v2351 = vshll.u32 %v2089, 16
      %v2353 = vrot.slane %v2351, 5
      %v2354 = vor.u32 %v2350, %v2353
      %v2355 = vrot.slane %v2354, 4
      %v2357 = vshll.u32 %v2090, 16
      %v2359 = vrot.slane %v2357, 5
      %v2360 = vsel %vm1012, %v2355, %v2359
      %v2361 = vshrl.u32 %v2090, 16
      %v2363 = vrot.slane %v2361, 4
      %v2364 = vor.u32 %v2363, %v2359
      %v2365 = vrot.slane %v2364, 4
      %v2367 = vshll.u32 %v2091, 16
      %v2369 = vrot.slane %v2367, 5
      %v2370 = vsel %vm1012, %v2365, %v2369
      %v2372 = vshrl.u32 %v2092, 16
      %v2374 = vrot.slane %v2372, 4
      %v2375 = vshll.u32 %v2092, 16
      %v2377 = vrot.slane %v2375, 5
      %v2378 = vor.u32 %v2374, %v2377
      %v2379 = vrot.slane %v2378, 4
      %v2381 = vshll.u32 %v2093, 16
      %v2383 = vrot.slane %v2381, 5
      %v2384 = vsel %vm1012, %v2379, %v2383
      %v2385 = vshrl.u32 %v2093, 16
      %v2387 = vrot.slane %v2385, 4
      %v2388 = vor.u32 %v2387, %v2383
      %v2389 = vrot.slane %v2388, 4
      %v2391 = vshll.u32 %v2094, 16
      %v2393 = vrot.slane %v2391, 5
      %v2394 = vsel %vm1012, %v2389, %v2393
      %v2396 = vshrl.u32 %v2095, 16
      %v2398 = vrot.slane %v2396, 4
      %v2399 = vshll.u32 %v2095, 16
      %v2401 = vrot.slane %v2399, 5
      %v2402 = vor.u32 %v2398, %v2401
      %v2403 = vrot.slane %v2402, 4
      %v2405 = vshll.u32 %v2096, 16
      %v2407 = vrot.slane %v2405, 5
      %v2408 = vsel %vm1012, %v2403, %v2407
      %v2409 = vshrl.u32 %v2096, 16
      %v2411 = vrot.slane %v2409, 4
      %v2412 = vor.u32 %v2411, %v2407
      %v2413 = vrot.slane %v2412, 4
      %v2415 = vshll.u32 %v2097, 16
      %v2417 = vrot.slane %v2415, 5
      %v2418 = vsel %vm1012, %v2413, %v2417
      %v2420 = vshrl.u32 %v2098, 16
      %v2422 = vrot.slane %v2420, 4
      %v2423 = vshll.u32 %v2098, 16
      %v2425 = vrot.slane %v2423, 5
      %v2426 = vor.u32 %v2422, %v2425
      %v2427 = vrot.slane %v2426, 4
      %v2429 = vshll.u32 %v2099, 16
      %v2431 = vrot.slane %v2429, 5
      %v2432 = vsel %vm1012, %v2427, %v2431
      %v2433 = vshrl.u32 %v2099, 16
      %v2435 = vrot.slane %v2433, 4
      %v2436 = vor.u32 %v2435, %v2431
      %v2437 = vrot.slane %v2436, 4
      %v2439 = vshll.u32 %v2100, 16
      %v2441 = vrot.slane %v2439, 5
      %v2442 = vsel %vm1012, %v2437, %v2441
      %v2444 = vshrl.u32 %v2101, 16
      %v2446 = vrot.slane %v2444, 4
      %v2447 = vshll.u32 %v2101, 16
      %v2449 = vrot.slane %v2447, 5
      %v2450 = vor.u32 %v2446, %v2449
      %v2451 = vrot.slane %v2450, 4
      %v2453 = vshll.u32 %v2102, 16
      %v2455 = vrot.slane %v2453, 5
      %v2456 = vsel %vm1012, %v2451, %v2455
      %v2457 = vshrl.u32 %v2102, 16
      %v2459 = vrot.slane %v2457, 4
      %v2460 = vor.u32 %v2459, %v2455
      %v2461 = vrot.slane %v2460, 4
      %v2463 = vshll.u32 %v2103, 16
      %v2465 = vrot.slane %v2463, 5
      %v2466 = vsel %vm1012, %v2461, %v2465
      %v2468 = vshrl.u32 %v2104, 16
      %v2470 = vrot.slane %v2468, 4
      %v2471 = vshll.u32 %v2104, 16
      %v2473 = vrot.slane %v2471, 5
      %v2474 = vor.u32 %v2470, %v2473
      %v2475 = vrot.slane %v2474, 4
      %v2477 = vshll.u32 %v2105, 16
      %v2479 = vrot.slane %v2477, 5
      %v2480 = vsel %vm1012, %v2475, %v2479
      %v2481 = vshrl.u32 %v2105, 16
      %v2483 = vrot.slane %v2481, 4
      %v2484 = vor.u32 %v2483, %v2479
      %v2485 = vrot.slane %v2484, 4
      %v2487 = vshll.u32 %v2106, 16
      %v2489 = vrot.slane %v2487, 5
      %v2490 = vsel %vm1012, %v2485, %v2489
      %2491 = vrot.lane.b32.xlu0 %v2120, 16
      %v2492 = vpop.permute.xlu0 %2491
      %2493 = vrot.lane.b32.xlu0 %v2130, 16
      %v2494 = vpop.permute.xlu0 %2493
      %2495 = vrot.lane.b32.xlu0 %v2144, 16
      %v2496 = vpop.permute.xlu0 %2495
      %2497 = vrot.lane.b32.xlu0 %v2154, 16
      %v2498 = vpop.permute.xlu0 %2497
      %2499 = vrot.lane.b32.xlu0 %v2168, 16
      %v2500 = vpop.permute.xlu0 %2499
      %2501 = vrot.lane.b32.xlu0 %v2178, 16
      %v2502 = vpop.permute.xlu0 %2501
      %2503 = vrot.lane.b32.xlu0 %v2192, 16
      %v2504 = vpop.permute.xlu0 %2503
      %2505 = vrot.lane.b32.xlu0 %v2202, 16
      %v2506 = vpop.permute.xlu0 %2505
      %2507 = vrot.lane.b32.xlu0 %v2216, 16
      %v2508 = vpop.permute.xlu0 %2507
      %2509 = vrot.lane.b32.xlu0 %v2226, 16
      %v2510 = vpop.permute.xlu0 %2509
      %2511 = vrot.lane.b32.xlu0 %v2240, 16
      %v2512 = vpop.permute.xlu0 %2511
      %2513 = vrot.lane.b32.xlu0 %v2250, 16
      %v2514 = vpop.permute.xlu0 %2513
      %2515 = vrot.lane.b32.xlu0 %v2264, 16
      %v2516 = vpop.permute.xlu0 %2515
      %2517 = vrot.lane.b32.xlu0 %v2274, 16
      %v2518 = vpop.permute.xlu0 %2517
      %2519 = vrot.lane.b32.xlu0 %v2288, 16
      %v2520 = vpop.permute.xlu0 %2519
      %2521 = vrot.lane.b32.xlu0 %v2298, 16
      %v2522 = vpop.permute.xlu0 %2521
      %2523 = vrot.lane.b32.xlu0 %v2312, 16
      %v2524 = vpop.permute.xlu0 %2523
      %2525 = vrot.lane.b32.xlu0 %v2322, 16
      %v2526 = vpop.permute.xlu0 %2525
      %2527 = vrot.lane.b32.xlu0 %v2336, 16
      %v2528 = vpop.permute.xlu0 %2527
      %2529 = vrot.lane.b32.xlu0 %v2346, 16
      %v2530 = vpop.permute.xlu0 %2529
      %2531 = vrot.lane.b32.xlu0 %v2360, 16
      %v2532 = vpop.permute.xlu0 %2531
      %2533 = vrot.lane.b32.xlu0 %v2370, 16
      %v2534 = vpop.permute.xlu0 %2533
      %2535 = vrot.lane.b32.xlu0 %v2384, 16
      %v2536 = vpop.permute.xlu0 %2535
      %2537 = vrot.lane.b32.xlu0 %v2394, 16
      %v2538 = vpop.permute.xlu0 %2537
      %2539 = vrot.lane.b32.xlu0 %v2408, 16
      %v2540 = vpop.permute.xlu0 %2539
      %2541 = vrot.lane.b32.xlu0 %v2418, 16
      %v2542 = vpop.permute.xlu0 %2541
      %2543 = vrot.lane.b32.xlu0 %v2432, 16
      %v2544 = vpop.permute.xlu0 %2543
      %2545 = vrot.lane.b32.xlu0 %v2442, 16
      %v2546 = vpop.permute.xlu0 %2545
      %2547 = vrot.lane.b32.xlu0 %v2456, 16
      %v2548 = vpop.permute.xlu0 %2547
      %2549 = vrot.lane.b32.xlu0 %v2466, 16
      %v2550 = vpop.permute.xlu0 %2549
      %2551 = vrot.lane.b32.xlu0 %v2480, 16
      %v2552 = vpop.permute.xlu0 %2551
      %2553 = vrot.lane.b32.xlu0 %v2490, 16
      %v2554 = vpop.permute.xlu0 %2553
      %vm2587 = vcmask 158848
      %2588 = vst.msk [vmem:[#allocation3] sm:$0xf] %vm2587, %v2492
      %2589 = vst.msk [vmem:[#allocation3 + $0x4] sm:$0xf] %vm2587, %v2494
      %2590 = vst.msk [vmem:[#allocation3 + $0x8] sm:$0xf] %vm2587, %v2496
      %2591 = vst.msk [vmem:[#allocation3 + $0xc] sm:$0xf] %vm2587, %v2498
      %2592 = vst.msk [vmem:[#allocation3 + $0x10] sm:$0xf] %vm2587, %v2500
      %2593 = vst.msk [vmem:[#allocation3 + $0x14] sm:$0xf] %vm2587, %v2502
      %2594 = vst.msk [vmem:[#allocation3 + $0x18] sm:$0xf] %vm2587, %v2504
      %2595 = vst.msk [vmem:[#allocation3 + $0x1c] sm:$0xf] %vm2587, %v2506
      %2596 = vst.msk [vmem:[#allocation3 + $0x20] sm:$0xf] %vm2587, %v2508
      %2597 = vst.msk [vmem:[#allocation3 + $0x24] sm:$0xf] %vm2587, %v2510
      %2598 = vst.msk [vmem:[#allocation3 + $0x28] sm:$0xf] %vm2587, %v2512
      %2599 = vst.msk [vmem:[#allocation3 + $0x2c] sm:$0xf] %vm2587, %v2514
      %2600 = vst.msk [vmem:[#allocation3 + $0x30] sm:$0xf] %vm2587, %v2516
      %2601 = vst.msk [vmem:[#allocation3 + $0x34] sm:$0xf] %vm2587, %v2518
      %2602 = vst.msk [vmem:[#allocation3 + $0x38] sm:$0xf] %vm2587, %v2520
      %2603 = vst.msk [vmem:[#allocation3 + $0x3c] sm:$0xf] %vm2587, %v2522
      %2604 = vst.msk [vmem:[#allocation3 + $0x40] sm:$0xf] %vm2587, %v2524
      %2605 = vst.msk [vmem:[#allocation3 + $0x44] sm:$0xf] %vm2587, %v2526
      %2606 = vst.msk [vmem:[#allocation3 + $0x48] sm:$0xf] %vm2587, %v2528
      %2607 = vst.msk [vmem:[#allocation3 + $0x4c] sm:$0xf] %vm2587, %v2530
      %2608 = vst.msk [vmem:[#allocation3 + $0x50] sm:$0xf] %vm2587, %v2532
      %2609 = vst.msk [vmem:[#allocation3 + $0x54] sm:$0xf] %vm2587, %v2534
      %2610 = vst.msk [vmem:[#allocation3 + $0x58] sm:$0xf] %vm2587, %v2536
      %2611 = vst.msk [vmem:[#allocation3 + $0x5c] sm:$0xf] %vm2587, %v2538
      %2612 = vst.msk [vmem:[#allocation3 + $0x60] sm:$0xf] %vm2587, %v2540
      %2613 = vst.msk [vmem:[#allocation3 + $0x64] sm:$0xf] %vm2587, %v2542
      %2614 = vst.msk [vmem:[#allocation3 + $0x68] sm:$0xf] %vm2587, %v2544
      %2615 = vst.msk [vmem:[#allocation3 + $0x6c] sm:$0xf] %vm2587, %v2546
      %2616 = vst.msk [vmem:[#allocation3 + $0x70] sm:$0xf] %vm2587, %v2548
      %2617 = vst.msk [vmem:[#allocation3 + $0x74] sm:$0xf] %vm2587, %v2550
      %2618 = vst.msk [vmem:[#allocation3 + $0x78] sm:$0xf] %vm2587, %v2552
      %2619 = vst.msk [vmem:[#allocation3 + $0x7c] sm:$0xf] %vm2587, %v2554
      %v2620 = vld [vmem:[%s559] sm:$0xe]
      %v2621 = vld [vmem:[%s559 + $0x4] sm:$0xf]
      %v2622 = vld [vmem:[%s559 + $0x8] sm:$0x1]
      %v2623 = vld [vmem:[%s559 + $0xc] sm:$0xe]
      %v2624 = vld [vmem:[%s559 + $0x10] sm:$0xf]
      %v2625 = vld [vmem:[%s559 + $0x14] sm:$0x1]
      %v2626 = vld [vmem:[%s559 + $0x18] sm:$0xe]
      %v2627 = vld [vmem:[%s559 + $0x1c] sm:$0xf]
      %v2628 = vld [vmem:[%s559 + $0x20] sm:$0x1]
      %v2629 = vld [vmem:[%s559 + $0x24] sm:$0xe]
      %v2630 = vld [vmem:[%s559 + $0x28] sm:$0xf]
      %v2631 = vld [vmem:[%s559 + $0x2c] sm:$0x1]
      %v2632 = vld [vmem:[%s559 + $0x30] sm:$0xe]
      %v2633 = vld [vmem:[%s559 + $0x34] sm:$0xf]
      %v2634 = vld [vmem:[%s559 + $0x38] sm:$0x1]
      %v2635 = vld [vmem:[%s559 + $0x3c] sm:$0xe]
      %v2636 = vld [vmem:[%s559 + $0x40] sm:$0xf]
      %v2637 = vld [vmem:[%s559 + $0x44] sm:$0x1]
      %v2638 = vld [vmem:[%s559 + $0x48] sm:$0xe]
      %v2639 = vld [vmem:[%s559 + $0x4c] sm:$0xf]
      %v2640 = vld [vmem:[%s559 + $0x50] sm:$0x1]
      %v2641 = vld [vmem:[%s559 + $0x54] sm:$0xe]
      %v2642 = vld [vmem:[%s559 + $0x58] sm:$0xf]
      %v2643 = vld [vmem:[%s559 + $0x5c] sm:$0x1]
      %v2644 = vld [vmem:[%s559 + $0x60] sm:$0xe]
      %v2645 = vld [vmem:[%s559 + $0x64] sm:$0xf]
      %v2646 = vld [vmem:[%s559 + $0x68] sm:$0x1]
      %v2647 = vld [vmem:[%s559 + $0x6c] sm:$0xe]
      %v2648 = vld [vmem:[%s559 + $0x70] sm:$0xf]
      %v2649 = vld [vmem:[%s559 + $0x74] sm:$0x1]
      %v2650 = vld [vmem:[%s559 + $0x78] sm:$0xe]
      %v2651 = vld [vmem:[%s559 + $0x7c] sm:$0xf]
      %v2652 = vld [vmem:[%s559 + $0x80] sm:$0x1]
      %v2653 = vld [vmem:[%s559 + $0x84] sm:$0xe]
      %v2654 = vld [vmem:[%s559 + $0x88] sm:$0xf]
      %v2655 = vld [vmem:[%s559 + $0x8c] sm:$0x1]
      %v2656 = vld [vmem:[%s559 + $0x90] sm:$0xe]
      %v2657 = vld [vmem:[%s559 + $0x94] sm:$0xf]
      %v2658 = vld [vmem:[%s559 + $0x98] sm:$0x1]
      %v2659 = vld [vmem:[%s559 + $0x9c] sm:$0xe]
      %v2660 = vld [vmem:[%s559 + $0xa0] sm:$0xf]
      %v2661 = vld [vmem:[%s559 + $0xa4] sm:$0x1]
      %v2662 = vld [vmem:[%s559 + $0xa8] sm:$0xe]
      %v2663 = vld [vmem:[%s559 + $0xac] sm:$0xf]
      %v2664 = vld [vmem:[%s559 + $0xb0] sm:$0x1]
      %v2665 = vld [vmem:[%s559 + $0xb4] sm:$0xe]
      %v2666 = vld [vmem:[%s559 + $0xb8] sm:$0xf]
      %v2667 = vld [vmem:[%s559 + $0xbc] sm:$0x1]
      %v2716 = vrot.slane %v2620, 5
      %v2717 = vrot.slane %v2716, 4
      %v2718 = vrot.slane %v2621, 5
      %v2719 = vsel %vm1624, %v2717, %v2718
      %v2720 = vrot.slane %v2718, 4
      %v2721 = vrot.slane %v2622, 5
      %v2722 = vsel %vm1624, %v2720, %v2721
      %v2723 = vrot.slane %v2623, 5
      %v2724 = vrot.slane %v2723, 4
      %v2725 = vrot.slane %v2624, 5
      %v2726 = vsel %vm1624, %v2724, %v2725
      %v2727 = vrot.slane %v2725, 4
      %v2728 = vrot.slane %v2625, 5
      %v2729 = vsel %vm1624, %v2727, %v2728
      %v2730 = vrot.slane %v2626, 5
      %v2731 = vrot.slane %v2730, 4
      %v2732 = vrot.slane %v2627, 5
      %v2733 = vsel %vm1624, %v2731, %v2732
      %v2734 = vrot.slane %v2732, 4
      %v2735 = vrot.slane %v2628, 5
      %v2736 = vsel %vm1624, %v2734, %v2735
      %v2737 = vrot.slane %v2629, 5
      %v2738 = vrot.slane %v2737, 4
      %v2739 = vrot.slane %v2630, 5
      %v2740 = vsel %vm1624, %v2738, %v2739
      %v2741 = vrot.slane %v2739, 4
      %v2742 = vrot.slane %v2631, 5
      %v2743 = vsel %vm1624, %v2741, %v2742
      %v2744 = vrot.slane %v2632, 5
      %v2745 = vrot.slane %v2744, 4
      %v2746 = vrot.slane %v2633, 5
      %v2747 = vsel %vm1624, %v2745, %v2746
      %v2748 = vrot.slane %v2746, 4
      %v2749 = vrot.slane %v2634, 5
      %v2750 = vsel %vm1624, %v2748, %v2749
      %v2751 = vrot.slane %v2635, 5
      %v2752 = vrot.slane %v2751, 4
      %v2753 = vrot.slane %v2636, 5
      %v2754 = vsel %vm1624, %v2752, %v2753
      %v2755 = vrot.slane %v2753, 4
      %v2756 = vrot.slane %v2637, 5
      %v2757 = vsel %vm1624, %v2755, %v2756
      %v2758 = vrot.slane %v2638, 5
      %v2759 = vrot.slane %v2758, 4
      %v2760 = vrot.slane %v2639, 5
      %v2761 = vsel %vm1624, %v2759, %v2760
      %v2762 = vrot.slane %v2760, 4
      %v2763 = vrot.slane %v2640, 5
      %v2764 = vsel %vm1624, %v2762, %v2763
      %v2765 = vrot.slane %v2641, 5
      %v2766 = vrot.slane %v2765, 4
      %v2767 = vrot.slane %v2642, 5
      %v2768 = vsel %vm1624, %v2766, %v2767
      %v2769 = vrot.slane %v2767, 4
      %v2770 = vrot.slane %v2643, 5
      %v2771 = vsel %vm1624, %v2769, %v2770
      %v2772 = vrot.slane %v2644, 5
      %v2773 = vrot.slane %v2772, 4
      %v2774 = vrot.slane %v2645, 5
      %v2775 = vsel %vm1624, %v2773, %v2774
      %v2776 = vrot.slane %v2774, 4
      %v2777 = vrot.slane %v2646, 5
      %v2778 = vsel %vm1624, %v2776, %v2777
      %v2779 = vrot.slane %v2647, 5
      %v2780 = vrot.slane %v2779, 4
      %v2781 = vrot.slane %v2648, 5
      %v2782 = vsel %vm1624, %v2780, %v2781
      %v2783 = vrot.slane %v2781, 4
      %v2784 = vrot.slane %v2649, 5
      %v2785 = vsel %vm1624, %v2783, %v2784
      %v2786 = vrot.slane %v2650, 5
      %v2787 = vrot.slane %v2786, 4
      %v2788 = vrot.slane %v2651, 5
      %v2789 = vsel %vm1624, %v2787, %v2788
      %v2790 = vrot.slane %v2788, 4
      %v2791 = vrot.slane %v2652, 5
      %v2792 = vsel %vm1624, %v2790, %v2791
      %v2793 = vrot.slane %v2653, 5
      %v2794 = vrot.slane %v2793, 4
      %v2795 = vrot.slane %v2654, 5
      %v2796 = vsel %vm1624, %v2794, %v2795
      %v2797 = vrot.slane %v2795, 4
      %v2798 = vrot.slane %v2655, 5
      %v2799 = vsel %vm1624, %v2797, %v2798
      %v2800 = vrot.slane %v2656, 5
      %v2801 = vrot.slane %v2800, 4
      %v2802 = vrot.slane %v2657, 5
      %v2803 = vsel %vm1624, %v2801, %v2802
      %v2804 = vrot.slane %v2802, 4
      %v2805 = vrot.slane %v2658, 5
      %v2806 = vsel %vm1624, %v2804, %v2805
      %v2807 = vrot.slane %v2659, 5
      %v2808 = vrot.slane %v2807, 4
      %v2809 = vrot.slane %v2660, 5
      %v2810 = vsel %vm1624, %v2808, %v2809
      %v2811 = vrot.slane %v2809, 4
      %v2812 = vrot.slane %v2661, 5
      %v2813 = vsel %vm1624, %v2811, %v2812
      %v2814 = vrot.slane %v2662, 5
      %v2815 = vrot.slane %v2814, 4
      %v2816 = vrot.slane %v2663, 5
      %v2817 = vsel %vm1624, %v2815, %v2816
      %v2818 = vrot.slane %v2816, 4
      %v2819 = vrot.slane %v2664, 5
      %v2820 = vsel %vm1624, %v2818, %v2819
      %v2821 = vrot.slane %v2665, 5
      %v2822 = vrot.slane %v2821, 4
      %v2823 = vrot.slane %v2666, 5
      %v2824 = vsel %vm1624, %v2822, %v2823
      %v2825 = vrot.slane %v2823, 4
      %v2826 = vrot.slane %v2667, 5
      %v2827 = vsel %vm1624, %v2825, %v2826
      %2828 = vrot.lane.b32.xlu0 %v2719, 20
      %v2829 = vpop.permute.xlu0 %2828
      %2830 = vrot.lane.b32.xlu0 %v2722, 20
      %v2831 = vpop.permute.xlu0 %2830
      %2832 = vrot.lane.b32.xlu0 %v2726, 20
      %v2833 = vpop.permute.xlu0 %2832
      %2834 = vrot.lane.b32.xlu0 %v2729, 20
      %v2835 = vpop.permute.xlu0 %2834
      %2836 = vrot.lane.b32.xlu0 %v2733, 20
      %v2837 = vpop.permute.xlu0 %2836
      %2838 = vrot.lane.b32.xlu0 %v2736, 20
      %v2839 = vpop.permute.xlu0 %2838
      %2840 = vrot.lane.b32.xlu0 %v2740, 20
      %v2841 = vpop.permute.xlu0 %2840
      %2842 = vrot.lane.b32.xlu0 %v2743, 20
      %v2843 = vpop.permute.xlu0 %2842
      %2844 = vrot.lane.b32.xlu0 %v2747, 20
      %v2845 = vpop.permute.xlu0 %2844
      %2846 = vrot.lane.b32.xlu0 %v2750, 20
      %v2847 = vpop.permute.xlu0 %2846
      %2848 = vrot.lane.b32.xlu0 %v2754, 20
      %v2849 = vpop.permute.xlu0 %2848
      %2850 = vrot.lane.b32.xlu0 %v2757, 20
      %v2851 = vpop.permute.xlu0 %2850
      %2852 = vrot.lane.b32.xlu0 %v2761, 20
      %v2853 = vpop.permute.xlu0 %2852
      %2854 = vrot.lane.b32.xlu0 %v2764, 20
      %v2855 = vpop.permute.xlu0 %2854
      %2856 = vrot.lane.b32.xlu0 %v2768, 20
      %v2857 = vpop.permute.xlu0 %2856
      %2858 = vrot.lane.b32.xlu0 %v2771, 20
      %v2859 = vpop.permute.xlu0 %2858
      %2860 = vrot.lane.b32.xlu0 %v2775, 20
      %v2861 = vpop.permute.xlu0 %2860
      %2862 = vrot.lane.b32.xlu0 %v2778, 20
      %v2863 = vpop.permute.xlu0 %2862
      %2864 = vrot.lane.b32.xlu0 %v2782, 20
      %v2865 = vpop.permute.xlu0 %2864
      %2866 = vrot.lane.b32.xlu0 %v2785, 20
      %v2867 = vpop.permute.xlu0 %2866
      %2868 = vrot.lane.b32.xlu0 %v2789, 20
      %v2869 = vpop.permute.xlu0 %2868
      %2870 = vrot.lane.b32.xlu0 %v2792, 20
      %v2871 = vpop.permute.xlu0 %2870
      %2872 = vrot.lane.b32.xlu0 %v2796, 20
      %v2873 = vpop.permute.xlu0 %2872
      %2874 = vrot.lane.b32.xlu0 %v2799, 20
      %v2875 = vpop.permute.xlu0 %2874
      %2876 = vrot.lane.b32.xlu0 %v2803, 20
      %v2877 = vpop.permute.xlu0 %2876
      %2878 = vrot.lane.b32.xlu0 %v2806, 20
      %v2879 = vpop.permute.xlu0 %2878
      %2880 = vrot.lane.b32.xlu0 %v2810, 20
      %v2881 = vpop.permute.xlu0 %2880
      %2882 = vrot.lane.b32.xlu0 %v2813, 20
      %v2883 = vpop.permute.xlu0 %2882
      %2884 = vrot.lane.b32.xlu0 %v2817, 20
      %v2885 = vpop.permute.xlu0 %2884
      %2886 = vrot.lane.b32.xlu0 %v2820, 20
      %v2887 = vpop.permute.xlu0 %2886
      %2888 = vrot.lane.b32.xlu0 %v2824, 20
      %v2889 = vpop.permute.xlu0 %2888
      %2890 = vrot.lane.b32.xlu0 %v2827, 20
      %v2891 = vpop.permute.xlu0 %2890
      %vm2924 = vcmask 191648
      %2925 = vst.msk [vmem:[#allocation3] sm:$0xf] %vm2924, %v2829
      %2926 = vst.msk [vmem:[#allocation3 + $0x4] sm:$0xf] %vm2924, %v2831
      %2927 = vst.msk [vmem:[#allocation3 + $0x8] sm:$0xf] %vm2924, %v2833
      %2928 = vst.msk [vmem:[#allocation3 + $0xc] sm:$0xf] %vm2924, %v2835
      %2929 = vst.msk [vmem:[#allocation3 + $0x10] sm:$0xf] %vm2924, %v2837
      %2930 = vst.msk [vmem:[#allocation3 + $0x14] sm:$0xf] %vm2924, %v2839
      %2931 = vst.msk [vmem:[#allocation3 + $0x18] sm:$0xf] %vm2924, %v2841
      %2932 = vst.msk [vmem:[#allocation3 + $0x1c] sm:$0xf] %vm2924, %v2843
      %2933 = vst.msk [vmem:[#allocation3 + $0x20] sm:$0xf] %vm2924, %v2845
      %2934 = vst.msk [vmem:[#allocation3 + $0x24] sm:$0xf] %vm2924, %v2847
      %2935 = vst.msk [vmem:[#allocation3 + $0x28] sm:$0xf] %vm2924, %v2849
      %2936 = vst.msk [vmem:[#allocation3 + $0x2c] sm:$0xf] %vm2924, %v2851
      %2937 = vst.msk [vmem:[#allocation3 + $0x30] sm:$0xf] %vm2924, %v2853
      %2938 = vst.msk [vmem:[#allocation3 + $0x34] sm:$0xf] %vm2924, %v2855
      %2939 = vst.msk [vmem:[#allocation3 + $0x38] sm:$0xf] %vm2924, %v2857
      %2940 = vst.msk [vmem:[#allocation3 + $0x3c] sm:$0xf] %vm2924, %v2859
      %2941 = vst.msk [vmem:[#allocation3 + $0x40] sm:$0xf] %vm2924, %v2861
      %2942 = vst.msk [vmem:[#allocation3 + $0x44] sm:$0xf] %vm2924, %v2863
      %2943 = vst.msk [vmem:[#allocation3 + $0x48] sm:$0xf] %vm2924, %v2865
      %2944 = vst.msk [vmem:[#allocation3 + $0x4c] sm:$0xf] %vm2924, %v2867
      %2945 = vst.msk [vmem:[#allocation3 + $0x50] sm:$0xf] %vm2924, %v2869
      %2946 = vst.msk [vmem:[#allocation3 + $0x54] sm:$0xf] %vm2924, %v2871
      %2947 = vst.msk [vmem:[#allocation3 + $0x58] sm:$0xf] %vm2924, %v2873
      %2948 = vst.msk [vmem:[#allocation3 + $0x5c] sm:$0xf] %vm2924, %v2875
      %2949 = vst.msk [vmem:[#allocation3 + $0x60] sm:$0xf] %vm2924, %v2877
      %2950 = vst.msk [vmem:[#allocation3 + $0x64] sm:$0xf] %vm2924, %v2879
      %2951 = vst.msk [vmem:[#allocation3 + $0x68] sm:$0xf] %vm2924, %v2881
      %2952 = vst.msk [vmem:[#allocation3 + $0x6c] sm:$0xf] %vm2924, %v2883
      %2953 = vst.msk [vmem:[#allocation3 + $0x70] sm:$0xf] %vm2924, %v2885
      %2954 = vst.msk [vmem:[#allocation3 + $0x74] sm:$0xf] %vm2924, %v2887
      %2955 = vst.msk [vmem:[#allocation3 + $0x78] sm:$0xf] %vm2924, %v2889
      %2956 = vst.msk [vmem:[#allocation3 + $0x7c] sm:$0xf] %vm2924, %v2891
      %s2957 = scalar_lea.vmem [#allocation2], 24
      %v2958 = vld [vmem:[%s2957] sm:$0xf]
      %v2959 = vld [vmem:[%s2957 + $0x4] sm:$0xf]
      %v2960 = vld [vmem:[%s2957 + $0xc] sm:$0xf]
      %v2961 = vld [vmem:[%s2957 + $0x10] sm:$0xf]
      %v2962 = vld [vmem:[%s2957 + $0x18] sm:$0xf]
      %v2963 = vld [vmem:[%s2957 + $0x1c] sm:$0xf]
      %v2964 = vld [vmem:[%s2957 + $0x24] sm:$0xf]
      %v2965 = vld [vmem:[%s2957 + $0x28] sm:$0xf]
      %v2966 = vld [vmem:[%s2957 + $0x30] sm:$0xf]
      %v2967 = vld [vmem:[%s2957 + $0x34] sm:$0xf]
      %v2968 = vld [vmem:[%s2957 + $0x3c] sm:$0xf]
      %v2969 = vld [vmem:[%s2957 + $0x40] sm:$0xf]
      %v2970 = vld [vmem:[%s2957 + $0x48] sm:$0xf]
      %v2971 = vld [vmem:[%s2957 + $0x4c] sm:$0xf]
      %v2972 = vld [vmem:[%s2957 + $0x54] sm:$0xf]
      %v2973 = vld [vmem:[%s2957 + $0x58] sm:$0xf]
      %v2974 = vld [vmem:[%s2957 + $0x60] sm:$0xf]
      %v2975 = vld [vmem:[%s2957 + $0x64] sm:$0xf]
      %v2976 = vld [vmem:[%s2957 + $0x6c] sm:$0xf]
      %v2977 = vld [vmem:[%s2957 + $0x70] sm:$0xf]
      %v2978 = vld [vmem:[%s2957 + $0x78] sm:$0xf]
      %v2979 = vld [vmem:[%s2957 + $0x7c] sm:$0xf]
      %v2980 = vld [vmem:[%s2957 + $0x84] sm:$0xf]
      %v2981 = vld [vmem:[%s2957 + $0x88] sm:$0xf]
      %v2982 = vld [vmem:[%s2957 + $0x90] sm:$0xf]
      %v2983 = vld [vmem:[%s2957 + $0x94] sm:$0xf]
      %v2984 = vld [vmem:[%s2957 + $0x9c] sm:$0xf]
      %v2985 = vld [vmem:[%s2957 + $0xa0] sm:$0xf]
      %v2986 = vld [vmem:[%s2957 + $0xa8] sm:$0xf]
      %v2987 = vld [vmem:[%s2957 + $0xac] sm:$0xf]
      %v2988 = vld [vmem:[%s2957 + $0xb4] sm:$0xf]
      %v2989 = vld [vmem:[%s2957 + $0xb8] sm:$0xf]
      %3022 = vrot.lane.b32.xlu0 %v2958, 24
      %v3023 = vpop.permute.xlu0 %3022
      %3024 = vrot.lane.b32.xlu0 %v2959, 24
      %v3025 = vpop.permute.xlu0 %3024
      %3026 = vrot.lane.b32.xlu0 %v2960, 24
      %v3027 = vpop.permute.xlu0 %3026
      %3028 = vrot.lane.b32.xlu0 %v2961, 24
      %v3029 = vpop.permute.xlu0 %3028
      %3030 = vrot.lane.b32.xlu0 %v2962, 24
      %v3031 = vpop.permute.xlu0 %3030
      %3032 = vrot.lane.b32.xlu0 %v2963, 24
      %v3033 = vpop.permute.xlu0 %3032
      %3034 = vrot.lane.b32.xlu0 %v2964, 24
      %v3035 = vpop.permute.xlu0 %3034
      %3036 = vrot.lane.b32.xlu0 %v2965, 24
      %v3037 = vpop.permute.xlu0 %3036
      %3038 = vrot.lane.b32.xlu0 %v2966, 24
      %v3039 = vpop.permute.xlu0 %3038
      %3040 = vrot.lane.b32.xlu0 %v2967, 24
      %v3041 = vpop.permute.xlu0 %3040
      %3042 = vrot.lane.b32.xlu0 %v2968, 24
      %v3043 = vpop.permute.xlu0 %3042
      %3044 = vrot.lane.b32.xlu0 %v2969, 24
      %v3045 = vpop.permute.xlu0 %3044
      %3046 = vrot.lane.b32.xlu0 %v2970, 24
      %v3047 = vpop.permute.xlu0 %3046
      %3048 = vrot.lane.b32.xlu0 %v2971, 24
      %v3049 = vpop.permute.xlu0 %3048
      %3050 = vrot.lane.b32.xlu0 %v2972, 24
      %v3051 = vpop.permute.xlu0 %3050
      %3052 = vrot.lane.b32.xlu0 %v2973, 24
      %v3053 = vpop.permute.xlu0 %3052
      %3054 = vrot.lane.b32.xlu0 %v2974, 24
      %v3055 = vpop.permute.xlu0 %3054
      %3056 = vrot.lane.b32.xlu0 %v2975, 24
      %v3057 = vpop.permute.xlu0 %3056
      %3058 = vrot.lane.b32.xlu0 %v2976, 24
      %v3059 = vpop.permute.xlu0 %3058
      %3060 = vrot.lane.b32.xlu0 %v2977, 24
      %v3061 = vpop.permute.xlu0 %3060
      %3062 = vrot.lane.b32.xlu0 %v2978, 24
      %v3063 = vpop.permute.xlu0 %3062
      %3064 = vrot.lane.b32.xlu0 %v2979, 24
      %v3065 = vpop.permute.xlu0 %3064
      %3066 = vrot.lane.b32.xlu0 %v2980, 24
      %v3067 = vpop.permute.xlu0 %3066
      %3068 = vrot.lane.b32.xlu0 %v2981, 24
      %v3069 = vpop.permute.xlu0 %3068
      %3070 = vrot.lane.b32.xlu0 %v2982, 24
      %v3071 = vpop.permute.xlu0 %3070
      %3072 = vrot.lane.b32.xlu0 %v2983, 24
      %v3073 = vpop.permute.xlu0 %3072
      %3074 = vrot.lane.b32.xlu0 %v2984, 24
      %v3075 = vpop.permute.xlu0 %3074
      %3076 = vrot.lane.b32.xlu0 %v2985, 24
      %v3077 = vpop.permute.xlu0 %3076
      %3078 = vrot.lane.b32.xlu0 %v2986, 24
      %v3079 = vpop.permute.xlu0 %3078
      %3080 = vrot.lane.b32.xlu0 %v2987, 24
      %v3081 = vpop.permute.xlu0 %3080
      %3082 = vrot.lane.b32.xlu0 %v2988, 24
      %v3083 = vpop.permute.xlu0 %3082
      %3084 = vrot.lane.b32.xlu0 %v2989, 24
      %v3085 = vpop.permute.xlu0 %3084
      %vm3118 = vcmask 224448
      %3119 = vst.msk [vmem:[#allocation3] sm:$0xf] %vm3118, %v3023
      %3120 = vst.msk [vmem:[#allocation3 + $0x4] sm:$0xf] %vm3118, %v3025
      %3121 = vst.msk [vmem:[#allocation3 + $0x8] sm:$0xf] %vm3118, %v3027
      %3122 = vst.msk [vmem:[#allocation3 + $0xc] sm:$0xf] %vm3118, %v3029
      %3123 = vst.msk [vmem:[#allocation3 + $0x10] sm:$0xf] %vm3118, %v3031
      %3124 = vst.msk [vmem:[#allocation3 + $0x14] sm:$0xf] %vm3118, %v3033
      %3125 = vst.msk [vmem:[#allocation3 + $0x18] sm:$0xf] %vm3118, %v3035
      %3126 = vst.msk [vmem:[#allocation3 + $0x1c] sm:$0xf] %vm3118, %v3037
      %3127 = vst.msk [vmem:[#allocation3 + $0x20] sm:$0xf] %vm3118, %v3039
      %3128 = vst.msk [vmem:[#allocation3 + $0x24] sm:$0xf] %vm3118, %v3041
      %3129 = vst.msk [vmem:[#allocation3 + $0x28] sm:$0xf] %vm3118, %v3043
      %3130 = vst.msk [vmem:[#allocation3 + $0x2c] sm:$0xf] %vm3118, %v3045
      %3131 = vst.msk [vmem:[#allocation3 + $0x30] sm:$0xf] %vm3118, %v3047
      %3132 = vst.msk [vmem:[#allocation3 + $0x34] sm:$0xf] %vm3118, %v3049
      %3133 = vst.msk [vmem:[#allocation3 + $0x38] sm:$0xf] %vm3118, %v3051
      %3134 = vst.msk [vmem:[#allocation3 + $0x3c] sm:$0xf] %vm3118, %v3053
      %3135 = vst.msk [vmem:[#allocation3 + $0x40] sm:$0xf] %vm3118, %v3055
      %3136 = vst.msk [vmem:[#allocation3 + $0x44] sm:$0xf] %vm3118, %v3057
      %3137 = vst.msk [vmem:[#allocation3 + $0x48] sm:$0xf] %vm3118, %v3059
      %3138 = vst.msk [vmem:[#allocation3 + $0x4c] sm:$0xf] %vm3118, %v3061
      %3139 = vst.msk [vmem:[#allocation3 + $0x50] sm:$0xf] %vm3118, %v3063
      %3140 = vst.msk [vmem:[#allocation3 + $0x54] sm:$0xf] %vm3118, %v3065
      %3141 = vst.msk [vmem:[#allocation3 + $0x58] sm:$0xf] %vm3118, %v3067
      %3142 = vst.msk [vmem:[#allocation3 + $0x5c] sm:$0xf] %vm3118, %v3069
      %3143 = vst.msk [vmem:[#allocation3 + $0x60] sm:$0xf] %vm3118, %v3071
      %3144 = vst.msk [vmem:[#allocation3 + $0x64] sm:$0xf] %vm3118, %v3073
      %3145 = vst.msk [vmem:[#allocation3 + $0x68] sm:$0xf] %vm3118, %v3075
      %3146 = vst.msk [vmem:[#allocation3 + $0x6c] sm:$0xf] %vm3118, %v3077
      %3147 = vst.msk [vmem:[#allocation3 + $0x70] sm:$0xf] %vm3118, %v3079
      %3148 = vst.msk [vmem:[#allocation3 + $0x74] sm:$0xf] %vm3118, %v3081
      %3149 = vst.msk [vmem:[#allocation3 + $0x78] sm:$0xf] %vm3118, %v3083
      %3150 = vst.msk [vmem:[#allocation3 + $0x7c] sm:$0xf] %vm3118, %v3085
      %v3151 = vld [vmem:[%s2957] sm:$0xf]
      %v3152 = vld [vmem:[%s2957 + $0x4] sm:$0xf]
      %v3153 = vld [vmem:[%s2957 + $0x8] sm:$0x1]
      %v3154 = vld [vmem:[%s2957 + $0xc] sm:$0xf]
      %v3155 = vld [vmem:[%s2957 + $0x10] sm:$0xf]
      %v3156 = vld [vmem:[%s2957 + $0x14] sm:$0x1]
      %v3157 = vld [vmem:[%s2957 + $0x18] sm:$0xf]
      %v3158 = vld [vmem:[%s2957 + $0x1c] sm:$0xf]
      %v3159 = vld [vmem:[%s2957 + $0x20] sm:$0x1]
      %v3160 = vld [vmem:[%s2957 + $0x24] sm:$0xf]
      %v3161 = vld [vmem:[%s2957 + $0x28] sm:$0xf]
      %v3162 = vld [vmem:[%s2957 + $0x2c] sm:$0x1]
      %v3163 = vld [vmem:[%s2957 + $0x30] sm:$0xf]
      %v3164 = vld [vmem:[%s2957 + $0x34] sm:$0xf]
      %v3165 = vld [vmem:[%s2957 + $0x38] sm:$0x1]
      %v3166 = vld [vmem:[%s2957 + $0x3c] sm:$0xf]
      %v3167 = vld [vmem:[%s2957 + $0x40] sm:$0xf]
      %v3168 = vld [vmem:[%s2957 + $0x44] sm:$0x1]
      %v3169 = vld [vmem:[%s2957 + $0x48] sm:$0xf]
      %v3170 = vld [vmem:[%s2957 + $0x4c] sm:$0xf]
      %v3171 = vld [vmem:[%s2957 + $0x50] sm:$0x1]
      %v3172 = vld [vmem:[%s2957 + $0x54] sm:$0xf]
      %v3173 = vld [vmem:[%s2957 + $0x58] sm:$0xf]
      %v3174 = vld [vmem:[%s2957 + $0x5c] sm:$0x1]
      %v3175 = vld [vmem:[%s2957 + $0x60] sm:$0xf]
      %v3176 = vld [vmem:[%s2957 + $0x64] sm:$0xf]
      %v3177 = vld [vmem:[%s2957 + $0x68] sm:$0x1]
      %v3178 = vld [vmem:[%s2957 + $0x6c] sm:$0xf]
      %v3179 = vld [vmem:[%s2957 + $0x70] sm:$0xf]
      %v3180 = vld [vmem:[%s2957 + $0x74] sm:$0x1]
      %v3181 = vld [vmem:[%s2957 + $0x78] sm:$0xf]
      %v3182 = vld [vmem:[%s2957 + $0x7c] sm:$0xf]
      %v3183 = vld [vmem:[%s2957 + $0x80] sm:$0x1]
      %v3184 = vld [vmem:[%s2957 + $0x84] sm:$0xf]
      %v3185 = vld [vmem:[%s2957 + $0x88] sm:$0xf]
      %v3186 = vld [vmem:[%s2957 + $0x8c] sm:$0x1]
      %v3187 = vld [vmem:[%s2957 + $0x90] sm:$0xf]
      %v3188 = vld [vmem:[%s2957 + $0x94] sm:$0xf]
      %v3189 = vld [vmem:[%s2957 + $0x98] sm:$0x1]
      %v3190 = vld [vmem:[%s2957 + $0x9c] sm:$0xf]
      %v3191 = vld [vmem:[%s2957 + $0xa0] sm:$0xf]
      %v3192 = vld [vmem:[%s2957 + $0xa4] sm:$0x1]
      %v3193 = vld [vmem:[%s2957 + $0xa8] sm:$0xf]
      %v3194 = vld [vmem:[%s2957 + $0xac] sm:$0xf]
      %v3195 = vld [vmem:[%s2957 + $0xb0] sm:$0x1]
      %v3196 = vld [vmem:[%s2957 + $0xb4] sm:$0xf]
      %v3197 = vld [vmem:[%s2957 + $0xb8] sm:$0xf]
      %v3198 = vld [vmem:[%s2957 + $0xbc] sm:$0x1]
      %v3200 = vshrl.u32 %v3151, 16
      %v3202 = vrot.slane %v3200, 4
      %v3203 = vshll.u32 %v3151, 16
      %v3205 = vrot.slane %v3203, 5
      %v3206 = vor.u32 %v3202, %v3205
      %v3207 = vrot.slane %v3206, 4
      %v3209 = vshll.u32 %v3152, 16
      %v3211 = vrot.slane %v3209, 5
      %v3212 = vsel %vm1012, %v3207, %v3211
      %v3213 = vshrl.u32 %v3152, 16
      %v3215 = vrot.slane %v3213, 4
      %v3216 = vor.u32 %v3215, %v3211
      %v3217 = vrot.slane %v3216, 4
      %v3219 = vshll.u32 %v3153, 16
      %v3221 = vrot.slane %v3219, 5
      %v3222 = vsel %vm1012, %v3217, %v3221
      %v3224 = vshrl.u32 %v3154, 16
      %v3226 = vrot.slane %v3224, 4
      %v3227 = vshll.u32 %v3154, 16
      %v3229 = vrot.slane %v3227, 5
      %v3230 = vor.u32 %v3226, %v3229
      %v3231 = vrot.slane %v3230, 4
      %v3233 = vshll.u32 %v3155, 16
      %v3235 = vrot.slane %v3233, 5
      %v3236 = vsel %vm1012, %v3231, %v3235
      %v3237 = vshrl.u32 %v3155, 16
      %v3239 = vrot.slane %v3237, 4
      %v3240 = vor.u32 %v3239, %v3235
      %v3241 = vrot.slane %v3240, 4
      %v3243 = vshll.u32 %v3156, 16
      %v3245 = vrot.slane %v3243, 5
      %v3246 = vsel %vm1012, %v3241, %v3245
      %v3248 = vshrl.u32 %v3157, 16
      %v3250 = vrot.slane %v3248, 4
      %v3251 = vshll.u32 %v3157, 16
      %v3253 = vrot.slane %v3251, 5
      %v3254 = vor.u32 %v3250, %v3253
      %v3255 = vrot.slane %v3254, 4
      %v3257 = vshll.u32 %v3158, 16
      %v3259 = vrot.slane %v3257, 5
      %v3260 = vsel %vm1012, %v3255, %v3259
      %v3261 = vshrl.u32 %v3158, 16
      %v3263 = vrot.slane %v3261, 4
      %v3264 = vor.u32 %v3263, %v3259
      %v3265 = vrot.slane %v3264, 4
      %v3267 = vshll.u32 %v3159, 16
      %v3269 = vrot.slane %v3267, 5
      %v3270 = vsel %vm1012, %v3265, %v3269
      %v3272 = vshrl.u32 %v3160, 16
      %v3274 = vrot.slane %v3272, 4
      %v3275 = vshll.u32 %v3160, 16
      %v3277 = vrot.slane %v3275, 5
      %v3278 = vor.u32 %v3274, %v3277
      %v3279 = vrot.slane %v3278, 4
      %v3281 = vshll.u32 %v3161, 16
      %v3283 = vrot.slane %v3281, 5
      %v3284 = vsel %vm1012, %v3279, %v3283
      %v3285 = vshrl.u32 %v3161, 16
      %v3287 = vrot.slane %v3285, 4
      %v3288 = vor.u32 %v3287, %v3283
      %v3289 = vrot.slane %v3288, 4
      %v3291 = vshll.u32 %v3162, 16
      %v3293 = vrot.slane %v3291, 5
      %v3294 = vsel %vm1012, %v3289, %v3293
      %v3296 = vshrl.u32 %v3163, 16
      %v3298 = vrot.slane %v3296, 4
      %v3299 = vshll.u32 %v3163, 16
      %v3301 = vrot.slane %v3299, 5
      %v3302 = vor.u32 %v3298, %v3301
      %v3303 = vrot.slane %v3302, 4
      %v3305 = vshll.u32 %v3164, 16
      %v3307 = vrot.slane %v3305, 5
      %v3308 = vsel %vm1012, %v3303, %v3307
      %v3309 = vshrl.u32 %v3164, 16
      %v3311 = vrot.slane %v3309, 4
      %v3312 = vor.u32 %v3311, %v3307
      %v3313 = vrot.slane %v3312, 4
      %v3315 = vshll.u32 %v3165, 16
      %v3317 = vrot.slane %v3315, 5
      %v3318 = vsel %vm1012, %v3313, %v3317
      %v3320 = vshrl.u32 %v3166, 16
      %v3322 = vrot.slane %v3320, 4
      %v3323 = vshll.u32 %v3166, 16
      %v3325 = vrot.slane %v3323, 5
      %v3326 = vor.u32 %v3322, %v3325
      %v3327 = vrot.slane %v3326, 4
      %v3329 = vshll.u32 %v3167, 16
      %v3331 = vrot.slane %v3329, 5
      %v3332 = vsel %vm1012, %v3327, %v3331
      %v3333 = vshrl.u32 %v3167, 16
      %v3335 = vrot.slane %v3333, 4
      %v3336 = vor.u32 %v3335, %v3331
      %v3337 = vrot.slane %v3336, 4
      %v3339 = vshll.u32 %v3168, 16
      %v3341 = vrot.slane %v3339, 5
      %v3342 = vsel %vm1012, %v3337, %v3341
      %v3344 = vshrl.u32 %v3169, 16
      %v3346 = vrot.slane %v3344, 4
      %v3347 = vshll.u32 %v3169, 16
      %v3349 = vrot.slane %v3347, 5
      %v3350 = vor.u32 %v3346, %v3349
      %v3351 = vrot.slane %v3350, 4
      %v3353 = vshll.u32 %v3170, 16
      %v3355 = vrot.slane %v3353, 5
      %v3356 = vsel %vm1012, %v3351, %v3355
      %v3357 = vshrl.u32 %v3170, 16
      %v3359 = vrot.slane %v3357, 4
      %v3360 = vor.u32 %v3359, %v3355
      %v3361 = vrot.slane %v3360, 4
      %v3363 = vshll.u32 %v3171, 16
      %v3365 = vrot.slane %v3363, 5
      %v3366 = vsel %vm1012, %v3361, %v3365
      %v3368 = vshrl.u32 %v3172, 16
      %v3370 = vrot.slane %v3368, 4
      %v3371 = vshll.u32 %v3172, 16
      %v3373 = vrot.slane %v3371, 5
      %v3374 = vor.u32 %v3370, %v3373
      %v3375 = vrot.slane %v3374, 4
      %v3377 = vshll.u32 %v3173, 16
      %v3379 = vrot.slane %v3377, 5
      %v3380 = vsel %vm1012, %v3375, %v3379
      %v3381 = vshrl.u32 %v3173, 16
      %v3383 = vrot.slane %v3381, 4
      %v3384 = vor.u32 %v3383, %v3379
      %v3385 = vrot.slane %v3384, 4
      %v3387 = vshll.u32 %v3174, 16
      %v3389 = vrot.slane %v3387, 5
      %v3390 = vsel %vm1012, %v3385, %v3389
      %v3392 = vshrl.u32 %v3175, 16
      %v3394 = vrot.slane %v3392, 4
      %v3395 = vshll.u32 %v3175, 16
      %v3397 = vrot.slane %v3395, 5
      %v3398 = vor.u32 %v3394, %v3397
      %v3399 = vrot.slane %v3398, 4
      %v3401 = vshll.u32 %v3176, 16
      %v3403 = vrot.slane %v3401, 5
      %v3404 = vsel %vm1012, %v3399, %v3403
      %v3405 = vshrl.u32 %v3176, 16
      %v3407 = vrot.slane %v3405, 4
      %v3408 = vor.u32 %v3407, %v3403
      %v3409 = vrot.slane %v3408, 4
      %v3411 = vshll.u32 %v3177, 16
      %v3413 = vrot.slane %v3411, 5
      %v3414 = vsel %vm1012, %v3409, %v3413
      %v3416 = vshrl.u32 %v3178, 16
      %v3418 = vrot.slane %v3416, 4
      %v3419 = vshll.u32 %v3178, 16
      %v3421 = vrot.slane %v3419, 5
      %v3422 = vor.u32 %v3418, %v3421
      %v3423 = vrot.slane %v3422, 4
      %v3425 = vshll.u32 %v3179, 16
      %v3427 = vrot.slane %v3425, 5
      %v3428 = vsel %vm1012, %v3423, %v3427
      %v3429 = vshrl.u32 %v3179, 16
      %v3431 = vrot.slane %v3429, 4
      %v3432 = vor.u32 %v3431, %v3427
      %v3433 = vrot.slane %v3432, 4
      %v3435 = vshll.u32 %v3180, 16
      %v3437 = vrot.slane %v3435, 5
      %v3438 = vsel %vm1012, %v3433, %v3437
      %v3440 = vshrl.u32 %v3181, 16
      %v3442 = vrot.slane %v3440, 4
      %v3443 = vshll.u32 %v3181, 16
      %v3445 = vrot.slane %v3443, 5
      %v3446 = vor.u32 %v3442, %v3445
      %v3447 = vrot.slane %v3446, 4
      %v3449 = vshll.u32 %v3182, 16
      %v3451 = vrot.slane %v3449, 5
      %v3452 = vsel %vm1012, %v3447, %v3451
      %v3453 = vshrl.u32 %v3182, 16
      %v3455 = vrot.slane %v3453, 4
      %v3456 = vor.u32 %v3455, %v3451
      %v3457 = vrot.slane %v3456, 4
      %v3459 = vshll.u32 %v3183, 16
      %v3461 = vrot.slane %v3459, 5
      %v3462 = vsel %vm1012, %v3457, %v3461
      %v3464 = vshrl.u32 %v3184, 16
      %v3466 = vrot.slane %v3464, 4
      %v3467 = vshll.u32 %v3184, 16
      %v3469 = vrot.slane %v3467, 5
      %v3470 = vor.u32 %v3466, %v3469
      %v3471 = vrot.slane %v3470, 4
      %v3473 = vshll.u32 %v3185, 16
      %v3475 = vrot.slane %v3473, 5
      %v3476 = vsel %vm1012, %v3471, %v3475
      %v3477 = vshrl.u32 %v3185, 16
      %v3479 = vrot.slane %v3477, 4
      %v3480 = vor.u32 %v3479, %v3475
      %v3481 = vrot.slane %v3480, 4
      %v3483 = vshll.u32 %v3186, 16
      %v3485 = vrot.slane %v3483, 5
      %v3486 = vsel %vm1012, %v3481, %v3485
      %v3488 = vshrl.u32 %v3187, 16
      %v3490 = vrot.slane %v3488, 4
      %v3491 = vshll.u32 %v3187, 16
      %v3493 = vrot.slane %v3491, 5
      %v3494 = vor.u32 %v3490, %v3493
      %v3495 = vrot.slane %v3494, 4
      %v3497 = vshll.u32 %v3188, 16
      %v3499 = vrot.slane %v3497, 5
      %v3500 = vsel %vm1012, %v3495, %v3499
      %v3501 = vshrl.u32 %v3188, 16
      %v3503 = vrot.slane %v3501, 4
      %v3504 = vor.u32 %v3503, %v3499
      %v3505 = vrot.slane %v3504, 4
      %v3507 = vshll.u32 %v3189, 16
      %v3509 = vrot.slane %v3507, 5
      %v3510 = vsel %vm1012, %v3505, %v3509
      %v3512 = vshrl.u32 %v3190, 16
      %v3514 = vrot.slane %v3512, 4
      %v3515 = vshll.u32 %v3190, 16
      %v3517 = vrot.slane %v3515, 5
      %v3518 = vor.u32 %v3514, %v3517
      %v3519 = vrot.slane %v3518, 4
      %v3521 = vshll.u32 %v3191, 16
      %v3523 = vrot.slane %v3521, 5
      %v3524 = vsel %vm1012, %v3519, %v3523
      %v3525 = vshrl.u32 %v3191, 16
      %v3527 = vrot.slane %v3525, 4
      %v3528 = vor.u32 %v3527, %v3523
      %v3529 = vrot.slane %v3528, 4
      %v3531 = vshll.u32 %v3192, 16
      %v3533 = vrot.slane %v3531, 5
      %v3534 = vsel %vm1012, %v3529, %v3533
      %v3536 = vshrl.u32 %v3193, 16
      %v3538 = vrot.slane %v3536, 4
      %v3539 = vshll.u32 %v3193, 16
      %v3541 = vrot.slane %v3539, 5
      %v3542 = vor.u32 %v3538, %v3541
      %v3543 = vrot.slane %v3542, 4
      %v3545 = vshll.u32 %v3194, 16
      %v3547 = vrot.slane %v3545, 5
      %v3548 = vsel %vm1012, %v3543, %v3547
      %v3549 = vshrl.u32 %v3194, 16
      %v3551 = vrot.slane %v3549, 4
      %v3552 = vor.u32 %v3551, %v3547
      %v3553 = vrot.slane %v3552, 4
      %v3555 = vshll.u32 %v3195, 16
      %v3557 = vrot.slane %v3555, 5
      %v3558 = vsel %vm1012, %v3553, %v3557
      %v3560 = vshrl.u32 %v3196, 16
      %v3562 = vrot.slane %v3560, 4
      %v3563 = vshll.u32 %v3196, 16
      %v3565 = vrot.slane %v3563, 5
      %v3566 = vor.u32 %v3562, %v3565
      %v3567 = vrot.slane %v3566, 4
      %v3569 = vshll.u32 %v3197, 16
      %v3571 = vrot.slane %v3569, 5
      %v3572 = vsel %vm1012, %v3567, %v3571
      %v3573 = vshrl.u32 %v3197, 16
      %v3575 = vrot.slane %v3573, 4
      %v3576 = vor.u32 %v3575, %v3571
      %v3577 = vrot.slane %v3576, 4
      %v3579 = vshll.u32 %v3198, 16
      %v3581 = vrot.slane %v3579, 5
      %v3582 = vsel %vm1012, %v3577, %v3581
      %3583 = vrot.lane.b32.xlu0 %v3212, 28
      %v3584 = vpop.permute.xlu0 %3583
      %3585 = vrot.lane.b32.xlu0 %v3222, 28
      %v3586 = vpop.permute.xlu0 %3585
      %3587 = vrot.lane.b32.xlu0 %v3236, 28
      %v3588 = vpop.permute.xlu0 %3587
      %3589 = vrot.lane.b32.xlu0 %v3246, 28
      %v3590 = vpop.permute.xlu0 %3589
      %3591 = vrot.lane.b32.xlu0 %v3260, 28
      %v3592 = vpop.permute.xlu0 %3591
      %3593 = vrot.lane.b32.xlu0 %v3270, 28
      %v3594 = vpop.permute.xlu0 %3593
      %3595 = vrot.lane.b32.xlu0 %v3284, 28
      %v3596 = vpop.permute.xlu0 %3595
      %3597 = vrot.lane.b32.xlu0 %v3294, 28
      %v3598 = vpop.permute.xlu0 %3597
      %3599 = vrot.lane.b32.xlu0 %v3308, 28
      %v3600 = vpop.permute.xlu0 %3599
      %3601 = vrot.lane.b32.xlu0 %v3318, 28
      %v3602 = vpop.permute.xlu0 %3601
      %3603 = vrot.lane.b32.xlu0 %v3332, 28
      %v3604 = vpop.permute.xlu0 %3603
      %3605 = vrot.lane.b32.xlu0 %v3342, 28
      %v3606 = vpop.permute.xlu0 %3605
      %3607 = vrot.lane.b32.xlu0 %v3356, 28
      %v3608 = vpop.permute.xlu0 %3607
      %3609 = vrot.lane.b32.xlu0 %v3366, 28
      %v3610 = vpop.permute.xlu0 %3609
      %3611 = vrot.lane.b32.xlu0 %v3380, 28
      %v3612 = vpop.permute.xlu0 %3611
      %3613 = vrot.lane.b32.xlu0 %v3390, 28
      %v3614 = vpop.permute.xlu0 %3613
      %3615 = vrot.lane.b32.xlu0 %v3404, 28
      %v3616 = vpop.permute.xlu0 %3615
      %3617 = vrot.lane.b32.xlu0 %v3414, 28
      %v3618 = vpop.permute.xlu0 %3617
      %3619 = vrot.lane.b32.xlu0 %v3428, 28
      %v3620 = vpop.permute.xlu0 %3619
      %3621 = vrot.lane.b32.xlu0 %v3438, 28
      %v3622 = vpop.permute.xlu0 %3621
      %3623 = vrot.lane.b32.xlu0 %v3452, 28
      %v3624 = vpop.permute.xlu0 %3623
      %3625 = vrot.lane.b32.xlu0 %v3462, 28
      %v3626 = vpop.permute.xlu0 %3625
      %3627 = vrot.lane.b32.xlu0 %v3476, 28
      %v3628 = vpop.permute.xlu0 %3627
      %3629 = vrot.lane.b32.xlu0 %v3486, 28
      %v3630 = vpop.permute.xlu0 %3629
      %3631 = vrot.lane.b32.xlu0 %v3500, 28
      %v3632 = vpop.permute.xlu0 %3631
      %3633 = vrot.lane.b32.xlu0 %v3510, 28
      %v3634 = vpop.permute.xlu0 %3633
      %3635 = vrot.lane.b32.xlu0 %v3524, 28
      %v3636 = vpop.permute.xlu0 %3635
      %3637 = vrot.lane.b32.xlu0 %v3534, 28
      %v3638 = vpop.permute.xlu0 %3637
      %3639 = vrot.lane.b32.xlu0 %v3548, 28
      %v3640 = vpop.permute.xlu0 %3639
      %3641 = vrot.lane.b32.xlu0 %v3558, 28
      %v3642 = vpop.permute.xlu0 %3641
      %3643 = vrot.lane.b32.xlu0 %v3572, 28
      %v3644 = vpop.permute.xlu0 %3643
      %3645 = vrot.lane.b32.xlu0 %v3582, 28
      %v3646 = vpop.permute.xlu0 %3645
      %vm3679 = vcmask 257248
      %3680 = vst.msk [vmem:[#allocation3] sm:$0xf] %vm3679, %v3584
      %3681 = vst.msk [vmem:[#allocation3 + $0x4] sm:$0xf] %vm3679, %v3586
      %3682 = vst.msk [vmem:[#allocation3 + $0x8] sm:$0xf] %vm3679, %v3588
      %3683 = vst.msk [vmem:[#allocation3 + $0xc] sm:$0xf] %vm3679, %v3590
      %3684 = vst.msk [vmem:[#allocation3 + $0x10] sm:$0xf] %vm3679, %v3592
      %3685 = vst.msk [vmem:[#allocation3 + $0x14] sm:$0xf] %vm3679, %v3594
      %3686 = vst.msk [vmem:[#allocation3 + $0x18] sm:$0xf] %vm3679, %v3596
      %3687 = vst.msk [vmem:[#allocation3 + $0x1c] sm:$0xf] %vm3679, %v3598
      %3688 = vst.msk [vmem:[#allocation3 + $0x20] sm:$0xf] %vm3679, %v3600
      %3689 = vst.msk [vmem:[#allocation3 + $0x24] sm:$0xf] %vm3679, %v3602
      %3690 = vst.msk [vmem:[#allocation3 + $0x28] sm:$0xf] %vm3679, %v3604
      %3691 = vst.msk [vmem:[#allocation3 + $0x2c] sm:$0xf] %vm3679, %v3606
      %3692 = vst.msk [vmem:[#allocation3 + $0x30] sm:$0xf] %vm3679, %v3608
      %3693 = vst.msk [vmem:[#allocation3 + $0x34] sm:$0xf] %vm3679, %v3610
      %3694 = vst.msk [vmem:[#allocation3 + $0x38] sm:$0xf] %vm3679, %v3612
      %3695 = vst.msk [vmem:[#allocation3 + $0x3c] sm:$0xf] %vm3679, %v3614
      %3696 = vst.msk [vmem:[#allocation3 + $0x40] sm:$0xf] %vm3679, %v3616
      %3697 = vst.msk [vmem:[#allocation3 + $0x44] sm:$0xf] %vm3679, %v3618
      %3698 = vst.msk [vmem:[#allocation3 + $0x48] sm:$0xf] %vm3679, %v3620
      %3699 = vst.msk [vmem:[#allocation3 + $0x4c] sm:$0xf] %vm3679, %v3622
      %3700 = vst.msk [vmem:[#allocation3 + $0x50] sm:$0xf] %vm3679, %v3624
      %3701 = vst.msk [vmem:[#allocation3 + $0x54] sm:$0xf] %vm3679, %v3626
      %3702 = vst.msk [vmem:[#allocation3 + $0x58] sm:$0xf] %vm3679, %v3628
      %3703 = vst.msk [vmem:[#allocation3 + $0x5c] sm:$0xf] %vm3679, %v3630
      %3704 = vst.msk [vmem:[#allocation3 + $0x60] sm:$0xf] %vm3679, %v3632
      %3705 = vst.msk [vmem:[#allocation3 + $0x64] sm:$0xf] %vm3679, %v3634
      %3706 = vst.msk [vmem:[#allocation3 + $0x68] sm:$0xf] %vm3679, %v3636
      %3707 = vst.msk [vmem:[#allocation3 + $0x6c] sm:$0xf] %vm3679, %v3638
      %3708 = vst.msk [vmem:[#allocation3 + $0x70] sm:$0xf] %vm3679, %v3640
      %3709 = vst.msk [vmem:[#allocation3 + $0x74] sm:$0xf] %vm3679, %v3642
      %3710 = vst.msk [vmem:[#allocation3 + $0x78] sm:$0xf] %vm3679, %v3644
      %3711 = vst.msk [vmem:[#allocation3 + $0x7c] sm:$0xf] %vm3679, %v3646
      %v3712 = vld [vmem:[%s2957] sm:$0xe]
      %v3713 = vld [vmem:[%s2957 + $0x4] sm:$0xf]
      %v3714 = vld [vmem:[%s2957 + $0x8] sm:$0x1]
      %v3715 = vld [vmem:[%s2957 + $0xc] sm:$0xe]
      %v3716 = vld [vmem:[%s2957 + $0x10] sm:$0xf]
      %v3717 = vld [vmem:[%s2957 + $0x14] sm:$0x1]
      %v3718 = vld [vmem:[%s2957 + $0x18] sm:$0xe]
      %v3719 = vld [vmem:[%s2957 + $0x1c] sm:$0xf]
      %v3720 = vld [vmem:[%s2957 + $0x20] sm:$0x1]
      %v3721 = vld [vmem:[%s2957 + $0x24] sm:$0xe]
      %v3722 = vld [vmem:[%s2957 + $0x28] sm:$0xf]
      %v3723 = vld [vmem:[%s2957 + $0x2c] sm:$0x1]
      %v3724 = vld [vmem:[%s2957 + $0x30] sm:$0xe]
      %v3725 = vld [vmem:[%s2957 + $0x34] sm:$0xf]
      %v3726 = vld [vmem:[%s2957 + $0x38] sm:$0x1]
      %v3727 = vld [vmem:[%s2957 + $0x3c] sm:$0xe]
      %v3728 = vld [vmem:[%s2957 + $0x40] sm:$0xf]
      %v3729 = vld [vmem:[%s2957 + $0x44] sm:$0x1]
      %v3730 = vld [vmem:[%s2957 + $0x48] sm:$0xe]
      %v3731 = vld [vmem:[%s2957 + $0x4c] sm:$0xf]
      %v3732 = vld [vmem:[%s2957 + $0x50] sm:$0x1]
      %v3733 = vld [vmem:[%s2957 + $0x54] sm:$0xe]
      %v3734 = vld [vmem:[%s2957 + $0x58] sm:$0xf]
      %v3735 = vld [vmem:[%s2957 + $0x5c] sm:$0x1]
      %v3736 = vld [vmem:[%s2957 + $0x60] sm:$0xe]
      %v3737 = vld [vmem:[%s2957 + $0x64] sm:$0xf]
      %v3738 = vld [vmem:[%s2957 + $0x68] sm:$0x1]
      %v3739 = vld [vmem:[%s2957 + $0x6c] sm:$0xe]
      %v3740 = vld [vmem:[%s2957 + $0x70] sm:$0xf]
      %v3741 = vld [vmem:[%s2957 + $0x74] sm:$0x1]
      %v3742 = vld [vmem:[%s2957 + $0x78] sm:$0xe]
      %v3743 = vld [vmem:[%s2957 + $0x7c] sm:$0xf]
      %v3744 = vld [vmem:[%s2957 + $0x80] sm:$0x1]
      %v3745 = vld [vmem:[%s2957 + $0x84] sm:$0xe]
      %v3746 = vld [vmem:[%s2957 + $0x88] sm:$0xf]
      %v3747 = vld [vmem:[%s2957 + $0x8c] sm:$0x1]
      %v3748 = vld [vmem:[%s2957 + $0x90] sm:$0xe]
      %v3749 = vld [vmem:[%s2957 + $0x94] sm:$0xf]
      %v3750 = vld [vmem:[%s2957 + $0x98] sm:$0x1]
      %v3751 = vld [vmem:[%s2957 + $0x9c] sm:$0xe]
      %v3752 = vld [vmem:[%s2957 + $0xa0] sm:$0xf]
      %v3753 = vld [vmem:[%s2957 + $0xa4] sm:$0x1]
      %v3754 = vld [vmem:[%s2957 + $0xa8] sm:$0xe]
      %v3755 = vld [vmem:[%s2957 + $0xac] sm:$0xf]
      %v3756 = vld [vmem:[%s2957 + $0xb0] sm:$0x1]
      %v3757 = vld [vmem:[%s2957 + $0xb4] sm:$0xe]
      %v3758 = vld [vmem:[%s2957 + $0xb8] sm:$0xf]
      %v3759 = vld [vmem:[%s2957 + $0xbc] sm:$0x1]
      %v3808 = vrot.slane %v3712, 5
      %v3809 = vrot.slane %v3808, 4
      %v3810 = vrot.slane %v3713, 5
      %v3811 = vsel %vm1624, %v3809, %v3810
      %v3812 = vrot.slane %v3810, 4
      %v3813 = vrot.slane %v3714, 5
      %v3814 = vsel %vm1624, %v3812, %v3813
      %v3815 = vrot.slane %v3715, 5
      %v3816 = vrot.slane %v3815, 4
      %v3817 = vrot.slane %v3716, 5
      %v3818 = vsel %vm1624, %v3816, %v3817
      %v3819 = vrot.slane %v3817, 4
      %v3820 = vrot.slane %v3717, 5
      %v3821 = vsel %vm1624, %v3819, %v3820
      %v3822 = vrot.slane %v3718, 5
      %v3823 = vrot.slane %v3822, 4
      %v3824 = vrot.slane %v3719, 5
      %v3825 = vsel %vm1624, %v3823, %v3824
      %v3826 = vrot.slane %v3824, 4
      %v3827 = vrot.slane %v3720, 5
      %v3828 = vsel %vm1624, %v3826, %v3827
      %v3829 = vrot.slane %v3721, 5
      %v3830 = vrot.slane %v3829, 4
      %v3831 = vrot.slane %v3722, 5
      %v3832 = vsel %vm1624, %v3830, %v3831
      %v3833 = vrot.slane %v3831, 4
      %v3834 = vrot.slane %v3723, 5
      %v3835 = vsel %vm1624, %v3833, %v3834
      %v3836 = vrot.slane %v3724, 5
      %v3837 = vrot.slane %v3836, 4
      %v3838 = vrot.slane %v3725, 5
      %v3839 = vsel %vm1624, %v3837, %v3838
      %v3840 = vrot.slane %v3838, 4
      %v3841 = vrot.slane %v3726, 5
      %v3842 = vsel %vm1624, %v3840, %v3841
      %v3843 = vrot.slane %v3727, 5
      %v3844 = vrot.slane %v3843, 4
      %v3845 = vrot.slane %v3728, 5
      %v3846 = vsel %vm1624, %v3844, %v3845
      %v3847 = vrot.slane %v3845, 4
      %v3848 = vrot.slane %v3729, 5
      %v3849 = vsel %vm1624, %v3847, %v3848
      %v3850 = vrot.slane %v3730, 5
      %v3851 = vrot.slane %v3850, 4
      %v3852 = vrot.slane %v3731, 5
      %v3853 = vsel %vm1624, %v3851, %v3852
      %v3854 = vrot.slane %v3852, 4
      %v3855 = vrot.slane %v3732, 5
      %v3856 = vsel %vm1624, %v3854, %v3855
      %v3857 = vrot.slane %v3733, 5
      %v3858 = vrot.slane %v3857, 4
      %v3859 = vrot.slane %v3734, 5
      %v3860 = vsel %vm1624, %v3858, %v3859
      %v3861 = vrot.slane %v3859, 4
      %v3862 = vrot.slane %v3735, 5
      %v3863 = vsel %vm1624, %v3861, %v3862
      %v3864 = vrot.slane %v3736, 5
      %v3865 = vrot.slane %v3864, 4
      %v3866 = vrot.slane %v3737, 5
      %v3867 = vsel %vm1624, %v3865, %v3866
      %v3868 = vrot.slane %v3866, 4
      %v3869 = vrot.slane %v3738, 5
      %v3870 = vsel %vm1624, %v3868, %v3869
      %v3871 = vrot.slane %v3739, 5
      %v3872 = vrot.slane %v3871, 4
      %v3873 = vrot.slane %v3740, 5
      %v3874 = vsel %vm1624, %v3872, %v3873
      %v3875 = vrot.slane %v3873, 4
      %v3876 = vrot.slane %v3741, 5
      %v3877 = vsel %vm1624, %v3875, %v3876
      %v3878 = vrot.slane %v3742, 5
      %v3879 = vrot.slane %v3878, 4
      %v3880 = vrot.slane %v3743, 5
      %v3881 = vsel %vm1624, %v3879, %v3880
      %v3882 = vrot.slane %v3880, 4
      %v3883 = vrot.slane %v3744, 5
      %v3884 = vsel %vm1624, %v3882, %v3883
      %v3885 = vrot.slane %v3745, 5
      %v3886 = vrot.slane %v3885, 4
      %v3887 = vrot.slane %v3746, 5
      %v3888 = vsel %vm1624, %v3886, %v3887
      %v3889 = vrot.slane %v3887, 4
      %v3890 = vrot.slane %v3747, 5
      %v3891 = vsel %vm1624, %v3889, %v3890
      %v3892 = vrot.slane %v3748, 5
      %v3893 = vrot.slane %v3892, 4
      %v3894 = vrot.slane %v3749, 5
      %v3895 = vsel %vm1624, %v3893, %v3894
      %v3896 = vrot.slane %v3894, 4
      %v3897 = vrot.slane %v3750, 5
      %v3898 = vsel %vm1624, %v3896, %v3897
      %v3899 = vrot.slane %v3751, 5
      %v3900 = vrot.slane %v3899, 4
      %v3901 = vrot.slane %v3752, 5
      %v3902 = vsel %vm1624, %v3900, %v3901
      %v3903 = vrot.slane %v3901, 4
      %v3904 = vrot.slane %v3753, 5
      %v3905 = vsel %vm1624, %v3903, %v3904
      %v3906 = vrot.slane %v3754, 5
      %v3907 = vrot.slane %v3906, 4
      %v3908 = vrot.slane %v3755, 5
      %v3909 = vsel %vm1624, %v3907, %v3908
      %v3910 = vrot.slane %v3908, 4
      %v3911 = vrot.slane %v3756, 5
      %v3912 = vsel %vm1624, %v3910, %v3911
      %v3913 = vrot.slane %v3757, 5
      %v3914 = vrot.slane %v3913, 4
      %v3915 = vrot.slane %v3758, 5
      %v3916 = vsel %vm1624, %v3914, %v3915
      %v3917 = vrot.slane %v3915, 4
      %v3918 = vrot.slane %v3759, 5
      %v3919 = vsel %vm1624, %v3917, %v3918
      %3920 = vrot.lane.b32.xlu0 %v3811, 32
      %v3921 = vpop.permute.xlu0 %3920
      %3922 = vrot.lane.b32.xlu0 %v3814, 32
      %v3923 = vpop.permute.xlu0 %3922
      %3924 = vrot.lane.b32.xlu0 %v3818, 32
      %v3925 = vpop.permute.xlu0 %3924
      %3926 = vrot.lane.b32.xlu0 %v3821, 32
      %v3927 = vpop.permute.xlu0 %3926
      %3928 = vrot.lane.b32.xlu0 %v3825, 32
      %v3929 = vpop.permute.xlu0 %3928
      %3930 = vrot.lane.b32.xlu0 %v3828, 32
      %v3931 = vpop.permute.xlu0 %3930
      %3932 = vrot.lane.b32.xlu0 %v3832, 32
      %v3933 = vpop.permute.xlu0 %3932
      %3934 = vrot.lane.b32.xlu0 %v3835, 32
      %v3935 = vpop.permute.xlu0 %3934
      %3936 = vrot.lane.b32.xlu0 %v3839, 32
      %v3937 = vpop.permute.xlu0 %3936
      %3938 = vrot.lane.b32.xlu0 %v3842, 32
      %v3939 = vpop.permute.xlu0 %3938
      %3940 = vrot.lane.b32.xlu0 %v3846, 32
      %v3941 = vpop.permute.xlu0 %3940
      %3942 = vrot.lane.b32.xlu0 %v3849, 32
      %v3943 = vpop.permute.xlu0 %3942
      %3944 = vrot.lane.b32.xlu0 %v3853, 32
      %v3945 = vpop.permute.xlu0 %3944
      %3946 = vrot.lane.b32.xlu0 %v3856, 32
      %v3947 = vpop.permute.xlu0 %3946
      %3948 = vrot.lane.b32.xlu0 %v3860, 32
      %v3949 = vpop.permute.xlu0 %3948
      %3950 = vrot.lane.b32.xlu0 %v3863, 32
      %v3951 = vpop.permute.xlu0 %3950
      %3952 = vrot.lane.b32.xlu0 %v3867, 32
      %v3953 = vpop.permute.xlu0 %3952
      %3954 = vrot.lane.b32.xlu0 %v3870, 32
      %v3955 = vpop.permute.xlu0 %3954
      %3956 = vrot.lane.b32.xlu0 %v3874, 32
      %v3957 = vpop.permute.xlu0 %3956
      %3958 = vrot.lane.b32.xlu0 %v3877, 32
      %v3959 = vpop.permute.xlu0 %3958
      %3960 = vrot.lane.b32.xlu0 %v3881, 32
      %v3961 = vpop.permute.xlu0 %3960
      %3962 = vrot.lane.b32.xlu0 %v3884, 32
      %v3963 = vpop.permute.xlu0 %3962
      %3964 = vrot.lane.b32.xlu0 %v3888, 32
      %v3965 = vpop.permute.xlu0 %3964
      %3966 = vrot.lane.b32.xlu0 %v3891, 32
      %v3967 = vpop.permute.xlu0 %3966
      %3968 = vrot.lane.b32.xlu0 %v3895, 32
      %v3969 = vpop.permute.xlu0 %3968
      %3970 = vrot.lane.b32.xlu0 %v3898, 32
      %v3971 = vpop.permute.xlu0 %3970
      %3972 = vrot.lane.b32.xlu0 %v3902, 32
      %v3973 = vpop.permute.xlu0 %3972
      %3974 = vrot.lane.b32.xlu0 %v3905, 32
      %v3975 = vpop.permute.xlu0 %3974
      %3976 = vrot.lane.b32.xlu0 %v3909, 32
      %v3977 = vpop.permute.xlu0 %3976
      %3978 = vrot.lane.b32.xlu0 %v3912, 32
      %v3979 = vpop.permute.xlu0 %3978
      %3980 = vrot.lane.b32.xlu0 %v3916, 32
      %v3981 = vpop.permute.xlu0 %3980
      %3982 = vrot.lane.b32.xlu0 %v3919, 32
      %v3983 = vpop.permute.xlu0 %3982
      %vm4016 = vcmask 290048
      %4017 = vst.msk [vmem:[#allocation3] sm:$0xf] %vm4016, %v3921
      %4018 = vst.msk [vmem:[#allocation3 + $0x4] sm:$0xf] %vm4016, %v3923
      %4019 = vst.msk [vmem:[#allocation3 + $0x8] sm:$0xf] %vm4016, %v3925
      %4020 = vst.msk [vmem:[#allocation3 + $0xc] sm:$0xf] %vm4016, %v3927
      %4021 = vst.msk [vmem:[#allocation3 + $0x10] sm:$0xf] %vm4016, %v3929
      %4022 = vst.msk [vmem:[#allocation3 + $0x14] sm:$0xf] %vm4016, %v3931
      %4023 = vst.msk [vmem:[#allocation3 + $0x18] sm:$0xf] %vm4016, %v3933
      %4024 = vst.msk [vmem:[#allocation3 + $0x1c] sm:$0xf] %vm4016, %v3935
      %4025 = vst.msk [vmem:[#allocation3 + $0x20] sm:$0xf] %vm4016, %v3937
      %4026 = vst.msk [vmem:[#allocation3 + $0x24] sm:$0xf] %vm4016, %v3939
      %4027 = vst.msk [vmem:[#allocation3 + $0x28] sm:$0xf] %vm4016, %v3941
      %4028 = vst.msk [vmem:[#allocation3 + $0x2c] sm:$0xf] %vm4016, %v3943
      %4029 = vst.msk [vmem:[#allocation3 + $0x30] sm:$0xf] %vm4016, %v3945
      %4030 = vst.msk [vmem:[#allocation3 + $0x34] sm:$0xf] %vm4016, %v3947
      %4031 = vst.msk [vmem:[#allocation3 + $0x38] sm:$0xf] %vm4016, %v3949
      %4032 = vst.msk [vmem:[#allocation3 + $0x3c] sm:$0xf] %vm4016, %v3951
      %4033 = vst.msk [vmem:[#allocation3 + $0x40] sm:$0xf] %vm4016, %v3953
      %4034 = vst.msk [vmem:[#allocation3 + $0x44] sm:$0xf] %vm4016, %v3955
      %4035 = vst.msk [vmem:[#allocation3 + $0x48] sm:$0xf] %vm4016, %v3957
      %4036 = vst.msk [vmem:[#allocation3 + $0x4c] sm:$0xf] %vm4016, %v3959
      %4037 = vst.msk [vmem:[#allocation3 + $0x50] sm:$0xf] %vm4016, %v3961
      %4038 = vst.msk [vmem:[#allocation3 + $0x54] sm:$0xf] %vm4016, %v3963
      %4039 = vst.msk [vmem:[#allocation3 + $0x58] sm:$0xf] %vm4016, %v3965
      %4040 = vst.msk [vmem:[#allocation3 + $0x5c] sm:$0xf] %vm4016, %v3967
      %4041 = vst.msk [vmem:[#allocation3 + $0x60] sm:$0xf] %vm4016, %v3969
      %4042 = vst.msk [vmem:[#allocation3 + $0x64] sm:$0xf] %vm4016, %v3971
      %4043 = vst.msk [vmem:[#allocation3 + $0x68] sm:$0xf] %vm4016, %v3973
      %4044 = vst.msk [vmem:[#allocation3 + $0x6c] sm:$0xf] %vm4016, %v3975
      %4045 = vst.msk [vmem:[#allocation3 + $0x70] sm:$0xf] %vm4016, %v3977
      %4046 = vst.msk [vmem:[#allocation3 + $0x74] sm:$0xf] %vm4016, %v3979
      %4047 = vst.msk [vmem:[#allocation3 + $0x78] sm:$0xf] %vm4016, %v3981
      %4048 = vst.msk [vmem:[#allocation3 + $0x7c] sm:$0xf] %vm4016, %v3983
      %v4049 = vld [vmem:[#allocation3] sm:$0xf]
      %v4050 = vld [vmem:[#allocation3 + $0x4] sm:$0xf]
      %v4051 = vld [vmem:[#allocation3 + $0x8] sm:$0xf]
      %v4052 = vld [vmem:[#allocation3 + $0xc] sm:$0xf]
      %v4053 = vld [vmem:[#allocation3 + $0x10] sm:$0xf]
      %v4054 = vld [vmem:[#allocation3 + $0x14] sm:$0xf]
      %v4055 = vld [vmem:[#allocation3 + $0x18] sm:$0xf]
      %v4056 = vld [vmem:[#allocation3 + $0x1c] sm:$0xf]
      %v4057 = vld [vmem:[#allocation3 + $0x20] sm:$0xf]
      %v4058 = vld [vmem:[#allocation3 + $0x24] sm:$0xf]
      %v4059 = vld [vmem:[#allocation3 + $0x28] sm:$0xf]
      %v4060 = vld [vmem:[#allocation3 + $0x2c] sm:$0xf]
      %v4061 = vld [vmem:[#allocation3 + $0x30] sm:$0xf]
      %v4062 = vld [vmem:[#allocation3 + $0x34] sm:$0xf]
      %v4063 = vld [vmem:[#allocation3 + $0x38] sm:$0xf]
      %v4064 = vld [vmem:[#allocation3 + $0x3c] sm:$0xf]
      %v4065 = vld [vmem:[#allocation3 + $0x40] sm:$0xf]
      %v4066 = vld [vmem:[#allocation3 + $0x44] sm:$0xf]
      %v4067 = vld [vmem:[#allocation3 + $0x48] sm:$0xf]
      %v4068 = vld [vmem:[#allocation3 + $0x4c] sm:$0xf]
      %v4069 = vld [vmem:[#allocation3 + $0x50] sm:$0xf]
      %v4070 = vld [vmem:[#allocation3 + $0x54] sm:$0xf]
      %v4071 = vld [vmem:[#allocation3 + $0x58] sm:$0xf]
      %v4072 = vld [vmem:[#allocation3 + $0x5c] sm:$0xf]
      %v4073 = vld [vmem:[#allocation3 + $0x60] sm:$0xf]
      %v4074 = vld [vmem:[#allocation3 + $0x64] sm:$0xf]
      %v4075 = vld [vmem:[#allocation3 + $0x68] sm:$0xf]
      %v4076 = vld [vmem:[#allocation3 + $0x6c] sm:$0xf]
      %v4077 = vld [vmem:[#allocation3 + $0x70] sm:$0xf]
      %v4078 = vld [vmem:[#allocation3 + $0x74] sm:$0xf]
      %v4079 = vld [vmem:[#allocation3 + $0x78] sm:$0xf]
      %v4080 = vld [vmem:[#allocation3 + $0x7c] sm:$0xf]
      %v4081 = vld [vmem:[%s1] sm:$0xf]
      %v4082 = vld [vmem:[%s1 + $0x4] sm:$0xf]
      %v4083 = vld [vmem:[%s1 + $0x8] sm:$0xf]
      %v4084 = vld [vmem:[%s1 + $0xc] sm:$0xf]
      %v4085 = vld [vmem:[%s1 + $0x10] sm:$0x3]
      %v4118 = vunpack.c.l.b16 %v4049
      %v4119 = vunpack.c.l.b16 %v4050
      %v4120 = vunpack.c.l.b16 %v4051
      %v4121 = vunpack.c.l.b16 %v4052
      %v4122 = vunpack.c.l.b16 %v4053
      %v4123 = vunpack.c.l.b16 %v4054
      %v4124 = vunpack.c.l.b16 %v4055
      %v4125 = vunpack.c.l.b16 %v4056
      %v4126 = vunpack.c.l.b16 %v4057
      %v4127 = vunpack.c.l.b16 %v4058
      %v4128 = vunpack.c.l.b16 %v4059
      %v4129 = vunpack.c.l.b16 %v4060
      %v4130 = vunpack.c.l.b16 %v4061
      %v4131 = vunpack.c.l.b16 %v4062
      %v4132 = vunpack.c.l.b16 %v4063
      %v4133 = vunpack.c.l.b16 %v4064
      %v4134 = vunpack.c.l.b16 %v4065
      %v4135 = vunpack.c.l.b16 %v4066
      %v4136 = vunpack.c.l.b16 %v4067
      %v4137 = vunpack.c.l.b16 %v4068
      %v4138 = vunpack.c.l.b16 %v4069
      %v4139 = vunpack.c.l.b16 %v4070
      %v4140 = vunpack.c.l.b16 %v4071
      %v4141 = vunpack.c.l.b16 %v4072
      %v4142 = vunpack.c.l.b16 %v4073
      %v4143 = vunpack.c.l.b16 %v4074
      %v4144 = vunpack.c.l.b16 %v4075
      %v4145 = vunpack.c.l.b16 %v4076
      %v4146 = vunpack.c.l.b16 %v4077
      %v4147 = vunpack.c.l.b16 %v4078
      %v4148 = vunpack.c.l.b16 %v4079
      %v4149 = vunpack.c.l.b16 %v4080
      %v4150 = vpack.c.b16 %v4119, %v4118
      %v4151 = vpack.c.b16 %v4121, %v4120
      %v4152 = vpack.c.b16 %v4123, %v4122
      %v4153 = vpack.c.b16 %v4125, %v4124
      %v4154 = vpack.c.b16 %v4127, %v4126
      %v4155 = vpack.c.b16 %v4129, %v4128
      %v4156 = vpack.c.b16 %v4131, %v4130
      %v4157 = vpack.c.b16 %v4133, %v4132
      %v4158 = vpack.c.b16 %v4135, %v4134
      %v4159 = vpack.c.b16 %v4137, %v4136
      %v4160 = vpack.c.b16 %v4139, %v4138
      %v4161 = vpack.c.b16 %v4141, %v4140
      %v4162 = vpack.c.b16 %v4143, %v4142
      %v4163 = vpack.c.b16 %v4145, %v4144
      %v4164 = vpack.c.b16 %v4147, %v4146
      %v4165 = vpack.c.b16 %v4149, %v4148
      %v4171 = vunpack.c.l.b16 %v4081
      %v4172 = vunpack.c.l.b16 %v4082
      %v4173 = vunpack.c.l.b16 %v4083
      %v4174 = vunpack.c.l.b16 %v4084
      %v4175 = vunpack.c.l.b16 %v4085
      %v4176 = vpack.c.b16 %v4172, %v4171
      %v4177 = vpack.c.b16 %v4174, %v4173
      %v4178 = vpack.c.b16 %v4175, %v4175
      %vm4181 = vcmask 293888
      %v4183 = vsel %vm4181, %v4150, 0
      %v4186 = vsel %vm4181, %v4151, 0
      %v4189 = vsel %vm4181, %v4152, 0
      %v4192 = vsel %vm4181, %v4153, 0
      %v4195 = vsel %vm4181, %v4154, 0
      %v4198 = vsel %vm4181, %v4155, 0
      %v4201 = vsel %vm4181, %v4156, 0
      %v4204 = vsel %vm4181, %v4157, 0
      %v4207 = vsel %vm4181, %v4158, 0
      %v4210 = vsel %vm4181, %v4159, 0
      %v4213 = vsel %vm4181, %v4160, 0
      %v4216 = vsel %vm4181, %v4161, 0
      %v4219 = vsel %vm4181, %v4162, 0
      %v4222 = vsel %vm4181, %v4163, 0
      %v4225 = vsel %vm4181, %v4164, 0
      %v4228 = vsel %vm4181, %v4165, 0
      %vm4230 = vcmask 1041408
      %v4232 = vsel %vm4230, %v4178, 0
      %4234 = vmatpush.bf16.msra.mxu0 0
      %4235 = vmatpush.bf16.msra.mxu0 0
      %4236 = vmatpush.bf16.msra.mxu0 0
      %4237 = vmatpush.bf16.msra.mxu0 0
      %4238 = vmatpush.bf16.msra.mxu0 0
      %4239 = vmatpush.bf16.msra.mxu0 %v4232
      %4240 = vmatpush.bf16.msra.mxu0 %v4177
      %4241 = vmatpush.bf16.msra.mxu0 %v4176
      %4242 = vmatmul.bf16.gmra.mxu0 %v4183
      %v4243 = vpop.f32.mrf.mxu0
      %v4244 = vadd.f32 0.0, %v4243
      %v4245 = vpop.f32.mrf.mxu0
      %v4246 = vadd.f32 0.0, %v4245
      %4247 = vmatmul.bf16.gmra.mxu0 %v4186
      %v4248 = vpop.f32.mrf.mxu0
      %v4249 = vadd.f32 0.0, %v4248
      %v4250 = vpop.f32.mrf.mxu0
      %v4251 = vadd.f32 0.0, %v4250
      %4252 = vmatmul.bf16.gmra.mxu0 %v4189
      %v4253 = vpop.f32.mrf.mxu0
      %v4254 = vadd.f32 0.0, %v4253
      %v4255 = vpop.f32.mrf.mxu0
      %v4256 = vadd.f32 0.0, %v4255
      %4257 = vmatmul.bf16.gmra.mxu0 %v4192
      %v4258 = vpop.f32.mrf.mxu0
      %v4259 = vadd.f32 0.0, %v4258
      %v4260 = vpop.f32.mrf.mxu0
      %v4261 = vadd.f32 0.0, %v4260
      %4262 = vmatmul.bf16.gmra.mxu0 %v4195
      %v4263 = vpop.f32.mrf.mxu0
      %v4264 = vadd.f32 0.0, %v4263
      %v4265 = vpop.f32.mrf.mxu0
      %v4266 = vadd.f32 0.0, %v4265
      %4267 = vmatmul.bf16.gmra.mxu0 %v4198
      %v4268 = vpop.f32.mrf.mxu0
      %v4269 = vadd.f32 0.0, %v4268
      %v4270 = vpop.f32.mrf.mxu0
      %v4271 = vadd.f32 0.0, %v4270
      %4272 = vmatmul.bf16.gmra.mxu0 %v4201
      %v4273 = vpop.f32.mrf.mxu0
      %v4274 = vadd.f32 0.0, %v4273
      %v4275 = vpop.f32.mrf.mxu0
      %v4276 = vadd.f32 0.0, %v4275
      %4277 = vmatmul.bf16.gmra.mxu0 %v4204
      %v4278 = vpop.f32.mrf.mxu0
      %v4279 = vadd.f32 0.0, %v4278
      %v4280 = vpop.f32.mrf.mxu0
      %v4281 = vadd.f32 0.0, %v4280
      %4282 = vmatmul.bf16.gmra.mxu0 %v4207
      %v4283 = vpop.f32.mrf.mxu0
      %v4284 = vadd.f32 0.0, %v4283
      %v4285 = vpop.f32.mrf.mxu0
      %v4286 = vadd.f32 0.0, %v4285
      %4287 = vmatmul.bf16.gmra.mxu0 %v4210
      %v4288 = vpop.f32.mrf.mxu0
      %v4289 = vadd.f32 0.0, %v4288
      %v4290 = vpop.f32.mrf.mxu0
      %v4291 = vadd.f32 0.0, %v4290
      %4292 = vmatmul.bf16.gmra.mxu0 %v4213
      %v4293 = vpop.f32.mrf.mxu0
      %v4294 = vadd.f32 0.0, %v4293
      %v4295 = vpop.f32.mrf.mxu0
      %v4296 = vadd.f32 0.0, %v4295
      %4297 = vmatmul.bf16.gmra.mxu0 %v4216
      %v4298 = vpop.f32.mrf.mxu0
      %v4299 = vadd.f32 0.0, %v4298
      %v4300 = vpop.f32.mrf.mxu0
      %v4301 = vadd.f32 0.0, %v4300
      %4302 = vmatmul.bf16.gmra.mxu0 %v4219
      %v4303 = vpop.f32.mrf.mxu0
      %v4304 = vadd.f32 0.0, %v4303
      %v4305 = vpop.f32.mrf.mxu0
      %v4306 = vadd.f32 0.0, %v4305
      %4307 = vmatmul.bf16.gmra.mxu0 %v4222
      %v4308 = vpop.f32.mrf.mxu0
      %v4309 = vadd.f32 0.0, %v4308
      %v4310 = vpop.f32.mrf.mxu0
      %v4311 = vadd.f32 0.0, %v4310
      %4312 = vmatmul.bf16.gmra.mxu0 %v4225
      %v4313 = vpop.f32.mrf.mxu0
      %v4314 = vadd.f32 0.0, %v4313
      %v4315 = vpop.f32.mrf.mxu0
      %v4316 = vadd.f32 0.0, %v4315
      %4317 = vmatmul.bf16.gmra.mxu0 %v4228
      %v4318 = vpop.f32.mrf.mxu0
      %v4319 = vadd.f32 0.0, %v4318
      %v4320 = vpop.f32.mrf.mxu0
      %v4321 = vadd.f32 0.0, %v4320
      %4322 = vdwg.mxu0
      %vm4323 = vcmask 31744
      %v4324 = vsel %vm4323, %v4244, 0.0
      %v4325 = vsel %vm4323, %v4246, 0.0
      %v4326 = vadd.f32 %v4324, %v4325
      %v4327 = vsel %vm4323, %v4249, 0.0
      %v4328 = vadd.f32 %v4326, %v4327
      %v4329 = vsel %vm4323, %v4251, 0.0
      %v4330 = vadd.f32 %v4328, %v4329
      %v4331 = vsel %vm4323, %v4254, 0.0
      %v4332 = vadd.f32 %v4330, %v4331
      %v4333 = vsel %vm4323, %v4256, 0.0
      %v4334 = vadd.f32 %v4332, %v4333
      %v4335 = vsel %vm4323, %v4259, 0.0
      %v4336 = vadd.f32 %v4334, %v4335
      %v4337 = vsel %vm4323, %v4261, 0.0
      %v4338 = vadd.f32 %v4336, %v4337
      %v4339 = vsel %vm4323, %v4264, 0.0
      %v4340 = vadd.f32 %v4338, %v4339
      %v4341 = vsel %vm4323, %v4266, 0.0
      %v4342 = vadd.f32 %v4340, %v4341
      %v4343 = vsel %vm4323, %v4269, 0.0
      %v4344 = vadd.f32 %v4342, %v4343
      %v4345 = vsel %vm4323, %v4271, 0.0
      %v4346 = vadd.f32 %v4344, %v4345
      %v4347 = vsel %vm4323, %v4274, 0.0
      %v4348 = vadd.f32 %v4346, %v4347
      %v4349 = vsel %vm4323, %v4276, 0.0
      %v4350 = vadd.f32 %v4348, %v4349
      %v4351 = vsel %vm4323, %v4279, 0.0
      %v4352 = vadd.f32 %v4350, %v4351
      %v4353 = vsel %vm4323, %v4281, 0.0
      %v4354 = vadd.f32 %v4352, %v4353
      %v4355 = vsel %vm4323, %v4284, 0.0
      %v4356 = vadd.f32 %v4354, %v4355
      %v4357 = vsel %vm4323, %v4286, 0.0
      %v4358 = vadd.f32 %v4356, %v4357
      %v4359 = vsel %vm4323, %v4289, 0.0
      %v4360 = vadd.f32 %v4358, %v4359
      %v4361 = vsel %vm4323, %v4291, 0.0
      %v4362 = vadd.f32 %v4360, %v4361
      %v4363 = vsel %vm4323, %v4294, 0.0
      %v4364 = vadd.f32 %v4362, %v4363
      %v4365 = vsel %vm4323, %v4296, 0.0
      %v4366 = vadd.f32 %v4364, %v4365
      %v4367 = vsel %vm4323, %v4299, 0.0
      %v4368 = vadd.f32 %v4366, %v4367
      %v4369 = vsel %vm4323, %v4301, 0.0
      %v4370 = vadd.f32 %v4368, %v4369
      %v4371 = vsel %vm4323, %v4304, 0.0
      %v4372 = vadd.f32 %v4370, %v4371
      %v4373 = vsel %vm4323, %v4306, 0.0
      %v4374 = vadd.f32 %v4372, %v4373
      %v4375 = vsel %vm4323, %v4309, 0.0
      %v4376 = vadd.f32 %v4374, %v4375
      %v4377 = vsel %vm4323, %v4311, 0.0
      %v4378 = vadd.f32 %v4376, %v4377
      %v4379 = vsel %vm4323, %v4314, 0.0
      %v4380 = vadd.f32 %v4378, %v4379
      %v4381 = vsel %vm4323, %v4316, 0.0
      %v4382 = vadd.f32 %v4380, %v4381
      %v4383 = vsel %vm4323, %v4319, 0.0
      %v4384 = vadd.f32 %v4382, %v4383
      %v4385 = vsel %vm4323, %v4321, 0.0
      %v4386 = vadd.f32 %v4384, %v4385
      %v4387 = vrot.slane %v4386, 4
      %v4388 = vadd.f32 %v4386, %v4387
      %v4389 = vrot.slane %v4388, 2
      %v4390 = vadd.f32 %v4388, %v4389
      %v4391 = vrot.slane %v4390, 1
      %v4392 = vadd.f32 %v4390, %v4391
      %v4393 = vmul.f32 %v4244, %v4244
      %v4394 = vmul.f32 %v4246, %v4246
      %v4395 = vmul.f32 %v4249, %v4249
      %v4396 = vmul.f32 %v4251, %v4251
      %v4397 = vmul.f32 %v4254, %v4254
      %v4398 = vmul.f32 %v4256, %v4256
      %v4399 = vmul.f32 %v4259, %v4259
      %v4400 = vmul.f32 %v4261, %v4261
      %v4401 = vmul.f32 %v4264, %v4264
      %v4402 = vmul.f32 %v4266, %v4266
      %v4403 = vmul.f32 %v4269, %v4269
      %v4404 = vmul.f32 %v4271, %v4271
      %v4405 = vmul.f32 %v4274, %v4274
      %v4406 = vmul.f32 %v4276, %v4276
      %v4407 = vmul.f32 %v4279, %v4279
      %v4408 = vmul.f32 %v4281, %v4281
      %v4409 = vmul.f32 %v4284, %v4284
      %v4410 = vmul.f32 %v4286, %v4286
      %v4411 = vmul.f32 %v4289, %v4289
      %v4412 = vmul.f32 %v4291, %v4291
      %v4413 = vmul.f32 %v4294, %v4294
      %v4414 = vmul.f32 %v4296, %v4296
      %v4415 = vmul.f32 %v4299, %v4299
      %v4416 = vmul.f32 %v4301, %v4301
      %v4417 = vmul.f32 %v4304, %v4304
      %v4418 = vmul.f32 %v4306, %v4306
      %v4419 = vmul.f32 %v4309, %v4309
      %v4420 = vmul.f32 %v4311, %v4311
      %v4421 = vmul.f32 %v4314, %v4314
      %v4422 = vmul.f32 %v4316, %v4316
      %v4423 = vmul.f32 %v4319, %v4319
      %v4424 = vmul.f32 %v4321, %v4321
      %v4425 = vsel %vm4323, %v4393, 0.0
      %v4426 = vsel %vm4323, %v4394, 0.0
      %v4427 = vadd.f32 %v4425, %v4426
      %v4428 = vsel %vm4323, %v4395, 0.0
      %v4429 = vadd.f32 %v4427, %v4428
      %v4430 = vsel %vm4323, %v4396, 0.0
      %v4431 = vadd.f32 %v4429, %v4430
      %v4432 = vsel %vm4323, %v4397, 0.0
      %v4433 = vadd.f32 %v4431, %v4432
      %v4434 = vsel %vm4323, %v4398, 0.0
      %v4435 = vadd.f32 %v4433, %v4434
      %v4436 = vsel %vm4323, %v4399, 0.0
      %v4437 = vadd.f32 %v4435, %v4436
      %v4438 = vsel %vm4323, %v4400, 0.0
      %v4439 = vadd.f32 %v4437, %v4438
      %v4440 = vsel %vm4323, %v4401, 0.0
      %v4441 = vadd.f32 %v4439, %v4440
      %v4442 = vsel %vm4323, %v4402, 0.0
      %v4443 = vadd.f32 %v4441, %v4442
      %v4444 = vsel %vm4323, %v4403, 0.0
      %v4445 = vadd.f32 %v4443, %v4444
      %v4446 = vsel %vm4323, %v4404, 0.0
      %v4447 = vadd.f32 %v4445, %v4446
      %v4448 = vsel %vm4323, %v4405, 0.0
      %v4449 = vadd.f32 %v4447, %v4448
      %v4450 = vsel %vm4323, %v4406, 0.0
      %v4451 = vadd.f32 %v4449, %v4450
      %v4452 = vsel %vm4323, %v4407, 0.0
      %v4453 = vadd.f32 %v4451, %v4452
      %v4454 = vsel %vm4323, %v4408, 0.0
      %v4455 = vadd.f32 %v4453, %v4454
      %v4456 = vsel %vm4323, %v4409, 0.0
      %v4457 = vadd.f32 %v4455, %v4456
      %v4458 = vsel %vm4323, %v4410, 0.0
      %v4459 = vadd.f32 %v4457, %v4458
      %v4460 = vsel %vm4323, %v4411, 0.0
      %v4461 = vadd.f32 %v4459, %v4460
      %v4462 = vsel %vm4323, %v4412, 0.0
      %v4463 = vadd.f32 %v4461, %v4462
      %v4464 = vsel %vm4323, %v4413, 0.0
      %v4465 = vadd.f32 %v4463, %v4464
      %v4466 = vsel %vm4323, %v4414, 0.0
      %v4467 = vadd.f32 %v4465, %v4466
      %v4468 = vsel %vm4323, %v4415, 0.0
      %v4469 = vadd.f32 %v4467, %v4468
      %v4470 = vsel %vm4323, %v4416, 0.0
      %v4471 = vadd.f32 %v4469, %v4470
      %v4472 = vsel %vm4323, %v4417, 0.0
      %v4473 = vadd.f32 %v4471, %v4472
      %v4474 = vsel %vm4323, %v4418, 0.0
      %v4475 = vadd.f32 %v4473, %v4474
      %v4476 = vsel %vm4323, %v4419, 0.0
      %v4477 = vadd.f32 %v4475, %v4476
      %v4478 = vsel %vm4323, %v4420, 0.0
      %v4479 = vadd.f32 %v4477, %v4478
      %v4480 = vsel %vm4323, %v4421, 0.0
      %v4481 = vadd.f32 %v4479, %v4480
      %v4482 = vsel %vm4323, %v4422, 0.0
      %v4483 = vadd.f32 %v4481, %v4482
      %v4484 = vsel %vm4323, %v4423, 0.0
      %v4485 = vadd.f32 %v4483, %v4484
      %v4486 = vsel %vm4323, %v4424, 0.0
      %v4487 = vadd.f32 %v4485, %v4486
      %v4488 = vrot.slane %v4487, 4
      %v4489 = vadd.f32 %v4487, %v4488
      %v4490 = vrot.slane %v4489, 2
      %v4491 = vadd.f32 %v4489, %v4490
      %v4492 = vrot.slane %v4491, 1
      %v4493 = vadd.f32 %v4491, %v4492
      %v4494 = vmul.f32 %v4392, 0.00390625
      %v4495 = vmul.f32 %v4493, 0.00390625
      %v4496 = vmul.f32 %v4494, %v4494
      %v4497 = vsub.f32 %v4495, %v4496
      %v4498 = vsub.f32 %v4244, %v4494
      %v4499 = vsub.f32 %v4246, %v4494
      %v4500 = vsub.f32 %v4249, %v4494
      %v4501 = vsub.f32 %v4251, %v4494
      %v4502 = vsub.f32 %v4254, %v4494
      %v4503 = vsub.f32 %v4256, %v4494
      %v4504 = vsub.f32 %v4259, %v4494
      %v4505 = vsub.f32 %v4261, %v4494
      %v4506 = vsub.f32 %v4264, %v4494
      %v4507 = vsub.f32 %v4266, %v4494
      %v4508 = vsub.f32 %v4269, %v4494
      %v4509 = vsub.f32 %v4271, %v4494
      %v4510 = vsub.f32 %v4274, %v4494
      %v4511 = vsub.f32 %v4276, %v4494
      %v4512 = vsub.f32 %v4279, %v4494
      %v4513 = vsub.f32 %v4281, %v4494
      %v4514 = vsub.f32 %v4284, %v4494
      %v4515 = vsub.f32 %v4286, %v4494
      %v4516 = vsub.f32 %v4289, %v4494
      %v4517 = vsub.f32 %v4291, %v4494
      %v4518 = vsub.f32 %v4294, %v4494
      %v4519 = vsub.f32 %v4296, %v4494
      %v4520 = vsub.f32 %v4299, %v4494
      %v4521 = vsub.f32 %v4301, %v4494
      %v4522 = vsub.f32 %v4304, %v4494
      %v4523 = vsub.f32 %v4306, %v4494
      %v4524 = vsub.f32 %v4309, %v4494
      %v4525 = vsub.f32 %v4311, %v4494
      %v4526 = vsub.f32 %v4314, %v4494
      %v4527 = vsub.f32 %v4316, %v4494
      %v4528 = vsub.f32 %v4319, %v4494
      %v4529 = vsub.f32 %v4321, %v4494
      %v4530 = vadd.f32 %v4497, 1e-05
      %v4531 = vrsqrt.pop %v4530
      %v4532 = vmul.f32 %v4531, %v4530
      %v4533 = vmul.f32 %v4532, %v4531
      %v4534 = vmul.f32 0.5, %v4533
      %v4535 = vsub.f32 1.5, %v4534
      %v4536 = vmul.f32 %v4531, %v4535
      %vm4537 = vweird.f32 %v4530
      %vm4538 = vweird.f32 %v4531
      %vm4539 = vmor %vm4537, %vm4538
      %v4540 = vsel %vm4539, %v4531, %v4536
      %v4541 = vmul.f32 %v4498, %v4540
      %v4542 = vmul.f32 %v4499, %v4540
      %v4543 = vmul.f32 %v4500, %v4540
      %v4544 = vmul.f32 %v4501, %v4540
      %v4545 = vmul.f32 %v4502, %v4540
      %v4546 = vmul.f32 %v4503, %v4540
      %v4547 = vmul.f32 %v4504, %v4540
      %v4548 = vmul.f32 %v4505, %v4540
      %v4549 = vmul.f32 %v4506, %v4540
      %v4550 = vmul.f32 %v4507, %v4540
      %v4551 = vmul.f32 %v4508, %v4540
      %v4552 = vmul.f32 %v4509, %v4540
      %v4553 = vmul.f32 %v4510, %v4540
      %v4554 = vmul.f32 %v4511, %v4540
      %v4555 = vmul.f32 %v4512, %v4540
      %v4556 = vmul.f32 %v4513, %v4540
      %v4557 = vmul.f32 %v4514, %v4540
      %v4558 = vmul.f32 %v4515, %v4540
      %v4559 = vmul.f32 %v4516, %v4540
      %v4560 = vmul.f32 %v4517, %v4540
      %v4561 = vmul.f32 %v4518, %v4540
      %v4562 = vmul.f32 %v4519, %v4540
      %v4563 = vmul.f32 %v4520, %v4540
      %v4564 = vmul.f32 %v4521, %v4540
      %v4565 = vmul.f32 %v4522, %v4540
      %v4566 = vmul.f32 %v4523, %v4540
      %v4567 = vmul.f32 %v4524, %v4540
      %v4568 = vmul.f32 %v4525, %v4540
      %v4569 = vmul.f32 %v4526, %v4540
      %v4570 = vmul.f32 %v4527, %v4540
      %v4571 = vmul.f32 %v4528, %v4540
      %v4572 = vmul.f32 %v4529, %v4540
      %v4573 = vmax.f32 %v4541, 0.0
      %v4574 = vmax.f32 %v4542, 0.0
      %v4575 = vmax.f32 %v4543, 0.0
      %v4576 = vmax.f32 %v4544, 0.0
      %v4577 = vmax.f32 %v4545, 0.0
      %v4578 = vmax.f32 %v4546, 0.0
      %v4579 = vmax.f32 %v4547, 0.0
      %v4580 = vmax.f32 %v4548, 0.0
      %v4581 = vmax.f32 %v4549, 0.0
      %v4582 = vmax.f32 %v4550, 0.0
      %v4583 = vmax.f32 %v4551, 0.0
      %v4584 = vmax.f32 %v4552, 0.0
      %v4585 = vmax.f32 %v4553, 0.0
      %v4586 = vmax.f32 %v4554, 0.0
      %v4587 = vmax.f32 %v4555, 0.0
      %v4588 = vmax.f32 %v4556, 0.0
      %v4589 = vmax.f32 %v4557, 0.0
      %v4590 = vmax.f32 %v4558, 0.0
      %v4591 = vmax.f32 %v4559, 0.0
      %v4592 = vmax.f32 %v4560, 0.0
      %v4593 = vmax.f32 %v4561, 0.0
      %v4594 = vmax.f32 %v4562, 0.0
      %v4595 = vmax.f32 %v4563, 0.0
      %v4596 = vmax.f32 %v4564, 0.0
      %v4597 = vmax.f32 %v4565, 0.0
      %v4598 = vmax.f32 %v4566, 0.0
      %v4599 = vmax.f32 %v4567, 0.0
      %v4600 = vmax.f32 %v4568, 0.0
      %v4601 = vmax.f32 %v4569, 0.0
      %v4602 = vmax.f32 %v4570, 0.0
      %v4603 = vmax.f32 %v4571, 0.0
      %v4604 = vmax.f32 %v4572, 0.0
      %v4605 = vpack.c.bf16 %v4573, %v4573
      %v4606 = vpack.c.bf16 %v4574, %v4574
      %v4607 = vpack.c.bf16 %v4575, %v4575
      %v4608 = vpack.c.bf16 %v4576, %v4576
      %v4609 = vpack.c.bf16 %v4577, %v4577
      %v4610 = vpack.c.bf16 %v4578, %v4578
      %v4611 = vpack.c.bf16 %v4579, %v4579
      %v4612 = vpack.c.bf16 %v4580, %v4580
      %v4613 = vpack.c.bf16 %v4581, %v4581
      %v4614 = vpack.c.bf16 %v4582, %v4582
      %v4615 = vpack.c.bf16 %v4583, %v4583
      %v4616 = vpack.c.bf16 %v4584, %v4584
      %v4617 = vpack.c.bf16 %v4585, %v4585
      %v4618 = vpack.c.bf16 %v4586, %v4586
      %v4619 = vpack.c.bf16 %v4587, %v4587
      %v4620 = vpack.c.bf16 %v4588, %v4588
      %v4621 = vpack.c.bf16 %v4589, %v4589
      %v4622 = vpack.c.bf16 %v4590, %v4590
      %v4623 = vpack.c.bf16 %v4591, %v4591
      %v4624 = vpack.c.bf16 %v4592, %v4592
      %v4625 = vpack.c.bf16 %v4593, %v4593
      %v4626 = vpack.c.bf16 %v4594, %v4594
      %v4627 = vpack.c.bf16 %v4595, %v4595
      %v4628 = vpack.c.bf16 %v4596, %v4596
      %v4629 = vpack.c.bf16 %v4597, %v4597
      %v4630 = vpack.c.bf16 %v4598, %v4598
      %v4631 = vpack.c.bf16 %v4599, %v4599
      %v4632 = vpack.c.bf16 %v4600, %v4600
      %v4633 = vpack.c.bf16 %v4601, %v4601
      %v4634 = vpack.c.bf16 %v4602, %v4602
      %v4635 = vpack.c.bf16 %v4603, %v4603
      %v4636 = vpack.c.bf16 %v4604, %v4604
      %v4638 = vshrl.u32 %v4605, 16
      %v4640 = vrot.slane %v4638, 7
      %v4641 = vshll.u32 %v4605, 16
      %v4643 = vor.u32 %v4640, %v4641
      %v4644 = vrot.slane %v4640, 4
      %v4646 = vshrl.u32 %v4606, 16
      %v4648 = vrot.slane %v4646, 7
      %v4649 = vshll.u32 %v4606, 16
      %v4651 = vor.u32 %v4648, %v4649
      %v4652 = vsel %vm238, %v4644, %v4651
      %v4653 = vrot.slane %v4648, 4
      %v4655 = vshrl.u32 %v4607, 16
      %v4657 = vrot.slane %v4655, 7
      %v4658 = vshll.u32 %v4607, 16
      %v4660 = vor.u32 %v4657, %v4658
      %v4661 = vrot.slane %v4657, 4
      %v4663 = vshrl.u32 %v4608, 16
      %v4665 = vrot.slane %v4663, 7
      %v4666 = vshll.u32 %v4608, 16
      %v4668 = vor.u32 %v4665, %v4666
      %v4669 = vsel %vm238, %v4661, %v4668
      %v4670 = vrot.slane %v4665, 4
      %v4672 = vshrl.u32 %v4609, 16
      %v4674 = vrot.slane %v4672, 7
      %v4675 = vshll.u32 %v4609, 16
      %v4677 = vor.u32 %v4674, %v4675
      %v4678 = vrot.slane %v4674, 4
      %v4680 = vshrl.u32 %v4610, 16
      %v4682 = vrot.slane %v4680, 7
      %v4683 = vshll.u32 %v4610, 16
      %v4685 = vor.u32 %v4682, %v4683
      %v4686 = vsel %vm238, %v4678, %v4685
      %v4687 = vrot.slane %v4682, 4
      %v4689 = vshrl.u32 %v4611, 16
      %v4691 = vrot.slane %v4689, 7
      %v4692 = vshll.u32 %v4611, 16
      %v4694 = vor.u32 %v4691, %v4692
      %v4695 = vrot.slane %v4691, 4
      %v4697 = vshrl.u32 %v4612, 16
      %v4699 = vrot.slane %v4697, 7
      %v4700 = vshll.u32 %v4612, 16
      %v4702 = vor.u32 %v4699, %v4700
      %v4703 = vsel %vm238, %v4695, %v4702
      %v4704 = vrot.slane %v4699, 4
      %v4706 = vshrl.u32 %v4613, 16
      %v4708 = vrot.slane %v4706, 7
      %v4709 = vshll.u32 %v4613, 16
      %v4711 = vor.u32 %v4708, %v4709
      %v4712 = vrot.slane %v4708, 4
      %v4714 = vshrl.u32 %v4614, 16
      %v4716 = vrot.slane %v4714, 7
      %v4717 = vshll.u32 %v4614, 16
      %v4719 = vor.u32 %v4716, %v4717
      %v4720 = vsel %vm238, %v4712, %v4719
      %v4721 = vrot.slane %v4716, 4
      %v4723 = vshrl.u32 %v4615, 16
      %v4725 = vrot.slane %v4723, 7
      %v4726 = vshll.u32 %v4615, 16
      %v4728 = vor.u32 %v4725, %v4726
      %v4729 = vrot.slane %v4725, 4
      %v4731 = vshrl.u32 %v4616, 16
      %v4733 = vrot.slane %v4731, 7
      %v4734 = vshll.u32 %v4616, 16
      %v4736 = vor.u32 %v4733, %v4734
      %v4737 = vsel %vm238, %v4729, %v4736
      %v4738 = vrot.slane %v4733, 4
      %v4740 = vshrl.u32 %v4617, 16
      %v4742 = vrot.slane %v4740, 7
      %v4743 = vshll.u32 %v4617, 16
      %v4745 = vor.u32 %v4742, %v4743
      %v4746 = vrot.slane %v4742, 4
      %v4748 = vshrl.u32 %v4618, 16
      %v4750 = vrot.slane %v4748, 7
      %v4751 = vshll.u32 %v4618, 16
      %v4753 = vor.u32 %v4750, %v4751
      %v4754 = vsel %vm238, %v4746, %v4753
      %v4755 = vrot.slane %v4750, 4
      %v4757 = vshrl.u32 %v4619, 16
      %v4759 = vrot.slane %v4757, 7
      %v4760 = vshll.u32 %v4619, 16
      %v4762 = vor.u32 %v4759, %v4760
      %v4763 = vrot.slane %v4759, 4
      %v4765 = vshrl.u32 %v4620, 16
      %v4767 = vrot.slane %v4765, 7
      %v4768 = vshll.u32 %v4620, 16
      %v4770 = vor.u32 %v4767, %v4768
      %v4771 = vsel %vm238, %v4763, %v4770
      %v4772 = vrot.slane %v4767, 4
      %v4774 = vshrl.u32 %v4621, 16
      %v4776 = vrot.slane %v4774, 7
      %v4777 = vshll.u32 %v4621, 16
      %v4779 = vor.u32 %v4776, %v4777
      %v4780 = vrot.slane %v4776, 4
      %v4782 = vshrl.u32 %v4622, 16
      %v4784 = vrot.slane %v4782, 7
      %v4785 = vshll.u32 %v4622, 16
      %v4787 = vor.u32 %v4784, %v4785
      %v4788 = vsel %vm238, %v4780, %v4787
      %v4789 = vrot.slane %v4784, 4
      %v4791 = vshrl.u32 %v4623, 16
      %v4793 = vrot.slane %v4791, 7
      %v4794 = vshll.u32 %v4623, 16
      %v4796 = vor.u32 %v4793, %v4794
      %v4797 = vrot.slane %v4793, 4
      %v4799 = vshrl.u32 %v4624, 16
      %v4801 = vrot.slane %v4799, 7
      %v4802 = vshll.u32 %v4624, 16
      %v4804 = vor.u32 %v4801, %v4802
      %v4805 = vsel %vm238, %v4797, %v4804
      %v4806 = vrot.slane %v4801, 4
      %v4808 = vshrl.u32 %v4625, 16
      %v4810 = vrot.slane %v4808, 7
      %v4811 = vshll.u32 %v4625, 16
      %v4813 = vor.u32 %v4810, %v4811
      %v4814 = vrot.slane %v4810, 4
      %v4816 = vshrl.u32 %v4626, 16
      %v4818 = vrot.slane %v4816, 7
      %v4819 = vshll.u32 %v4626, 16
      %v4821 = vor.u32 %v4818, %v4819
      %v4822 = vsel %vm238, %v4814, %v4821
      %v4823 = vrot.slane %v4818, 4
      %v4825 = vshrl.u32 %v4627, 16
      %v4827 = vrot.slane %v4825, 7
      %v4828 = vshll.u32 %v4627, 16
      %v4830 = vor.u32 %v4827, %v4828
      %v4831 = vrot.slane %v4827, 4
      %v4833 = vshrl.u32 %v4628, 16
      %v4835 = vrot.slane %v4833, 7
      %v4836 = vshll.u32 %v4628, 16
      %v4838 = vor.u32 %v4835, %v4836
      %v4839 = vsel %vm238, %v4831, %v4838
      %v4840 = vrot.slane %v4835, 4
      %v4842 = vshrl.u32 %v4629, 16
      %v4844 = vrot.slane %v4842, 7
      %v4845 = vshll.u32 %v4629, 16
      %v4847 = vor.u32 %v4844, %v4845
      %v4848 = vrot.slane %v4844, 4
      %v4850 = vshrl.u32 %v4630, 16
      %v4852 = vrot.slane %v4850, 7
      %v4853 = vshll.u32 %v4630, 16
      %v4855 = vor.u32 %v4852, %v4853
      %v4856 = vsel %vm238, %v4848, %v4855
      %v4857 = vrot.slane %v4852, 4
      %v4859 = vshrl.u32 %v4631, 16
      %v4861 = vrot.slane %v4859, 7
      %v4862 = vshll.u32 %v4631, 16
      %v4864 = vor.u32 %v4861, %v4862
      %v4865 = vrot.slane %v4861, 4
      %v4867 = vshrl.u32 %v4632, 16
      %v4869 = vrot.slane %v4867, 7
      %v4870 = vshll.u32 %v4632, 16
      %v4872 = vor.u32 %v4869, %v4870
      %v4873 = vsel %vm238, %v4865, %v4872
      %v4874 = vrot.slane %v4869, 4
      %v4876 = vshrl.u32 %v4633, 16
      %v4878 = vrot.slane %v4876, 7
      %v4879 = vshll.u32 %v4633, 16
      %v4881 = vor.u32 %v4878, %v4879
      %v4882 = vrot.slane %v4878, 4
      %v4884 = vshrl.u32 %v4634, 16
      %v4886 = vrot.slane %v4884, 7
      %v4887 = vshll.u32 %v4634, 16
      %v4889 = vor.u32 %v4886, %v4887
      %v4890 = vsel %vm238, %v4882, %v4889
      %v4891 = vrot.slane %v4886, 4
      %v4893 = vshrl.u32 %v4635, 16
      %v4895 = vrot.slane %v4893, 7
      %v4896 = vshll.u32 %v4635, 16
      %v4898 = vor.u32 %v4895, %v4896
      %v4899 = vrot.slane %v4895, 4
      %v4901 = vshrl.u32 %v4636, 16
      %v4903 = vrot.slane %v4901, 7
      %v4904 = vshll.u32 %v4636, 16
      %v4906 = vor.u32 %v4903, %v4904
      %v4907 = vsel %vm238, %v4899, %v4906
      %v4908 = vrot.slane %v4903, 4
      %v4957 = vld [vmem:[%s559] sm:$0xf]
      %v4958 = vsel %vm562, %v4643, %v4957
      %4959 = vst [vmem:[%s559] sm:$0xf] %v4958
      %4960 = vst.msk [vmem:[%s559 + $0x4] sm:$0xf] %vm566, %v4652
      %v4961 = vld [vmem:[%s559 + $0x8] sm:$0x1]
      %v4962 = vsel %vm569, %v4653, %v4961
      %4963 = vst [vmem:[%s559 + $0x8] sm:$0x1] %v4962
      %v4964 = vld [vmem:[%s559 + $0xc] sm:$0xf]
      %v4965 = vsel %vm562, %v4660, %v4964
      %4966 = vst [vmem:[%s559 + $0xc] sm:$0xf] %v4965
      %4967 = vst.msk [vmem:[%s559 + $0x10] sm:$0xf] %vm566, %v4669
      %v4968 = vld [vmem:[%s559 + $0x14] sm:$0x1]
      %v4969 = vsel %vm569, %v4670, %v4968
      %4970 = vst [vmem:[%s559 + $0x14] sm:$0x1] %v4969
      %v4971 = vld [vmem:[%s559 + $0x18] sm:$0xf]
      %v4972 = vsel %vm562, %v4677, %v4971
      %4973 = vst [vmem:[%s559 + $0x18] sm:$0xf] %v4972
      %4974 = vst.msk [vmem:[%s559 + $0x1c] sm:$0xf] %vm566, %v4686
      %v4975 = vld [vmem:[%s559 + $0x20] sm:$0x1]
      %v4976 = vsel %vm569, %v4687, %v4975
      %4977 = vst [vmem:[%s559 + $0x20] sm:$0x1] %v4976
      %v4978 = vld [vmem:[%s559 + $0x24] sm:$0xf]
      %v4979 = vsel %vm562, %v4694, %v4978
      %4980 = vst [vmem:[%s559 + $0x24] sm:$0xf] %v4979
      %4981 = vst.msk [vmem:[%s559 + $0x28] sm:$0xf] %vm566, %v4703
      %v4982 = vld [vmem:[%s559 + $0x2c] sm:$0x1]
      %v4983 = vsel %vm569, %v4704, %v4982
      %4984 = vst [vmem:[%s559 + $0x2c] sm:$0x1] %v4983
      %v4985 = vld [vmem:[%s559 + $0x30] sm:$0xf]
      %v4986 = vsel %vm562, %v4711, %v4985
      %4987 = vst [vmem:[%s559 + $0x30] sm:$0xf] %v4986
      %4988 = vst.msk [vmem:[%s559 + $0x34] sm:$0xf] %vm566, %v4720
      %v4989 = vld [vmem:[%s559 + $0x38] sm:$0x1]
      %v4990 = vsel %vm569, %v4721, %v4989
      %4991 = vst [vmem:[%s559 + $0x38] sm:$0x1] %v4990
      %v4992 = vld [vmem:[%s559 + $0x3c] sm:$0xf]
      %v4993 = vsel %vm562, %v4728, %v4992
      %4994 = vst [vmem:[%s559 + $0x3c] sm:$0xf] %v4993
      %4995 = vst.msk [vmem:[%s559 + $0x40] sm:$0xf] %vm566, %v4737
      %v4996 = vld [vmem:[%s559 + $0x44] sm:$0x1]
      %v4997 = vsel %vm569, %v4738, %v4996
      %4998 = vst [vmem:[%s559 + $0x44] sm:$0x1] %v4997
      %v4999 = vld [vmem:[%s559 + $0x48] sm:$0xf]
      %v5000 = vsel %vm562, %v4745, %v4999
      %5001 = vst [vmem:[%s559 + $0x48] sm:$0xf] %v5000
      %5002 = vst.msk [vmem:[%s559 + $0x4c] sm:$0xf] %vm566, %v4754
      %v5003 = vld [vmem:[%s559 + $0x50] sm:$0x1]
      %v5004 = vsel %vm569, %v4755, %v5003
      %5005 = vst [vmem:[%s559 + $0x50] sm:$0x1] %v5004
      %v5006 = vld [vmem:[%s559 + $0x54] sm:$0xf]
      %v5007 = vsel %vm562, %v4762, %v5006
      %5008 = vst [vmem:[%s559 + $0x54] sm:$0xf] %v5007
      %5009 = vst.msk [vmem:[%s559 + $0x58] sm:$0xf] %vm566, %v4771
      %v5010 = vld [vmem:[%s559 + $0x5c] sm:$0x1]
      %v5011 = vsel %vm569, %v4772, %v5010
      %5012 = vst [vmem:[%s559 + $0x5c] sm:$0x1] %v5011
      %v5013 = vld [vmem:[%s559 + $0x60] sm:$0xf]
      %v5014 = vsel %vm562, %v4779, %v5013
      %5015 = vst [vmem:[%s559 + $0x60] sm:$0xf] %v5014
      %5016 = vst.msk [vmem:[%s559 + $0x64] sm:$0xf] %vm566, %v4788
      %v5017 = vld [vmem:[%s559 + $0x68] sm:$0x1]
      %v5018 = vsel %vm569, %v4789, %v5017
      %5019 = vst [vmem:[%s559 + $0x68] sm:$0x1] %v5018
      %v5020 = vld [vmem:[%s559 + $0x6c] sm:$0xf]
      %v5021 = vsel %vm562, %v4796, %v5020
      %5022 = vst [vmem:[%s559 + $0x6c] sm:$0xf] %v5021
      %5023 = vst.msk [vmem:[%s559 + $0x70] sm:$0xf] %vm566, %v4805
      %v5024 = vld [vmem:[%s559 + $0x74] sm:$0x1]
      %v5025 = vsel %vm569, %v4806, %v5024
      %5026 = vst [vmem:[%s559 + $0x74] sm:$0x1] %v5025
      %v5027 = vld [vmem:[%s559 + $0x78] sm:$0xf]
      %v5028 = vsel %vm562, %v4813, %v5027
      %5029 = vst [vmem:[%s559 + $0x78] sm:$0xf] %v5028
      %5030 = vst.msk [vmem:[%s559 + $0x7c] sm:$0xf] %vm566, %v4822
      %v5031 = vld [vmem:[%s559 + $0x80] sm:$0x1]
      %v5032 = vsel %vm569, %v4823, %v5031
      %5033 = vst [vmem:[%s559 + $0x80] sm:$0x1] %v5032
      %v5034 = vld [vmem:[%s559 + $0x84] sm:$0xf]
      %v5035 = vsel %vm562, %v4830, %v5034
      %5036 = vst [vmem:[%s559 + $0x84] sm:$0xf] %v5035
      %5037 = vst.msk [vmem:[%s559 + $0x88] sm:$0xf] %vm566, %v4839
      %v5038 = vld [vmem:[%s559 + $0x8c] sm:$0x1]
      %v5039 = vsel %vm569, %v4840, %v5038
      %5040 = vst [vmem:[%s559 + $0x8c] sm:$0x1] %v5039
      %v5041 = vld [vmem:[%s559 + $0x90] sm:$0xf]
      %v5042 = vsel %vm562, %v4847, %v5041
      %5043 = vst [vmem:[%s559 + $0x90] sm:$0xf] %v5042
      %5044 = vst.msk [vmem:[%s559 + $0x94] sm:$0xf] %vm566, %v4856
      %v5045 = vld [vmem:[%s559 + $0x98] sm:$0x1]
      %v5046 = vsel %vm569, %v4857, %v5045
      %5047 = vst [vmem:[%s559 + $0x98] sm:$0x1] %v5046
      %v5048 = vld [vmem:[%s559 + $0x9c] sm:$0xf]
      %v5049 = vsel %vm562, %v4864, %v5048
      %5050 = vst [vmem:[%s559 + $0x9c] sm:$0xf] %v5049
      %5051 = vst.msk [vmem:[%s559 + $0xa0] sm:$0xf] %vm566, %v4873
      %v5052 = vld [vmem:[%s559 + $0xa4] sm:$0x1]
      %v5053 = vsel %vm569, %v4874, %v5052
      %5054 = vst [vmem:[%s559 + $0xa4] sm:$0x1] %v5053
      %v5055 = vld [vmem:[%s559 + $0xa8] sm:$0xf]
      %v5056 = vsel %vm562, %v4881, %v5055
      %5057 = vst [vmem:[%s559 + $0xa8] sm:$0xf] %v5056
      %5058 = vst.msk [vmem:[%s559 + $0xac] sm:$0xf] %vm566, %v4890
      %v5059 = vld [vmem:[%s559 + $0xb0] sm:$0x1]
      %v5060 = vsel %vm569, %v4891, %v5059
      %5061 = vst [vmem:[%s559 + $0xb0] sm:$0x1] %v5060
      %v5062 = vld [vmem:[%s559 + $0xb4] sm:$0xf]
      %v5063 = vsel %vm562, %v4898, %v5062
      %5064 = vst [vmem:[%s559 + $0xb4] sm:$0xf] %v5063
      %5065 = vst.msk [vmem:[%s559 + $0xb8] sm:$0xf] %vm566, %v4907
      %v5066 = vld [vmem:[%s559 + $0xbc] sm:$0x1]
      %v5067 = vsel %vm569, %v4908, %v5066
      %5068 = vst [vmem:[%s559 + $0xbc] sm:$0x1] %v5067
      %v5069 = vld [vmem:[#allocation2] sm:$0xf]
      %v5070 = vsel %vm562, %v4660, %v5069
      %5071 = vst [vmem:[#allocation2] sm:$0xf] %v5070
      %5072 = vst.msk [vmem:[#allocation2 + $0x4] sm:$0xf] %vm566, %v4669
      %v5073 = vld [vmem:[#allocation2 + $0x8] sm:$0x1]
      %v5074 = vsel %vm569, %v4670, %v5073
      %5075 = vst [vmem:[#allocation2 + $0x8] sm:$0x1] %v5074
      %v5076 = vld [vmem:[%s685] sm:$0xf]
      %v5077 = vsel %vm562, %v4881, %v5076
      %5078 = vst [vmem:[%s685] sm:$0xf] %v5077
      %5079 = vst.msk [vmem:[%s685 + $0x4] sm:$0xf] %vm566, %v4890
      %v5080 = vld [vmem:[%s685 + $0x8] sm:$0x1]
      %v5081 = vsel %vm569, %v4891, %v5080
      %5082 = vst [vmem:[%s685 + $0x8] sm:$0x1] %v5081
      %v5083 = vrot.slane %v4638, 4
      %v5084 = vrot.slane %v5083, 4
      %v5085 = vrot.slane %v4655, 4
      %v5086 = vrot.slane %v5085, 4
      %v5087 = vrot.slane %v4672, 4
      %v5088 = vrot.slane %v5087, 4
      %v5089 = vrot.slane %v4689, 4
      %v5090 = vrot.slane %v5089, 4
      %v5091 = vrot.slane %v4706, 4
      %v5092 = vrot.slane %v5091, 4
      %v5093 = vrot.slane %v4723, 4
      %v5094 = vrot.slane %v5093, 4
      %v5095 = vrot.slane %v4740, 4
      %v5096 = vrot.slane %v5095, 4
      %v5097 = vrot.slane %v4757, 4
      %v5098 = vrot.slane %v5097, 4
      %v5099 = vrot.slane %v4774, 4
      %v5100 = vrot.slane %v5099, 4
      %v5101 = vrot.slane %v4791, 4
      %v5102 = vrot.slane %v5101, 4
      %v5103 = vrot.slane %v4808, 4
      %v5104 = vrot.slane %v5103, 4
      %v5105 = vrot.slane %v4825, 4
      %v5106 = vrot.slane %v5105, 4
      %v5107 = vrot.slane %v4842, 4
      %v5108 = vrot.slane %v5107, 4
      %v5109 = vrot.slane %v4859, 4
      %v5110 = vrot.slane %v5109, 4
      %v5111 = vrot.slane %v4876, 4
      %v5112 = vrot.slane %v5111, 4
      %v5113 = vrot.slane %v4893, 4
      %v5114 = vrot.slane %v5113, 4
      %v5131 = vld [vmem:[%s559] sm:$0x1]
      %v5132 = vsel %vm569, %v5084, %v5131
      %5133 = vst [vmem:[%s559] sm:$0x1] %v5132
      %v5134 = vld [vmem:[%s559 + $0xc] sm:$0x1]
      %v5135 = vsel %vm569, %v5086, %v5134
      %5136 = vst [vmem:[%s559 + $0xc] sm:$0x1] %v5135
      %v5137 = vld [vmem:[%s559 + $0x18] sm:$0x1]
      %v5138 = vsel %vm569, %v5088, %v5137
      %5139 = vst [vmem:[%s559 + $0x18] sm:$0x1] %v5138
      %v5140 = vld [vmem:[%s559 + $0x24] sm:$0x1]
      %v5141 = vsel %vm569, %v5090, %v5140
      %5142 = vst [vmem:[%s559 + $0x24] sm:$0x1] %v5141
      %v5143 = vld [vmem:[%s559 + $0x30] sm:$0x1]
      %v5144 = vsel %vm569, %v5092, %v5143
      %5145 = vst [vmem:[%s559 + $0x30] sm:$0x1] %v5144
      %v5146 = vld [vmem:[%s559 + $0x3c] sm:$0x1]
      %v5147 = vsel %vm569, %v5094, %v5146
      %5148 = vst [vmem:[%s559 + $0x3c] sm:$0x1] %v5147
      %v5149 = vld [vmem:[%s559 + $0x48] sm:$0x1]
      %v5150 = vsel %vm569, %v5096, %v5149
      %5151 = vst [vmem:[%s559 + $0x48] sm:$0x1] %v5150
      %v5152 = vld [vmem:[%s559 + $0x54] sm:$0x1]
      %v5153 = vsel %vm569, %v5098, %v5152
      %5154 = vst [vmem:[%s559 + $0x54] sm:$0x1] %v5153
      %v5155 = vld [vmem:[%s559 + $0x60] sm:$0x1]
      %v5156 = vsel %vm569, %v5100, %v5155
      %5157 = vst [vmem:[%s559 + $0x60] sm:$0x1] %v5156
      %v5158 = vld [vmem:[%s559 + $0x6c] sm:$0x1]
      %v5159 = vsel %vm569, %v5102, %v5158
      %5160 = vst [vmem:[%s559 + $0x6c] sm:$0x1] %v5159
      %v5161 = vld [vmem:[%s559 + $0x78] sm:$0x1]
      %v5162 = vsel %vm569, %v5104, %v5161
      %5163 = vst [vmem:[%s559 + $0x78] sm:$0x1] %v5162
      %v5164 = vld [vmem:[%s559 + $0x84] sm:$0x1]
      %v5165 = vsel %vm569, %v5106, %v5164
      %5166 = vst [vmem:[%s559 + $0x84] sm:$0x1] %v5165
      %v5167 = vld [vmem:[%s559 + $0x90] sm:$0x1]
      %v5168 = vsel %vm569, %v5108, %v5167
      %5169 = vst [vmem:[%s559 + $0x90] sm:$0x1] %v5168
      %v5170 = vld [vmem:[%s559 + $0x9c] sm:$0x1]
      %v5171 = vsel %vm569, %v5110, %v5170
      %5172 = vst [vmem:[%s559 + $0x9c] sm:$0x1] %v5171
      %v5173 = vld [vmem:[%s559 + $0xa8] sm:$0x1]
      %v5174 = vsel %vm569, %v5112, %v5173
      %5175 = vst [vmem:[%s559 + $0xa8] sm:$0x1] %v5174
      %v5176 = vld [vmem:[%s559 + $0xb4] sm:$0x1]
      %v5177 = vsel %vm569, %v5114, %v5176
      %5178 = vst [vmem:[%s559 + $0xb4] sm:$0x1] %v5177
      %v5179 = vrot.slane %v4649, 7
      %v5180 = vrot.slane %v5179, 4
      %v5181 = vrot.slane %v4666, 7
      %v5182 = vrot.slane %v5181, 4
      %v5183 = vrot.slane %v4683, 7
      %v5184 = vrot.slane %v5183, 4
      %v5185 = vrot.slane %v4700, 7
      %v5186 = vrot.slane %v5185, 4
      %v5187 = vrot.slane %v4717, 7
      %v5188 = vrot.slane %v5187, 4
      %v5189 = vrot.slane %v4734, 7
      %v5190 = vrot.slane %v5189, 4
      %v5191 = vrot.slane %v4751, 7
      %v5192 = vrot.slane %v5191, 4
      %v5193 = vrot.slane %v4768, 7
      %v5194 = vrot.slane %v5193, 4
      %v5195 = vrot.slane %v4785, 7
      %v5196 = vrot.slane %v5195, 4
      %v5197 = vrot.slane %v4802, 7
      %v5198 = vrot.slane %v5197, 4
      %v5199 = vrot.slane %v4819, 7
      %v5200 = vrot.slane %v5199, 4
      %v5201 = vrot.slane %v4836, 7
      %v5202 = vrot.slane %v5201, 4
      %v5203 = vrot.slane %v4853, 7
      %v5204 = vrot.slane %v5203, 4
      %v5205 = vrot.slane %v4870, 7
      %v5206 = vrot.slane %v5205, 4
      %v5207 = vrot.slane %v4887, 7
      %v5208 = vrot.slane %v5207, 4
      %v5209 = vrot.slane %v4904, 7
      %v5210 = vrot.slane %v5209, 4
      %v5227 = vld [vmem:[%s559 + $0x8] sm:$0x1]
      %v5228 = vsel %vm837, %v5180, %v5227
      %5229 = vst [vmem:[%s559 + $0x8] sm:$0x1] %v5228
      %v5230 = vld [vmem:[%s559 + $0x14] sm:$0x1]
      %v5231 = vsel %vm837, %v5182, %v5230
      %5232 = vst [vmem:[%s559 + $0x14] sm:$0x1] %v5231
      %v5233 = vld [vmem:[%s559 + $0x20] sm:$0x1]
      %v5234 = vsel %vm837, %v5184, %v5233
      %5235 = vst [vmem:[%s559 + $0x20] sm:$0x1] %v5234
      %v5236 = vld [vmem:[%s559 + $0x2c] sm:$0x1]
      %v5237 = vsel %vm837, %v5186, %v5236
      %5238 = vst [vmem:[%s559 + $0x2c] sm:$0x1] %v5237
      %v5239 = vld [vmem:[%s559 + $0x38] sm:$0x1]
      %v5240 = vsel %vm837, %v5188, %v5239
      %5241 = vst [vmem:[%s559 + $0x38] sm:$0x1] %v5240
      %v5242 = vld [vmem:[%s559 + $0x44] sm:$0x1]
      %v5243 = vsel %vm837, %v5190, %v5242
      %5244 = vst [vmem:[%s559 + $0x44] sm:$0x1] %v5243
      %v5245 = vld [vmem:[%s559 + $0x50] sm:$0x1]
      %v5246 = vsel %vm837, %v5192, %v5245
      %5247 = vst [vmem:[%s559 + $0x50] sm:$0x1] %v5246
      %v5248 = vld [vmem:[%s559 + $0x5c] sm:$0x1]
      %v5249 = vsel %vm837, %v5194, %v5248
      %5250 = vst [vmem:[%s559 + $0x5c] sm:$0x1] %v5249
      %v5251 = vld [vmem:[%s559 + $0x68] sm:$0x1]
      %v5252 = vsel %vm837, %v5196, %v5251
      %5253 = vst [vmem:[%s559 + $0x68] sm:$0x1] %v5252
      %v5254 = vld [vmem:[%s559 + $0x74] sm:$0x1]
      %v5255 = vsel %vm837, %v5198, %v5254
      %5256 = vst [vmem:[%s559 + $0x74] sm:$0x1] %v5255
      %v5257 = vld [vmem:[%s559 + $0x80] sm:$0x1]
      %v5258 = vsel %vm837, %v5200, %v5257
      %5259 = vst [vmem:[%s559 + $0x80] sm:$0x1] %v5258
      %v5260 = vld [vmem:[%s559 + $0x8c] sm:$0x1]
      %v5261 = vsel %vm837, %v5202, %v5260
      %5262 = vst [vmem:[%s559 + $0x8c] sm:$0x1] %v5261
      %v5263 = vld [vmem:[%s559 + $0x98] sm:$0x1]
      %v5264 = vsel %vm837, %v5204, %v5263
      %5265 = vst [vmem:[%s559 + $0x98] sm:$0x1] %v5264
      %v5266 = vld [vmem:[%s559 + $0xa4] sm:$0x1]
      %v5267 = vsel %vm837, %v5206, %v5266
      %5268 = vst [vmem:[%s559 + $0xa4] sm:$0x1] %v5267
      %v5269 = vld [vmem:[%s559 + $0xb0] sm:$0x1]
      %v5270 = vsel %vm837, %v5208, %v5269
      %5271 = vst [vmem:[%s559 + $0xb0] sm:$0x1] %v5270
      %v5272 = vld [vmem:[%s559 + $0xbc] sm:$0x1]
      %v5273 = vsel %vm837, %v5210, %v5272
      %5274 = vst [vmem:[%s559 + $0xbc] sm:$0x1] %v5273
      %v5275 = vld [vmem:[#allocation2] sm:$0x1]
      %v5276 = vsel %vm569, %v5086, %v5275
      %5277 = vst [vmem:[#allocation2] sm:$0x1] %v5276
      %v5278 = vld [vmem:[#allocation2 + $0x8] sm:$0x1]
      %v5279 = vsel %vm837, %v5182, %v5278
      %5280 = vst [vmem:[#allocation2 + $0x8] sm:$0x1] %v5279
      %v5281 = vld [vmem:[%s685] sm:$0x1]
      %v5282 = vsel %vm569, %v5112, %v5281
      %5283 = vst [vmem:[%s685] sm:$0x1] %v5282
      %v5284 = vld [vmem:[%s685 + $0x8] sm:$0x1]
      %v5285 = vsel %vm837, %v5208, %v5284
      %5286 = vst [vmem:[%s685 + $0x8] sm:$0x1] %v5285
      %v5287 = vld [vmem:[#allocation2] sm:$0xf]
      %v5288 = vld [vmem:[#allocation2 + $0x4] sm:$0xf]
      %v5289 = vld [vmem:[#allocation2 + $0xc] sm:$0xf]
      %v5290 = vld [vmem:[#allocation2 + $0x10] sm:$0xf]
      %v5291 = vld [vmem:[#allocation2 + $0x18] sm:$0xf]
      %v5292 = vld [vmem:[#allocation2 + $0x1c] sm:$0xf]
      %v5293 = vld [vmem:[#allocation2 + $0x24] sm:$0xf]
      %v5294 = vld [vmem:[#allocation2 + $0x28] sm:$0xf]
      %v5295 = vld [vmem:[#allocation2 + $0x30] sm:$0xf]
      %v5296 = vld [vmem:[#allocation2 + $0x34] sm:$0xf]
      %v5297 = vld [vmem:[#allocation2 + $0x3c] sm:$0xf]
      %v5298 = vld [vmem:[#allocation2 + $0x40] sm:$0xf]
      %v5299 = vld [vmem:[#allocation2 + $0x48] sm:$0xf]
      %v5300 = vld [vmem:[#allocation2 + $0x4c] sm:$0xf]
      %v5301 = vld [vmem:[#allocation2 + $0x54] sm:$0xf]
      %v5302 = vld [vmem:[#allocation2 + $0x58] sm:$0xf]
      %v5303 = vld [vmem:[#allocation2 + $0x60] sm:$0xf]
      %v5304 = vld [vmem:[#allocation2 + $0x64] sm:$0xf]
      %v5305 = vld [vmem:[#allocation2 + $0x6c] sm:$0xf]
      %v5306 = vld [vmem:[#allocation2 + $0x70] sm:$0xf]
      %v5307 = vld [vmem:[#allocation2 + $0x78] sm:$0xf]
      %v5308 = vld [vmem:[#allocation2 + $0x7c] sm:$0xf]
      %v5309 = vld [vmem:[#allocation2 + $0x84] sm:$0xf]
      %v5310 = vld [vmem:[#allocation2 + $0x88] sm:$0xf]
      %v5311 = vld [vmem:[#allocation2 + $0x90] sm:$0xf]
      %v5312 = vld [vmem:[#allocation2 + $0x94] sm:$0xf]
      %v5313 = vld [vmem:[#allocation2 + $0x9c] sm:$0xf]
      %v5314 = vld [vmem:[#allocation2 + $0xa0] sm:$0xf]
      %v5315 = vld [vmem:[#allocation2 + $0xa8] sm:$0xf]
      %v5316 = vld [vmem:[#allocation2 + $0xac] sm:$0xf]
      %v5317 = vld [vmem:[#allocation2 + $0xb4] sm:$0xf]
      %v5318 = vld [vmem:[#allocation2 + $0xb8] sm:$0xf]
      %5319 = vst.msk [vmem:[#allocation3] sm:$0xf] %vm566, %v5287
      %5320 = vst.msk [vmem:[#allocation3 + $0x4] sm:$0xf] %vm566, %v5288
      %5321 = vst.msk [vmem:[#allocation3 + $0x8] sm:$0xf] %vm566, %v5289
      %5322 = vst.msk [vmem:[#allocation3 + $0xc] sm:$0xf] %vm566, %v5290
      %5323 = vst.msk [vmem:[#allocation3 + $0x10] sm:$0xf] %vm566, %v5291
      %5324 = vst.msk [vmem:[#allocation3 + $0x14] sm:$0xf] %vm566, %v5292
      %5325 = vst.msk [vmem:[#allocation3 + $0x18] sm:$0xf] %vm566, %v5293
      %5326 = vst.msk [vmem:[#allocation3 + $0x1c] sm:$0xf] %vm566, %v5294
      %5327 = vst.msk [vmem:[#allocation3 + $0x20] sm:$0xf] %vm566, %v5295
      %5328 = vst.msk [vmem:[#allocation3 + $0x24] sm:$0xf] %vm566, %v5296
      %5329 = vst.msk [vmem:[#allocation3 + $0x28] sm:$0xf] %vm566, %v5297
      %5330 = vst.msk [vmem:[#allocation3 + $0x2c] sm:$0xf] %vm566, %v5298
      %5331 = vst.msk [vmem:[#allocation3 + $0x30] sm:$0xf] %vm566, %v5299
      %5332 = vst.msk [vmem:[#allocation3 + $0x34] sm:$0xf] %vm566, %v5300
      %5333 = vst.msk [vmem:[#allocation3 + $0x38] sm:$0xf] %vm566, %v5301
      %5334 = vst.msk [vmem:[#allocation3 + $0x3c] sm:$0xf] %vm566, %v5302
      %5335 = vst.msk [vmem:[#allocation3 + $0x40] sm:$0xf] %vm566, %v5303
      %5336 = vst.msk [vmem:[#allocation3 + $0x44] sm:$0xf] %vm566, %v5304
      %5337 = vst.msk [vmem:[#allocation3 + $0x48] sm:$0xf] %vm566, %v5305
      %5338 = vst.msk [vmem:[#allocation3 + $0x4c] sm:$0xf] %vm566, %v5306
      %5339 = vst.msk [vmem:[#allocation3 + $0x50] sm:$0xf] %vm566, %v5307
      %5340 = vst.msk [vmem:[#allocation3 + $0x54] sm:$0xf] %vm566, %v5308
      %5341 = vst.msk [vmem:[#allocation3 + $0x58] sm:$0xf] %vm566, %v5309
      %5342 = vst.msk [vmem:[#allocation3 + $0x5c] sm:$0xf] %vm566, %v5310
      %5343 = vst.msk [vmem:[#allocation3 + $0x60] sm:$0xf] %vm566, %v5311
      %5344 = vst.msk [vmem:[#allocation3 + $0x64] sm:$0xf] %vm566, %v5312
      %5345 = vst.msk [vmem:[#allocation3 + $0x68] sm:$0xf] %vm566, %v5313
      %5346 = vst.msk [vmem:[#allocation3 + $0x6c] sm:$0xf] %vm566, %v5314
      %5347 = vst.msk [vmem:[#allocation3 + $0x70] sm:$0xf] %vm566, %v5315
      %5348 = vst.msk [vmem:[#allocation3 + $0x74] sm:$0xf] %vm566, %v5316
      %5349 = vst.msk [vmem:[#allocation3 + $0x78] sm:$0xf] %vm566, %v5317
      %5350 = vst.msk [vmem:[#allocation3 + $0x7c] sm:$0xf] %vm566, %v5318
      %v5351 = vld [vmem:[#allocation2] sm:$0xf]
      %v5352 = vld [vmem:[#allocation2 + $0x4] sm:$0xf]
      %v5353 = vld [vmem:[#allocation2 + $0x8] sm:$0x1]
      %v5354 = vld [vmem:[#allocation2 + $0xc] sm:$0xf]
      %v5355 = vld [vmem:[#allocation2 + $0x10] sm:$0xf]
      %v5356 = vld [vmem:[#allocation2 + $0x14] sm:$0x1]
      %v5357 = vld [vmem:[#allocation2 + $0x18] sm:$0xf]
      %v5358 = vld [vmem:[#allocation2 + $0x1c] sm:$0xf]
      %v5359 = vld [vmem:[#allocation2 + $0x20] sm:$0x1]
      %v5360 = vld [vmem:[#allocation2 + $0x24] sm:$0xf]
      %v5361 = vld [vmem:[#allocation2 + $0x28] sm:$0xf]
      %v5362 = vld [vmem:[#allocation2 + $0x2c] sm:$0x1]
      %v5363 = vld [vmem:[#allocation2 + $0x30] sm:$0xf]
      %v5364 = vld [vmem:[#allocation2 + $0x34] sm:$0xf]
      %v5365 = vld [vmem:[#allocation2 + $0x38] sm:$0x1]
      %v5366 = vld [vmem:[#allocation2 + $0x3c] sm:$0xf]
      %v5367 = vld [vmem:[#allocation2 + $0x40] sm:$0xf]
      %v5368 = vld [vmem:[#allocation2 + $0x44] sm:$0x1]
      %v5369 = vld [vmem:[#allocation2 + $0x48] sm:$0xf]
      %v5370 = vld [vmem:[#allocation2 + $0x4c] sm:$0xf]
      %v5371 = vld [vmem:[#allocation2 + $0x50] sm:$0x1]
      %v5372 = vld [vmem:[#allocation2 + $0x54] sm:$0xf]
      %v5373 = vld [vmem:[#allocation2 + $0x58] sm:$0xf]
      %v5374 = vld [vmem:[#allocation2 + $0x5c] sm:$0x1]
      %v5375 = vld [vmem:[#allocation2 + $0x60] sm:$0xf]
      %v5376 = vld [vmem:[#allocation2 + $0x64] sm:$0xf]
      %v5377 = vld [vmem:[#allocation2 + $0x68] sm:$0x1]
      %v5378 = vld [vmem:[#allocation2 + $0x6c] sm:$0xf]
      %v5379 = vld [vmem:[#allocation2 + $0x70] sm:$0xf]
      %v5380 = vld [vmem:[#allocation2 + $0x74] sm:$0x1]
      %v5381 = vld [vmem:[#allocation2 + $0x78] sm:$0xf]
      %v5382 = vld [vmem:[#allocation2 + $0x7c] sm:$0xf]
      %v5383 = vld [vmem:[#allocation2 + $0x80] sm:$0x1]
      %v5384 = vld [vmem:[#allocation2 + $0x84] sm:$0xf]
      %v5385 = vld [vmem:[#allocation2 + $0x88] sm:$0xf]
      %v5386 = vld [vmem:[#allocation2 + $0x8c] sm:$0x1]
      %v5387 = vld [vmem:[#allocation2 + $0x90] sm:$0xf]
      %v5388 = vld [vmem:[#allocation2 + $0x94] sm:$0xf]
      %v5389 = vld [vmem:[#allocation2 + $0x98] sm:$0x1]
      %v5390 = vld [vmem:[#allocation2 + $0x9c] sm:$0xf]
      %v5391 = vld [vmem:[#allocation2 + $0xa0] sm:$0xf]
      %v5392 = vld [vmem:[#allocation2 + $0xa4] sm:$0x1]
      %v5393 = vld [vmem:[#allocation2 + $0xa8] sm:$0xf]
      %v5394 = vld [vmem:[#allocation2 + $0xac] sm:$0xf]
      %v5395 = vld [vmem:[#allocation2 + $0xb0] sm:$0x1]
      %v5396 = vld [vmem:[#allocation2 + $0xb4] sm:$0xf]
      %v5397 = vld [vmem:[#allocation2 + $0xb8] sm:$0xf]
      %v5398 = vld [vmem:[#allocation2 + $0xbc] sm:$0x1]
      %v5400 = vshrl.u32 %v5351, 16
      %v5402 = vrot.slane %v5400, 4
      %v5403 = vshll.u32 %v5351, 16
      %v5405 = vrot.slane %v5403, 5
      %v5406 = vor.u32 %v5402, %v5405
      %v5407 = vrot.slane %v5406, 4
      %v5409 = vshll.u32 %v5352, 16
      %v5411 = vrot.slane %v5409, 5
      %v5412 = vsel %vm1012, %v5407, %v5411
      %v5413 = vshrl.u32 %v5352, 16
      %v5415 = vrot.slane %v5413, 4
      %v5416 = vor.u32 %v5415, %v5411
      %v5417 = vrot.slane %v5416, 4
      %v5419 = vshll.u32 %v5353, 16
      %v5421 = vrot.slane %v5419, 5
      %v5422 = vsel %vm1012, %v5417, %v5421
      %v5424 = vshrl.u32 %v5354, 16
      %v5426 = vrot.slane %v5424, 4
      %v5427 = vshll.u32 %v5354, 16
      %v5429 = vrot.slane %v5427, 5
      %v5430 = vor.u32 %v5426, %v5429
      %v5431 = vrot.slane %v5430, 4
      %v5433 = vshll.u32 %v5355, 16
      %v5435 = vrot.slane %v5433, 5
      %v5436 = vsel %vm1012, %v5431, %v5435
      %v5437 = vshrl.u32 %v5355, 16
      %v5439 = vrot.slane %v5437, 4
      %v5440 = vor.u32 %v5439, %v5435
      %v5441 = vrot.slane %v5440, 4
      %v5443 = vshll.u32 %v5356, 16
      %v5445 = vrot.slane %v5443, 5
      %v5446 = vsel %vm1012, %v5441, %v5445
      %v5448 = vshrl.u32 %v5357, 16
      %v5450 = vrot.slane %v5448, 4
      %v5451 = vshll.u32 %v5357, 16
      %v5453 = vrot.slane %v5451, 5
      %v5454 = vor.u32 %v5450, %v5453
      %v5455 = vrot.slane %v5454, 4
      %v5457 = vshll.u32 %v5358, 16
      %v5459 = vrot.slane %v5457, 5
      %v5460 = vsel %vm1012, %v5455, %v5459
      %v5461 = vshrl.u32 %v5358, 16
      %v5463 = vrot.slane %v5461, 4
      %v5464 = vor.u32 %v5463, %v5459
      %v5465 = vrot.slane %v5464, 4
      %v5467 = vshll.u32 %v5359, 16
      %v5469 = vrot.slane %v5467, 5
      %v5470 = vsel %vm1012, %v5465, %v5469
      %v5472 = vshrl.u32 %v5360, 16
      %v5474 = vrot.slane %v5472, 4
      %v5475 = vshll.u32 %v5360, 16
      %v5477 = vrot.slane %v5475, 5
      %v5478 = vor.u32 %v5474, %v5477
      %v5479 = vrot.slane %v5478, 4
      %v5481 = vshll.u32 %v5361, 16
      %v5483 = vrot.slane %v5481, 5
      %v5484 = vsel %vm1012, %v5479, %v5483
      %v5485 = vshrl.u32 %v5361, 16
      %v5487 = vrot.slane %v5485, 4
      %v5488 = vor.u32 %v5487, %v5483
      %v5489 = vrot.slane %v5488, 4
      %v5491 = vshll.u32 %v5362, 16
      %v5493 = vrot.slane %v5491, 5
      %v5494 = vsel %vm1012, %v5489, %v5493
      %v5496 = vshrl.u32 %v5363, 16
      %v5498 = vrot.slane %v5496, 4
      %v5499 = vshll.u32 %v5363, 16
      %v5501 = vrot.slane %v5499, 5
      %v5502 = vor.u32 %v5498, %v5501
      %v5503 = vrot.slane %v5502, 4
      %v5505 = vshll.u32 %v5364, 16
      %v5507 = vrot.slane %v5505, 5
      %v5508 = vsel %vm1012, %v5503, %v5507
      %v5509 = vshrl.u32 %v5364, 16
      %v5511 = vrot.slane %v5509, 4
      %v5512 = vor.u32 %v5511, %v5507
      %v5513 = vrot.slane %v5512, 4
      %v5515 = vshll.u32 %v5365, 16
      %v5517 = vrot.slane %v5515, 5
      %v5518 = vsel %vm1012, %v5513, %v5517
      %v5520 = vshrl.u32 %v5366, 16
      %v5522 = vrot.slane %v5520, 4
      %v5523 = vshll.u32 %v5366, 16
      %v5525 = vrot.slane %v5523, 5
      %v5526 = vor.u32 %v5522, %v5525
      %v5527 = vrot.slane %v5526, 4
      %v5529 = vshll.u32 %v5367, 16
      %v5531 = vrot.slane %v5529, 5
      %v5532 = vsel %vm1012, %v5527, %v5531
      %v5533 = vshrl.u32 %v5367, 16
      %v5535 = vrot.slane %v5533, 4
      %v5536 = vor.u32 %v5535, %v5531
      %v5537 = vrot.slane %v5536, 4
      %v5539 = vshll.u32 %v5368, 16
      %v5541 = vrot.slane %v5539, 5
      %v5542 = vsel %vm1012, %v5537, %v5541
      %v5544 = vshrl.u32 %v5369, 16
      %v5546 = vrot.slane %v5544, 4
      %v5547 = vshll.u32 %v5369, 16
      %v5549 = vrot.slane %v5547, 5
      %v5550 = vor.u32 %v5546, %v5549
      %v5551 = vrot.slane %v5550, 4
      %v5553 = vshll.u32 %v5370, 16
      %v5555 = vrot.slane %v5553, 5
      %v5556 = vsel %vm1012, %v5551, %v5555
      %v5557 = vshrl.u32 %v5370, 16
      %v5559 = vrot.slane %v5557, 4
      %v5560 = vor.u32 %v5559, %v5555
      %v5561 = vrot.slane %v5560, 4
      %v5563 = vshll.u32 %v5371, 16
      %v5565 = vrot.slane %v5563, 5
      %v5566 = vsel %vm1012, %v5561, %v5565
      %v5568 = vshrl.u32 %v5372, 16
      %v5570 = vrot.slane %v5568, 4
      %v5571 = vshll.u32 %v5372, 16
      %v5573 = vrot.slane %v5571, 5
      %v5574 = vor.u32 %v5570, %v5573
      %v5575 = vrot.slane %v5574, 4
      %v5577 = vshll.u32 %v5373, 16
      %v5579 = vrot.slane %v5577, 5
      %v5580 = vsel %vm1012, %v5575, %v5579
      %v5581 = vshrl.u32 %v5373, 16
      %v5583 = vrot.slane %v5581, 4
      %v5584 = vor.u32 %v5583, %v5579
      %v5585 = vrot.slane %v5584, 4
      %v5587 = vshll.u32 %v5374, 16
      %v5589 = vrot.slane %v5587, 5
      %v5590 = vsel %vm1012, %v5585, %v5589
      %v5592 = vshrl.u32 %v5375, 16
      %v5594 = vrot.slane %v5592, 4
      %v5595 = vshll.u32 %v5375, 16
      %v5597 = vrot.slane %v5595, 5
      %v5598 = vor.u32 %v5594, %v5597
      %v5599 = vrot.slane %v5598, 4
      %v5601 = vshll.u32 %v5376, 16
      %v5603 = vrot.slane %v5601, 5
      %v5604 = vsel %vm1012, %v5599, %v5603
      %v5605 = vshrl.u32 %v5376, 16
      %v5607 = vrot.slane %v5605, 4
      %v5608 = vor.u32 %v5607, %v5603
      %v5609 = vrot.slane %v5608, 4
      %v5611 = vshll.u32 %v5377, 16
      %v5613 = vrot.slane %v5611, 5
      %v5614 = vsel %vm1012, %v5609, %v5613
      %v5616 = vshrl.u32 %v5378, 16
      %v5618 = vrot.slane %v5616, 4
      %v5619 = vshll.u32 %v5378, 16
      %v5621 = vrot.slane %v5619, 5
      %v5622 = vor.u32 %v5618, %v5621
      %v5623 = vrot.slane %v5622, 4
      %v5625 = vshll.u32 %v5379, 16
      %v5627 = vrot.slane %v5625, 5
      %v5628 = vsel %vm1012, %v5623, %v5627
      %v5629 = vshrl.u32 %v5379, 16
      %v5631 = vrot.slane %v5629, 4
      %v5632 = vor.u32 %v5631, %v5627
      %v5633 = vrot.slane %v5632, 4
      %v5635 = vshll.u32 %v5380, 16
      %v5637 = vrot.slane %v5635, 5
      %v5638 = vsel %vm1012, %v5633, %v5637
      %v5640 = vshrl.u32 %v5381, 16
      %v5642 = vrot.slane %v5640, 4
      %v5643 = vshll.u32 %v5381, 16
      %v5645 = vrot.slane %v5643, 5
      %v5646 = vor.u32 %v5642, %v5645
      %v5647 = vrot.slane %v5646, 4
      %v5649 = vshll.u32 %v5382, 16
      %v5651 = vrot.slane %v5649, 5
      %v5652 = vsel %vm1012, %v5647, %v5651
      %v5653 = vshrl.u32 %v5382, 16
      %v5655 = vrot.slane %v5653, 4
      %v5656 = vor.u32 %v5655, %v5651
      %v5657 = vrot.slane %v5656, 4
      %v5659 = vshll.u32 %v5383, 16
      %v5661 = vrot.slane %v5659, 5
      %v5662 = vsel %vm1012, %v5657, %v5661
      %v5664 = vshrl.u32 %v5384, 16
      %v5666 = vrot.slane %v5664, 4
      %v5667 = vshll.u32 %v5384, 16
      %v5669 = vrot.slane %v5667, 5
      %v5670 = vor.u32 %v5666, %v5669
      %v5671 = vrot.slane %v5670, 4
      %v5673 = vshll.u32 %v5385, 16
      %v5675 = vrot.slane %v5673, 5
      %v5676 = vsel %vm1012, %v5671, %v5675
      %v5677 = vshrl.u32 %v5385, 16
      %v5679 = vrot.slane %v5677, 4
      %v5680 = vor.u32 %v5679, %v5675
      %v5681 = vrot.slane %v5680, 4
      %v5683 = vshll.u32 %v5386, 16
      %v5685 = vrot.slane %v5683, 5
      %v5686 = vsel %vm1012, %v5681, %v5685
      %v5688 = vshrl.u32 %v5387, 16
      %v5690 = vrot.slane %v5688, 4
      %v5691 = vshll.u32 %v5387, 16
      %v5693 = vrot.slane %v5691, 5
      %v5694 = vor.u32 %v5690, %v5693
      %v5695 = vrot.slane %v5694, 4
      %v5697 = vshll.u32 %v5388, 16
      %v5699 = vrot.slane %v5697, 5
      %v5700 = vsel %vm1012, %v5695, %v5699
      %v5701 = vshrl.u32 %v5388, 16
      %v5703 = vrot.slane %v5701, 4
      %v5704 = vor.u32 %v5703, %v5699
      %v5705 = vrot.slane %v5704, 4
      %v5707 = vshll.u32 %v5389, 16
      %v5709 = vrot.slane %v5707, 5
      %v5710 = vsel %vm1012, %v5705, %v5709
      %v5712 = vshrl.u32 %v5390, 16
      %v5714 = vrot.slane %v5712, 4
      %v5715 = vshll.u32 %v5390, 16
      %v5717 = vrot.slane %v5715, 5
      %v5718 = vor.u32 %v5714, %v5717
      %v5719 = vrot.slane %v5718, 4
      %v5721 = vshll.u32 %v5391, 16
      %v5723 = vrot.slane %v5721, 5
      %v5724 = vsel %vm1012, %v5719, %v5723
      %v5725 = vshrl.u32 %v5391, 16
      %v5727 = vrot.slane %v5725, 4
      %v5728 = vor.u32 %v5727, %v5723
      %v5729 = vrot.slane %v5728, 4
      %v5731 = vshll.u32 %v5392, 16
      %v5733 = vrot.slane %v5731, 5
      %v5734 = vsel %vm1012, %v5729, %v5733
      %v5736 = vshrl.u32 %v5393, 16
      %v5738 = vrot.slane %v5736, 4
      %v5739 = vshll.u32 %v5393, 16
      %v5741 = vrot.slane %v5739, 5
      %v5742 = vor.u32 %v5738, %v5741
      %v5743 = vrot.slane %v5742, 4
      %v5745 = vshll.u32 %v5394, 16
      %v5747 = vrot.slane %v5745, 5
      %v5748 = vsel %vm1012, %v5743, %v5747
      %v5749 = vshrl.u32 %v5394, 16
      %v5751 = vrot.slane %v5749, 4
      %v5752 = vor.u32 %v5751, %v5747
      %v5753 = vrot.slane %v5752, 4
      %v5755 = vshll.u32 %v5395, 16
      %v5757 = vrot.slane %v5755, 5
      %v5758 = vsel %vm1012, %v5753, %v5757
      %v5760 = vshrl.u32 %v5396, 16
      %v5762 = vrot.slane %v5760, 4
      %v5763 = vshll.u32 %v5396, 16
      %v5765 = vrot.slane %v5763, 5
      %v5766 = vor.u32 %v5762, %v5765
      %v5767 = vrot.slane %v5766, 4
      %v5769 = vshll.u32 %v5397, 16
      %v5771 = vrot.slane %v5769, 5
      %v5772 = vsel %vm1012, %v5767, %v5771
      %v5773 = vshrl.u32 %v5397, 16
      %v5775 = vrot.slane %v5773, 4
      %v5776 = vor.u32 %v5775, %v5771
      %v5777 = vrot.slane %v5776, 4
      %v5779 = vshll.u32 %v5398, 16
      %v5781 = vrot.slane %v5779, 5
      %v5782 = vsel %vm1012, %v5777, %v5781
      %5783 = vrot.lane.b32.xlu0 %v5412, 4
      %v5784 = vpop.permute.xlu0 %5783
      %5785 = vrot.lane.b32.xlu0 %v5422, 4
      %v5786 = vpop.permute.xlu0 %5785
      %5787 = vrot.lane.b32.xlu0 %v5436, 4
      %v5788 = vpop.permute.xlu0 %5787
      %5789 = vrot.lane.b32.xlu0 %v5446, 4
      %v5790 = vpop.permute.xlu0 %5789
      %5791 = vrot.lane.b32.xlu0 %v5460, 4
      %v5792 = vpop.permute.xlu0 %5791
      %5793 = vrot.lane.b32.xlu0 %v5470, 4
      %v5794 = vpop.permute.xlu0 %5793
      %5795 = vrot.lane.b32.xlu0 %v5484, 4
      %v5796 = vpop.permute.xlu0 %5795
      %5797 = vrot.lane.b32.xlu0 %v5494, 4
      %v5798 = vpop.permute.xlu0 %5797
      %5799 = vrot.lane.b32.xlu0 %v5508, 4
      %v5800 = vpop.permute.xlu0 %5799
      %5801 = vrot.lane.b32.xlu0 %v5518, 4
      %v5802 = vpop.permute.xlu0 %5801
      %5803 = vrot.lane.b32.xlu0 %v5532, 4
      %v5804 = vpop.permute.xlu0 %5803
      %5805 = vrot.lane.b32.xlu0 %v5542, 4
      %v5806 = vpop.permute.xlu0 %5805
      %5807 = vrot.lane.b32.xlu0 %v5556, 4
      %v5808 = vpop.permute.xlu0 %5807
      %5809 = vrot.lane.b32.xlu0 %v5566, 4
      %v5810 = vpop.permute.xlu0 %5809
      %5811 = vrot.lane.b32.xlu0 %v5580, 4
      %v5812 = vpop.permute.xlu0 %5811
      %5813 = vrot.lane.b32.xlu0 %v5590, 4
      %v5814 = vpop.permute.xlu0 %5813
      %5815 = vrot.lane.b32.xlu0 %v5604, 4
      %v5816 = vpop.permute.xlu0 %5815
      %5817 = vrot.lane.b32.xlu0 %v5614, 4
      %v5818 = vpop.permute.xlu0 %5817
      %5819 = vrot.lane.b32.xlu0 %v5628, 4
      %v5820 = vpop.permute.xlu0 %5819
      %5821 = vrot.lane.b32.xlu0 %v5638, 4
      %v5822 = vpop.permute.xlu0 %5821
      %5823 = vrot.lane.b32.xlu0 %v5652, 4
      %v5824 = vpop.permute.xlu0 %5823
      %5825 = vrot.lane.b32.xlu0 %v5662, 4
      %v5826 = vpop.permute.xlu0 %5825
      %5827 = vrot.lane.b32.xlu0 %v5676, 4
      %v5828 = vpop.permute.xlu0 %5827
      %5829 = vrot.lane.b32.xlu0 %v5686, 4
      %v5830 = vpop.permute.xlu0 %5829
      %5831 = vrot.lane.b32.xlu0 %v5700, 4
      %v5832 = vpop.permute.xlu0 %5831
      %5833 = vrot.lane.b32.xlu0 %v5710, 4
      %v5834 = vpop.permute.xlu0 %5833
      %5835 = vrot.lane.b32.xlu0 %v5724, 4
      %v5836 = vpop.permute.xlu0 %5835
      %5837 = vrot.lane.b32.xlu0 %v5734, 4
      %v5838 = vpop.permute.xlu0 %5837
      %5839 = vrot.lane.b32.xlu0 %v5748, 4
      %v5840 = vpop.permute.xlu0 %5839
      %5841 = vrot.lane.b32.xlu0 %v5758, 4
      %v5842 = vpop.permute.xlu0 %5841
      %5843 = vrot.lane.b32.xlu0 %v5772, 4
      %v5844 = vpop.permute.xlu0 %5843
      %5845 = vrot.lane.b32.xlu0 %v5782, 4
      %v5846 = vpop.permute.xlu0 %5845
      %5879 = vst.msk [vmem:[#allocation3] sm:$0xf] %vm1493, %v5784
      %5880 = vst.msk [vmem:[#allocation3 + $0x4] sm:$0xf] %vm1493, %v5786
      %5881 = vst.msk [vmem:[#allocation3 + $0x8] sm:$0xf] %vm1493, %v5788
      %5882 = vst.msk [vmem:[#allocation3 + $0xc] sm:$0xf] %vm1493, %v5790
      %5883 = vst.msk [vmem:[#allocation3 + $0x10] sm:$0xf] %vm1493, %v5792
      %5884 = vst.msk [vmem:[#allocation3 + $0x14] sm:$0xf] %vm1493, %v5794
      %5885 = vst.msk [vmem:[#allocation3 + $0x18] sm:$0xf] %vm1493, %v5796
      %5886 = vst.msk [vmem:[#allocation3 + $0x1c] sm:$0xf] %vm1493, %v5798
      %5887 = vst.msk [vmem:[#allocation3 + $0x20] sm:$0xf] %vm1493, %v5800
      %5888 = vst.msk [vmem:[#allocation3 + $0x24] sm:$0xf] %vm1493, %v5802
      %5889 = vst.msk [vmem:[#allocation3 + $0x28] sm:$0xf] %vm1493, %v5804
      %5890 = vst.msk [vmem:[#allocation3 + $0x2c] sm:$0xf] %vm1493, %v5806
      %5891 = vst.msk [vmem:[#allocation3 + $0x30] sm:$0xf] %vm1493, %v5808
      %5892 = vst.msk [vmem:[#allocation3 + $0x34] sm:$0xf] %vm1493, %v5810
      %5893 = vst.msk [vmem:[#allocation3 + $0x38] sm:$0xf] %vm1493, %v5812
      %5894 = vst.msk [vmem:[#allocation3 + $0x3c] sm:$0xf] %vm1493, %v5814
      %5895 = vst.msk [vmem:[#allocation3 + $0x40] sm:$0xf] %vm1493, %v5816
      %5896 = vst.msk [vmem:[#allocation3 + $0x44] sm:$0xf] %vm1493, %v5818
      %5897 = vst.msk [vmem:[#allocation3 + $0x48] sm:$0xf] %vm1493, %v5820
      %5898 = vst.msk [vmem:[#allocation3 + $0x4c] sm:$0xf] %vm1493, %v5822
      %5899 = vst.msk [vmem:[#allocation3 + $0x50] sm:$0xf] %vm1493, %v5824
      %5900 = vst.msk [vmem:[#allocation3 + $0x54] sm:$0xf] %vm1493, %v5826
      %5901 = vst.msk [vmem:[#allocation3 + $0x58] sm:$0xf] %vm1493, %v5828
      %5902 = vst.msk [vmem:[#allocation3 + $0x5c] sm:$0xf] %vm1493, %v5830
      %5903 = vst.msk [vmem:[#allocation3 + $0x60] sm:$0xf] %vm1493, %v5832
      %5904 = vst.msk [vmem:[#allocation3 + $0x64] sm:$0xf] %vm1493, %v5834
      %5905 = vst.msk [vmem:[#allocation3 + $0x68] sm:$0xf] %vm1493, %v5836
      %5906 = vst.msk [vmem:[#allocation3 + $0x6c] sm:$0xf] %vm1493, %v5838
      %5907 = vst.msk [vmem:[#allocation3 + $0x70] sm:$0xf] %vm1493, %v5840
      %5908 = vst.msk [vmem:[#allocation3 + $0x74] sm:$0xf] %vm1493, %v5842
      %5909 = vst.msk [vmem:[#allocation3 + $0x78] sm:$0xf] %vm1493, %v5844
      %5910 = vst.msk [vmem:[#allocation3 + $0x7c] sm:$0xf] %vm1493, %v5846
      %v5911 = vld [vmem:[#allocation2] sm:$0xe]
      %v5912 = vld [vmem:[#allocation2 + $0x4] sm:$0xf]
      %v5913 = vld [vmem:[#allocation2 + $0x8] sm:$0x1]
      %v5914 = vld [vmem:[#allocation2 + $0xc] sm:$0xe]
      %v5915 = vld [vmem:[#allocation2 + $0x10] sm:$0xf]
      %v5916 = vld [vmem:[#allocation2 + $0x14] sm:$0x1]
      %v5917 = vld [vmem:[#allocation2 + $0x18] sm:$0xe]
      %v5918 = vld [vmem:[#allocation2 + $0x1c] sm:$0xf]
      %v5919 = vld [vmem:[#allocation2 + $0x20] sm:$0x1]
      %v5920 = vld [vmem:[#allocation2 + $0x24] sm:$0xe]
      %v5921 = vld [vmem:[#allocation2 + $0x28] sm:$0xf]
      %v5922 = vld [vmem:[#allocation2 + $0x2c] sm:$0x1]
      %v5923 = vld [vmem:[#allocation2 + $0x30] sm:$0xe]
      %v5924 = vld [vmem:[#allocation2 + $0x34] sm:$0xf]
      %v5925 = vld [vmem:[#allocation2 + $0x38] sm:$0x1]
      %v5926 = vld [vmem:[#allocation2 + $0x3c] sm:$0xe]
      %v5927 = vld [vmem:[#allocation2 + $0x40] sm:$0xf]
      %v5928 = vld [vmem:[#allocation2 + $0x44] sm:$0x1]
      %v5929 = vld [vmem:[#allocation2 + $0x48] sm:$0xe]
      %v5930 = vld [vmem:[#allocation2 + $0x4c] sm:$0xf]
      %v5931 = vld [vmem:[#allocation2 + $0x50] sm:$0x1]
      %v5932 = vld [vmem:[#allocation2 + $0x54] sm:$0xe]
      %v5933 = vld [vmem:[#allocation2 + $0x58] sm:$0xf]
      %v5934 = vld [vmem:[#allocation2 + $0x5c] sm:$0x1]
      %v5935 = vld [vmem:[#allocation2 + $0x60] sm:$0xe]
      %v5936 = vld [vmem:[#allocation2 + $0x64] sm:$0xf]
      %v5937 = vld [vmem:[#allocation2 + $0x68] sm:$0x1]
      %v5938 = vld [vmem:[#allocation2 + $0x6c] sm:$0xe]
      %v5939 = vld [vmem:[#allocation2 + $0x70] sm:$0xf]
      %v5940 = vld [vmem:[#allocation2 + $0x74] sm:$0x1]
      %v5941 = vld [vmem:[#allocation2 + $0x78] sm:$0xe]
      %v5942 = vld [vmem:[#allocation2 + $0x7c] sm:$0xf]
      %v5943 = vld [vmem:[#allocation2 + $0x80] sm:$0x1]
      %v5944 = vld [vmem:[#allocation2 + $0x84] sm:$0xe]
      %v5945 = vld [vmem:[#allocation2 + $0x88] sm:$0xf]
      %v5946 = vld [vmem:[#allocation2 + $0x8c] sm:$0x1]
      %v5947 = vld [vmem:[#allocation2 + $0x90] sm:$0xe]
      %v5948 = vld [vmem:[#allocation2 + $0x94] sm:$0xf]
      %v5949 = vld [vmem:[#allocation2 + $0x98] sm:$0x1]
      %v5950 = vld [vmem:[#allocation2 + $0x9c] sm:$0xe]
      %v5951 = vld [vmem:[#allocation2 + $0xa0] sm:$0xf]
      %v5952 = vld [vmem:[#allocation2 + $0xa4] sm:$0x1]
      %v5953 = vld [vmem:[#allocation2 + $0xa8] sm:$0xe]
      %v5954 = vld [vmem:[#allocation2 + $0xac] sm:$0xf]
      %v5955 = vld [vmem:[#allocation2 + $0xb0] sm:$0x1]
      %v5956 = vld [vmem:[#allocation2 + $0xb4] sm:$0xe]
      %v5957 = vld [vmem:[#allocation2 + $0xb8] sm:$0xf]
      %v5958 = vld [vmem:[#allocation2 + $0xbc] sm:$0x1]
      %v6007 = vrot.slane %v5911, 5
      %v6008 = vrot.slane %v6007, 4
      %v6009 = vrot.slane %v5912, 5
      %v6010 = vsel %vm1624, %v6008, %v6009
      %v6011 = vrot.slane %v6009, 4
      %v6012 = vrot.slane %v5913, 5
      %v6013 = vsel %vm1624, %v6011, %v6012
      %v6014 = vrot.slane %v5914, 5
      %v6015 = vrot.slane %v6014, 4
      %v6016 = vrot.slane %v5915, 5
      %v6017 = vsel %vm1624, %v6015, %v6016
      %v6018 = vrot.slane %v6016, 4
      %v6019 = vrot.slane %v5916, 5
      %v6020 = vsel %vm1624, %v6018, %v6019
      %v6021 = vrot.slane %v5917, 5
      %v6022 = vrot.slane %v6021, 4
      %v6023 = vrot.slane %v5918, 5
      %v6024 = vsel %vm1624, %v6022, %v6023
      %v6025 = vrot.slane %v6023, 4
      %v6026 = vrot.slane %v5919, 5
      %v6027 = vsel %vm1624, %v6025, %v6026
      %v6028 = vrot.slane %v5920, 5
      %v6029 = vrot.slane %v6028, 4
      %v6030 = vrot.slane %v5921, 5
      %v6031 = vsel %vm1624, %v6029, %v6030
      %v6032 = vrot.slane %v6030, 4
      %v6033 = vrot.slane %v5922, 5
      %v6034 = vsel %vm1624, %v6032, %v6033
      %v6035 = vrot.slane %v5923, 5
      %v6036 = vrot.slane %v6035, 4
      %v6037 = vrot.slane %v5924, 5
      %v6038 = vsel %vm1624, %v6036, %v6037
      %v6039 = vrot.slane %v6037, 4
      %v6040 = vrot.slane %v5925, 5
      %v6041 = vsel %vm1624, %v6039, %v6040
      %v6042 = vrot.slane %v5926, 5
      %v6043 = vrot.slane %v6042, 4
      %v6044 = vrot.slane %v5927, 5
      %v6045 = vsel %vm1624, %v6043, %v6044
      %v6046 = vrot.slane %v6044, 4
      %v6047 = vrot.slane %v5928, 5
      %v6048 = vsel %vm1624, %v6046, %v6047
      %v6049 = vrot.slane %v5929, 5
      %v6050 = vrot.slane %v6049, 4
      %v6051 = vrot.slane %v5930, 5
      %v6052 = vsel %vm1624, %v6050, %v6051
      %v6053 = vrot.slane %v6051, 4
      %v6054 = vrot.slane %v5931, 5
      %v6055 = vsel %vm1624, %v6053, %v6054
      %v6056 = vrot.slane %v5932, 5
      %v6057 = vrot.slane %v6056, 4
      %v6058 = vrot.slane %v5933, 5
      %v6059 = vsel %vm1624, %v6057, %v6058
      %v6060 = vrot.slane %v6058, 4
      %v6061 = vrot.slane %v5934, 5
      %v6062 = vsel %vm1624, %v6060, %v6061
      %v6063 = vrot.slane %v5935, 5
      %v6064 = vrot.slane %v6063, 4
      %v6065 = vrot.slane %v5936, 5
      %v6066 = vsel %vm1624, %v6064, %v6065
      %v6067 = vrot.slane %v6065, 4
      %v6068 = vrot.slane %v5937, 5
      %v6069 = vsel %vm1624, %v6067, %v6068
      %v6070 = vrot.slane %v5938, 5
      %v6071 = vrot.slane %v6070, 4
      %v6072 = vrot.slane %v5939, 5
      %v6073 = vsel %vm1624, %v6071, %v6072
      %v6074 = vrot.slane %v6072, 4
      %v6075 = vrot.slane %v5940, 5
      %v6076 = vsel %vm1624, %v6074, %v6075
      %v6077 = vrot.slane %v5941, 5
      %v6078 = vrot.slane %v6077, 4
      %v6079 = vrot.slane %v5942, 5
      %v6080 = vsel %vm1624, %v6078, %v6079
      %v6081 = vrot.slane %v6079, 4
      %v6082 = vrot.slane %v5943, 5
      %v6083 = vsel %vm1624, %v6081, %v6082
      %v6084 = vrot.slane %v5944, 5
      %v6085 = vrot.slane %v6084, 4
      %v6086 = vrot.slane %v5945, 5
      %v6087 = vsel %vm1624, %v6085, %v6086
      %v6088 = vrot.slane %v6086, 4
      %v6089 = vrot.slane %v5946, 5
      %v6090 = vsel %vm1624, %v6088, %v6089
      %v6091 = vrot.slane %v5947, 5
      %v6092 = vrot.slane %v6091, 4
      %v6093 = vrot.slane %v5948, 5
      %v6094 = vsel %vm1624, %v6092, %v6093
      %v6095 = vrot.slane %v6093, 4
      %v6096 = vrot.slane %v5949, 5
      %v6097 = vsel %vm1624, %v6095, %v6096
      %v6098 = vrot.slane %v5950, 5
      %v6099 = vrot.slane %v6098, 4
      %v6100 = vrot.slane %v5951, 5
      %v6101 = vsel %vm1624, %v6099, %v6100
      %v6102 = vrot.slane %v6100, 4
      %v6103 = vrot.slane %v5952, 5
      %v6104 = vsel %vm1624, %v6102, %v6103
      %v6105 = vrot.slane %v5953, 5
      %v6106 = vrot.slane %v6105, 4
      %v6107 = vrot.slane %v5954, 5
      %v6108 = vsel %vm1624, %v6106, %v6107
      %v6109 = vrot.slane %v6107, 4
      %v6110 = vrot.slane %v5955, 5
      %v6111 = vsel %vm1624, %v6109, %v6110
      %v6112 = vrot.slane %v5956, 5
      %v6113 = vrot.slane %v6112, 4
      %v6114 = vrot.slane %v5957, 5
      %v6115 = vsel %vm1624, %v6113, %v6114
      %v6116 = vrot.slane %v6114, 4
      %v6117 = vrot.slane %v5958, 5
      %v6118 = vsel %vm1624, %v6116, %v6117
      %6119 = vrot.lane.b32.xlu0 %v6010, 8
      %v6120 = vpop.permute.xlu0 %6119
      %6121 = vrot.lane.b32.xlu0 %v6013, 8
      %v6122 = vpop.permute.xlu0 %6121
      %6123 = vrot.lane.b32.xlu0 %v6017, 8
      %v6124 = vpop.permute.xlu0 %6123
      %6125 = vrot.lane.b32.xlu0 %v6020, 8
      %v6126 = vpop.permute.xlu0 %6125
      %6127 = vrot.lane.b32.xlu0 %v6024, 8
      %v6128 = vpop.permute.xlu0 %6127
      %6129 = vrot.lane.b32.xlu0 %v6027, 8
      %v6130 = vpop.permute.xlu0 %6129
      %6131 = vrot.lane.b32.xlu0 %v6031, 8
      %v6132 = vpop.permute.xlu0 %6131
      %6133 = vrot.lane.b32.xlu0 %v6034, 8
      %v6134 = vpop.permute.xlu0 %6133
      %6135 = vrot.lane.b32.xlu0 %v6038, 8
      %v6136 = vpop.permute.xlu0 %6135
      %6137 = vrot.lane.b32.xlu0 %v6041, 8
      %v6138 = vpop.permute.xlu0 %6137
      %6139 = vrot.lane.b32.xlu0 %v6045, 8
      %v6140 = vpop.permute.xlu0 %6139
      %6141 = vrot.lane.b32.xlu0 %v6048, 8
      %v6142 = vpop.permute.xlu0 %6141
      %6143 = vrot.lane.b32.xlu0 %v6052, 8
      %v6144 = vpop.permute.xlu0 %6143
      %6145 = vrot.lane.b32.xlu0 %v6055, 8
      %v6146 = vpop.permute.xlu0 %6145
      %6147 = vrot.lane.b32.xlu0 %v6059, 8
      %v6148 = vpop.permute.xlu0 %6147
      %6149 = vrot.lane.b32.xlu0 %v6062, 8
      %v6150 = vpop.permute.xlu0 %6149
      %6151 = vrot.lane.b32.xlu0 %v6066, 8
      %v6152 = vpop.permute.xlu0 %6151
      %6153 = vrot.lane.b32.xlu0 %v6069, 8
      %v6154 = vpop.permute.xlu0 %6153
      %6155 = vrot.lane.b32.xlu0 %v6073, 8
      %v6156 = vpop.permute.xlu0 %6155
      %6157 = vrot.lane.b32.xlu0 %v6076, 8
      %v6158 = vpop.permute.xlu0 %6157
      %6159 = vrot.lane.b32.xlu0 %v6080, 8
      %v6160 = vpop.permute.xlu0 %6159
      %6161 = vrot.lane.b32.xlu0 %v6083, 8
      %v6162 = vpop.permute.xlu0 %6161
      %6163 = vrot.lane.b32.xlu0 %v6087, 8
      %v6164 = vpop.permute.xlu0 %6163
      %6165 = vrot.lane.b32.xlu0 %v6090, 8
      %v6166 = vpop.permute.xlu0 %6165
      %6167 = vrot.lane.b32.xlu0 %v6094, 8
      %v6168 = vpop.permute.xlu0 %6167
      %6169 = vrot.lane.b32.xlu0 %v6097, 8
      %v6170 = vpop.permute.xlu0 %6169
      %6171 = vrot.lane.b32.xlu0 %v6101, 8
      %v6172 = vpop.permute.xlu0 %6171
      %6173 = vrot.lane.b32.xlu0 %v6104, 8
      %v6174 = vpop.permute.xlu0 %6173
      %6175 = vrot.lane.b32.xlu0 %v6108, 8
      %v6176 = vpop.permute.xlu0 %6175
      %6177 = vrot.lane.b32.xlu0 %v6111, 8
      %v6178 = vpop.permute.xlu0 %6177
      %6179 = vrot.lane.b32.xlu0 %v6115, 8
      %v6180 = vpop.permute.xlu0 %6179
      %6181 = vrot.lane.b32.xlu0 %v6118, 8
      %v6182 = vpop.permute.xlu0 %6181
      %6215 = vst.msk [vmem:[#allocation3] sm:$0xf] %vm1833, %v6120
      %6216 = vst.msk [vmem:[#allocation3 + $0x4] sm:$0xf] %vm1833, %v6122
      %6217 = vst.msk [vmem:[#allocation3 + $0x8] sm:$0xf] %vm1833, %v6124
      %6218 = vst.msk [vmem:[#allocation3 + $0xc] sm:$0xf] %vm1833, %v6126
      %6219 = vst.msk [vmem:[#allocation3 + $0x10] sm:$0xf] %vm1833, %v6128
      %6220 = vst.msk [vmem:[#allocation3 + $0x14] sm:$0xf] %vm1833, %v6130
      %6221 = vst.msk [vmem:[#allocation3 + $0x18] sm:$0xf] %vm1833, %v6132
      %6222 = vst.msk [vmem:[#allocation3 + $0x1c] sm:$0xf] %vm1833, %v6134
      %6223 = vst.msk [vmem:[#allocation3 + $0x20] sm:$0xf] %vm1833, %v6136
      %6224 = vst.msk [vmem:[#allocation3 + $0x24] sm:$0xf] %vm1833, %v6138
      %6225 = vst.msk [vmem:[#allocation3 + $0x28] sm:$0xf] %vm1833, %v6140
      %6226 = vst.msk [vmem:[#allocation3 + $0x2c] sm:$0xf] %vm1833, %v6142
      %6227 = vst.msk [vmem:[#allocation3 + $0x30] sm:$0xf] %vm1833, %v6144
      %6228 = vst.msk [vmem:[#allocation3 + $0x34] sm:$0xf] %vm1833, %v6146
      %6229 = vst.msk [vmem:[#allocation3 + $0x38] sm:$0xf] %vm1833, %v6148
      %6230 = vst.msk [vmem:[#allocation3 + $0x3c] sm:$0xf] %vm1833, %v6150
      %6231 = vst.msk [vmem:[#allocation3 + $0x40] sm:$0xf] %vm1833, %v6152
      %6232 = vst.msk [vmem:[#allocation3 + $0x44] sm:$0xf] %vm1833, %v6154
      %6233 = vst.msk [vmem:[#allocation3 + $0x48] sm:$0xf] %vm1833, %v6156
      %6234 = vst.msk [vmem:[#allocation3 + $0x4c] sm:$0xf] %vm1833, %v6158
      %6235 = vst.msk [vmem:[#allocation3 + $0x50] sm:$0xf] %vm1833, %v6160
      %6236 = vst.msk [vmem:[#allocation3 + $0x54] sm:$0xf] %vm1833, %v6162
      %6237 = vst.msk [vmem:[#allocation3 + $0x58] sm:$0xf] %vm1833, %v6164
      %6238 = vst.msk [vmem:[#allocation3 + $0x5c] sm:$0xf] %vm1833, %v6166
      %6239 = vst.msk [vmem:[#allocation3 + $0x60] sm:$0xf] %vm1833, %v6168
      %6240 = vst.msk [vmem:[#allocation3 + $0x64] sm:$0xf] %vm1833, %v6170
      %6241 = vst.msk [vmem:[#allocation3 + $0x68] sm:$0xf] %vm1833, %v6172
      %6242 = vst.msk [vmem:[#allocation3 + $0x6c] sm:$0xf] %vm1833, %v6174
      %6243 = vst.msk [vmem:[#allocation3 + $0x70] sm:$0xf] %vm1833, %v6176
      %6244 = vst.msk [vmem:[#allocation3 + $0x74] sm:$0xf] %vm1833, %v6178
      %6245 = vst.msk [vmem:[#allocation3 + $0x78] sm:$0xf] %vm1833, %v6180
      %6246 = vst.msk [vmem:[#allocation3 + $0x7c] sm:$0xf] %vm1833, %v6182
      %v6247 = vld [vmem:[%s559] sm:$0xf]
      %v6248 = vld [vmem:[%s559 + $0x4] sm:$0xf]
      %v6249 = vld [vmem:[%s559 + $0xc] sm:$0xf]
      %v6250 = vld [vmem:[%s559 + $0x10] sm:$0xf]
      %v6251 = vld [vmem:[%s559 + $0x18] sm:$0xf]
      %v6252 = vld [vmem:[%s559 + $0x1c] sm:$0xf]
      %v6253 = vld [vmem:[%s559 + $0x24] sm:$0xf]
      %v6254 = vld [vmem:[%s559 + $0x28] sm:$0xf]
      %v6255 = vld [vmem:[%s559 + $0x30] sm:$0xf]
      %v6256 = vld [vmem:[%s559 + $0x34] sm:$0xf]
      %v6257 = vld [vmem:[%s559 + $0x3c] sm:$0xf]
      %v6258 = vld [vmem:[%s559 + $0x40] sm:$0xf]
      %v6259 = vld [vmem:[%s559 + $0x48] sm:$0xf]
      %v6260 = vld [vmem:[%s559 + $0x4c] sm:$0xf]
      %v6261 = vld [vmem:[%s559 + $0x54] sm:$0xf]
      %v6262 = vld [vmem:[%s559 + $0x58] sm:$0xf]
      %v6263 = vld [vmem:[%s559 + $0x60] sm:$0xf]
      %v6264 = vld [vmem:[%s559 + $0x64] sm:$0xf]
      %v6265 = vld [vmem:[%s559 + $0x6c] sm:$0xf]
      %v6266 = vld [vmem:[%s559 + $0x70] sm:$0xf]
      %v6267 = vld [vmem:[%s559 + $0x78] sm:$0xf]
      %v6268 = vld [vmem:[%s559 + $0x7c] sm:$0xf]
      %v6269 = vld [vmem:[%s559 + $0x84] sm:$0xf]
      %v6270 = vld [vmem:[%s559 + $0x88] sm:$0xf]
      %v6271 = vld [vmem:[%s559 + $0x90] sm:$0xf]
      %v6272 = vld [vmem:[%s559 + $0x94] sm:$0xf]
      %v6273 = vld [vmem:[%s559 + $0x9c] sm:$0xf]
      %v6274 = vld [vmem:[%s559 + $0xa0] sm:$0xf]
      %v6275 = vld [vmem:[%s559 + $0xa8] sm:$0xf]
      %v6276 = vld [vmem:[%s559 + $0xac] sm:$0xf]
      %v6277 = vld [vmem:[%s559 + $0xb4] sm:$0xf]
      %v6278 = vld [vmem:[%s559 + $0xb8] sm:$0xf]
      %6311 = vrot.lane.b32.xlu0 %v6247, 12
      %v6312 = vpop.permute.xlu0 %6311
      %6313 = vrot.lane.b32.xlu0 %v6248, 12
      %v6314 = vpop.permute.xlu0 %6313
      %6315 = vrot.lane.b32.xlu0 %v6249, 12
      %v6316 = vpop.permute.xlu0 %6315
      %6317 = vrot.lane.b32.xlu0 %v6250, 12
      %v6318 = vpop.permute.xlu0 %6317
      %6319 = vrot.lane.b32.xlu0 %v6251, 12
      %v6320 = vpop.permute.xlu0 %6319
      %6321 = vrot.lane.b32.xlu0 %v6252, 12
      %v6322 = vpop.permute.xlu0 %6321
      %6323 = vrot.lane.b32.xlu0 %v6253, 12
      %v6324 = vpop.permute.xlu0 %6323
      %6325 = vrot.lane.b32.xlu0 %v6254, 12
      %v6326 = vpop.permute.xlu0 %6325
      %6327 = vrot.lane.b32.xlu0 %v6255, 12
      %v6328 = vpop.permute.xlu0 %6327
      %6329 = vrot.lane.b32.xlu0 %v6256, 12
      %v6330 = vpop.permute.xlu0 %6329
      %6331 = vrot.lane.b32.xlu0 %v6257, 12
      %v6332 = vpop.permute.xlu0 %6331
      %6333 = vrot.lane.b32.xlu0 %v6258, 12
      %v6334 = vpop.permute.xlu0 %6333
      %6335 = vrot.lane.b32.xlu0 %v6259, 12
      %v6336 = vpop.permute.xlu0 %6335
      %6337 = vrot.lane.b32.xlu0 %v6260, 12
      %v6338 = vpop.permute.xlu0 %6337
      %6339 = vrot.lane.b32.xlu0 %v6261, 12
      %v6340 = vpop.permute.xlu0 %6339
      %6341 = vrot.lane.b32.xlu0 %v6262, 12
      %v6342 = vpop.permute.xlu0 %6341
      %6343 = vrot.lane.b32.xlu0 %v6263, 12
      %v6344 = vpop.permute.xlu0 %6343
      %6345 = vrot.lane.b32.xlu0 %v6264, 12
      %v6346 = vpop.permute.xlu0 %6345
      %6347 = vrot.lane.b32.xlu0 %v6265, 12
      %v6348 = vpop.permute.xlu0 %6347
      %6349 = vrot.lane.b32.xlu0 %v6266, 12
      %v6350 = vpop.permute.xlu0 %6349
      %6351 = vrot.lane.b32.xlu0 %v6267, 12
      %v6352 = vpop.permute.xlu0 %6351
      %6353 = vrot.lane.b32.xlu0 %v6268, 12
      %v6354 = vpop.permute.xlu0 %6353
      %6355 = vrot.lane.b32.xlu0 %v6269, 12
      %v6356 = vpop.permute.xlu0 %6355
      %6357 = vrot.lane.b32.xlu0 %v6270, 12
      %v6358 = vpop.permute.xlu0 %6357
      %6359 = vrot.lane.b32.xlu0 %v6271, 12
      %v6360 = vpop.permute.xlu0 %6359
      %6361 = vrot.lane.b32.xlu0 %v6272, 12
      %v6362 = vpop.permute.xlu0 %6361
      %6363 = vrot.lane.b32.xlu0 %v6273, 12
      %v6364 = vpop.permute.xlu0 %6363
      %6365 = vrot.lane.b32.xlu0 %v6274, 12
      %v6366 = vpop.permute.xlu0 %6365
      %6367 = vrot.lane.b32.xlu0 %v6275, 12
      %v6368 = vpop.permute.xlu0 %6367
      %6369 = vrot.lane.b32.xlu0 %v6276, 12
      %v6370 = vpop.permute.xlu0 %6369
      %6371 = vrot.lane.b32.xlu0 %v6277, 12
      %v6372 = vpop.permute.xlu0 %6371
      %6373 = vrot.lane.b32.xlu0 %v6278, 12
      %v6374 = vpop.permute.xlu0 %6373
      %6407 = vst.msk [vmem:[#allocation3] sm:$0xf] %vm2026, %v6312
      %6408 = vst.msk [vmem:[#allocation3 + $0x4] sm:$0xf] %vm2026, %v6314
      %6409 = vst.msk [vmem:[#allocation3 + $0x8] sm:$0xf] %vm2026, %v6316
      %6410 = vst.msk [vmem:[#allocation3 + $0xc] sm:$0xf] %vm2026, %v6318
      %6411 = vst.msk [vmem:[#allocation3 + $0x10] sm:$0xf] %vm2026, %v6320
      %6412 = vst.msk [vmem:[#allocation3 + $0x14] sm:$0xf] %vm2026, %v6322
      %6413 = vst.msk [vmem:[#allocation3 + $0x18] sm:$0xf] %vm2026, %v6324
      %6414 = vst.msk [vmem:[#allocation3 + $0x1c] sm:$0xf] %vm2026, %v6326
      %6415 = vst.msk [vmem:[#allocation3 + $0x20] sm:$0xf] %vm2026, %v6328
      %6416 = vst.msk [vmem:[#allocation3 + $0x24] sm:$0xf] %vm2026, %v6330
      %6417 = vst.msk [vmem:[#allocation3 + $0x28] sm:$0xf] %vm2026, %v6332
      %6418 = vst.msk [vmem:[#allocation3 + $0x2c] sm:$0xf] %vm2026, %v6334
      %6419 = vst.msk [vmem:[#allocation3 + $0x30] sm:$0xf] %vm2026, %v6336
      %6420 = vst.msk [vmem:[#allocation3 + $0x34] sm:$0xf] %vm2026, %v6338
      %6421 = vst.msk [vmem:[#allocation3 + $0x38] sm:$0xf] %vm2026, %v6340
      %6422 = vst.msk [vmem:[#allocation3 + $0x3c] sm:$0xf] %vm2026, %v6342
      %6423 = vst.msk [vmem:[#allocation3 + $0x40] sm:$0xf] %vm2026, %v6344
      %6424 = vst.msk [vmem:[#allocation3 + $0x44] sm:$0xf] %vm2026, %v6346
      %6425 = vst.msk [vmem:[#allocation3 + $0x48] sm:$0xf] %vm2026, %v6348
      %6426 = vst.msk [vmem:[#allocation3 + $0x4c] sm:$0xf] %vm2026, %v6350
      %6427 = vst.msk [vmem:[#allocation3 + $0x50] sm:$0xf] %vm2026, %v6352
      %6428 = vst.msk [vmem:[#allocation3 + $0x54] sm:$0xf] %vm2026, %v6354
      %6429 = vst.msk [vmem:[#allocation3 + $0x58] sm:$0xf] %vm2026, %v6356
      %6430 = vst.msk [vmem:[#allocation3 + $0x5c] sm:$0xf] %vm2026, %v6358
      %6431 = vst.msk [vmem:[#allocation3 + $0x60] sm:$0xf] %vm2026, %v6360
      %6432 = vst.msk [vmem:[#allocation3 + $0x64] sm:$0xf] %vm2026, %v6362
      %6433 = vst.msk [vmem:[#allocation3 + $0x68] sm:$0xf] %vm2026, %v6364
      %6434 = vst.msk [vmem:[#allocation3 + $0x6c] sm:$0xf] %vm2026, %v6366
      %6435 = vst.msk [vmem:[#allocation3 + $0x70] sm:$0xf] %vm2026, %v6368
      %6436 = vst.msk [vmem:[#allocation3 + $0x74] sm:$0xf] %vm2026, %v6370
      %6437 = vst.msk [vmem:[#allocation3 + $0x78] sm:$0xf] %vm2026, %v6372
      %6438 = vst.msk [vmem:[#allocation3 + $0x7c] sm:$0xf] %vm2026, %v6374
      %v6439 = vld [vmem:[%s559] sm:$0xf]
      %v6440 = vld [vmem:[%s559 + $0x4] sm:$0xf]
      %v6441 = vld [vmem:[%s559 + $0x8] sm:$0x1]
      %v6442 = vld [vmem:[%s559 + $0xc] sm:$0xf]
      %v6443 = vld [vmem:[%s559 + $0x10] sm:$0xf]
      %v6444 = vld [vmem:[%s559 + $0x14] sm:$0x1]
      %v6445 = vld [vmem:[%s559 + $0x18] sm:$0xf]
      %v6446 = vld [vmem:[%s559 + $0x1c] sm:$0xf]
      %v6447 = vld [vmem:[%s559 + $0x20] sm:$0x1]
      %v6448 = vld [vmem:[%s559 + $0x24] sm:$0xf]
      %v6449 = vld [vmem:[%s559 + $0x28] sm:$0xf]
      %v6450 = vld [vmem:[%s559 + $0x2c] sm:$0x1]
      %v6451 = vld [vmem:[%s559 + $0x30] sm:$0xf]
      %v6452 = vld [vmem:[%s559 + $0x34] sm:$0xf]
      %v6453 = vld [vmem:[%s559 + $0x38] sm:$0x1]
      %v6454 = vld [vmem:[%s559 + $0x3c] sm:$0xf]
      %v6455 = vld [vmem:[%s559 + $0x40] sm:$0xf]
      %v6456 = vld [vmem:[%s559 + $0x44] sm:$0x1]
      %v6457 = vld [vmem:[%s559 + $0x48] sm:$0xf]
      %v6458 = vld [vmem:[%s559 + $0x4c] sm:$0xf]
      %v6459 = vld [vmem:[%s559 + $0x50] sm:$0x1]
      %v6460 = vld [vmem:[%s559 + $0x54] sm:$0xf]
      %v6461 = vld [vmem:[%s559 + $0x58] sm:$0xf]
      %v6462 = vld [vmem:[%s559 + $0x5c] sm:$0x1]
      %v6463 = vld [vmem:[%s559 + $0x60] sm:$0xf]
      %v6464 = vld [vmem:[%s559 + $0x64] sm:$0xf]
      %v6465 = vld [vmem:[%s559 + $0x68] sm:$0x1]
      %v6466 = vld [vmem:[%s559 + $0x6c] sm:$0xf]
      %v6467 = vld [vmem:[%s559 + $0x70] sm:$0xf]
      %v6468 = vld [vmem:[%s559 + $0x74] sm:$0x1]
      %v6469 = vld [vmem:[%s559 + $0x78] sm:$0xf]
      %v6470 = vld [vmem:[%s559 + $0x7c] sm:$0xf]
      %v6471 = vld [vmem:[%s559 + $0x80] sm:$0x1]
      %v6472 = vld [vmem:[%s559 + $0x84] sm:$0xf]
      %v6473 = vld [vmem:[%s559 + $0x88] sm:$0xf]
      %v6474 = vld [vmem:[%s559 + $0x8c] sm:$0x1]
      %v6475 = vld [vmem:[%s559 + $0x90] sm:$0xf]
      %v6476 = vld [vmem:[%s559 + $0x94] sm:$0xf]
      %v6477 = vld [vmem:[%s559 + $0x98] sm:$0x1]
      %v6478 = vld [vmem:[%s559 + $0x9c] sm:$0xf]
      %v6479 = vld [vmem:[%s559 + $0xa0] sm:$0xf]
      %v6480 = vld [vmem:[%s559 + $0xa4] sm:$0x1]
      %v6481 = vld [vmem:[%s559 + $0xa8] sm:$0xf]
      %v6482 = vld [vmem:[%s559 + $0xac] sm:$0xf]
      %v6483 = vld [vmem:[%s559 + $0xb0] sm:$0x1]
      %v6484 = vld [vmem:[%s559 + $0xb4] sm:$0xf]
      %v6485 = vld [vmem:[%s559 + $0xb8] sm:$0xf]
      %v6486 = vld [vmem:[%s559 + $0xbc] sm:$0x1]
      %v6488 = vshrl.u32 %v6439, 16
      %v6490 = vrot.slane %v6488, 4
      %v6491 = vshll.u32 %v6439, 16
      %v6493 = vrot.slane %v6491, 5
      %v6494 = vor.u32 %v6490, %v6493
      %v6495 = vrot.slane %v6494, 4
      %v6497 = vshll.u32 %v6440, 16
      %v6499 = vrot.slane %v6497, 5
      %v6500 = vsel %vm1012, %v6495, %v6499
      %v6501 = vshrl.u32 %v6440, 16
      %v6503 = vrot.slane %v6501, 4
      %v6504 = vor.u32 %v6503, %v6499
      %v6505 = vrot.slane %v6504, 4
      %v6507 = vshll.u32 %v6441, 16
      %v6509 = vrot.slane %v6507, 5
      %v6510 = vsel %vm1012, %v6505, %v6509
      %v6512 = vshrl.u32 %v6442, 16
      %v6514 = vrot.slane %v6512, 4
      %v6515 = vshll.u32 %v6442, 16
      %v6517 = vrot.slane %v6515, 5
      %v6518 = vor.u32 %v6514, %v6517
      %v6519 = vrot.slane %v6518, 4
      %v6521 = vshll.u32 %v6443, 16
      %v6523 = vrot.slane %v6521, 5
      %v6524 = vsel %vm1012, %v6519, %v6523
      %v6525 = vshrl.u32 %v6443, 16
      %v6527 = vrot.slane %v6525, 4
      %v6528 = vor.u32 %v6527, %v6523
      %v6529 = vrot.slane %v6528, 4
      %v6531 = vshll.u32 %v6444, 16
      %v6533 = vrot.slane %v6531, 5
      %v6534 = vsel %vm1012, %v6529, %v6533
      %v6536 = vshrl.u32 %v6445, 16
      %v6538 = vrot.slane %v6536, 4
      %v6539 = vshll.u32 %v6445, 16
      %v6541 = vrot.slane %v6539, 5
      %v6542 = vor.u32 %v6538, %v6541
      %v6543 = vrot.slane %v6542, 4
      %v6545 = vshll.u32 %v6446, 16
      %v6547 = vrot.slane %v6545, 5
      %v6548 = vsel %vm1012, %v6543, %v6547
      %v6549 = vshrl.u32 %v6446, 16
      %v6551 = vrot.slane %v6549, 4
      %v6552 = vor.u32 %v6551, %v6547
      %v6553 = vrot.slane %v6552, 4
      %v6555 = vshll.u32 %v6447, 16
      %v6557 = vrot.slane %v6555, 5
      %v6558 = vsel %vm1012, %v6553, %v6557
      %v6560 = vshrl.u32 %v6448, 16
      %v6562 = vrot.slane %v6560, 4
      %v6563 = vshll.u32 %v6448, 16
      %v6565 = vrot.slane %v6563, 5
      %v6566 = vor.u32 %v6562, %v6565
      %v6567 = vrot.slane %v6566, 4
      %v6569 = vshll.u32 %v6449, 16
      %v6571 = vrot.slane %v6569, 5
      %v6572 = vsel %vm1012, %v6567, %v6571
      %v6573 = vshrl.u32 %v6449, 16
      %v6575 = vrot.slane %v6573, 4
      %v6576 = vor.u32 %v6575, %v6571
      %v6577 = vrot.slane %v6576, 4
      %v6579 = vshll.u32 %v6450, 16
      %v6581 = vrot.slane %v6579, 5
      %v6582 = vsel %vm1012, %v6577, %v6581
      %v6584 = vshrl.u32 %v6451, 16
      %v6586 = vrot.slane %v6584, 4
      %v6587 = vshll.u32 %v6451, 16
      %v6589 = vrot.slane %v6587, 5
      %v6590 = vor.u32 %v6586, %v6589
      %v6591 = vrot.slane %v6590, 4
      %v6593 = vshll.u32 %v6452, 16
      %v6595 = vrot.slane %v6593, 5
      %v6596 = vsel %vm1012, %v6591, %v6595
      %v6597 = vshrl.u32 %v6452, 16
      %v6599 = vrot.slane %v6597, 4
      %v6600 = vor.u32 %v6599, %v6595
      %v6601 = vrot.slane %v6600, 4
      %v6603 = vshll.u32 %v6453, 16
      %v6605 = vrot.slane %v6603, 5
      %v6606 = vsel %vm1012, %v6601, %v6605
      %v6608 = vshrl.u32 %v6454, 16
      %v6610 = vrot.slane %v6608, 4
      %v6611 = vshll.u32 %v6454, 16
      %v6613 = vrot.slane %v6611, 5
      %v6614 = vor.u32 %v6610, %v6613
      %v6615 = vrot.slane %v6614, 4
      %v6617 = vshll.u32 %v6455, 16
      %v6619 = vrot.slane %v6617, 5
      %v6620 = vsel %vm1012, %v6615, %v6619
      %v6621 = vshrl.u32 %v6455, 16
      %v6623 = vrot.slane %v6621, 4
      %v6624 = vor.u32 %v6623, %v6619
      %v6625 = vrot.slane %v6624, 4
      %v6627 = vshll.u32 %v6456, 16
      %v6629 = vrot.slane %v6627, 5
      %v6630 = vsel %vm1012, %v6625, %v6629
      %v6632 = vshrl.u32 %v6457, 16
      %v6634 = vrot.slane %v6632, 4
      %v6635 = vshll.u32 %v6457, 16
      %v6637 = vrot.slane %v6635, 5
      %v6638 = vor.u32 %v6634, %v6637
      %v6639 = vrot.slane %v6638, 4
      %v6641 = vshll.u32 %v6458, 16
      %v6643 = vrot.slane %v6641, 5
      %v6644 = vsel %vm1012, %v6639, %v6643
      %v6645 = vshrl.u32 %v6458, 16
      %v6647 = vrot.slane %v6645, 4
      %v6648 = vor.u32 %v6647, %v6643
      %v6649 = vrot.slane %v6648, 4
      %v6651 = vshll.u32 %v6459, 16
      %v6653 = vrot.slane %v6651, 5
      %v6654 = vsel %vm1012, %v6649, %v6653
      %v6656 = vshrl.u32 %v6460, 16
      %v6658 = vrot.slane %v6656, 4
      %v6659 = vshll.u32 %v6460, 16
      %v6661 = vrot.slane %v6659, 5
      %v6662 = vor.u32 %v6658, %v6661
      %v6663 = vrot.slane %v6662, 4
      %v6665 = vshll.u32 %v6461, 16
      %v6667 = vrot.slane %v6665, 5
      %v6668 = vsel %vm1012, %v6663, %v6667
      %v6669 = vshrl.u32 %v6461, 16
      %v6671 = vrot.slane %v6669, 4
      %v6672 = vor.u32 %v6671, %v6667
      %v6673 = vrot.slane %v6672, 4
      %v6675 = vshll.u32 %v6462, 16
      %v6677 = vrot.slane %v6675, 5
      %v6678 = vsel %vm1012, %v6673, %v6677
      %v6680 = vshrl.u32 %v6463, 16
      %v6682 = vrot.slane %v6680, 4
      %v6683 = vshll.u32 %v6463, 16
      %v6685 = vrot.slane %v6683, 5
      %v6686 = vor.u32 %v6682, %v6685
      %v6687 = vrot.slane %v6686, 4
      %v6689 = vshll.u32 %v6464, 16
      %v6691 = vrot.slane %v6689, 5
      %v6692 = vsel %vm1012, %v6687, %v6691
      %v6693 = vshrl.u32 %v6464, 16
      %v6695 = vrot.slane %v6693, 4
      %v6696 = vor.u32 %v6695, %v6691
      %v6697 = vrot.slane %v6696, 4
      %v6699 = vshll.u32 %v6465, 16
      %v6701 = vrot.slane %v6699, 5
      %v6702 = vsel %vm1012, %v6697, %v6701
      %v6704 = vshrl.u32 %v6466, 16
      %v6706 = vrot.slane %v6704, 4
      %v6707 = vshll.u32 %v6466, 16
      %v6709 = vrot.slane %v6707, 5
      %v6710 = vor.u32 %v6706, %v6709
      %v6711 = vrot.slane %v6710, 4
      %v6713 = vshll.u32 %v6467, 16
      %v6715 = vrot.slane %v6713, 5
      %v6716 = vsel %vm1012, %v6711, %v6715
      %v6717 = vshrl.u32 %v6467, 16
      %v6719 = vrot.slane %v6717, 4
      %v6720 = vor.u32 %v6719, %v6715
      %v6721 = vrot.slane %v6720, 4
      %v6723 = vshll.u32 %v6468, 16
      %v6725 = vrot.slane %v6723, 5
      %v6726 = vsel %vm1012, %v6721, %v6725
      %v6728 = vshrl.u32 %v6469, 16
      %v6730 = vrot.slane %v6728, 4
      %v6731 = vshll.u32 %v6469, 16
      %v6733 = vrot.slane %v6731, 5
      %v6734 = vor.u32 %v6730, %v6733
      %v6735 = vrot.slane %v6734, 4
      %v6737 = vshll.u32 %v6470, 16
      %v6739 = vrot.slane %v6737, 5
      %v6740 = vsel %vm1012, %v6735, %v6739
      %v6741 = vshrl.u32 %v6470, 16
      %v6743 = vrot.slane %v6741, 4
      %v6744 = vor.u32 %v6743, %v6739
      %v6745 = vrot.slane %v6744, 4
      %v6747 = vshll.u32 %v6471, 16
      %v6749 = vrot.slane %v6747, 5
      %v6750 = vsel %vm1012, %v6745, %v6749
      %v6752 = vshrl.u32 %v6472, 16
      %v6754 = vrot.slane %v6752, 4
      %v6755 = vshll.u32 %v6472, 16
      %v6757 = vrot.slane %v6755, 5
      %v6758 = vor.u32 %v6754, %v6757
      %v6759 = vrot.slane %v6758, 4
      %v6761 = vshll.u32 %v6473, 16
      %v6763 = vrot.slane %v6761, 5
      %v6764 = vsel %vm1012, %v6759, %v6763
      %v6765 = vshrl.u32 %v6473, 16
      %v6767 = vrot.slane %v6765, 4
      %v6768 = vor.u32 %v6767, %v6763
      %v6769 = vrot.slane %v6768, 4
      %v6771 = vshll.u32 %v6474, 16
      %v6773 = vrot.slane %v6771, 5
      %v6774 = vsel %vm1012, %v6769, %v6773
      %v6776 = vshrl.u32 %v6475, 16
      %v6778 = vrot.slane %v6776, 4
      %v6779 = vshll.u32 %v6475, 16
      %v6781 = vrot.slane %v6779, 5
      %v6782 = vor.u32 %v6778, %v6781
      %v6783 = vrot.slane %v6782, 4
      %v6785 = vshll.u32 %v6476, 16
      %v6787 = vrot.slane %v6785, 5
      %v6788 = vsel %vm1012, %v6783, %v6787
      %v6789 = vshrl.u32 %v6476, 16
      %v6791 = vrot.slane %v6789, 4
      %v6792 = vor.u32 %v6791, %v6787
      %v6793 = vrot.slane %v6792, 4
      %v6795 = vshll.u32 %v6477, 16
      %v6797 = vrot.slane %v6795, 5
      %v6798 = vsel %vm1012, %v6793, %v6797
      %v6800 = vshrl.u32 %v6478, 16
      %v6802 = vrot.slane %v6800, 4
      %v6803 = vshll.u32 %v6478, 16
      %v6805 = vrot.slane %v6803, 5
      %v6806 = vor.u32 %v6802, %v6805
      %v6807 = vrot.slane %v6806, 4
      %v6809 = vshll.u32 %v6479, 16
      %v6811 = vrot.slane %v6809, 5
      %v6812 = vsel %vm1012, %v6807, %v6811
      %v6813 = vshrl.u32 %v6479, 16
      %v6815 = vrot.slane %v6813, 4
      %v6816 = vor.u32 %v6815, %v6811
      %v6817 = vrot.slane %v6816, 4
      %v6819 = vshll.u32 %v6480, 16
      %v6821 = vrot.slane %v6819, 5
      %v6822 = vsel %vm1012, %v6817, %v6821
      %v6824 = vshrl.u32 %v6481, 16
      %v6826 = vrot.slane %v6824, 4
      %v6827 = vshll.u32 %v6481, 16
      %v6829 = vrot.slane %v6827, 5
      %v6830 = vor.u32 %v6826, %v6829
      %v6831 = vrot.slane %v6830, 4
      %v6833 = vshll.u32 %v6482, 16
      %v6835 = vrot.slane %v6833, 5
      %v6836 = vsel %vm1012, %v6831, %v6835
      %v6837 = vshrl.u32 %v6482, 16
      %v6839 = vrot.slane %v6837, 4
      %v6840 = vor.u32 %v6839, %v6835
      %v6841 = vrot.slane %v6840, 4
      %v6843 = vshll.u32 %v6483, 16
      %v6845 = vrot.slane %v6843, 5
      %v6846 = vsel %vm1012, %v6841, %v6845
      %v6848 = vshrl.u32 %v6484, 16
      %v6850 = vrot.slane %v6848, 4
      %v6851 = vshll.u32 %v6484, 16
      %v6853 = vrot.slane %v6851, 5
      %v6854 = vor.u32 %v6850, %v6853
      %v6855 = vrot.slane %v6854, 4
      %v6857 = vshll.u32 %v6485, 16
      %v6859 = vrot.slane %v6857, 5
      %v6860 = vsel %vm1012, %v6855, %v6859
      %v6861 = vshrl.u32 %v6485, 16
      %v6863 = vrot.slane %v6861, 4
      %v6864 = vor.u32 %v6863, %v6859
      %v6865 = vrot.slane %v6864, 4
      %v6867 = vshll.u32 %v6486, 16
      %v6869 = vrot.slane %v6867, 5
      %v6870 = vsel %vm1012, %v6865, %v6869
      %6871 = vrot.lane.b32.xlu0 %v6500, 16
      %v6872 = vpop.permute.xlu0 %6871
      %6873 = vrot.lane.b32.xlu0 %v6510, 16
      %v6874 = vpop.permute.xlu0 %6873
      %6875 = vrot.lane.b32.xlu0 %v6524, 16
      %v6876 = vpop.permute.xlu0 %6875
      %6877 = vrot.lane.b32.xlu0 %v6534, 16
      %v6878 = vpop.permute.xlu0 %6877
      %6879 = vrot.lane.b32.xlu0 %v6548, 16
      %v6880 = vpop.permute.xlu0 %6879
      %6881 = vrot.lane.b32.xlu0 %v6558, 16
      %v6882 = vpop.permute.xlu0 %6881
      %6883 = vrot.lane.b32.xlu0 %v6572, 16
      %v6884 = vpop.permute.xlu0 %6883
      %6885 = vrot.lane.b32.xlu0 %v6582, 16
      %v6886 = vpop.permute.xlu0 %6885
      %6887 = vrot.lane.b32.xlu0 %v6596, 16
      %v6888 = vpop.permute.xlu0 %6887
      %6889 = vrot.lane.b32.xlu0 %v6606, 16
      %v6890 = vpop.permute.xlu0 %6889
      %6891 = vrot.lane.b32.xlu0 %v6620, 16
      %v6892 = vpop.permute.xlu0 %6891
      %6893 = vrot.lane.b32.xlu0 %v6630, 16
      %v6894 = vpop.permute.xlu0 %6893
      %6895 = vrot.lane.b32.xlu0 %v6644, 16
      %v6896 = vpop.permute.xlu0 %6895
      %6897 = vrot.lane.b32.xlu0 %v6654, 16
      %v6898 = vpop.permute.xlu0 %6897
      %6899 = vrot.lane.b32.xlu0 %v6668, 16
      %v6900 = vpop.permute.xlu0 %6899
      %6901 = vrot.lane.b32.xlu0 %v6678, 16
      %v6902 = vpop.permute.xlu0 %6901
      %6903 = vrot.lane.b32.xlu0 %v6692, 16
      %v6904 = vpop.permute.xlu0 %6903
      %6905 = vrot.lane.b32.xlu0 %v6702, 16
      %v6906 = vpop.permute.xlu0 %6905
      %6907 = vrot.lane.b32.xlu0 %v6716, 16
      %v6908 = vpop.permute.xlu0 %6907
      %6909 = vrot.lane.b32.xlu0 %v6726, 16
      %v6910 = vpop.permute.xlu0 %6909
      %6911 = vrot.lane.b32.xlu0 %v6740, 16
      %v6912 = vpop.permute.xlu0 %6911
      %6913 = vrot.lane.b32.xlu0 %v6750, 16
      %v6914 = vpop.permute.xlu0 %6913
      %6915 = vrot.lane.b32.xlu0 %v6764, 16
      %v6916 = vpop.permute.xlu0 %6915
      %6917 = vrot.lane.b32.xlu0 %v6774, 16
      %v6918 = vpop.permute.xlu0 %6917
      %6919 = vrot.lane.b32.xlu0 %v6788, 16
      %v6920 = vpop.permute.xlu0 %6919
      %6921 = vrot.lane.b32.xlu0 %v6798, 16
      %v6922 = vpop.permute.xlu0 %6921
      %6923 = vrot.lane.b32.xlu0 %v6812, 16
      %v6924 = vpop.permute.xlu0 %6923
      %6925 = vrot.lane.b32.xlu0 %v6822, 16
      %v6926 = vpop.permute.xlu0 %6925
      %6927 = vrot.lane.b32.xlu0 %v6836, 16
      %v6928 = vpop.permute.xlu0 %6927
      %6929 = vrot.lane.b32.xlu0 %v6846, 16
      %v6930 = vpop.permute.xlu0 %6929
      %6931 = vrot.lane.b32.xlu0 %v6860, 16
      %v6932 = vpop.permute.xlu0 %6931
      %6933 = vrot.lane.b32.xlu0 %v6870, 16
      %v6934 = vpop.permute.xlu0 %6933
      %6967 = vst.msk [vmem:[#allocation3] sm:$0xf] %vm2587, %v6872
      %6968 = vst.msk [vmem:[#allocation3 + $0x4] sm:$0xf] %vm2587, %v6874
      %6969 = vst.msk [vmem:[#allocation3 + $0x8] sm:$0xf] %vm2587, %v6876
      %6970 = vst.msk [vmem:[#allocation3 + $0xc] sm:$0xf] %vm2587, %v6878
      %6971 = vst.msk [vmem:[#allocation3 + $0x10] sm:$0xf] %vm2587, %v6880
      %6972 = vst.msk [vmem:[#allocation3 + $0x14] sm:$0xf] %vm2587, %v6882
      %6973 = vst.msk [vmem:[#allocation3 + $0x18] sm:$0xf] %vm2587, %v6884
      %6974 = vst.msk [vmem:[#allocation3 + $0x1c] sm:$0xf] %vm2587, %v6886
      %6975 = vst.msk [vmem:[#allocation3 + $0x20] sm:$0xf] %vm2587, %v6888
      %6976 = vst.msk [vmem:[#allocation3 + $0x24] sm:$0xf] %vm2587, %v6890
      %6977 = vst.msk [vmem:[#allocation3 + $0x28] sm:$0xf] %vm2587, %v6892
      %6978 = vst.msk [vmem:[#allocation3 + $0x2c] sm:$0xf] %vm2587, %v6894
      %6979 = vst.msk [vmem:[#allocation3 + $0x30] sm:$0xf] %vm2587, %v6896
      %6980 = vst.msk [vmem:[#allocation3 + $0x34] sm:$0xf] %vm2587, %v6898
      %6981 = vst.msk [vmem:[#allocation3 + $0x38] sm:$0xf] %vm2587, %v6900
      %6982 = vst.msk [vmem:[#allocation3 + $0x3c] sm:$0xf] %vm2587, %v6902
      %6983 = vst.msk [vmem:[#allocation3 + $0x40] sm:$0xf] %vm2587, %v6904
      %6984 = vst.msk [vmem:[#allocation3 + $0x44] sm:$0xf] %vm2587, %v6906
      %6985 = vst.msk [vmem:[#allocation3 + $0x48] sm:$0xf] %vm2587, %v6908
      %6986 = vst.msk [vmem:[#allocation3 + $0x4c] sm:$0xf] %vm2587, %v6910
      %6987 = vst.msk [vmem:[#allocation3 + $0x50] sm:$0xf] %vm2587, %v6912
      %6988 = vst.msk [vmem:[#allocation3 + $0x54] sm:$0xf] %vm2587, %v6914
      %6989 = vst.msk [vmem:[#allocation3 + $0x58] sm:$0xf] %vm2587, %v6916
      %6990 = vst.msk [vmem:[#allocation3 + $0x5c] sm:$0xf] %vm2587, %v6918
      %6991 = vst.msk [vmem:[#allocation3 + $0x60] sm:$0xf] %vm2587, %v6920
      %6992 = vst.msk [vmem:[#allocation3 + $0x64] sm:$0xf] %vm2587, %v6922
      %6993 = vst.msk [vmem:[#allocation3 + $0x68] sm:$0xf] %vm2587, %v6924
      %6994 = vst.msk [vmem:[#allocation3 + $0x6c] sm:$0xf] %vm2587, %v6926
      %6995 = vst.msk [vmem:[#allocation3 + $0x70] sm:$0xf] %vm2587, %v6928
      %6996 = vst.msk [vmem:[#allocation3 + $0x74] sm:$0xf] %vm2587, %v6930
      %6997 = vst.msk [vmem:[#allocation3 + $0x78] sm:$0xf] %vm2587, %v6932
      %6998 = vst.msk [vmem:[#allocation3 + $0x7c] sm:$0xf] %vm2587, %v6934
      %v6999 = vld [vmem:[%s559] sm:$0xe]
      %v7000 = vld [vmem:[%s559 + $0x4] sm:$0xf]
      %v7001 = vld [vmem:[%s559 + $0x8] sm:$0x1]
      %v7002 = vld [vmem:[%s559 + $0xc] sm:$0xe]
      %v7003 = vld [vmem:[%s559 + $0x10] sm:$0xf]
      %v7004 = vld [vmem:[%s559 + $0x14] sm:$0x1]
      %v7005 = vld [vmem:[%s559 + $0x18] sm:$0xe]
      %v7006 = vld [vmem:[%s559 + $0x1c] sm:$0xf]
      %v7007 = vld [vmem:[%s559 + $0x20] sm:$0x1]
      %v7008 = vld [vmem:[%s559 + $0x24] sm:$0xe]
      %v7009 = vld [vmem:[%s559 + $0x28] sm:$0xf]
      %v7010 = vld [vmem:[%s559 + $0x2c] sm:$0x1]
      %v7011 = vld [vmem:[%s559 + $0x30] sm:$0xe]
      %v7012 = vld [vmem:[%s559 + $0x34] sm:$0xf]
      %v7013 = vld [vmem:[%s559 + $0x38] sm:$0x1]
      %v7014 = vld [vmem:[%s559 + $0x3c] sm:$0xe]
      %v7015 = vld [vmem:[%s559 + $0x40] sm:$0xf]
      %v7016 = vld [vmem:[%s559 + $0x44] sm:$0x1]
      %v7017 = vld [vmem:[%s559 + $0x48] sm:$0xe]
      %v7018 = vld [vmem:[%s559 + $0x4c] sm:$0xf]
      %v7019 = vld [vmem:[%s559 + $0x50] sm:$0x1]
      %v7020 = vld [vmem:[%s559 + $0x54] sm:$0xe]
      %v7021 = vld [vmem:[%s559 + $0x58] sm:$0xf]
      %v7022 = vld [vmem:[%s559 + $0x5c] sm:$0x1]
      %v7023 = vld [vmem:[%s559 + $0x60] sm:$0xe]
      %v7024 = vld [vmem:[%s559 + $0x64] sm:$0xf]
      %v7025 = vld [vmem:[%s559 + $0x68] sm:$0x1]
      %v7026 = vld [vmem:[%s559 + $0x6c] sm:$0xe]
      %v7027 = vld [vmem:[%s559 + $0x70] sm:$0xf]
      %v7028 = vld [vmem:[%s559 + $0x74] sm:$0x1]
      %v7029 = vld [vmem:[%s559 + $0x78] sm:$0xe]
      %v7030 = vld [vmem:[%s559 + $0x7c] sm:$0xf]
      %v7031 = vld [vmem:[%s559 + $0x80] sm:$0x1]
      %v7032 = vld [vmem:[%s559 + $0x84] sm:$0xe]
      %v7033 = vld [vmem:[%s559 + $0x88] sm:$0xf]
      %v7034 = vld [vmem:[%s559 + $0x8c] sm:$0x1]
      %v7035 = vld [vmem:[%s559 + $0x90] sm:$0xe]
      %v7036 = vld [vmem:[%s559 + $0x94] sm:$0xf]
      %v7037 = vld [vmem:[%s559 + $0x98] sm:$0x1]
      %v7038 = vld [vmem:[%s559 + $0x9c] sm:$0xe]
      %v7039 = vld [vmem:[%s559 + $0xa0] sm:$0xf]
      %v7040 = vld [vmem:[%s559 + $0xa4] sm:$0x1]
      %v7041 = vld [vmem:[%s559 + $0xa8] sm:$0xe]
      %v7042 = vld [vmem:[%s559 + $0xac] sm:$0xf]
      %v7043 = vld [vmem:[%s559 + $0xb0] sm:$0x1]
      %v7044 = vld [vmem:[%s559 + $0xb4] sm:$0xe]
      %v7045 = vld [vmem:[%s559 + $0xb8] sm:$0xf]
      %v7046 = vld [vmem:[%s559 + $0xbc] sm:$0x1]
      %v7095 = vrot.slane %v6999, 5
      %v7096 = vrot.slane %v7095, 4
      %v7097 = vrot.slane %v7000, 5
      %v7098 = vsel %vm1624, %v7096, %v7097
      %v7099 = vrot.slane %v7097, 4
      %v7100 = vrot.slane %v7001, 5
      %v7101 = vsel %vm1624, %v7099, %v7100
      %v7102 = vrot.slane %v7002, 5
      %v7103 = vrot.slane %v7102, 4
      %v7104 = vrot.slane %v7003, 5
      %v7105 = vsel %vm1624, %v7103, %v7104
      %v7106 = vrot.slane %v7104, 4
      %v7107 = vrot.slane %v7004, 5
      %v7108 = vsel %vm1624, %v7106, %v7107
      %v7109 = vrot.slane %v7005, 5
      %v7110 = vrot.slane %v7109, 4
      %v7111 = vrot.slane %v7006, 5
      %v7112 = vsel %vm1624, %v7110, %v7111
      %v7113 = vrot.slane %v7111, 4
      %v7114 = vrot.slane %v7007, 5
      %v7115 = vsel %vm1624, %v7113, %v7114
      %v7116 = vrot.slane %v7008, 5
      %v7117 = vrot.slane %v7116, 4
      %v7118 = vrot.slane %v7009, 5
      %v7119 = vsel %vm1624, %v7117, %v7118
      %v7120 = vrot.slane %v7118, 4
      %v7121 = vrot.slane %v7010, 5
      %v7122 = vsel %vm1624, %v7120, %v7121
      %v7123 = vrot.slane %v7011, 5
      %v7124 = vrot.slane %v7123, 4
      %v7125 = vrot.slane %v7012, 5
      %v7126 = vsel %vm1624, %v7124, %v7125
      %v7127 = vrot.slane %v7125, 4
      %v7128 = vrot.slane %v7013, 5
      %v7129 = vsel %vm1624, %v7127, %v7128
      %v7130 = vrot.slane %v7014, 5
      %v7131 = vrot.slane %v7130, 4
      %v7132 = vrot.slane %v7015, 5
      %v7133 = vsel %vm1624, %v7131, %v7132
      %v7134 = vrot.slane %v7132, 4
      %v7135 = vrot.slane %v7016, 5
      %v7136 = vsel %vm1624, %v7134, %v7135
      %v7137 = vrot.slane %v7017, 5
      %v7138 = vrot.slane %v7137, 4
      %v7139 = vrot.slane %v7018, 5
      %v7140 = vsel %vm1624, %v7138, %v7139
      %v7141 = vrot.slane %v7139, 4
      %v7142 = vrot.slane %v7019, 5
      %v7143 = vsel %vm1624, %v7141, %v7142
      %v7144 = vrot.slane %v7020, 5
      %v7145 = vrot.slane %v7144, 4
      %v7146 = vrot.slane %v7021, 5
      %v7147 = vsel %vm1624, %v7145, %v7146
      %v7148 = vrot.slane %v7146, 4
      %v7149 = vrot.slane %v7022, 5
      %v7150 = vsel %vm1624, %v7148, %v7149
      %v7151 = vrot.slane %v7023, 5
      %v7152 = vrot.slane %v7151, 4
      %v7153 = vrot.slane %v7024, 5
      %v7154 = vsel %vm1624, %v7152, %v7153
      %v7155 = vrot.slane %v7153, 4
      %v7156 = vrot.slane %v7025, 5
      %v7157 = vsel %vm1624, %v7155, %v7156
      %v7158 = vrot.slane %v7026, 5
      %v7159 = vrot.slane %v7158, 4
      %v7160 = vrot.slane %v7027, 5
      %v7161 = vsel %vm1624, %v7159, %v7160
      %v7162 = vrot.slane %v7160, 4
      %v7163 = vrot.slane %v7028, 5
      %v7164 = vsel %vm1624, %v7162, %v7163
      %v7165 = vrot.slane %v7029, 5
      %v7166 = vrot.slane %v7165, 4
      %v7167 = vrot.slane %v7030, 5
      %v7168 = vsel %vm1624, %v7166, %v7167
      %v7169 = vrot.slane %v7167, 4
      %v7170 = vrot.slane %v7031, 5
      %v7171 = vsel %vm1624, %v7169, %v7170
      %v7172 = vrot.slane %v7032, 5
      %v7173 = vrot.slane %v7172, 4
      %v7174 = vrot.slane %v7033, 5
      %v7175 = vsel %vm1624, %v7173, %v7174
      %v7176 = vrot.slane %v7174, 4
      %v7177 = vrot.slane %v7034, 5
      %v7178 = vsel %vm1624, %v7176, %v7177
      %v7179 = vrot.slane %v7035, 5
      %v7180 = vrot.slane %v7179, 4
      %v7181 = vrot.slane %v7036, 5
      %v7182 = vsel %vm1624, %v7180, %v7181
      %v7183 = vrot.slane %v7181, 4
      %v7184 = vrot.slane %v7037, 5
      %v7185 = vsel %vm1624, %v7183, %v7184
      %v7186 = vrot.slane %v7038, 5
      %v7187 = vrot.slane %v7186, 4
      %v7188 = vrot.slane %v7039, 5
      %v7189 = vsel %vm1624, %v7187, %v7188
      %v7190 = vrot.slane %v7188, 4
      %v7191 = vrot.slane %v7040, 5
      %v7192 = vsel %vm1624, %v7190, %v7191
      %v7193 = vrot.slane %v7041, 5
      %v7194 = vrot.slane %v7193, 4
      %v7195 = vrot.slane %v7042, 5
      %v7196 = vsel %vm1624, %v7194, %v7195
      %v7197 = vrot.slane %v7195, 4
      %v7198 = vrot.slane %v7043, 5
      %v7199 = vsel %vm1624, %v7197, %v7198
      %v7200 = vrot.slane %v7044, 5
      %v7201 = vrot.slane %v7200, 4
      %v7202 = vrot.slane %v7045, 5
      %v7203 = vsel %vm1624, %v7201, %v7202
      %v7204 = vrot.slane %v7202, 4
      %v7205 = vrot.slane %v7046, 5
      %v7206 = vsel %vm1624, %v7204, %v7205
      %7207 = vrot.lane.b32.xlu0 %v7098, 20
      %v7208 = vpop.permute.xlu0 %7207
      %7209 = vrot.lane.b32.xlu0 %v7101, 20
      %v7210 = vpop.permute.xlu0 %7209
      %7211 = vrot.lane.b32.xlu0 %v7105, 20
      %v7212 = vpop.permute.xlu0 %7211
      %7213 = vrot.lane.b32.xlu0 %v7108, 20
      %v7214 = vpop.permute.xlu0 %7213
      %7215 = vrot.lane.b32.xlu0 %v7112, 20
      %v7216 = vpop.permute.xlu0 %7215
      %7217 = vrot.lane.b32.xlu0 %v7115, 20
      %v7218 = vpop.permute.xlu0 %7217
      %7219 = vrot.lane.b32.xlu0 %v7119, 20
      %v7220 = vpop.permute.xlu0 %7219
      %7221 = vrot.lane.b32.xlu0 %v7122, 20
      %v7222 = vpop.permute.xlu0 %7221
      %7223 = vrot.lane.b32.xlu0 %v7126, 20
      %v7224 = vpop.permute.xlu0 %7223
      %7225 = vrot.lane.b32.xlu0 %v7129, 20
      %v7226 = vpop.permute.xlu0 %7225
      %7227 = vrot.lane.b32.xlu0 %v7133, 20
      %v7228 = vpop.permute.xlu0 %7227
      %7229 = vrot.lane.b32.xlu0 %v7136, 20
      %v7230 = vpop.permute.xlu0 %7229
      %7231 = vrot.lane.b32.xlu0 %v7140, 20
      %v7232 = vpop.permute.xlu0 %7231
      %7233 = vrot.lane.b32.xlu0 %v7143, 20
      %v7234 = vpop.permute.xlu0 %7233
      %7235 = vrot.lane.b32.xlu0 %v7147, 20
      %v7236 = vpop.permute.xlu0 %7235
      %7237 = vrot.lane.b32.xlu0 %v7150, 20
      %v7238 = vpop.permute.xlu0 %7237
      %7239 = vrot.lane.b32.xlu0 %v7154, 20
      %v7240 = vpop.permute.xlu0 %7239
      %7241 = vrot.lane.b32.xlu0 %v7157, 20
      %v7242 = vpop.permute.xlu0 %7241
      %7243 = vrot.lane.b32.xlu0 %v7161, 20
      %v7244 = vpop.permute.xlu0 %7243
      %7245 = vrot.lane.b32.xlu0 %v7164, 20
      %v7246 = vpop.permute.xlu0 %7245
      %7247 = vrot.lane.b32.xlu0 %v7168, 20
      %v7248 = vpop.permute.xlu0 %7247
      %7249 = vrot.lane.b32.xlu0 %v7171, 20
      %v7250 = vpop.permute.xlu0 %7249
      %7251 = vrot.lane.b32.xlu0 %v7175, 20
      %v7252 = vpop.permute.xlu0 %7251
      %7253 = vrot.lane.b32.xlu0 %v7178, 20
      %v7254 = vpop.permute.xlu0 %7253
      %7255 = vrot.lane.b32.xlu0 %v7182, 20
      %v7256 = vpop.permute.xlu0 %7255
      %7257 = vrot.lane.b32.xlu0 %v7185, 20
      %v7258 = vpop.permute.xlu0 %7257
      %7259 = vrot.lane.b32.xlu0 %v7189, 20
      %v7260 = vpop.permute.xlu0 %7259
      %7261 = vrot.lane.b32.xlu0 %v7192, 20
      %v7262 = vpop.permute.xlu0 %7261
      %7263 = vrot.lane.b32.xlu0 %v7196, 20
      %v7264 = vpop.permute.xlu0 %7263
      %7265 = vrot.lane.b32.xlu0 %v7199, 20
      %v7266 = vpop.permute.xlu0 %7265
      %7267 = vrot.lane.b32.xlu0 %v7203, 20
      %v7268 = vpop.permute.xlu0 %7267
      %7269 = vrot.lane.b32.xlu0 %v7206, 20
      %v7270 = vpop.permute.xlu0 %7269
      %7303 = vst.msk [vmem:[#allocation3] sm:$0xf] %vm2924, %v7208
      %7304 = vst.msk [vmem:[#allocation3 + $0x4] sm:$0xf] %vm2924, %v7210
      %7305 = vst.msk [vmem:[#allocation3 + $0x8] sm:$0xf] %vm2924, %v7212
      %7306 = vst.msk [vmem:[#allocation3 + $0xc] sm:$0xf] %vm2924, %v7214
      %7307 = vst.msk [vmem:[#allocation3 + $0x10] sm:$0xf] %vm2924, %v7216
      %7308 = vst.msk [vmem:[#allocation3 + $0x14] sm:$0xf] %vm2924, %v7218
      %7309 = vst.msk [vmem:[#allocation3 + $0x18] sm:$0xf] %vm2924, %v7220
      %7310 = vst.msk [vmem:[#allocation3 + $0x1c] sm:$0xf] %vm2924, %v7222
      %7311 = vst.msk [vmem:[#allocation3 + $0x20] sm:$0xf] %vm2924, %v7224
      %7312 = vst.msk [vmem:[#allocation3 + $0x24] sm:$0xf] %vm2924, %v7226
      %7313 = vst.msk [vmem:[#allocation3 + $0x28] sm:$0xf] %vm2924, %v7228
      %7314 = vst.msk [vmem:[#allocation3 + $0x2c] sm:$0xf] %vm2924, %v7230
      %7315 = vst.msk [vmem:[#allocation3 + $0x30] sm:$0xf] %vm2924, %v7232
      %7316 = vst.msk [vmem:[#allocation3 + $0x34] sm:$0xf] %vm2924, %v7234
      %7317 = vst.msk [vmem:[#allocation3 + $0x38] sm:$0xf] %vm2924, %v7236
      %7318 = vst.msk [vmem:[#allocation3 + $0x3c] sm:$0xf] %vm2924, %v7238
      %7319 = vst.msk [vmem:[#allocation3 + $0x40] sm:$0xf] %vm2924, %v7240
      %7320 = vst.msk [vmem:[#allocation3 + $0x44] sm:$0xf] %vm2924, %v7242
      %7321 = vst.msk [vmem:[#allocation3 + $0x48] sm:$0xf] %vm2924, %v7244
      %7322 = vst.msk [vmem:[#allocation3 + $0x4c] sm:$0xf] %vm2924, %v7246
      %7323 = vst.msk [vmem:[#allocation3 + $0x50] sm:$0xf] %vm2924, %v7248
      %7324 = vst.msk [vmem:[#allocation3 + $0x54] sm:$0xf] %vm2924, %v7250
      %7325 = vst.msk [vmem:[#allocation3 + $0x58] sm:$0xf] %vm2924, %v7252
      %7326 = vst.msk [vmem:[#allocation3 + $0x5c] sm:$0xf] %vm2924, %v7254
      %7327 = vst.msk [vmem:[#allocation3 + $0x60] sm:$0xf] %vm2924, %v7256
      %7328 = vst.msk [vmem:[#allocation3 + $0x64] sm:$0xf] %vm2924, %v7258
      %7329 = vst.msk [vmem:[#allocation3 + $0x68] sm:$0xf] %vm2924, %v7260
      %7330 = vst.msk [vmem:[#allocation3 + $0x6c] sm:$0xf] %vm2924, %v7262
      %7331 = vst.msk [vmem:[#allocation3 + $0x70] sm:$0xf] %vm2924, %v7264
      %7332 = vst.msk [vmem:[#allocation3 + $0x74] sm:$0xf] %vm2924, %v7266
      %7333 = vst.msk [vmem:[#allocation3 + $0x78] sm:$0xf] %vm2924, %v7268
      %7334 = vst.msk [vmem:[#allocation3 + $0x7c] sm:$0xf] %vm2924, %v7270
      %v7335 = vld [vmem:[%s2957] sm:$0xf]
      %v7336 = vld [vmem:[%s2957 + $0x4] sm:$0xf]
      %v7337 = vld [vmem:[%s2957 + $0xc] sm:$0xf]
      %v7338 = vld [vmem:[%s2957 + $0x10] sm:$0xf]
      %v7339 = vld [vmem:[%s2957 + $0x18] sm:$0xf]
      %v7340 = vld [vmem:[%s2957 + $0x1c] sm:$0xf]
      %v7341 = vld [vmem:[%s2957 + $0x24] sm:$0xf]
      %v7342 = vld [vmem:[%s2957 + $0x28] sm:$0xf]
      %v7343 = vld [vmem:[%s2957 + $0x30] sm:$0xf]
      %v7344 = vld [vmem:[%s2957 + $0x34] sm:$0xf]
      %v7345 = vld [vmem:[%s2957 + $0x3c] sm:$0xf]
      %v7346 = vld [vmem:[%s2957 + $0x40] sm:$0xf]
      %v7347 = vld [vmem:[%s2957 + $0x48] sm:$0xf]
      %v7348 = vld [vmem:[%s2957 + $0x4c] sm:$0xf]
      %v7349 = vld [vmem:[%s2957 + $0x54] sm:$0xf]
      %v7350 = vld [vmem:[%s2957 + $0x58] sm:$0xf]
      %v7351 = vld [vmem:[%s2957 + $0x60] sm:$0xf]
      %v7352 = vld [vmem:[%s2957 + $0x64] sm:$0xf]
      %v7353 = vld [vmem:[%s2957 + $0x6c] sm:$0xf]
      %v7354 = vld [vmem:[%s2957 + $0x70] sm:$0xf]
      %v7355 = vld [vmem:[%s2957 + $0x78] sm:$0xf]
      %v7356 = vld [vmem:[%s2957 + $0x7c] sm:$0xf]
      %v7357 = vld [vmem:[%s2957 + $0x84] sm:$0xf]
      %v7358 = vld [vmem:[%s2957 + $0x88] sm:$0xf]
      %v7359 = vld [vmem:[%s2957 + $0x90] sm:$0xf]
      %v7360 = vld [vmem:[%s2957 + $0x94] sm:$0xf]
      %v7361 = vld [vmem:[%s2957 + $0x9c] sm:$0xf]
      %v7362 = vld [vmem:[%s2957 + $0xa0] sm:$0xf]
      %v7363 = vld [vmem:[%s2957 + $0xa8] sm:$0xf]
      %v7364 = vld [vmem:[%s2957 + $0xac] sm:$0xf]
      %v7365 = vld [vmem:[%s2957 + $0xb4] sm:$0xf]
      %v7366 = vld [vmem:[%s2957 + $0xb8] sm:$0xf]
      %7399 = vrot.lane.b32.xlu0 %v7335, 24
      %v7400 = vpop.permute.xlu0 %7399
      %7401 = vrot.lane.b32.xlu0 %v7336, 24
      %v7402 = vpop.permute.xlu0 %7401
      %7403 = vrot.lane.b32.xlu0 %v7337, 24
      %v7404 = vpop.permute.xlu0 %7403
      %7405 = vrot.lane.b32.xlu0 %v7338, 24
      %v7406 = vpop.permute.xlu0 %7405
      %7407 = vrot.lane.b32.xlu0 %v7339, 24
      %v7408 = vpop.permute.xlu0 %7407
      %7409 = vrot.lane.b32.xlu0 %v7340, 24
      %v7410 = vpop.permute.xlu0 %7409
      %7411 = vrot.lane.b32.xlu0 %v7341, 24
      %v7412 = vpop.permute.xlu0 %7411
      %7413 = vrot.lane.b32.xlu0 %v7342, 24
      %v7414 = vpop.permute.xlu0 %7413
      %7415 = vrot.lane.b32.xlu0 %v7343, 24
      %v7416 = vpop.permute.xlu0 %7415
      %7417 = vrot.lane.b32.xlu0 %v7344, 24
      %v7418 = vpop.permute.xlu0 %7417
      %7419 = vrot.lane.b32.xlu0 %v7345, 24
      %v7420 = vpop.permute.xlu0 %7419
      %7421 = vrot.lane.b32.xlu0 %v7346, 24
      %v7422 = vpop.permute.xlu0 %7421
      %7423 = vrot.lane.b32.xlu0 %v7347, 24
      %v7424 = vpop.permute.xlu0 %7423
      %7425 = vrot.lane.b32.xlu0 %v7348, 24
      %v7426 = vpop.permute.xlu0 %7425
      %7427 = vrot.lane.b32.xlu0 %v7349, 24
      %v7428 = vpop.permute.xlu0 %7427
      %7429 = vrot.lane.b32.xlu0 %v7350, 24
      %v7430 = vpop.permute.xlu0 %7429
      %7431 = vrot.lane.b32.xlu0 %v7351, 24
      %v7432 = vpop.permute.xlu0 %7431
      %7433 = vrot.lane.b32.xlu0 %v7352, 24
      %v7434 = vpop.permute.xlu0 %7433
      %7435 = vrot.lane.b32.xlu0 %v7353, 24
      %v7436 = vpop.permute.xlu0 %7435
      %7437 = vrot.lane.b32.xlu0 %v7354, 24
      %v7438 = vpop.permute.xlu0 %7437
      %7439 = vrot.lane.b32.xlu0 %v7355, 24
      %v7440 = vpop.permute.xlu0 %7439
      %7441 = vrot.lane.b32.xlu0 %v7356, 24
      %v7442 = vpop.permute.xlu0 %7441
      %7443 = vrot.lane.b32.xlu0 %v7357, 24
      %v7444 = vpop.permute.xlu0 %7443
      %7445 = vrot.lane.b32.xlu0 %v7358, 24
      %v7446 = vpop.permute.xlu0 %7445
      %7447 = vrot.lane.b32.xlu0 %v7359, 24
      %v7448 = vpop.permute.xlu0 %7447
      %7449 = vrot.lane.b32.xlu0 %v7360, 24
      %v7450 = vpop.permute.xlu0 %7449
      %7451 = vrot.lane.b32.xlu0 %v7361, 24
      %v7452 = vpop.permute.xlu0 %7451
      %7453 = vrot.lane.b32.xlu0 %v7362, 24
      %v7454 = vpop.permute.xlu0 %7453
      %7455 = vrot.lane.b32.xlu0 %v7363, 24
      %v7456 = vpop.permute.xlu0 %7455
      %7457 = vrot.lane.b32.xlu0 %v7364, 24
      %v7458 = vpop.permute.xlu0 %7457
      %7459 = vrot.lane.b32.xlu0 %v7365, 24
      %v7460 = vpop.permute.xlu0 %7459
      %7461 = vrot.lane.b32.xlu0 %v7366, 24
      %v7462 = vpop.permute.xlu0 %7461
      %7495 = vst.msk [vmem:[#allocation3] sm:$0xf] %vm3118, %v7400
      %7496 = vst.msk [vmem:[#allocation3 + $0x4] sm:$0xf] %vm3118, %v7402
      %7497 = vst.msk [vmem:[#allocation3 + $0x8] sm:$0xf] %vm3118, %v7404
      %7498 = vst.msk [vmem:[#allocation3 + $0xc] sm:$0xf] %vm3118, %v7406
      %7499 = vst.msk [vmem:[#allocation3 + $0x10] sm:$0xf] %vm3118, %v7408
      %7500 = vst.msk [vmem:[#allocation3 + $0x14] sm:$0xf] %vm3118, %v7410
      %7501 = vst.msk [vmem:[#allocation3 + $0x18] sm:$0xf] %vm3118, %v7412
      %7502 = vst.msk [vmem:[#allocation3 + $0x1c] sm:$0xf] %vm3118, %v7414
      %7503 = vst.msk [vmem:[#allocation3 + $0x20] sm:$0xf] %vm3118, %v7416
      %7504 = vst.msk [vmem:[#allocation3 + $0x24] sm:$0xf] %vm3118, %v7418
      %7505 = vst.msk [vmem:[#allocation3 + $0x28] sm:$0xf] %vm3118, %v7420
      %7506 = vst.msk [vmem:[#allocation3 + $0x2c] sm:$0xf] %vm3118, %v7422
      %7507 = vst.msk [vmem:[#allocation3 + $0x30] sm:$0xf] %vm3118, %v7424
      %7508 = vst.msk [vmem:[#allocation3 + $0x34] sm:$0xf] %vm3118, %v7426
      %7509 = vst.msk [vmem:[#allocation3 + $0x38] sm:$0xf] %vm3118, %v7428
      %7510 = vst.msk [vmem:[#allocation3 + $0x3c] sm:$0xf] %vm3118, %v7430
      %7511 = vst.msk [vmem:[#allocation3 + $0x40] sm:$0xf] %vm3118, %v7432
      %7512 = vst.msk [vmem:[#allocation3 + $0x44] sm:$0xf] %vm3118, %v7434
      %7513 = vst.msk [vmem:[#allocation3 + $0x48] sm:$0xf] %vm3118, %v7436
      %7514 = vst.msk [vmem:[#allocation3 + $0x4c] sm:$0xf] %vm3118, %v7438
      %7515 = vst.msk [vmem:[#allocation3 + $0x50] sm:$0xf] %vm3118, %v7440
      %7516 = vst.msk [vmem:[#allocation3 + $0x54] sm:$0xf] %vm3118, %v7442
      %7517 = vst.msk [vmem:[#allocation3 + $0x58] sm:$0xf] %vm3118, %v7444
      %7518 = vst.msk [vmem:[#allocation3 + $0x5c] sm:$0xf] %vm3118, %v7446
      %7519 = vst.msk [vmem:[#allocation3 + $0x60] sm:$0xf] %vm3118, %v7448
      %7520 = vst.msk [vmem:[#allocation3 + $0x64] sm:$0xf] %vm3118, %v7450
      %7521 = vst.msk [vmem:[#allocation3 + $0x68] sm:$0xf] %vm3118, %v7452
      %7522 = vst.msk [vmem:[#allocation3 + $0x6c] sm:$0xf] %vm3118, %v7454
      %7523 = vst.msk [vmem:[#allocation3 + $0x70] sm:$0xf] %vm3118, %v7456
      %7524 = vst.msk [vmem:[#allocation3 + $0x74] sm:$0xf] %vm3118, %v7458
      %7525 = vst.msk [vmem:[#allocation3 + $0x78] sm:$0xf] %vm3118, %v7460
      %7526 = vst.msk [vmem:[#allocation3 + $0x7c] sm:$0xf] %vm3118, %v7462
      %v7527 = vld [vmem:[%s2957] sm:$0xf]
      %v7528 = vld [vmem:[%s2957 + $0x4] sm:$0xf]
      %v7529 = vld [vmem:[%s2957 + $0x8] sm:$0x1]
      %v7530 = vld [vmem:[%s2957 + $0xc] sm:$0xf]
      %v7531 = vld [vmem:[%s2957 + $0x10] sm:$0xf]
      %v7532 = vld [vmem:[%s2957 + $0x14] sm:$0x1]
      %v7533 = vld [vmem:[%s2957 + $0x18] sm:$0xf]
      %v7534 = vld [vmem:[%s2957 + $0x1c] sm:$0xf]
      %v7535 = vld [vmem:[%s2957 + $0x20] sm:$0x1]
      %v7536 = vld [vmem:[%s2957 + $0x24] sm:$0xf]
      %v7537 = vld [vmem:[%s2957 + $0x28] sm:$0xf]
      %v7538 = vld [vmem:[%s2957 + $0x2c] sm:$0x1]
      %v7539 = vld [vmem:[%s2957 + $0x30] sm:$0xf]
      %v7540 = vld [vmem:[%s2957 + $0x34] sm:$0xf]
      %v7541 = vld [vmem:[%s2957 + $0x38] sm:$0x1]
      %v7542 = vld [vmem:[%s2957 + $0x3c] sm:$0xf]
      %v7543 = vld [vmem:[%s2957 + $0x40] sm:$0xf]
      %v7544 = vld [vmem:[%s2957 + $0x44] sm:$0x1]
      %v7545 = vld [vmem:[%s2957 + $0x48] sm:$0xf]
      %v7546 = vld [vmem:[%s2957 + $0x4c] sm:$0xf]
      %v7547 = vld [vmem:[%s2957 + $0x50] sm:$0x1]
      %v7548 = vld [vmem:[%s2957 + $0x54] sm:$0xf]
      %v7549 = vld [vmem:[%s2957 + $0x58] sm:$0xf]
      %v7550 = vld [vmem:[%s2957 + $0x5c] sm:$0x1]
      %v7551 = vld [vmem:[%s2957 + $0x60] sm:$0xf]
      %v7552 = vld [vmem:[%s2957 + $0x64] sm:$0xf]
      %v7553 = vld [vmem:[%s2957 + $0x68] sm:$0x1]
      %v7554 = vld [vmem:[%s2957 + $0x6c] sm:$0xf]
      %v7555 = vld [vmem:[%s2957 + $0x70] sm:$0xf]
      %v7556 = vld [vmem:[%s2957 + $0x74] sm:$0x1]
      %v7557 = vld [vmem:[%s2957 + $0x78] sm:$0xf]
      %v7558 = vld [vmem:[%s2957 + $0x7c] sm:$0xf]
      %v7559 = vld [vmem:[%s2957 + $0x80] sm:$0x1]
      %v7560 = vld [vmem:[%s2957 + $0x84] sm:$0xf]
      %v7561 = vld [vmem:[%s2957 + $0x88] sm:$0xf]
      %v7562 = vld [vmem:[%s2957 + $0x8c] sm:$0x1]
      %v7563 = vld [vmem:[%s2957 + $0x90] sm:$0xf]
      %v7564 = vld [vmem:[%s2957 + $0x94] sm:$0xf]
      %v7565 = vld [vmem:[%s2957 + $0x98] sm:$0x1]
      %v7566 = vld [vmem:[%s2957 + $0x9c] sm:$0xf]
      %v7567 = vld [vmem:[%s2957 + $0xa0] sm:$0xf]
      %v7568 = vld [vmem:[%s2957 + $0xa4] sm:$0x1]
      %v7569 = vld [vmem:[%s2957 + $0xa8] sm:$0xf]
      %v7570 = vld [vmem:[%s2957 + $0xac] sm:$0xf]
      %v7571 = vld [vmem:[%s2957 + $0xb0] sm:$0x1]
      %v7572 = vld [vmem:[%s2957 + $0xb4] sm:$0xf]
      %v7573 = vld [vmem:[%s2957 + $0xb8] sm:$0xf]
      %v7574 = vld [vmem:[%s2957 + $0xbc] sm:$0x1]
      %v7576 = vshrl.u32 %v7527, 16
      %v7578 = vrot.slane %v7576, 4
      %v7579 = vshll.u32 %v7527, 16
      %v7581 = vrot.slane %v7579, 5
      %v7582 = vor.u32 %v7578, %v7581
      %v7583 = vrot.slane %v7582, 4
      %v7585 = vshll.u32 %v7528, 16
      %v7587 = vrot.slane %v7585, 5
      %v7588 = vsel %vm1012, %v7583, %v7587
      %v7589 = vshrl.u32 %v7528, 16
      %v7591 = vrot.slane %v7589, 4
      %v7592 = vor.u32 %v7591, %v7587
      %v7593 = vrot.slane %v7592, 4
      %v7595 = vshll.u32 %v7529, 16
      %v7597 = vrot.slane %v7595, 5
      %v7598 = vsel %vm1012, %v7593, %v7597
      %v7600 = vshrl.u32 %v7530, 16
      %v7602 = vrot.slane %v7600, 4
      %v7603 = vshll.u32 %v7530, 16
      %v7605 = vrot.slane %v7603, 5
      %v7606 = vor.u32 %v7602, %v7605
      %v7607 = vrot.slane %v7606, 4
      %v7609 = vshll.u32 %v7531, 16
      %v7611 = vrot.slane %v7609, 5
      %v7612 = vsel %vm1012, %v7607, %v7611
      %v7613 = vshrl.u32 %v7531, 16
      %v7615 = vrot.slane %v7613, 4
      %v7616 = vor.u32 %v7615, %v7611
      %v7617 = vrot.slane %v7616, 4
      %v7619 = vshll.u32 %v7532, 16
      %v7621 = vrot.slane %v7619, 5
      %v7622 = vsel %vm1012, %v7617, %v7621
      %v7624 = vshrl.u32 %v7533, 16
      %v7626 = vrot.slane %v7624, 4
      %v7627 = vshll.u32 %v7533, 16
      %v7629 = vrot.slane %v7627, 5
      %v7630 = vor.u32 %v7626, %v7629
      %v7631 = vrot.slane %v7630, 4
      %v7633 = vshll.u32 %v7534, 16
      %v7635 = vrot.slane %v7633, 5
      %v7636 = vsel %vm1012, %v7631, %v7635
      %v7637 = vshrl.u32 %v7534, 16
      %v7639 = vrot.slane %v7637, 4
      %v7640 = vor.u32 %v7639, %v7635
      %v7641 = vrot.slane %v7640, 4
      %v7643 = vshll.u32 %v7535, 16
      %v7645 = vrot.slane %v7643, 5
      %v7646 = vsel %vm1012, %v7641, %v7645
      %v7648 = vshrl.u32 %v7536, 16
      %v7650 = vrot.slane %v7648, 4
      %v7651 = vshll.u32 %v7536, 16
      %v7653 = vrot.slane %v7651, 5
      %v7654 = vor.u32 %v7650, %v7653
      %v7655 = vrot.slane %v7654, 4
      %v7657 = vshll.u32 %v7537, 16
      %v7659 = vrot.slane %v7657, 5
      %v7660 = vsel %vm1012, %v7655, %v7659
      %v7661 = vshrl.u32 %v7537, 16
      %v7663 = vrot.slane %v7661, 4
      %v7664 = vor.u32 %v7663, %v7659
      %v7665 = vrot.slane %v7664, 4
      %v7667 = vshll.u32 %v7538, 16
      %v7669 = vrot.slane %v7667, 5
      %v7670 = vsel %vm1012, %v7665, %v7669
      %v7672 = vshrl.u32 %v7539, 16
      %v7674 = vrot.slane %v7672, 4
      %v7675 = vshll.u32 %v7539, 16
      %v7677 = vrot.slane %v7675, 5
      %v7678 = vor.u32 %v7674, %v7677
      %v7679 = vrot.slane %v7678, 4
      %v7681 = vshll.u32 %v7540, 16
      %v7683 = vrot.slane %v7681, 5
      %v7684 = vsel %vm1012, %v7679, %v7683
      %v7685 = vshrl.u32 %v7540, 16
      %v7687 = vrot.slane %v7685, 4
      %v7688 = vor.u32 %v7687, %v7683
      %v7689 = vrot.slane %v7688, 4
      %v7691 = vshll.u32 %v7541, 16
      %v7693 = vrot.slane %v7691, 5
      %v7694 = vsel %vm1012, %v7689, %v7693
      %v7696 = vshrl.u32 %v7542, 16
      %v7698 = vrot.slane %v7696, 4
      %v7699 = vshll.u32 %v7542, 16
      %v7701 = vrot.slane %v7699, 5
      %v7702 = vor.u32 %v7698, %v7701
      %v7703 = vrot.slane %v7702, 4
      %v7705 = vshll.u32 %v7543, 16
      %v7707 = vrot.slane %v7705, 5
      %v7708 = vsel %vm1012, %v7703, %v7707
      %v7709 = vshrl.u32 %v7543, 16
      %v7711 = vrot.slane %v7709, 4
      %v7712 = vor.u32 %v7711, %v7707
      %v7713 = vrot.slane %v7712, 4
      %v7715 = vshll.u32 %v7544, 16
      %v7717 = vrot.slane %v7715, 5
      %v7718 = vsel %vm1012, %v7713, %v7717
      %v7720 = vshrl.u32 %v7545, 16
      %v7722 = vrot.slane %v7720, 4
      %v7723 = vshll.u32 %v7545, 16
      %v7725 = vrot.slane %v7723, 5
      %v7726 = vor.u32 %v7722, %v7725
      %v7727 = vrot.slane %v7726, 4
      %v7729 = vshll.u32 %v7546, 16
      %v7731 = vrot.slane %v7729, 5
      %v7732 = vsel %vm1012, %v7727, %v7731
      %v7733 = vshrl.u32 %v7546, 16
      %v7735 = vrot.slane %v7733, 4
      %v7736 = vor.u32 %v7735, %v7731
      %v7737 = vrot.slane %v7736, 4
      %v7739 = vshll.u32 %v7547, 16
      %v7741 = vrot.slane %v7739, 5
      %v7742 = vsel %vm1012, %v7737, %v7741
      %v7744 = vshrl.u32 %v7548, 16
      %v7746 = vrot.slane %v7744, 4
      %v7747 = vshll.u32 %v7548, 16
      %v7749 = vrot.slane %v7747, 5
      %v7750 = vor.u32 %v7746, %v7749
      %v7751 = vrot.slane %v7750, 4
      %v7753 = vshll.u32 %v7549, 16
      %v7755 = vrot.slane %v7753, 5
      %v7756 = vsel %vm1012, %v7751, %v7755
      %v7757 = vshrl.u32 %v7549, 16
      %v7759 = vrot.slane %v7757, 4
      %v7760 = vor.u32 %v7759, %v7755
      %v7761 = vrot.slane %v7760, 4
      %v7763 = vshll.u32 %v7550, 16
      %v7765 = vrot.slane %v7763, 5
      %v7766 = vsel %vm1012, %v7761, %v7765
      %v7768 = vshrl.u32 %v7551, 16
      %v7770 = vrot.slane %v7768, 4
      %v7771 = vshll.u32 %v7551, 16
      %v7773 = vrot.slane %v7771, 5
      %v7774 = vor.u32 %v7770, %v7773
      %v7775 = vrot.slane %v7774, 4
      %v7777 = vshll.u32 %v7552, 16
      %v7779 = vrot.slane %v7777, 5
      %v7780 = vsel %vm1012, %v7775, %v7779
      %v7781 = vshrl.u32 %v7552, 16
      %v7783 = vrot.slane %v7781, 4
      %v7784 = vor.u32 %v7783, %v7779
      %v7785 = vrot.slane %v7784, 4
      %v7787 = vshll.u32 %v7553, 16
      %v7789 = vrot.slane %v7787, 5
      %v7790 = vsel %vm1012, %v7785, %v7789
      %v7792 = vshrl.u32 %v7554, 16
      %v7794 = vrot.slane %v7792, 4
      %v7795 = vshll.u32 %v7554, 16
      %v7797 = vrot.slane %v7795, 5
      %v7798 = vor.u32 %v7794, %v7797
      %v7799 = vrot.slane %v7798, 4
      %v7801 = vshll.u32 %v7555, 16
      %v7803 = vrot.slane %v7801, 5
      %v7804 = vsel %vm1012, %v7799, %v7803
      %v7805 = vshrl.u32 %v7555, 16
      %v7807 = vrot.slane %v7805, 4
      %v7808 = vor.u32 %v7807, %v7803
      %v7809 = vrot.slane %v7808, 4
      %v7811 = vshll.u32 %v7556, 16
      %v7813 = vrot.slane %v7811, 5
      %v7814 = vsel %vm1012, %v7809, %v7813
      %v7816 = vshrl.u32 %v7557, 16
      %v7818 = vrot.slane %v7816, 4
      %v7819 = vshll.u32 %v7557, 16
      %v7821 = vrot.slane %v7819, 5
      %v7822 = vor.u32 %v7818, %v7821
      %v7823 = vrot.slane %v7822, 4
      %v7825 = vshll.u32 %v7558, 16
      %v7827 = vrot.slane %v7825, 5
      %v7828 = vsel %vm1012, %v7823, %v7827
      %v7829 = vshrl.u32 %v7558, 16
      %v7831 = vrot.slane %v7829, 4
      %v7832 = vor.u32 %v7831, %v7827
      %v7833 = vrot.slane %v7832, 4
      %v7835 = vshll.u32 %v7559, 16
      %v7837 = vrot.slane %v7835, 5
      %v7838 = vsel %vm1012, %v7833, %v7837
      %v7840 = vshrl.u32 %v7560, 16
      %v7842 = vrot.slane %v7840, 4
      %v7843 = vshll.u32 %v7560, 16
      %v7845 = vrot.slane %v7843, 5
      %v7846 = vor.u32 %v7842, %v7845
      %v7847 = vrot.slane %v7846, 4
      %v7849 = vshll.u32 %v7561, 16
      %v7851 = vrot.slane %v7849, 5
      %v7852 = vsel %vm1012, %v7847, %v7851
      %v7853 = vshrl.u32 %v7561, 16
      %v7855 = vrot.slane %v7853, 4
      %v7856 = vor.u32 %v7855, %v7851
      %v7857 = vrot.slane %v7856, 4
      %v7859 = vshll.u32 %v7562, 16
      %v7861 = vrot.slane %v7859, 5
      %v7862 = vsel %vm1012, %v7857, %v7861
      %v7864 = vshrl.u32 %v7563, 16
      %v7866 = vrot.slane %v7864, 4
      %v7867 = vshll.u32 %v7563, 16
      %v7869 = vrot.slane %v7867, 5
      %v7870 = vor.u32 %v7866, %v7869
      %v7871 = vrot.slane %v7870, 4
      %v7873 = vshll.u32 %v7564, 16
      %v7875 = vrot.slane %v7873, 5
      %v7876 = vsel %vm1012, %v7871, %v7875
      %v7877 = vshrl.u32 %v7564, 16
      %v7879 = vrot.slane %v7877, 4
      %v7880 = vor.u32 %v7879, %v7875
      %v7881 = vrot.slane %v7880, 4
      %v7883 = vshll.u32 %v7565, 16
      %v7885 = vrot.slane %v7883, 5
      %v7886 = vsel %vm1012, %v7881, %v7885
      %v7888 = vshrl.u32 %v7566, 16
      %v7890 = vrot.slane %v7888, 4
      %v7891 = vshll.u32 %v7566, 16
      %v7893 = vrot.slane %v7891, 5
      %v7894 = vor.u32 %v7890, %v7893
      %v7895 = vrot.slane %v7894, 4
      %v7897 = vshll.u32 %v7567, 16
      %v7899 = vrot.slane %v7897, 5
      %v7900 = vsel %vm1012, %v7895, %v7899
      %v7901 = vshrl.u32 %v7567, 16
      %v7903 = vrot.slane %v7901, 4
      %v7904 = vor.u32 %v7903, %v7899
      %v7905 = vrot.slane %v7904, 4
      %v7907 = vshll.u32 %v7568, 16
      %v7909 = vrot.slane %v7907, 5
      %v7910 = vsel %vm1012, %v7905, %v7909
      %v7912 = vshrl.u32 %v7569, 16
      %v7914 = vrot.slane %v7912, 4
      %v7915 = vshll.u32 %v7569, 16
      %v7917 = vrot.slane %v7915, 5
      %v7918 = vor.u32 %v7914, %v7917
      %v7919 = vrot.slane %v7918, 4
      %v7921 = vshll.u32 %v7570, 16
      %v7923 = vrot.slane %v7921, 5
      %v7924 = vsel %vm1012, %v7919, %v7923
      %v7925 = vshrl.u32 %v7570, 16
      %v7927 = vrot.slane %v7925, 4
      %v7928 = vor.u32 %v7927, %v7923
      %v7929 = vrot.slane %v7928, 4
      %v7931 = vshll.u32 %v7571, 16
      %v7933 = vrot.slane %v7931, 5
      %v7934 = vsel %vm1012, %v7929, %v7933
      %v7936 = vshrl.u32 %v7572, 16
      %v7938 = vrot.slane %v7936, 4
      %v7939 = vshll.u32 %v7572, 16
      %v7941 = vrot.slane %v7939, 5
      %v7942 = vor.u32 %v7938, %v7941
      %v7943 = vrot.slane %v7942, 4
      %v7945 = vshll.u32 %v7573, 16
      %v7947 = vrot.slane %v7945, 5
      %v7948 = vsel %vm1012, %v7943, %v7947
      %v7949 = vshrl.u32 %v7573, 16
      %v7951 = vrot.slane %v7949, 4
      %v7952 = vor.u32 %v7951, %v7947
      %v7953 = vrot.slane %v7952, 4
      %v7955 = vshll.u32 %v7574, 16
      %v7957 = vrot.slane %v7955, 5
      %v7958 = vsel %vm1012, %v7953, %v7957
      %7959 = vrot.lane.b32.xlu0 %v7588, 28
      %v7960 = vpop.permute.xlu0 %7959
      %7961 = vrot.lane.b32.xlu0 %v7598, 28
      %v7962 = vpop.permute.xlu0 %7961
      %7963 = vrot.lane.b32.xlu0 %v7612, 28
      %v7964 = vpop.permute.xlu0 %7963
      %7965 = vrot.lane.b32.xlu0 %v7622, 28
      %v7966 = vpop.permute.xlu0 %7965
      %7967 = vrot.lane.b32.xlu0 %v7636, 28
      %v7968 = vpop.permute.xlu0 %7967
      %7969 = vrot.lane.b32.xlu0 %v7646, 28
      %v7970 = vpop.permute.xlu0 %7969
      %7971 = vrot.lane.b32.xlu0 %v7660, 28
      %v7972 = vpop.permute.xlu0 %7971
      %7973 = vrot.lane.b32.xlu0 %v7670, 28
      %v7974 = vpop.permute.xlu0 %7973
      %7975 = vrot.lane.b32.xlu0 %v7684, 28
      %v7976 = vpop.permute.xlu0 %7975
      %7977 = vrot.lane.b32.xlu0 %v7694, 28
      %v7978 = vpop.permute.xlu0 %7977
      %7979 = vrot.lane.b32.xlu0 %v7708, 28
      %v7980 = vpop.permute.xlu0 %7979
      %7981 = vrot.lane.b32.xlu0 %v7718, 28
      %v7982 = vpop.permute.xlu0 %7981
      %7983 = vrot.lane.b32.xlu0 %v7732, 28
      %v7984 = vpop.permute.xlu0 %7983
      %7985 = vrot.lane.b32.xlu0 %v7742, 28
      %v7986 = vpop.permute.xlu0 %7985
      %7987 = vrot.lane.b32.xlu0 %v7756, 28
      %v7988 = vpop.permute.xlu0 %7987
      %7989 = vrot.lane.b32.xlu0 %v7766, 28
      %v7990 = vpop.permute.xlu0 %7989
      %7991 = vrot.lane.b32.xlu0 %v7780, 28
      %v7992 = vpop.permute.xlu0 %7991
      %7993 = vrot.lane.b32.xlu0 %v7790, 28
      %v7994 = vpop.permute.xlu0 %7993
      %7995 = vrot.lane.b32.xlu0 %v7804, 28
      %v7996 = vpop.permute.xlu0 %7995
      %7997 = vrot.lane.b32.xlu0 %v7814, 28
      %v7998 = vpop.permute.xlu0 %7997
      %7999 = vrot.lane.b32.xlu0 %v7828, 28
      %v8000 = vpop.permute.xlu0 %7999
      %8001 = vrot.lane.b32.xlu0 %v7838, 28
      %v8002 = vpop.permute.xlu0 %8001
      %8003 = vrot.lane.b32.xlu0 %v7852, 28
      %v8004 = vpop.permute.xlu0 %8003
      %8005 = vrot.lane.b32.xlu0 %v7862, 28
      %v8006 = vpop.permute.xlu0 %8005
      %8007 = vrot.lane.b32.xlu0 %v7876, 28
      %v8008 = vpop.permute.xlu0 %8007
      %8009 = vrot.lane.b32.xlu0 %v7886, 28
      %v8010 = vpop.permute.xlu0 %8009
      %8011 = vrot.lane.b32.xlu0 %v7900, 28
      %v8012 = vpop.permute.xlu0 %8011
      %8013 = vrot.lane.b32.xlu0 %v7910, 28
      %v8014 = vpop.permute.xlu0 %8013
      %8015 = vrot.lane.b32.xlu0 %v7924, 28
      %v8016 = vpop.permute.xlu0 %8015
      %8017 = vrot.lane.b32.xlu0 %v7934, 28
      %v8018 = vpop.permute.xlu0 %8017
      %8019 = vrot.lane.b32.xlu0 %v7948, 28
      %v8020 = vpop.permute.xlu0 %8019
      %8021 = vrot.lane.b32.xlu0 %v7958, 28
      %v8022 = vpop.permute.xlu0 %8021
      %8055 = vst.msk [vmem:[#allocation3] sm:$0xf] %vm3679, %v7960
      %8056 = vst.msk [vmem:[#allocation3 + $0x4] sm:$0xf] %vm3679, %v7962
      %8057 = vst.msk [vmem:[#allocation3 + $0x8] sm:$0xf] %vm3679, %v7964
      %8058 = vst.msk [vmem:[#allocation3 + $0xc] sm:$0xf] %vm3679, %v7966
      %8059 = vst.msk [vmem:[#allocation3 + $0x10] sm:$0xf] %vm3679, %v7968
      %8060 = vst.msk [vmem:[#allocation3 + $0x14] sm:$0xf] %vm3679, %v7970
      %8061 = vst.msk [vmem:[#allocation3 + $0x18] sm:$0xf] %vm3679, %v7972
      %8062 = vst.msk [vmem:[#allocation3 + $0x1c] sm:$0xf] %vm3679, %v7974
      %8063 = vst.msk [vmem:[#allocation3 + $0x20] sm:$0xf] %vm3679, %v7976
      %8064 = vst.msk [vmem:[#allocation3 + $0x24] sm:$0xf] %vm3679, %v7978
      %8065 = vst.msk [vmem:[#allocation3 + $0x28] sm:$0xf] %vm3679, %v7980
      %8066 = vst.msk [vmem:[#allocation3 + $0x2c] sm:$0xf] %vm3679, %v7982
      %8067 = vst.msk [vmem:[#allocation3 + $0x30] sm:$0xf] %vm3679, %v7984
      %8068 = vst.msk [vmem:[#allocation3 + $0x34] sm:$0xf] %vm3679, %v7986
      %8069 = vst.msk [vmem:[#allocation3 + $0x38] sm:$0xf] %vm3679, %v7988
      %8070 = vst.msk [vmem:[#allocation3 + $0x3c] sm:$0xf] %vm3679, %v7990
      %8071 = vst.msk [vmem:[#allocation3 + $0x40] sm:$0xf] %vm3679, %v7992
      %8072 = vst.msk [vmem:[#allocation3 + $0x44] sm:$0xf] %vm3679, %v7994
      %8073 = vst.msk [vmem:[#allocation3 + $0x48] sm:$0xf] %vm3679, %v7996
      %8074 = vst.msk [vmem:[#allocation3 + $0x4c] sm:$0xf] %vm3679, %v7998
      %8075 = vst.msk [vmem:[#allocation3 + $0x50] sm:$0xf] %vm3679, %v8000
      %8076 = vst.msk [vmem:[#allocation3 + $0x54] sm:$0xf] %vm3679, %v8002
      %8077 = vst.msk [vmem:[#allocation3 + $0x58] sm:$0xf] %vm3679, %v8004
      %8078 = vst.msk [vmem:[#allocation3 + $0x5c] sm:$0xf] %vm3679, %v8006
      %8079 = vst.msk [vmem:[#allocation3 + $0x60] sm:$0xf] %vm3679, %v8008
      %8080 = vst.msk [vmem:[#allocation3 + $0x64] sm:$0xf] %vm3679, %v8010
      %8081 = vst.msk [vmem:[#allocation3 + $0x68] sm:$0xf] %vm3679, %v8012
      %8082 = vst.msk [vmem:[#allocation3 + $0x6c] sm:$0xf] %vm3679, %v8014
      %8083 = vst.msk [vmem:[#allocation3 + $0x70] sm:$0xf] %vm3679, %v8016
      %8084 = vst.msk [vmem:[#allocation3 + $0x74] sm:$0xf] %vm3679, %v8018
      %8085 = vst.msk [vmem:[#allocation3 + $0x78] sm:$0xf] %vm3679, %v8020
      %8086 = vst.msk [vmem:[#allocation3 + $0x7c] sm:$0xf] %vm3679, %v8022
      %v8087 = vld [vmem:[%s2957] sm:$0xe]
      %v8088 = vld [vmem:[%s2957 + $0x4] sm:$0xf]
      %v8089 = vld [vmem:[%s2957 + $0x8] sm:$0x1]
      %v8090 = vld [vmem:[%s2957 + $0xc] sm:$0xe]
      %v8091 = vld [vmem:[%s2957 + $0x10] sm:$0xf]
      %v8092 = vld [vmem:[%s2957 + $0x14] sm:$0x1]
      %v8093 = vld [vmem:[%s2957 + $0x18] sm:$0xe]
      %v8094 = vld [vmem:[%s2957 + $0x1c] sm:$0xf]
      %v8095 = vld [vmem:[%s2957 + $0x20] sm:$0x1]
      %v8096 = vld [vmem:[%s2957 + $0x24] sm:$0xe]
      %v8097 = vld [vmem:[%s2957 + $0x28] sm:$0xf]
      %v8098 = vld [vmem:[%s2957 + $0x2c] sm:$0x1]
      %v8099 = vld [vmem:[%s2957 + $0x30] sm:$0xe]
      %v8100 = vld [vmem:[%s2957 + $0x34] sm:$0xf]
      %v8101 = vld [vmem:[%s2957 + $0x38] sm:$0x1]
      %v8102 = vld [vmem:[%s2957 + $0x3c] sm:$0xe]
      %v8103 = vld [vmem:[%s2957 + $0x40] sm:$0xf]
      %v8104 = vld [vmem:[%s2957 + $0x44] sm:$0x1]
      %v8105 = vld [vmem:[%s2957 + $0x48] sm:$0xe]
      %v8106 = vld [vmem:[%s2957 + $0x4c] sm:$0xf]
      %v8107 = vld [vmem:[%s2957 + $0x50] sm:$0x1]
      %v8108 = vld [vmem:[%s2957 + $0x54] sm:$0xe]
      %v8109 = vld [vmem:[%s2957 + $0x58] sm:$0xf]
      %v8110 = vld [vmem:[%s2957 + $0x5c] sm:$0x1]
      %v8111 = vld [vmem:[%s2957 + $0x60] sm:$0xe]
      %v8112 = vld [vmem:[%s2957 + $0x64] sm:$0xf]
      %v8113 = vld [vmem:[%s2957 + $0x68] sm:$0x1]
      %v8114 = vld [vmem:[%s2957 + $0x6c] sm:$0xe]
      %v8115 = vld [vmem:[%s2957 + $0x70] sm:$0xf]
      %v8116 = vld [vmem:[%s2957 + $0x74] sm:$0x1]
      %v8117 = vld [vmem:[%s2957 + $0x78] sm:$0xe]
      %v8118 = vld [vmem:[%s2957 + $0x7c] sm:$0xf]
      %v8119 = vld [vmem:[%s2957 + $0x80] sm:$0x1]
      %v8120 = vld [vmem:[%s2957 + $0x84] sm:$0xe]
      %v8121 = vld [vmem:[%s2957 + $0x88] sm:$0xf]
      %v8122 = vld [vmem:[%s2957 + $0x8c] sm:$0x1]
      %v8123 = vld [vmem:[%s2957 + $0x90] sm:$0xe]
      %v8124 = vld [vmem:[%s2957 + $0x94] sm:$0xf]
      %v8125 = vld [vmem:[%s2957 + $0x98] sm:$0x1]
      %v8126 = vld [vmem:[%s2957 + $0x9c] sm:$0xe]
      %v8127 = vld [vmem:[%s2957 + $0xa0] sm:$0xf]
      %v8128 = vld [vmem:[%s2957 + $0xa4] sm:$0x1]
      %v8129 = vld [vmem:[%s2957 + $0xa8] sm:$0xe]
      %v8130 = vld [vmem:[%s2957 + $0xac] sm:$0xf]
      %v8131 = vld [vmem:[%s2957 + $0xb0] sm:$0x1]
      %v8132 = vld [vmem:[%s2957 + $0xb4] sm:$0xe]
      %v8133 = vld [vmem:[%s2957 + $0xb8] sm:$0xf]
      %v8134 = vld [vmem:[%s2957 + $0xbc] sm:$0x1]
      %v8183 = vrot.slane %v8087, 5
      %v8184 = vrot.slane %v8183, 4
      %v8185 = vrot.slane %v8088, 5
      %v8186 = vsel %vm1624, %v8184, %v8185
      %v8187 = vrot.slane %v8185, 4
      %v8188 = vrot.slane %v8089, 5
      %v8189 = vsel %vm1624, %v8187, %v8188
      %v8190 = vrot.slane %v8090, 5
      %v8191 = vrot.slane %v8190, 4
      %v8192 = vrot.slane %v8091, 5
      %v8193 = vsel %vm1624, %v8191, %v8192
      %v8194 = vrot.slane %v8192, 4
      %v8195 = vrot.slane %v8092, 5
      %v8196 = vsel %vm1624, %v8194, %v8195
      %v8197 = vrot.slane %v8093, 5
      %v8198 = vrot.slane %v8197, 4
      %v8199 = vrot.slane %v8094, 5
      %v8200 = vsel %vm1624, %v8198, %v8199
      %v8201 = vrot.slane %v8199, 4
      %v8202 = vrot.slane %v8095, 5
      %v8203 = vsel %vm1624, %v8201, %v8202
      %v8204 = vrot.slane %v8096, 5
      %v8205 = vrot.slane %v8204, 4
      %v8206 = vrot.slane %v8097, 5
      %v8207 = vsel %vm1624, %v8205, %v8206
      %v8208 = vrot.slane %v8206, 4
      %v8209 = vrot.slane %v8098, 5
      %v8210 = vsel %vm1624, %v8208, %v8209
      %v8211 = vrot.slane %v8099, 5
      %v8212 = vrot.slane %v8211, 4
      %v8213 = vrot.slane %v8100, 5
      %v8214 = vsel %vm1624, %v8212, %v8213
      %v8215 = vrot.slane %v8213, 4
      %v8216 = vrot.slane %v8101, 5
      %v8217 = vsel %vm1624, %v8215, %v8216
      %v8218 = vrot.slane %v8102, 5
      %v8219 = vrot.slane %v8218, 4
      %v8220 = vrot.slane %v8103, 5
      %v8221 = vsel %vm1624, %v8219, %v8220
      %v8222 = vrot.slane %v8220, 4
      %v8223 = vrot.slane %v8104, 5
      %v8224 = vsel %vm1624, %v8222, %v8223
      %v8225 = vrot.slane %v8105, 5
      %v8226 = vrot.slane %v8225, 4
      %v8227 = vrot.slane %v8106, 5
      %v8228 = vsel %vm1624, %v8226, %v8227
      %v8229 = vrot.slane %v8227, 4
      %v8230 = vrot.slane %v8107, 5
      %v8231 = vsel %vm1624, %v8229, %v8230
      %v8232 = vrot.slane %v8108, 5
      %v8233 = vrot.slane %v8232, 4
      %v8234 = vrot.slane %v8109, 5
      %v8235 = vsel %vm1624, %v8233, %v8234
      %v8236 = vrot.slane %v8234, 4
      %v8237 = vrot.slane %v8110, 5
      %v8238 = vsel %vm1624, %v8236, %v8237
      %v8239 = vrot.slane %v8111, 5
      %v8240 = vrot.slane %v8239, 4
      %v8241 = vrot.slane %v8112, 5
      %v8242 = vsel %vm1624, %v8240, %v8241
      %v8243 = vrot.slane %v8241, 4
      %v8244 = vrot.slane %v8113, 5
      %v8245 = vsel %vm1624, %v8243, %v8244
      %v8246 = vrot.slane %v8114, 5
      %v8247 = vrot.slane %v8246, 4
      %v8248 = vrot.slane %v8115, 5
      %v8249 = vsel %vm1624, %v8247, %v8248
      %v8250 = vrot.slane %v8248, 4
      %v8251 = vrot.slane %v8116, 5
      %v8252 = vsel %vm1624, %v8250, %v8251
      %v8253 = vrot.slane %v8117, 5
      %v8254 = vrot.slane %v8253, 4
      %v8255 = vrot.slane %v8118, 5
      %v8256 = vsel %vm1624, %v8254, %v8255
      %v8257 = vrot.slane %v8255, 4
      %v8258 = vrot.slane %v8119, 5
      %v8259 = vsel %vm1624, %v8257, %v8258
      %v8260 = vrot.slane %v8120, 5
      %v8261 = vrot.slane %v8260, 4
      %v8262 = vrot.slane %v8121, 5
      %v8263 = vsel %vm1624, %v8261, %v8262
      %v8264 = vrot.slane %v8262, 4
      %v8265 = vrot.slane %v8122, 5
      %v8266 = vsel %vm1624, %v8264, %v8265
      %v8267 = vrot.slane %v8123, 5
      %v8268 = vrot.slane %v8267, 4
      %v8269 = vrot.slane %v8124, 5
      %v8270 = vsel %vm1624, %v8268, %v8269
      %v8271 = vrot.slane %v8269, 4
      %v8272 = vrot.slane %v8125, 5
      %v8273 = vsel %vm1624, %v8271, %v8272
      %v8274 = vrot.slane %v8126, 5
      %v8275 = vrot.slane %v8274, 4
      %v8276 = vrot.slane %v8127, 5
      %v8277 = vsel %vm1624, %v8275, %v8276
      %v8278 = vrot.slane %v8276, 4
      %v8279 = vrot.slane %v8128, 5
      %v8280 = vsel %vm1624, %v8278, %v8279
      %v8281 = vrot.slane %v8129, 5
      %v8282 = vrot.slane %v8281, 4
      %v8283 = vrot.slane %v8130, 5
      %v8284 = vsel %vm1624, %v8282, %v8283
      %v8285 = vrot.slane %v8283, 4
      %v8286 = vrot.slane %v8131, 5
      %v8287 = vsel %vm1624, %v8285, %v8286
      %v8288 = vrot.slane %v8132, 5
      %v8289 = vrot.slane %v8288, 4
      %v8290 = vrot.slane %v8133, 5
      %v8291 = vsel %vm1624, %v8289, %v8290
      %v8292 = vrot.slane %v8290, 4
      %v8293 = vrot.slane %v8134, 5
      %v8294 = vsel %vm1624, %v8292, %v8293
      %8295 = vrot.lane.b32.xlu0 %v8186, 32
      %v8296 = vpop.permute.xlu0 %8295
      %8297 = vrot.lane.b32.xlu0 %v8189, 32
      %v8298 = vpop.permute.xlu0 %8297
      %8299 = vrot.lane.b32.xlu0 %v8193, 32
      %v8300 = vpop.permute.xlu0 %8299
      %8301 = vrot.lane.b32.xlu0 %v8196, 32
      %v8302 = vpop.permute.xlu0 %8301
      %8303 = vrot.lane.b32.xlu0 %v8200, 32
      %v8304 = vpop.permute.xlu0 %8303
      %8305 = vrot.lane.b32.xlu0 %v8203, 32
      %v8306 = vpop.permute.xlu0 %8305
      %8307 = vrot.lane.b32.xlu0 %v8207, 32
      %v8308 = vpop.permute.xlu0 %8307
      %8309 = vrot.lane.b32.xlu0 %v8210, 32
      %v8310 = vpop.permute.xlu0 %8309
      %8311 = vrot.lane.b32.xlu0 %v8214, 32
      %v8312 = vpop.permute.xlu0 %8311
      %8313 = vrot.lane.b32.xlu0 %v8217, 32
      %v8314 = vpop.permute.xlu0 %8313
      %8315 = vrot.lane.b32.xlu0 %v8221, 32
      %v8316 = vpop.permute.xlu0 %8315
      %8317 = vrot.lane.b32.xlu0 %v8224, 32
      %v8318 = vpop.permute.xlu0 %8317
      %8319 = vrot.lane.b32.xlu0 %v8228, 32
      %v8320 = vpop.permute.xlu0 %8319
      %8321 = vrot.lane.b32.xlu0 %v8231, 32
      %v8322 = vpop.permute.xlu0 %8321
      %8323 = vrot.lane.b32.xlu0 %v8235, 32
      %v8324 = vpop.permute.xlu0 %8323
      %8325 = vrot.lane.b32.xlu0 %v8238, 32
      %v8326 = vpop.permute.xlu0 %8325
      %8327 = vrot.lane.b32.xlu0 %v8242, 32
      %v8328 = vpop.permute.xlu0 %8327
      %8329 = vrot.lane.b32.xlu0 %v8245, 32
      %v8330 = vpop.permute.xlu0 %8329
      %8331 = vrot.lane.b32.xlu0 %v8249, 32
      %v8332 = vpop.permute.xlu0 %8331
      %8333 = vrot.lane.b32.xlu0 %v8252, 32
      %v8334 = vpop.permute.xlu0 %8333
      %8335 = vrot.lane.b32.xlu0 %v8256, 32
      %v8336 = vpop.permute.xlu0 %8335
      %8337 = vrot.lane.b32.xlu0 %v8259, 32
      %v8338 = vpop.permute.xlu0 %8337
      %8339 = vrot.lane.b32.xlu0 %v8263, 32
      %v8340 = vpop.permute.xlu0 %8339
      %8341 = vrot.lane.b32.xlu0 %v8266, 32
      %v8342 = vpop.permute.xlu0 %8341
      %8343 = vrot.lane.b32.xlu0 %v8270, 32
      %v8344 = vpop.permute.xlu0 %8343
      %8345 = vrot.lane.b32.xlu0 %v8273, 32
      %v8346 = vpop.permute.xlu0 %8345
      %8347 = vrot.lane.b32.xlu0 %v8277, 32
      %v8348 = vpop.permute.xlu0 %8347
      %8349 = vrot.lane.b32.xlu0 %v8280, 32
      %v8350 = vpop.permute.xlu0 %8349
      %8351 = vrot.lane.b32.xlu0 %v8284, 32
      %v8352 = vpop.permute.xlu0 %8351
      %8353 = vrot.lane.b32.xlu0 %v8287, 32
      %v8354 = vpop.permute.xlu0 %8353
      %8355 = vrot.lane.b32.xlu0 %v8291, 32
      %v8356 = vpop.permute.xlu0 %8355
      %8357 = vrot.lane.b32.xlu0 %v8294, 32
      %v8358 = vpop.permute.xlu0 %8357
      %8391 = vst.msk [vmem:[#allocation3] sm:$0xf] %vm4016, %v8296
      %8392 = vst.msk [vmem:[#allocation3 + $0x4] sm:$0xf] %vm4016, %v8298
      %8393 = vst.msk [vmem:[#allocation3 + $0x8] sm:$0xf] %vm4016, %v8300
      %8394 = vst.msk [vmem:[#allocation3 + $0xc] sm:$0xf] %vm4016, %v8302
      %8395 = vst.msk [vmem:[#allocation3 + $0x10] sm:$0xf] %vm4016, %v8304
      %8396 = vst.msk [vmem:[#allocation3 + $0x14] sm:$0xf] %vm4016, %v8306
      %8397 = vst.msk [vmem:[#allocation3 + $0x18] sm:$0xf] %vm4016, %v8308
      %8398 = vst.msk [vmem:[#allocation3 + $0x1c] sm:$0xf] %vm4016, %v8310
      %8399 = vst.msk [vmem:[#allocation3 + $0x20] sm:$0xf] %vm4016, %v8312
      %8400 = vst.msk [vmem:[#allocation3 + $0x24] sm:$0xf] %vm4016, %v8314
      %8401 = vst.msk [vmem:[#allocation3 + $0x28] sm:$0xf] %vm4016, %v8316
      %8402 = vst.msk [vmem:[#allocation3 + $0x2c] sm:$0xf] %vm4016, %v8318
      %8403 = vst.msk [vmem:[#allocation3 + $0x30] sm:$0xf] %vm4016, %v8320
      %8404 = vst.msk [vmem:[#allocation3 + $0x34] sm:$0xf] %vm4016, %v8322
      %8405 = vst.msk [vmem:[#allocation3 + $0x38] sm:$0xf] %vm4016, %v8324
      %8406 = vst.msk [vmem:[#allocation3 + $0x3c] sm:$0xf] %vm4016, %v8326
      %8407 = vst.msk [vmem:[#allocation3 + $0x40] sm:$0xf] %vm4016, %v8328
      %8408 = vst.msk [vmem:[#allocation3 + $0x44] sm:$0xf] %vm4016, %v8330
      %8409 = vst.msk [vmem:[#allocation3 + $0x48] sm:$0xf] %vm4016, %v8332
      %8410 = vst.msk [vmem:[#allocation3 + $0x4c] sm:$0xf] %vm4016, %v8334
      %8411 = vst.msk [vmem:[#allocation3 + $0x50] sm:$0xf] %vm4016, %v8336
      %8412 = vst.msk [vmem:[#allocation3 + $0x54] sm:$0xf] %vm4016, %v8338
      %8413 = vst.msk [vmem:[#allocation3 + $0x58] sm:$0xf] %vm4016, %v8340
      %8414 = vst.msk [vmem:[#allocation3 + $0x5c] sm:$0xf] %vm4016, %v8342
      %8415 = vst.msk [vmem:[#allocation3 + $0x60] sm:$0xf] %vm4016, %v8344
      %8416 = vst.msk [vmem:[#allocation3 + $0x64] sm:$0xf] %vm4016, %v8346
      %8417 = vst.msk [vmem:[#allocation3 + $0x68] sm:$0xf] %vm4016, %v8348
      %8418 = vst.msk [vmem:[#allocation3 + $0x6c] sm:$0xf] %vm4016, %v8350
      %8419 = vst.msk [vmem:[#allocation3 + $0x70] sm:$0xf] %vm4016, %v8352
      %8420 = vst.msk [vmem:[#allocation3 + $0x74] sm:$0xf] %vm4016, %v8354
      %8421 = vst.msk [vmem:[#allocation3 + $0x78] sm:$0xf] %vm4016, %v8356
      %8422 = vst.msk [vmem:[#allocation3 + $0x7c] sm:$0xf] %vm4016, %v8358
      %v8423 = vld [vmem:[#allocation3] sm:$0xf]
      %v8424 = vld [vmem:[#allocation3 + $0x4] sm:$0xf]
      %v8425 = vld [vmem:[#allocation3 + $0x8] sm:$0xf]
      %v8426 = vld [vmem:[#allocation3 + $0xc] sm:$0xf]
      %v8427 = vld [vmem:[#allocation3 + $0x10] sm:$0xf]
      %v8428 = vld [vmem:[#allocation3 + $0x14] sm:$0xf]
      %v8429 = vld [vmem:[#allocation3 + $0x18] sm:$0xf]
      %v8430 = vld [vmem:[#allocation3 + $0x1c] sm:$0xf]
      %v8431 = vld [vmem:[#allocation3 + $0x20] sm:$0xf]
      %v8432 = vld [vmem:[#allocation3 + $0x24] sm:$0xf]
      %v8433 = vld [vmem:[#allocation3 + $0x28] sm:$0xf]
      %v8434 = vld [vmem:[#allocation3 + $0x2c] sm:$0xf]
      %v8435 = vld [vmem:[#allocation3 + $0x30] sm:$0xf]
      %v8436 = vld [vmem:[#allocation3 + $0x34] sm:$0xf]
      %v8437 = vld [vmem:[#allocation3 + $0x38] sm:$0xf]
      %v8438 = vld [vmem:[#allocation3 + $0x3c] sm:$0xf]
      %v8439 = vld [vmem:[#allocation3 + $0x40] sm:$0xf]
      %v8440 = vld [vmem:[#allocation3 + $0x44] sm:$0xf]
      %v8441 = vld [vmem:[#allocation3 + $0x48] sm:$0xf]
      %v8442 = vld [vmem:[#allocation3 + $0x4c] sm:$0xf]
      %v8443 = vld [vmem:[#allocation3 + $0x50] sm:$0xf]
      %v8444 = vld [vmem:[#allocation3 + $0x54] sm:$0xf]
      %v8445 = vld [vmem:[#allocation3 + $0x58] sm:$0xf]
      %v8446 = vld [vmem:[#allocation3 + $0x5c] sm:$0xf]
      %v8447 = vld [vmem:[#allocation3 + $0x60] sm:$0xf]
      %v8448 = vld [vmem:[#allocation3 + $0x64] sm:$0xf]
      %v8449 = vld [vmem:[#allocation3 + $0x68] sm:$0xf]
      %v8450 = vld [vmem:[#allocation3 + $0x6c] sm:$0xf]
      %v8451 = vld [vmem:[#allocation3 + $0x70] sm:$0xf]
      %v8452 = vld [vmem:[#allocation3 + $0x74] sm:$0xf]
      %v8453 = vld [vmem:[#allocation3 + $0x78] sm:$0xf]
      %v8454 = vld [vmem:[#allocation3 + $0x7c] sm:$0xf]
      %v8455 = vld [vmem:[%s2] sm:$0xf]
      %v8456 = vld [vmem:[%s2 + $0x4] sm:$0xf]
      %v8457 = vld [vmem:[%s2 + $0x8] sm:$0xf]
      %v8458 = vld [vmem:[%s2 + $0xc] sm:$0xf]
      %v8459 = vld [vmem:[%s2 + $0x10] sm:$0x3]
      %v8492 = vunpack.c.l.b16 %v8423
      %v8493 = vunpack.c.l.b16 %v8424
      %v8494 = vunpack.c.l.b16 %v8425
      %v8495 = vunpack.c.l.b16 %v8426
      %v8496 = vunpack.c.l.b16 %v8427
      %v8497 = vunpack.c.l.b16 %v8428
      %v8498 = vunpack.c.l.b16 %v8429
      %v8499 = vunpack.c.l.b16 %v8430
      %v8500 = vunpack.c.l.b16 %v8431
      %v8501 = vunpack.c.l.b16 %v8432
      %v8502 = vunpack.c.l.b16 %v8433
      %v8503 = vunpack.c.l.b16 %v8434
      %v8504 = vunpack.c.l.b16 %v8435
      %v8505 = vunpack.c.l.b16 %v8436
      %v8506 = vunpack.c.l.b16 %v8437
      %v8507 = vunpack.c.l.b16 %v8438
      %v8508 = vunpack.c.l.b16 %v8439
      %v8509 = vunpack.c.l.b16 %v8440
      %v8510 = vunpack.c.l.b16 %v8441
      %v8511 = vunpack.c.l.b16 %v8442
      %v8512 = vunpack.c.l.b16 %v8443
      %v8513 = vunpack.c.l.b16 %v8444
      %v8514 = vunpack.c.l.b16 %v8445
      %v8515 = vunpack.c.l.b16 %v8446
      %v8516 = vunpack.c.l.b16 %v8447
      %v8517 = vunpack.c.l.b16 %v8448
      %v8518 = vunpack.c.l.b16 %v8449
      %v8519 = vunpack.c.l.b16 %v8450
      %v8520 = vunpack.c.l.b16 %v8451
      %v8521 = vunpack.c.l.b16 %v8452
      %v8522 = vunpack.c.l.b16 %v8453
      %v8523 = vunpack.c.l.b16 %v8454
      %v8524 = vpack.c.b16 %v8493, %v8492
      %v8525 = vpack.c.b16 %v8495, %v8494
      %v8526 = vpack.c.b16 %v8497, %v8496
      %v8527 = vpack.c.b16 %v8499, %v8498
      %v8528 = vpack.c.b16 %v8501, %v8500
      %v8529 = vpack.c.b16 %v8503, %v8502
      %v8530 = vpack.c.b16 %v8505, %v8504
      %v8531 = vpack.c.b16 %v8507, %v8506
      %v8532 = vpack.c.b16 %v8509, %v8508
      %v8533 = vpack.c.b16 %v8511, %v8510
      %v8534 = vpack.c.b16 %v8513, %v8512
      %v8535 = vpack.c.b16 %v8515, %v8514
      %v8536 = vpack.c.b16 %v8517, %v8516
      %v8537 = vpack.c.b16 %v8519, %v8518
      %v8538 = vpack.c.b16 %v8521, %v8520
      %v8539 = vpack.c.b16 %v8523, %v8522
      %v8545 = vunpack.c.l.b16 %v8455
      %v8546 = vunpack.c.l.b16 %v8456
      %v8547 = vunpack.c.l.b16 %v8457
      %v8548 = vunpack.c.l.b16 %v8458
      %v8549 = vunpack.c.l.b16 %v8459
      %v8550 = vpack.c.b16 %v8546, %v8545
      %v8551 = vpack.c.b16 %v8548, %v8547
      %v8552 = vpack.c.b16 %v8549, %v8549
      %v8556 = vsel %vm4181, %v8524, 0
      %v8559 = vsel %vm4181, %v8525, 0
      %v8562 = vsel %vm4181, %v8526, 0
      %v8565 = vsel %vm4181, %v8527, 0
      %v8568 = vsel %vm4181, %v8528, 0
      %v8571 = vsel %vm4181, %v8529, 0
      %v8574 = vsel %vm4181, %v8530, 0
      %v8577 = vsel %vm4181, %v8531, 0
      %v8580 = vsel %vm4181, %v8532, 0
      %v8583 = vsel %vm4181, %v8533, 0
      %v8586 = vsel %vm4181, %v8534, 0
      %v8589 = vsel %vm4181, %v8535, 0
      %v8592 = vsel %vm4181, %v8536, 0
      %v8595 = vsel %vm4181, %v8537, 0
      %v8598 = vsel %vm4181, %v8538, 0
      %v8601 = vsel %vm4181, %v8539, 0
      %v8604 = vsel %vm4230, %v8552, 0
      %8606 = vmatpush.bf16.msra.mxu0 0
      %8607 = vmatpush.bf16.msra.mxu0 0
      %8608 = vmatpush.bf16.msra.mxu0 0
      %8609 = vmatpush.bf16.msra.mxu0 0
      %8610 = vmatpush.bf16.msra.mxu0 0
      %8611 = vmatpush.bf16.msra.mxu0 %v8604
      %8612 = vmatpush.bf16.msra.mxu0 %v8551
      %8613 = vmatpush.bf16.msra.mxu0 %v8550
      %8614 = vmatmul.bf16.gmra.mxu0 %v8556
      %v8615 = vpop.f32.mrf.mxu0
      %v8616 = vadd.f32 0.0, %v8615
      %v8617 = vpop.f32.mrf.mxu0
      %v8618 = vadd.f32 0.0, %v8617
      %8619 = vmatmul.bf16.gmra.mxu0 %v8559
      %v8620 = vpop.f32.mrf.mxu0
      %v8621 = vadd.f32 0.0, %v8620
      %v8622 = vpop.f32.mrf.mxu0
      %v8623 = vadd.f32 0.0, %v8622
      %8624 = vmatmul.bf16.gmra.mxu0 %v8562
      %v8625 = vpop.f32.mrf.mxu0
      %v8626 = vadd.f32 0.0, %v8625
      %v8627 = vpop.f32.mrf.mxu0
      %v8628 = vadd.f32 0.0, %v8627
      %8629 = vmatmul.bf16.gmra.mxu0 %v8565
      %v8630 = vpop.f32.mrf.mxu0
      %v8631 = vadd.f32 0.0, %v8630
      %v8632 = vpop.f32.mrf.mxu0
      %v8633 = vadd.f32 0.0, %v8632
      %8634 = vmatmul.bf16.gmra.mxu0 %v8568
      %v8635 = vpop.f32.mrf.mxu0
      %v8636 = vadd.f32 0.0, %v8635
      %v8637 = vpop.f32.mrf.mxu0
      %v8638 = vadd.f32 0.0, %v8637
      %8639 = vmatmul.bf16.gmra.mxu0 %v8571
      %v8640 = vpop.f32.mrf.mxu0
      %v8641 = vadd.f32 0.0, %v8640
      %v8642 = vpop.f32.mrf.mxu0
      %v8643 = vadd.f32 0.0, %v8642
      %8644 = vmatmul.bf16.gmra.mxu0 %v8574
      %v8645 = vpop.f32.mrf.mxu0
      %v8646 = vadd.f32 0.0, %v8645
      %v8647 = vpop.f32.mrf.mxu0
      %v8648 = vadd.f32 0.0, %v8647
      %8649 = vmatmul.bf16.gmra.mxu0 %v8577
      %v8650 = vpop.f32.mrf.mxu0
      %v8651 = vadd.f32 0.0, %v8650
      %v8652 = vpop.f32.mrf.mxu0
      %v8653 = vadd.f32 0.0, %v8652
      %8654 = vmatmul.bf16.gmra.mxu0 %v8580
      %v8655 = vpop.f32.mrf.mxu0
      %v8656 = vadd.f32 0.0, %v8655
      %v8657 = vpop.f32.mrf.mxu0
      %v8658 = vadd.f32 0.0, %v8657
      %8659 = vmatmul.bf16.gmra.mxu0 %v8583
      %v8660 = vpop.f32.mrf.mxu0
      %v8661 = vadd.f32 0.0, %v8660
      %v8662 = vpop.f32.mrf.mxu0
      %v8663 = vadd.f32 0.0, %v8662
      %8664 = vmatmul.bf16.gmra.mxu0 %v8586
      %v8665 = vpop.f32.mrf.mxu0
      %v8666 = vadd.f32 0.0, %v8665
      %v8667 = vpop.f32.mrf.mxu0
      %v8668 = vadd.f32 0.0, %v8667
      %8669 = vmatmul.bf16.gmra.mxu0 %v8589
      %v8670 = vpop.f32.mrf.mxu0
      %v8671 = vadd.f32 0.0, %v8670
      %v8672 = vpop.f32.mrf.mxu0
      %v8673 = vadd.f32 0.0, %v8672
      %8674 = vmatmul.bf16.gmra.mxu0 %v8592
      %v8675 = vpop.f32.mrf.mxu0
      %v8676 = vadd.f32 0.0, %v8675
      %v8677 = vpop.f32.mrf.mxu0
      %v8678 = vadd.f32 0.0, %v8677
      %8679 = vmatmul.bf16.gmra.mxu0 %v8595
      %v8680 = vpop.f32.mrf.mxu0
      %v8681 = vadd.f32 0.0, %v8680
      %v8682 = vpop.f32.mrf.mxu0
      %v8683 = vadd.f32 0.0, %v8682
      %8684 = vmatmul.bf16.gmra.mxu0 %v8598
      %v8685 = vpop.f32.mrf.mxu0
      %v8686 = vadd.f32 0.0, %v8685
      %v8687 = vpop.f32.mrf.mxu0
      %v8688 = vadd.f32 0.0, %v8687
      %8689 = vmatmul.bf16.gmra.mxu0 %v8601
      %v8690 = vpop.f32.mrf.mxu0
      %v8691 = vadd.f32 0.0, %v8690
      %v8692 = vpop.f32.mrf.mxu0
      %v8693 = vadd.f32 0.0, %v8692
      %8694 = vdwg.mxu0
      %v8695 = vsel %vm4323, %v8616, 0.0
      %v8696 = vsel %vm4323, %v8618, 0.0
      %v8697 = vadd.f32 %v8695, %v8696
      %v8698 = vsel %vm4323, %v8621, 0.0
      %v8699 = vadd.f32 %v8697, %v8698
      %v8700 = vsel %vm4323, %v8623, 0.0
      %v8701 = vadd.f32 %v8699, %v8700
      %v8702 = vsel %vm4323, %v8626, 0.0
      %v8703 = vadd.f32 %v8701, %v8702
      %v8704 = vsel %vm4323, %v8628, 0.0
      %v8705 = vadd.f32 %v8703, %v8704
      %v8706 = vsel %vm4323, %v8631, 0.0
      %v8707 = vadd.f32 %v8705, %v8706
      %v8708 = vsel %vm4323, %v8633, 0.0
      %v8709 = vadd.f32 %v8707, %v8708
      %v8710 = vsel %vm4323, %v8636, 0.0
      %v8711 = vadd.f32 %v8709, %v8710
      %v8712 = vsel %vm4323, %v8638, 0.0
      %v8713 = vadd.f32 %v8711, %v8712
      %v8714 = vsel %vm4323, %v8641, 0.0
      %v8715 = vadd.f32 %v8713, %v8714
      %v8716 = vsel %vm4323, %v8643, 0.0
      %v8717 = vadd.f32 %v8715, %v8716
      %v8718 = vsel %vm4323, %v8646, 0.0
      %v8719 = vadd.f32 %v8717, %v8718
      %v8720 = vsel %vm4323, %v8648, 0.0
      %v8721 = vadd.f32 %v8719, %v8720
      %v8722 = vsel %vm4323, %v8651, 0.0
      %v8723 = vadd.f32 %v8721, %v8722
      %v8724 = vsel %vm4323, %v8653, 0.0
      %v8725 = vadd.f32 %v8723, %v8724
      %v8726 = vsel %vm4323, %v8656, 0.0
      %v8727 = vadd.f32 %v8725, %v8726
      %v8728 = vsel %vm4323, %v8658, 0.0
      %v8729 = vadd.f32 %v8727, %v8728
      %v8730 = vsel %vm4323, %v8661, 0.0
      %v8731 = vadd.f32 %v8729, %v8730
      %v8732 = vsel %vm4323, %v8663, 0.0
      %v8733 = vadd.f32 %v8731, %v8732
      %v8734 = vsel %vm4323, %v8666, 0.0
      %v8735 = vadd.f32 %v8733, %v8734
      %v8736 = vsel %vm4323, %v8668, 0.0
      %v8737 = vadd.f32 %v8735, %v8736
      %v8738 = vsel %vm4323, %v8671, 0.0
      %v8739 = vadd.f32 %v8737, %v8738
      %v8740 = vsel %vm4323, %v8673, 0.0
      %v8741 = vadd.f32 %v8739, %v8740
      %v8742 = vsel %vm4323, %v8676, 0.0
      %v8743 = vadd.f32 %v8741, %v8742
      %v8744 = vsel %vm4323, %v8678, 0.0
      %v8745 = vadd.f32 %v8743, %v8744
      %v8746 = vsel %vm4323, %v8681, 0.0
      %v8747 = vadd.f32 %v8745, %v8746
      %v8748 = vsel %vm4323, %v8683, 0.0
      %v8749 = vadd.f32 %v8747, %v8748
      %v8750 = vsel %vm4323, %v8686, 0.0
      %v8751 = vadd.f32 %v8749, %v8750
      %v8752 = vsel %vm4323, %v8688, 0.0
      %v8753 = vadd.f32 %v8751, %v8752
      %v8754 = vsel %vm4323, %v8691, 0.0
      %v8755 = vadd.f32 %v8753, %v8754
      %v8756 = vsel %vm4323, %v8693, 0.0
      %v8757 = vadd.f32 %v8755, %v8756
      %v8758 = vrot.slane %v8757, 4
      %v8759 = vadd.f32 %v8757, %v8758
      %v8760 = vrot.slane %v8759, 2
      %v8761 = vadd.f32 %v8759, %v8760
      %v8762 = vrot.slane %v8761, 1
      %v8763 = vadd.f32 %v8761, %v8762
      %v8764 = vmul.f32 %v8616, %v8616
      %v8765 = vmul.f32 %v8618, %v8618
      %v8766 = vmul.f32 %v8621, %v8621
      %v8767 = vmul.f32 %v8623, %v8623
      %v8768 = vmul.f32 %v8626, %v8626
      %v8769 = vmul.f32 %v8628, %v8628
      %v8770 = vmul.f32 %v8631, %v8631
      %v8771 = vmul.f32 %v8633, %v8633
      %v8772 = vmul.f32 %v8636, %v8636
      %v8773 = vmul.f32 %v8638, %v8638
      %v8774 = vmul.f32 %v8641, %v8641
      %v8775 = vmul.f32 %v8643, %v8643
      %v8776 = vmul.f32 %v8646, %v8646
      %v8777 = vmul.f32 %v8648, %v8648
      %v8778 = vmul.f32 %v8651, %v8651
      %v8779 = vmul.f32 %v8653, %v8653
      %v8780 = vmul.f32 %v8656, %v8656
      %v8781 = vmul.f32 %v8658, %v8658
      %v8782 = vmul.f32 %v8661, %v8661
      %v8783 = vmul.f32 %v8663, %v8663
      %v8784 = vmul.f32 %v8666, %v8666
      %v8785 = vmul.f32 %v8668, %v8668
      %v8786 = vmul.f32 %v8671, %v8671
      %v8787 = vmul.f32 %v8673, %v8673
      %v8788 = vmul.f32 %v8676, %v8676
      %v8789 = vmul.f32 %v8678, %v8678
      %v8790 = vmul.f32 %v8681, %v8681
      %v8791 = vmul.f32 %v8683, %v8683
      %v8792 = vmul.f32 %v8686, %v8686
      %v8793 = vmul.f32 %v8688, %v8688
      %v8794 = vmul.f32 %v8691, %v8691
      %v8795 = vmul.f32 %v8693, %v8693
      %v8796 = vsel %vm4323, %v8764, 0.0
      %v8797 = vsel %vm4323, %v8765, 0.0
      %v8798 = vadd.f32 %v8796, %v8797
      %v8799 = vsel %vm4323, %v8766, 0.0
      %v8800 = vadd.f32 %v8798, %v8799
      %v8801 = vsel %vm4323, %v8767, 0.0
      %v8802 = vadd.f32 %v8800, %v8801
      %v8803 = vsel %vm4323, %v8768, 0.0
      %v8804 = vadd.f32 %v8802, %v8803
      %v8805 = vsel %vm4323, %v8769, 0.0
      %v8806 = vadd.f32 %v8804, %v8805
      %v8807 = vsel %vm4323, %v8770, 0.0
      %v8808 = vadd.f32 %v8806, %v8807
      %v8809 = vsel %vm4323, %v8771, 0.0
      %v8810 = vadd.f32 %v8808, %v8809
      %v8811 = vsel %vm4323, %v8772, 0.0
      %v8812 = vadd.f32 %v8810, %v8811
      %v8813 = vsel %vm4323, %v8773, 0.0
      %v8814 = vadd.f32 %v8812, %v8813
      %v8815 = vsel %vm4323, %v8774, 0.0
      %v8816 = vadd.f32 %v8814, %v8815
      %v8817 = vsel %vm4323, %v8775, 0.0
      %v8818 = vadd.f32 %v8816, %v8817
      %v8819 = vsel %vm4323, %v8776, 0.0
      %v8820 = vadd.f32 %v8818, %v8819
      %v8821 = vsel %vm4323, %v8777, 0.0
      %v8822 = vadd.f32 %v8820, %v8821
      %v8823 = vsel %vm4323, %v8778, 0.0
      %v8824 = vadd.f32 %v8822, %v8823
      %v8825 = vsel %vm4323, %v8779, 0.0
      %v8826 = vadd.f32 %v8824, %v8825
      %v8827 = vsel %vm4323, %v8780, 0.0
      %v8828 = vadd.f32 %v8826, %v8827
      %v8829 = vsel %vm4323, %v8781, 0.0
      %v8830 = vadd.f32 %v8828, %v8829
      %v8831 = vsel %vm4323, %v8782, 0.0
      %v8832 = vadd.f32 %v8830, %v8831
      %v8833 = vsel %vm4323, %v8783, 0.0
      %v8834 = vadd.f32 %v8832, %v8833
      %v8835 = vsel %vm4323, %v8784, 0.0
      %v8836 = vadd.f32 %v8834, %v8835
      %v8837 = vsel %vm4323, %v8785, 0.0
      %v8838 = vadd.f32 %v8836, %v8837
      %v8839 = vsel %vm4323, %v8786, 0.0
      %v8840 = vadd.f32 %v8838, %v8839
      %v8841 = vsel %vm4323, %v8787, 0.0
      %v8842 = vadd.f32 %v8840, %v8841
      %v8843 = vsel %vm4323, %v8788, 0.0
      %v8844 = vadd.f32 %v8842, %v8843
      %v8845 = vsel %vm4323, %v8789, 0.0
      %v8846 = vadd.f32 %v8844, %v8845
      %v8847 = vsel %vm4323, %v8790, 0.0
      %v8848 = vadd.f32 %v8846, %v8847
      %v8849 = vsel %vm4323, %v8791, 0.0
      %v8850 = vadd.f32 %v8848, %v8849
      %v8851 = vsel %vm4323, %v8792, 0.0
      %v8852 = vadd.f32 %v8850, %v8851
      %v8853 = vsel %vm4323, %v8793, 0.0
      %v8854 = vadd.f32 %v8852, %v8853
      %v8855 = vsel %vm4323, %v8794, 0.0
      %v8856 = vadd.f32 %v8854, %v8855
      %v8857 = vsel %vm4323, %v8795, 0.0
      %v8858 = vadd.f32 %v8856, %v8857
      %v8859 = vrot.slane %v8858, 4
      %v8860 = vadd.f32 %v8858, %v8859
      %v8861 = vrot.slane %v8860, 2
      %v8862 = vadd.f32 %v8860, %v8861
      %v8863 = vrot.slane %v8862, 1
      %v8864 = vadd.f32 %v8862, %v8863
      %v8865 = vmul.f32 %v8763, 0.00390625
      %v8866 = vmul.f32 %v8864, 0.00390625
      %v8867 = vmul.f32 %v8865, %v8865
      %v8868 = vsub.f32 %v8866, %v8867
      %v8869 = vsub.f32 %v8616, %v8865
      %v8870 = vsub.f32 %v8618, %v8865
      %v8871 = vsub.f32 %v8621, %v8865
      %v8872 = vsub.f32 %v8623, %v8865
      %v8873 = vsub.f32 %v8626, %v8865
      %v8874 = vsub.f32 %v8628, %v8865
      %v8875 = vsub.f32 %v8631, %v8865
      %v8876 = vsub.f32 %v8633, %v8865
      %v8877 = vsub.f32 %v8636, %v8865
      %v8878 = vsub.f32 %v8638, %v8865
      %v8879 = vsub.f32 %v8641, %v8865
      %v8880 = vsub.f32 %v8643, %v8865
      %v8881 = vsub.f32 %v8646, %v8865
      %v8882 = vsub.f32 %v8648, %v8865
      %v8883 = vsub.f32 %v8651, %v8865
      %v8884 = vsub.f32 %v8653, %v8865
      %v8885 = vsub.f32 %v8656, %v8865
      %v8886 = vsub.f32 %v8658, %v8865
      %v8887 = vsub.f32 %v8661, %v8865
      %v8888 = vsub.f32 %v8663, %v8865
      %v8889 = vsub.f32 %v8666, %v8865
      %v8890 = vsub.f32 %v8668, %v8865
      %v8891 = vsub.f32 %v8671, %v8865
      %v8892 = vsub.f32 %v8673, %v8865
      %v8893 = vsub.f32 %v8676, %v8865
      %v8894 = vsub.f32 %v8678, %v8865
      %v8895 = vsub.f32 %v8681, %v8865
      %v8896 = vsub.f32 %v8683, %v8865
      %v8897 = vsub.f32 %v8686, %v8865
      %v8898 = vsub.f32 %v8688, %v8865
      %v8899 = vsub.f32 %v8691, %v8865
      %v8900 = vsub.f32 %v8693, %v8865
      %v8901 = vadd.f32 %v8868, 1e-05
      %v8902 = vrsqrt.pop %v8901
      %v8903 = vmul.f32 %v8902, %v8901
      %v8904 = vmul.f32 %v8903, %v8902
      %v8905 = vmul.f32 0.5, %v8904
      %v8906 = vsub.f32 1.5, %v8905
      %v8907 = vmul.f32 %v8902, %v8906
      %vm8908 = vweird.f32 %v8901
      %vm8909 = vweird.f32 %v8902
      %vm8910 = vmor %vm8908, %vm8909
      %v8911 = vsel %vm8910, %v8902, %v8907
      %v8912 = vmul.f32 %v8869, %v8911
      %v8913 = vmul.f32 %v8870, %v8911
      %v8914 = vmul.f32 %v8871, %v8911
      %v8915 = vmul.f32 %v8872, %v8911
      %v8916 = vmul.f32 %v8873, %v8911
      %v8917 = vmul.f32 %v8874, %v8911
      %v8918 = vmul.f32 %v8875, %v8911
      %v8919 = vmul.f32 %v8876, %v8911
      %v8920 = vmul.f32 %v8877, %v8911
      %v8921 = vmul.f32 %v8878, %v8911
      %v8922 = vmul.f32 %v8879, %v8911
      %v8923 = vmul.f32 %v8880, %v8911
      %v8924 = vmul.f32 %v8881, %v8911
      %v8925 = vmul.f32 %v8882, %v8911
      %v8926 = vmul.f32 %v8883, %v8911
      %v8927 = vmul.f32 %v8884, %v8911
      %v8928 = vmul.f32 %v8885, %v8911
      %v8929 = vmul.f32 %v8886, %v8911
      %v8930 = vmul.f32 %v8887, %v8911
      %v8931 = vmul.f32 %v8888, %v8911
      %v8932 = vmul.f32 %v8889, %v8911
      %v8933 = vmul.f32 %v8890, %v8911
      %v8934 = vmul.f32 %v8891, %v8911
      %v8935 = vmul.f32 %v8892, %v8911
      %v8936 = vmul.f32 %v8893, %v8911
      %v8937 = vmul.f32 %v8894, %v8911
      %v8938 = vmul.f32 %v8895, %v8911
      %v8939 = vmul.f32 %v8896, %v8911
      %v8940 = vmul.f32 %v8897, %v8911
      %v8941 = vmul.f32 %v8898, %v8911
      %v8942 = vmul.f32 %v8899, %v8911
      %v8943 = vmul.f32 %v8900, %v8911
      %v8944 = vadd.f32 %v172, %v8912
      %v8945 = vadd.f32 %v173, %v8913
      %v8946 = vadd.f32 %v174, %v8914
      %v8947 = vadd.f32 %v175, %v8915
      %v8948 = vadd.f32 %v176, %v8916
      %v8949 = vadd.f32 %v177, %v8917
      %v8950 = vadd.f32 %v178, %v8918
      %v8951 = vadd.f32 %v179, %v8919
      %v8952 = vadd.f32 %v180, %v8920
      %v8953 = vadd.f32 %v181, %v8921
      %v8954 = vadd.f32 %v182, %v8922
      %v8955 = vadd.f32 %v183, %v8923
      %v8956 = vadd.f32 %v184, %v8924
      %v8957 = vadd.f32 %v185, %v8925
      %v8958 = vadd.f32 %v186, %v8926
      %v8959 = vadd.f32 %v187, %v8927
      %v8960 = vadd.f32 %v188, %v8928
      %v8961 = vadd.f32 %v189, %v8929
      %v8962 = vadd.f32 %v190, %v8930
      %v8963 = vadd.f32 %v191, %v8931
      %v8964 = vadd.f32 %v192, %v8932
      %v8965 = vadd.f32 %v193, %v8933
      %v8966 = vadd.f32 %v194, %v8934
      %v8967 = vadd.f32 %v195, %v8935
      %v8968 = vadd.f32 %v196, %v8936
      %v8969 = vadd.f32 %v197, %v8937
      %v8970 = vadd.f32 %v198, %v8938
      %v8971 = vadd.f32 %v199, %v8939
      %v8972 = vadd.f32 %v200, %v8940
      %v8973 = vadd.f32 %v201, %v8941
      %v8974 = vadd.f32 %v202, %v8942
      %v8975 = vadd.f32 %v203, %v8943
      %8976 = vst.msk [vmem:[%s170] sm:$0xff] %vm4323, %v8944
      %8977 = vst.msk [vmem:[%s170 + $0x8] sm:$0xff] %vm4323, %v8945
      %8978 = vst.msk [vmem:[%s170 + $0x10] sm:$0xff] %vm4323, %v8946
      %8979 = vst.msk [vmem:[%s170 + $0x18] sm:$0xff] %vm4323, %v8947
      %8980 = vst.msk [vmem:[%s170 + $0x20] sm:$0xff] %vm4323, %v8948
      %8981 = vst.msk [vmem:[%s170 + $0x28] sm:$0xff] %vm4323, %v8949
      %8982 = vst.msk [vmem:[%s170 + $0x30] sm:$0xff] %vm4323, %v8950
      %8983 = vst.msk [vmem:[%s170 + $0x38] sm:$0xff] %vm4323, %v8951
      %8984 = vst.msk [vmem:[%s170 + $0x40] sm:$0xff] %vm4323, %v8952
      %8985 = vst.msk [vmem:[%s170 + $0x48] sm:$0xff] %vm4323, %v8953
      %8986 = vst.msk [vmem:[%s170 + $0x50] sm:$0xff] %vm4323, %v8954
      %8987 = vst.msk [vmem:[%s170 + $0x58] sm:$0xff] %vm4323, %v8955
      %8988 = vst.msk [vmem:[%s170 + $0x60] sm:$0xff] %vm4323, %v8956
      %8989 = vst.msk [vmem:[%s170 + $0x68] sm:$0xff] %vm4323, %v8957
      %8990 = vst.msk [vmem:[%s170 + $0x70] sm:$0xff] %vm4323, %v8958
      %8991 = vst.msk [vmem:[%s170 + $0x78] sm:$0xff] %vm4323, %v8959
      %8992 = vst.msk [vmem:[%s170 + $0x80] sm:$0xff] %vm4323, %v8960
      %8993 = vst.msk [vmem:[%s170 + $0x88] sm:$0xff] %vm4323, %v8961
      %8994 = vst.msk [vmem:[%s170 + $0x90] sm:$0xff] %vm4323, %v8962
      %8995 = vst.msk [vmem:[%s170 + $0x98] sm:$0xff] %vm4323, %v8963
      %8996 = vst.msk [vmem:[%s170 + $0xa0] sm:$0xff] %vm4323, %v8964
      %8997 = vst.msk [vmem:[%s170 + $0xa8] sm:$0xff] %vm4323, %v8965
      %8998 = vst.msk [vmem:[%s170 + $0xb0] sm:$0xff] %vm4323, %v8966
      %8999 = vst.msk [vmem:[%s170 + $0xb8] sm:$0xff] %vm4323, %v8967
      %9000 = vst.msk [vmem:[%s170 + $0xc0] sm:$0xff] %vm4323, %v8968
      %9001 = vst.msk [vmem:[%s170 + $0xc8] sm:$0xff] %vm4323, %v8969
      %9002 = vst.msk [vmem:[%s170 + $0xd0] sm:$0xff] %vm4323, %v8970
      %9003 = vst.msk [vmem:[%s170 + $0xd8] sm:$0xff] %vm4323, %v8971
      %9004 = vst.msk [vmem:[%s170 + $0xe0] sm:$0xff] %vm4323, %v8972
      %9005 = vst.msk [vmem:[%s170 + $0xe8] sm:$0xff] %vm4323, %v8973
      %9006 = vst.msk [vmem:[%s170 + $0xf0] sm:$0xff] %vm4323, %v8974
      %9007 = vst.msk [vmem:[%s170 + $0xf8] sm:$0xff] %vm4323, %v8975
      %p9008 = scmp.lt.s32.totalorder %s14, 1
      %s9009 = scalar_select %p9008, %s14, 1
      %s9010 = smul.addr %s9009, 32
      %s9011 = smul.addr %s9010, 8
      %s9012 = scalar_lea.vmem %s3, %s9011
      // Predicated region
      $region33: #{resblock_forward.1} parent=31 // pred_check
        %p9013 = pneg %p100
      $region34: #{resblock_forward.1} parent=31 // pred_check_branch
        %9015 = sbr.rel (%p9013) target = $region36
      $region35: #{resblock_forward.1} parent=31 // pred_region
        _
      $region36: #{resblock_forward.1} parent=31 // pred_fallthru
        _
    $region32: #{resblock_forward.1} parent=5 // pred_fallthru
      _
    %p9016 = scmp.le.s32.totalorder 2, %s9
    // Predicated region
    $region37: #{resblock_forward.1} parent=5 // pred_check
      %p9017 = pneg %p9016
    $region38: #{resblock_forward.1} parent=5 // pred_check_branch
      %9019 = sbr.rel (%p9017) target = $region40
    $region39: #{resblock_forward.1} parent=5 // pred_region
      %s9020 = ssub.s32 %s9, 2
      // Predicated region
      $region41: #{resblock_forward.1} parent=39 // pred_check
        %p9021 = pneg %p106
      $region42: #{resblock_forward.1} parent=39 // pred_check_branch
        %9023 = sbr.rel (%p9021) target = $region44
      $region43: #{resblock_forward.1} parent=39 // pred_region
        %p9024 = scmp.lt.s32.totalorder %s15, 1
        %s9025 = scalar_select %p9024, %s15, 1
        %s9026 = smul.addr %s9025, 32
        %s9027 = smul.addr %s9026, 8
        %s9028 = scalar_lea.vmem %s3, %s9027
      $region44: #{resblock_forward.1} parent=39 // pred_fallthru
        _
    $region40: #{resblock_forward.1} parent=5 // pred_fallthru
      _
  $region6: #{resblock_forward.1} parent=0 // loop_footer
    %s13 = sadd.s32 1, %s9
  $region7: #{resblock_forward.1} parent=0 // loop_footer_branch
    %8 = sbr.rel target = $region3
  $region8: #{resblock_forward.1} parent=0 // loop_exit
    _

</llo_original>
